<compile_context>
chip_gen: v6e
topology: v6e:2x2x1
jax: 0.10.0
libtpu: 0.0.40
codegen_flags: <defaults>
</compile_context>

<pallas_src>
import functools

import jax
import jax.numpy as jnp
from jax.experimental import pallas as pl
from jax.experimental.pallas import tpu as pltpu


def _round_up(x, m):
    return (x + m - 1) // m * m


def _postnet_fused_kernel(x_ref, wf_ref, wm_ref, wl_ref, sfm_ref, sl_ref,
                          o_ref, h_ref, *, n_layers, K, Tb, T_valid,
                          c_in, c_mid, c_out):
    """One batch element, all layers fused.

    x_ref:   (1, Tb, c_in)           bf16  input tile (channel/time zero-padded)
    wf_ref:  (K, c_in, c_mid)        bf16  layer-0 taps (BN scale folded in)
    wm_ref:  (L-2, K, c_mid, c_mid)  bf16  middle-layer taps
    wl_ref:  (K, c_mid, c_out)       bf16  last-layer taps
    sfm_ref: (L-1, 1, c_mid)         f32   folded conv-bias + BN shift (layers 0..L-2)
    sl_ref:  (1, c_out)              f32   folded shift (last layer)
    o_ref:   (1, Tb, c_out)          out dtype
    h_ref:   (Tb + halo, c_mid)      bf16  VMEM-resident activation with zero halo
    """
    pad = (K - 1) // 2

    # Zero ONLY the halo rows (full width): valid rows are overwritten from x_ref
    # below, and trailing alignment rows past the upper halo are never read.
    if pad:
        h_ref[0:pad, :] = jnp.zeros((pad, c_mid), h_ref.dtype)
        h_ref[pad + Tb:pad + Tb + pad, :] = jnp.zeros((pad, c_mid), h_ref.dtype)
    # Input occupies the first c_in lanes of the valid window; layer 0 only
    # reads those columns (stale data in lanes >= c_in is never touched).
    h_ref[pad:pad + Tb, 0:c_in] = x_ref[0]

    if Tb != T_valid:
        # Rows >= T_valid must stay exactly zero between layers to reproduce
        # PyTorch's zero padding at the true sequence end.
        valid = jax.lax.broadcasted_iota(jnp.int32, (Tb, 1), 0) < T_valid
    else:
        valid = None

    def conv(tap_w, cols):
        # Conv1d(kernel=K) as K shifted MXU matmuls on the resident halo'd tile;
        # accumulator initialized from the first tap (no zeros + add).
        acc = jnp.dot(h_ref[0:Tb, 0:cols], tap_w(0),
                      preferred_element_type=jnp.float32)
        for k in range(1, K):
            acc = acc + jnp.dot(h_ref[k:k + Tb, 0:cols], tap_w(k),
                                preferred_element_type=jnp.float32)
        return acc

    # Layers 0 .. L-2: conv -> (+shift) -> tanh, result stays in VMEM.
    for l in range(n_layers - 1):
        if l == 0:
            acc = conv(lambda k: wf_ref[k], c_in)
        else:
            acc = conv(lambda k, _l=l: wm_ref[_l - 1, k], c_mid)
        y = acc + sfm_ref[l]                        # eval BN (+ conv bias); scale folded
        y = jnp.tanh(y.astype(jnp.bfloat16))        # bf16 tanh (EUP), stored bf16 anyway
        if valid is not None:
            y = jnp.where(valid, y, jnp.zeros_like(y))
        h_ref[pad:pad + Tb, :] = y                  # stays VMEM resident

    # Last layer: conv -> (+shift), no tanh.  Tail rows >= T_valid are sliced
    # off by the wrapper, so no masking needed here.
    acc = conv(lambda k: wl_ref[k], c_mid)
    y = acc + sl_ref[...]
    o_ref[0] = y.astype(o_ref.dtype)


def _build_specs(K, L, Tb, c_in, c_mid, c_out, single_buffer):
    def const_spec(shape, imap):
        # Constant index_map -> DMA'd once; single-buffer to halve its VMEM.
        if single_buffer:
            return pl.BlockSpec(shape, imap, pipeline_mode=pl.Buffered(1))
        return pl.BlockSpec(shape, imap)

    in_specs = [
        pl.BlockSpec((1, Tb, c_in), lambda b: (b, 0, 0)),
        const_spec((K, c_in, c_mid), lambda b: (0, 0, 0)),
        const_spec((L - 2, K, c_mid, c_mid), lambda b: (0, 0, 0, 0)),
        const_spec((K, c_mid, c_out), lambda b: (0, 0, 0)),
        const_spec((L - 1, 1, c_mid), lambda b: (0, 0, 0)),
        const_spec((1, c_out), lambda b: (0, 0)),
    ]
    out_spec = pl.BlockSpec((1, Tb, c_out), lambda b: (b, 0, 0))
    return in_specs, out_spec


def postnet_forward(x, params):
    """x: (B, T, n_mel) -> (B, T, n_mel).  Matches PostNet.forward (eval semantics)."""
    wf, wm, wl = params["w_first"], params["w_mid"], params["w_last"]
    sfm, sl = params["shift_fm"], params["shift_last"]
    B, T, n_mel = x.shape
    K, c_in, c_mid = wf.shape
    L = wm.shape[0] + 2
    c_out = wl.shape[-1]
    pad = (K - 1) // 2
    Tb = _round_up(T, 16)
    halo_rows = _round_up(2 * pad, 16) if pad else 0

    # Single cheap pad of the (small) input: channels -> 128 lanes, time -> x16.
    x_p = jnp.pad(x.astype(jnp.bfloat16),
                  ((0, 0), (0, Tb - T), (0, c_in - n_mel)))

    kernel = functools.partial(_postnet_fused_kernel, n_layers=L, K=K, Tb=Tb,
                               T_valid=T, c_in=c_in, c_mid=c_mid, c_out=c_out)

    out_dtype = x.dtype
    out_bytes_per_el = jnp.dtype(out_dtype).itemsize
    out_shape = jax.ShapeDtypeStruct((B, Tb, c_out), out_dtype)
    scratch_shapes = [pltpu.VMEM((Tb + halo_rows, c_mid), jnp.bfloat16)]

    def nbytes(a):
        return a.size * a.dtype.itemsize

    flops = 2 * B * Tb * K * (c_in * c_mid
                              + (L - 2) * c_mid * c_mid
                              + c_mid * c_out)
    transcendentals = B * Tb * c_mid * (L - 1)
    bytes_accessed = (nbytes(x_p) + nbytes(wf) + nbytes(wm) + nbytes(wl)
                      + nbytes(sfm) + nbytes(sl)
                      + B * Tb * c_out * out_bytes_per_el)
    cost = pl.CostEstimate(flops=int(flops),
                           transcendentals=int(transcendentals),
                           bytes_accessed=int(bytes_accessed))

    weight_bytes = nbytes(wf) + nbytes(wm) + nbytes(wl) + nbytes(sfm) + nbytes(sl)

    def vmem_limit(single_buffer):
        w = weight_bytes * (1 if single_buffer else 2)
        io = 2 * Tb * c_in * 2 + 2 * Tb * c_out * out_bytes_per_el
        sc = (Tb + halo_rows) * c_mid * 2
        return int(max(w + io + sc + (4 << 20), 16 << 20))

    def run(single_buffer):
        in_specs, out_spec = _build_specs(K, L, Tb, c_in, c_mid, c_out,
                                          single_buffer)
        call = pl.pallas_call(
            kernel,
            out_shape=out_shape,
            grid_spec=pltpu.PrefetchScalarGridSpec(
                num_scalar_prefetch=0,
                grid=(B,),
                in_specs=in_specs,
                out_specs=out_spec,
                scratch_shapes=scratch_shapes,
            ),
            compiler_params=pltpu.CompilerParams(
                dimension_semantics=("parallel",),
                vmem_limit_bytes=vmem_limit(single_buffer),
            ),
            cost_estimate=cost,
        )
        return call(x_p, wf, wm, wl, sfm, sl)

    try:
        out = run(single_buffer=True)
    except Exception:
        # Fallback for JAX versions without BlockSpec pipeline_mode support;
        # identical math, just double-buffered constant operands.
        out = run(single_buffer=False)

    return out[:, :T, :n_mel]


def init_postnet_params(key, n_mel, emb_dim, kernel_size, n_convs, eps=1e-5):
    """Deterministic synthetic parameters matching the PyTorch module's shapes,
    with eval-mode BatchNorm folded in (scale -> weights, shift kept separate)
    and per-layer channels zero-padded to 128-lane multiples."""
    assert n_convs >= 3
    dims = [n_mel] + [emb_dim] * (n_convs - 1) + [n_mel]
    c_in = _round_up(n_mel, 128)
    c_mid = _round_up(emb_dim, 128)
    c_out = _round_up(n_mel, 128)

    w_list, sh_list = [], []
    for i in range(n_convs):
        cin, cout = dims[i], dims[i + 1]
        cin_p = c_in if i == 0 else c_mid
        cout_p = c_out if i == n_convs - 1 else c_mid
        key, k_w, k_b, k_g, k_be, k_m, k_v = jax.random.split(key, 7)
        # PyTorch Conv1d weight: (Cout, Cin, K); bias: (Cout,)
        conv_w = jax.random.normal(k_w, (cout, cin, kernel_size), jnp.float32) * 0.05
        conv_b = jax.random.normal(k_b, (cout,), jnp.float32) * 0.05
        # BatchNorm1d (eval mode, running stats)
        gamma = 1.0 + 0.1 * jax.random.normal(k_g, (cout,), jnp.float32)
        beta = 0.1 * jax.random.normal(k_be, (cout,), jnp.float32)
        run_mean = 0.1 * jax.random.normal(k_m, (cout,), jnp.float32)
        run_var = jnp.abs(1.0 + 0.1 * jax.random.normal(k_v, (cout,), jnp.float32))
        # Fold: gamma*(conv(x)+b - mean)/sqrt(var+eps) + beta = conv(x)*scale + shift
        scale = gamma / jnp.sqrt(run_var + eps)
        shift = beta + (conv_b - run_mean) * scale
        # Matmul form with BN scale folded into the weights:
        # W_mat[k, cin, cout] = conv_w[cout, cin, k] * scale[cout]
        w_mat = jnp.transpose(conv_w, (2, 1, 0)) * scale[None, None, :]
        # Zero-pad to lane-dense per-layer shapes; padded Cout lanes have zero
        # weight columns and zero shift -> stay exactly 0 (tanh(0)=0), so padded
        # lanes never leak into valid channels of later layers.
        w_pad = jnp.zeros((kernel_size, cin_p, cout_p), jnp.float32)
        w_pad = w_pad.at[:, :cin, :cout].set(w_mat)
        sh_pad = jnp.zeros((cout_p,), jnp.float32).at[:cout].set(shift)
        w_list.append(w_pad)
        sh_list.append(sh_pad)

    return {
        "w_first": w_list[0].astype(jnp.bfloat16),              # (K, c_in, c_mid)
        "w_mid": jnp.stack(w_list[1:-1]).astype(jnp.bfloat16),  # (L-2, K, c_mid, c_mid)
        "w_last": w_list[-1].astype(jnp.bfloat16),               # (K, c_mid, c_out)
        "shift_fm": jnp.stack(sh_list[:-1])[:, None, :],         # (L-1, 1, c_mid) f32
        "shift_last": sh_list[-1][None, :],                      # (1, c_out) f32
    }


if __name__ == "__main__":
    # Small shapes consistent with the module (scaled-down channel counts).
    B, T = 2, 8
    n_mel_channels = 16
    postnet_embedding_dim = 32
    postnet_kernel_size = 5
    postnet_n_convolutions = 5

    key = jax.random.PRNGKey(0)
    key, k_x = jax.random.split(key)
    x = jax.random.normal(k_x, (B, T, n_mel_channels), jnp.float32)

    params = init_postnet_params(
        key, n_mel_channels, postnet_embedding_dim,
        postnet_kernel_size, postnet_n_convolutions,
    )

    out = postnet_forward(x, params)
    jax.block_until_ready(out)
    assert out.shape == (B, T, n_mel_channels), out.shape
    print("KERNEL_OK")
</pallas_src>

<mosaic_0001>
module attributes {stable_mosaic.version = 11 : i64} {
  func.func @_postnet_fused_kernel(%arg0: i32, %arg1: memref<1x16x128xbf16, #tpu.memory_space<vmem>>, %arg2: memref<5x128x128xbf16, #tpu.memory_space<vmem>>, %arg3: memref<3x5x128x128xbf16, #tpu.memory_space<vmem>>, %arg4: memref<5x128x128xbf16, #tpu.memory_space<vmem>>, %arg5: memref<4x1x128xf32, #tpu.memory_space<vmem>>, %arg6: memref<1x128xf32, #tpu.memory_space<vmem>>, %arg7: memref<1x16x128xf32, #tpu.memory_space<vmem>>, %arg8: memref<32x128xbf16, #tpu.memory_space<vmem>>) attributes {dimension_semantics = [#tpu.dimension_semantics<parallel>], iteration_bounds = array<i64: 2>, scalar_prefetch = 0 : i64, scratch_operands = 1 : i64, tpu.core_type = #tpu.core_type<tc>, window_params = [{transform_indices = @transform_0, window_bounds = array<i64: 1, 16, 128>}, {pipeline_mode = #tpu.pipeline_mode<synchronous>, transform_indices = @transform_1, window_bounds = array<i64: 5, 128, 128>}, {pipeline_mode = #tpu.pipeline_mode<synchronous>, transform_indices = @transform_2, window_bounds = array<i64: 3, 5, 128, 128>}, {pipeline_mode = #tpu.pipeline_mode<synchronous>, transform_indices = @transform_3, window_bounds = array<i64: 5, 128, 128>}, {pipeline_mode = #tpu.pipeline_mode<synchronous>, transform_indices = @transform_4, window_bounds = array<i64: 4, 1, 128>}, {pipeline_mode = #tpu.pipeline_mode<synchronous>, transform_indices = @transform_5, window_bounds = array<i64: 1, 128>}, {transform_indices = @transform_6, window_bounds = array<i64: 1, 16, 128>}]} {
    %cst = arith.constant 0.000000e+00 : bf16
    %0 = vector.broadcast %cst : bf16 to vector<2x128xbf16>
    %c0 = arith.constant 0 : index
    %c0_0 = arith.constant 0 : index
    %1 = vector.load %arg8[%c0, %c0_0] : memref<32x128xbf16, #tpu.memory_space<vmem>>, vector<2x128xbf16>
    tpu.vector_store %arg8[%c0, %c0_0], %0 {strides = array<i32>} : memref<32x128xbf16, #tpu.memory_space<vmem>>, vector<2x128xbf16>,
    %cst_1 = arith.constant 0.000000e+00 : bf16
    %2 = vector.broadcast %cst_1 : bf16 to vector<2x128xbf16>
    %c18 = arith.constant 18 : index
    %c0_2 = arith.constant 0 : index
    %3 = vector.load %arg8[%c18, %c0_2] : memref<32x128xbf16, #tpu.memory_space<vmem>>, vector<2x128xbf16>
    tpu.vector_store %arg8[%c18, %c0_2], %2 {strides = array<i32>} : memref<32x128xbf16, #tpu.memory_space<vmem>>, vector<2x128xbf16>,
    %c0_3 = arith.constant 0 : index
    %c0_4 = arith.constant 0 : index
    %c0_5 = arith.constant 0 : index
    %4 = vector.load %arg1[%c0_3, %c0_4, %c0_5] : memref<1x16x128xbf16, #tpu.memory_space<vmem>>, vector<1x16x128xbf16>
    %5 = vector.shape_cast %4 : vector<1x16x128xbf16> to vector<16x128xbf16>
    %c2 = arith.constant 2 : index
    %c0_6 = arith.constant 0 : index
    %6 = vector.load %arg8[%c2, %c0_6] : memref<32x128xbf16, #tpu.memory_space<vmem>>, vector<16x128xbf16>
    tpu.vector_store %arg8[%c2, %c0_6], %5 {strides = array<i32>} : memref<32x128xbf16, #tpu.memory_space<vmem>>, vector<16x128xbf16>,
    %7 = tpu.iota {dimensions = array<i32: 0>} : vector<16x1xi32>
    %c8_i32 = arith.constant 8 : i32
    %8 = vector.broadcast %c8_i32 : i32 to vector<16x1xi32>
    %9 = arith.cmpi slt, %7, %8 : vector<16x1xi32>
    %c0_7 = arith.constant 0 : index
    %c0_8 = arith.constant 0 : index
    %10 = vector.load %arg8[%c0_7, %c0_8] : memref<32x128xbf16, #tpu.memory_space<vmem>>, vector<16x128xbf16>
    %c0_9 = arith.constant 0 : index
    %c0_10 = arith.constant 0 : index
    %c0_11 = arith.constant 0 : index
    %11 = vector.load %arg2[%c0_9, %c0_10, %c0_11] : memref<5x128x128xbf16, #tpu.memory_space<vmem>>, vector<1x128x128xbf16>
    %12 = vector.shape_cast %11 : vector<1x128x128xbf16> to vector<128x128xbf16>
    %cst_12 = arith.constant dense<0.000000e+00> : vector<16x128xf32>
    %13 = tpu.matmul %10, %12, %cst_12 {dimension_numbers = #tpu.dot_dimension_numbers<[1], [0], [0], [1], [0, 0, 1, 1], [], []>} : vector<16x128xbf16>, vector<128x128xbf16>, vector<16x128xf32> -> vector<16x128xf32>
    %c1 = arith.constant 1 : index
    %c0_13 = arith.constant 0 : index
    %14 = vector.load %arg8[%c1, %c0_13] : memref<32x128xbf16, #tpu.memory_space<vmem>>, vector<16x128xbf16>
    %c1_14 = arith.constant 1 : index
    %c0_15 = arith.constant 0 : index
    %c0_16 = arith.constant 0 : index
    %15 = vector.load %arg2[%c1_14, %c0_15, %c0_16] : memref<5x128x128xbf16, #tpu.memory_space<vmem>>, vector<1x128x128xbf16>
    %16 = vector.shape_cast %15 : vector<1x128x128xbf16> to vector<128x128xbf16>
    %cst_17 = arith.constant dense<0.000000e+00> : vector<16x128xf32>
    %17 = tpu.matmul %14, %16, %cst_17 {dimension_numbers = #tpu.dot_dimension_numbers<[1], [0], [0], [1], [0, 0, 1, 1], [], []>} : vector<16x128xbf16>, vector<128x128xbf16>, vector<16x128xf32> -> vector<16x128xf32>
    %18 = arith.addf %13, %17 : vector<16x128xf32>
    %c2_18 = arith.constant 2 : index
    %c0_19 = arith.constant 0 : index
    %19 = vector.load %arg8[%c2_18, %c0_19] : memref<32x128xbf16, #tpu.memory_space<vmem>>, vector<16x128xbf16>
    %c2_20 = arith.constant 2 : index
    %c0_21 = arith.constant 0 : index
    %c0_22 = arith.constant 0 : index
    %20 = vector.load %arg2[%c2_20, %c0_21, %c0_22] : memref<5x128x128xbf16, #tpu.memory_space<vmem>>, vector<1x128x128xbf16>
    %21 = vector.shape_cast %20 : vector<1x128x128xbf16> to vector<128x128xbf16>
    %cst_23 = arith.constant dense<0.000000e+00> : vector<16x128xf32>
    %22 = tpu.matmul %19, %21, %cst_23 {dimension_numbers = #tpu.dot_dimension_numbers<[1], [0], [0], [1], [0, 0, 1, 1], [], []>} : vector<16x128xbf16>, vector<128x128xbf16>, vector<16x128xf32> -> vector<16x128xf32>
    %23 = arith.addf %18, %22 : vector<16x128xf32>
    %c3 = arith.constant 3 : index
    %c0_24 = arith.constant 0 : index
    %24 = vector.load %arg8[%c3, %c0_24] : memref<32x128xbf16, #tpu.memory_space<vmem>>, vector<16x128xbf16>
    %c3_25 = arith.constant 3 : index
    %c0_26 = arith.constant 0 : index
    %c0_27 = arith.constant 0 : index
    %25 = vector.load %arg2[%c3_25, %c0_26, %c0_27] : memref<5x128x128xbf16, #tpu.memory_space<vmem>>, vector<1x128x128xbf16>
    %26 = vector.shape_cast %25 : vector<1x128x128xbf16> to vector<128x128xbf16>
    %cst_28 = arith.constant dense<0.000000e+00> : vector<16x128xf32>
    %27 = tpu.matmul %24, %26, %cst_28 {dimension_numbers = #tpu.dot_dimension_numbers<[1], [0], [0], [1], [0, 0, 1, 1], [], []>} : vector<16x128xbf16>, vector<128x128xbf16>, vector<16x128xf32> -> vector<16x128xf32>
    %28 = arith.addf %23, %27 : vector<16x128xf32>
    %c4 = arith.constant 4 : index
    %c0_29 = arith.constant 0 : index
    %29 = vector.load %arg8[%c4, %c0_29] : memref<32x128xbf16, #tpu.memory_space<vmem>>, vector<16x128xbf16>
    %c4_30 = arith.constant 4 : index
    %c0_31 = arith.constant 0 : index
    %c0_32 = arith.constant 0 : index
    %30 = vector.load %arg2[%c4_30, %c0_31, %c0_32] : memref<5x128x128xbf16, #tpu.memory_space<vmem>>, vector<1x128x128xbf16>
    %31 = vector.shape_cast %30 : vector<1x128x128xbf16> to vector<128x128xbf16>
    %cst_33 = arith.constant dense<0.000000e+00> : vector<16x128xf32>
    %32 = tpu.matmul %29, %31, %cst_33 {dimension_numbers = #tpu.dot_dimension_numbers<[1], [0], [0], [1], [0, 0, 1, 1], [], []>} : vector<16x128xbf16>, vector<128x128xbf16>, vector<16x128xf32> -> vector<16x128xf32>
    %33 = arith.addf %28, %32 : vector<16x128xf32>
    %c0_34 = arith.constant 0 : index
    %c0_35 = arith.constant 0 : index
    %c0_36 = arith.constant 0 : index
    %34 = vector.load %arg5[%c0_34, %c0_35, %c0_36] : memref<4x1x128xf32, #tpu.memory_space<vmem>>, vector<1x1x128xf32>
    %35 = vector.shape_cast %34 : vector<1x1x128xf32> to vector<1x128xf32>
    %36 = vector.broadcast %35 : vector<1x128xf32> to vector<16x128xf32>
    %37 = arith.addf %33, %36 : vector<16x128xf32>
    %38 = arith.truncf %37 : vector<16x128xf32> to vector<16x128xbf16>
    %39 = math.tanh %38 : vector<16x128xbf16>
    %cst_37 = arith.constant 0.000000e+00 : bf16
    %40 = vector.broadcast %cst_37 : bf16 to vector<16x128xbf16>
    %41 = vector.shape_cast %9 : vector<16x1xi1> to vector<16x1xi1>
    %42 = vector.broadcast %41 : vector<16x1xi1> to vector<16x128xi1>
    %43 = arith.select %42, %39, %40 : vector<16x128xi1>, vector<16x128xbf16>
    %c2_38 = arith.constant 2 : index
    %c0_39 = arith.constant 0 : index
    %44 = vector.load %arg8[%c2_38, %c0_39] : memref<32x128xbf16, #tpu.memory_space<vmem>>, vector<16x128xbf16>
    tpu.vector_store %arg8[%c2_38, %c0_39], %43 {strides = array<i32>} : memref<32x128xbf16, #tpu.memory_space<vmem>>, vector<16x128xbf16>,
    %c0_40 = arith.constant 0 : index
    %c0_41 = arith.constant 0 : index
    %45 = vector.load %arg8[%c0_40, %c0_41] : memref<32x128xbf16, #tpu.memory_space<vmem>>, vector<16x128xbf16>
    %c0_42 = arith.constant 0 : index
    %c0_43 = arith.constant 0 : index
    %c0_44 = arith.constant 0 : index
    %c0_45 = arith.constant 0 : index
    %46 = vector.load %arg3[%c0_42, %c0_43, %c0_44, %c0_45] : memref<3x5x128x128xbf16, #tpu.memory_space<vmem>>, vector<1x1x128x128xbf16>
    %47 = vector.shape_cast %46 : vector<1x1x128x128xbf16> to vector<128x128xbf16>
    %cst_46 = arith.constant dense<0.000000e+00> : vector<16x128xf32>
    %48 = tpu.matmul %45, %47, %cst_46 {dimension_numbers = #tpu.dot_dimension_numbers<[1], [0], [0], [1], [0, 0, 1, 1], [], []>} : vector<16x128xbf16>, vector<128x128xbf16>, vector<16x128xf32> -> vector<16x128xf32>
    %c1_47 = arith.constant 1 : index
    %c0_48 = arith.constant 0 : index
    %49 = vector.load %arg8[%c1_47, %c0_48] : memref<32x128xbf16, #tpu.memory_space<vmem>>, vector<16x128xbf16>
    %c0_49 = arith.constant 0 : index
    %c1_50 = arith.constant 1 : index
    %c0_51 = arith.constant 0 : index
    %c0_52 = arith.constant 0 : index
    %50 = vector.load %arg3[%c0_49, %c1_50, %c0_51, %c0_52] : memref<3x5x128x128xbf16, #tpu.memory_space<vmem>>, vector<1x1x128x128xbf16>
    %51 = vector.shape_cast %50 : vector<1x1x128x128xbf16> to vector<128x128xbf16>
    %cst_53 = arith.constant dense<0.000000e+00> : vector<16x128xf32>
    %52 = tpu.matmul %49, %51, %cst_53 {dimension_numbers = #tpu.dot_dimension_numbers<[1], [0], [0], [1], [0, 0, 1, 1], [], []>} : vector<16x128xbf16>, vector<128x128xbf16>, vector<16x128xf32> -> vector<16x128xf32>
    %53 = arith.addf %48, %52 : vector<16x128xf32>
    %c2_54 = arith.constant 2 : index
    %c0_55 = arith.constant 0 : index
    %54 = vector.load %arg8[%c2_54, %c0_55] : memref<32x128xbf16, #tpu.memory_space<vmem>>, vector<16x128xbf16>
    %c0_56 = arith.constant 0 : index
    %c2_57 = arith.constant 2 : index
    %c0_58 = arith.constant 0 : index
    %c0_59 = arith.constant 0 : index
    %55 = vector.load %arg3[%c0_56, %c2_57, %c0_58, %c0_59] : memref<3x5x128x128xbf16, #tpu.memory_space<vmem>>, vector<1x1x128x128xbf16>
    %56 = vector.shape_cast %55 : vector<1x1x128x128xbf16> to vector<128x128xbf16>
    %cst_60 = arith.constant dense<0.000000e+00> : vector<16x128xf32>
    %57 = tpu.matmul %54, %56, %cst_60 {dimension_numbers = #tpu.dot_dimension_numbers<[1], [0], [0], [1], [0, 0, 1, 1], [], []>} : vector<16x128xbf16>, vector<128x128xbf16>, vector<16x128xf32> -> vector<16x128xf32>
    %58 = arith.addf %53, %57 : vector<16x128xf32>
    %c3_61 = arith.constant 3 : index
    %c0_62 = arith.constant 0 : index
    %59 = vector.load %arg8[%c3_61, %c0_62] : memref<32x128xbf16, #tpu.memory_space<vmem>>, vector<16x128xbf16>
    %c0_63 = arith.constant 0 : index
    %c3_64 = arith.constant 3 : index
    %c0_65 = arith.constant 0 : index
    %c0_66 = arith.constant 0 : index
    %60 = vector.load %arg3[%c0_63, %c3_64, %c0_65, %c0_66] : memref<3x5x128x128xbf16, #tpu.memory_space<vmem>>, vector<1x1x128x128xbf16>
    %61 = vector.shape_cast %60 : vector<1x1x128x128xbf16> to vector<128x128xbf16>
    %cst_67 = arith.constant dense<0.000000e+00> : vector<16x128xf32>
    %62 = tpu.matmul %59, %61, %cst_67 {dimension_numbers = #tpu.dot_dimension_numbers<[1], [0], [0], [1], [0, 0, 1, 1], [], []>} : vector<16x128xbf16>, vector<128x128xbf16>, vector<16x128xf32> -> vector<16x128xf32>
    %63 = arith.addf %58, %62 : vector<16x128xf32>
    %c4_68 = arith.constant 4 : index
    %c0_69 = arith.constant 0 : index
    %64 = vector.load %arg8[%c4_68, %c0_69] : memref<32x128xbf16, #tpu.memory_space<vmem>>, vector<16x128xbf16>
    %c0_70 = arith.constant 0 : index
    %c4_71 = arith.constant 4 : index
    %c0_72 = arith.constant 0 : index
    %c0_73 = arith.constant 0 : index
    %65 = vector.load %arg3[%c0_70, %c4_71, %c0_72, %c0_73] : memref<3x5x128x128xbf16, #tpu.memory_space<vmem>>, vector<1x1x128x128xbf16>
    %66 = vector.shape_cast %65 : vector<1x1x128x128xbf16> to vector<128x128xbf16>
    %cst_74 = arith.constant dense<0.000000e+00> : vector<16x128xf32>
    %67 = tpu.matmul %64, %66, %cst_74 {dimension_numbers = #tpu.dot_dimension_numbers<[1], [0], [0], [1], [0, 0, 1, 1], [], []>} : vector<16x128xbf16>, vector<128x128xbf16>, vector<16x128xf32> -> vector<16x128xf32>
    %68 = arith.addf %63, %67 : vector<16x128xf32>
    %c1_75 = arith.constant 1 : index
    %c0_76 = arith.constant 0 : index
    %c0_77 = arith.constant 0 : index
    %69 = vector.load %arg5[%c1_75, %c0_76, %c0_77] : memref<4x1x128xf32, #tpu.memory_space<vmem>>, vector<1x1x128xf32>
    %70 = vector.shape_cast %69 : vector<1x1x128xf32> to vector<1x128xf32>
    %71 = vector.broadcast %70 : vector<1x128xf32> to vector<16x128xf32>
    %72 = arith.addf %68, %71 : vector<16x128xf32>
    %73 = arith.truncf %72 : vector<16x128xf32> to vector<16x128xbf16>
    %74 = math.tanh %73 : vector<16x128xbf16>
    %cst_78 = arith.constant 0.000000e+00 : bf16
    %75 = vector.broadcast %cst_78 : bf16 to vector<16x128xbf16>
    %76 = vector.shape_cast %9 : vector<16x1xi1> to vector<16x1xi1>
    %77 = vector.broadcast %76 : vector<16x1xi1> to vector<16x128xi1>
    %78 = arith.select %77, %74, %75 : vector<16x128xi1>, vector<16x128xbf16>
    %c2_79 = arith.constant 2 : index
    %c0_80 = arith.constant 0 : index
    %79 = vector.load %arg8[%c2_79, %c0_80] : memref<32x128xbf16, #tpu.memory_space<vmem>>, vector<16x128xbf16>
    tpu.vector_store %arg8[%c2_79, %c0_80], %78 {strides = array<i32>} : memref<32x128xbf16, #tpu.memory_space<vmem>>, vector<16x128xbf16>,
    %c0_81 = arith.constant 0 : index
    %c0_82 = arith.constant 0 : index
    %80 = vector.load %arg8[%c0_81, %c0_82] : memref<32x128xbf16, #tpu.memory_space<vmem>>, vector<16x128xbf16>
    %c1_83 = arith.constant 1 : index
    %c0_84 = arith.constant 0 : index
    %c0_85 = arith.constant 0 : index
    %c0_86 = arith.constant 0 : index
    %81 = vector.load %arg3[%c1_83, %c0_84, %c0_85, %c0_86] : memref<3x5x128x128xbf16, #tpu.memory_space<vmem>>, vector<1x1x128x128xbf16>
    %82 = vector.shape_cast %81 : vector<1x1x128x128xbf16> to vector<128x128xbf16>
    %cst_87 = arith.constant dense<0.000000e+00> : vector<16x128xf32>
    %83 = tpu.matmul %80, %82, %cst_87 {dimension_numbers = #tpu.dot_dimension_numbers<[1], [0], [0], [1], [0, 0, 1, 1], [], []>} : vector<16x128xbf16>, vector<128x128xbf16>, vector<16x128xf32> -> vector<16x128xf32>
    %c1_88 = arith.constant 1 : index
    %c0_89 = arith.constant 0 : index
    %84 = vector.load %arg8[%c1_88, %c0_89] : memref<32x128xbf16, #tpu.memory_space<vmem>>, vector<16x128xbf16>
    %c1_90 = arith.constant 1 : index
    %c1_91 = arith.constant 1 : index
    %c0_92 = arith.constant 0 : index
    %c0_93 = arith.constant 0 : index
    %85 = vector.load %arg3[%c1_90, %c1_91, %c0_92, %c0_93] : memref<3x5x128x128xbf16, #tpu.memory_space<vmem>>, vector<1x1x128x128xbf16>
    %86 = vector.shape_cast %85 : vector<1x1x128x128xbf16> to vector<128x128xbf16>
    %cst_94 = arith.constant dense<0.000000e+00> : vector<16x128xf32>
    %87 = tpu.matmul %84, %86, %cst_94 {dimension_numbers = #tpu.dot_dimension_numbers<[1], [0], [0], [1], [0, 0, 1, 1], [], []>} : vector<16x128xbf16>, vector<128x128xbf16>, vector<16x128xf32> -> vector<16x128xf32>
    %88 = arith.addf %83, %87 : vector<16x128xf32>
    %c2_95 = arith.constant 2 : index
    %c0_96 = arith.constant 0 : index
    %89 = vector.load %arg8[%c2_95, %c0_96] : memref<32x128xbf16, #tpu.memory_space<vmem>>, vector<16x128xbf16>
    %c1_97 = arith.constant 1 : index
    %c2_98 = arith.constant 2 : index
    %c0_99 = arith.constant 0 : index
    %c0_100 = arith.constant 0 : index
    %90 = vector.load %arg3[%c1_97, %c2_98, %c0_99, %c0_100] : memref<3x5x128x128xbf16, #tpu.memory_space<vmem>>, vector<1x1x128x128xbf16>
    %91 = vector.shape_cast %90 : vector<1x1x128x128xbf16> to vector<128x128xbf16>
    %cst_101 = arith.constant dense<0.000000e+00> : vector<16x128xf32>
    %92 = tpu.matmul %89, %91, %cst_101 {dimension_numbers = #tpu.dot_dimension_numbers<[1], [0], [0], [1], [0, 0, 1, 1], [], []>} : vector<16x128xbf16>, vector<128x128xbf16>, vector<16x128xf32> -> vector<16x128xf32>
    %93 = arith.addf %88, %92 : vector<16x128xf32>
    %c3_102 = arith.constant 3 : index
    %c0_103 = arith.constant 0 : index
    %94 = vector.load %arg8[%c3_102, %c0_103] : memref<32x128xbf16, #tpu.memory_space<vmem>>, vector<16x128xbf16>
    %c1_104 = arith.constant 1 : index
    %c3_105 = arith.constant 3 : index
    %c0_106 = arith.constant 0 : index
    %c0_107 = arith.constant 0 : index
    %95 = vector.load %arg3[%c1_104, %c3_105, %c0_106, %c0_107] : memref<3x5x128x128xbf16, #tpu.memory_space<vmem>>, vector<1x1x128x128xbf16>
    %96 = vector.shape_cast %95 : vector<1x1x128x128xbf16> to vector<128x128xbf16>
    %cst_108 = arith.constant dense<0.000000e+00> : vector<16x128xf32>
    %97 = tpu.matmul %94, %96, %cst_108 {dimension_numbers = #tpu.dot_dimension_numbers<[1], [0], [0], [1], [0, 0, 1, 1], [], []>} : vector<16x128xbf16>, vector<128x128xbf16>, vector<16x128xf32> -> vector<16x128xf32>
    %98 = arith.addf %93, %97 : vector<16x128xf32>
    %c4_109 = arith.constant 4 : index
    %c0_110 = arith.constant 0 : index
    %99 = vector.load %arg8[%c4_109, %c0_110] : memref<32x128xbf16, #tpu.memory_space<vmem>>, vector<16x128xbf16>
    %c1_111 = arith.constant 1 : index
    %c4_112 = arith.constant 4 : index
    %c0_113 = arith.constant 0 : index
    %c0_114 = arith.constant 0 : index
    %100 = vector.load %arg3[%c1_111, %c4_112, %c0_113, %c0_114] : memref<3x5x128x128xbf16, #tpu.memory_space<vmem>>, vector<1x1x128x128xbf16>
    %101 = vector.shape_cast %100 : vector<1x1x128x128xbf16> to vector<128x128xbf16>
    %cst_115 = arith.constant dense<0.000000e+00> : vector<16x128xf32>
    %102 = tpu.matmul %99, %101, %cst_115 {dimension_numbers = #tpu.dot_dimension_numbers<[1], [0], [0], [1], [0, 0, 1, 1], [], []>} : vector<16x128xbf16>, vector<128x128xbf16>, vector<16x128xf32> -> vector<16x128xf32>
    %103 = arith.addf %98, %102 : vector<16x128xf32>
    %c2_116 = arith.constant 2 : index
    %c0_117 = arith.constant 0 : index
    %c0_118 = arith.constant 0 : index
    %104 = vector.load %arg5[%c2_116, %c0_117, %c0_118] : memref<4x1x128xf32, #tpu.memory_space<vmem>>, vector<1x1x128xf32>
    %105 = vector.shape_cast %104 : vector<1x1x128xf32> to vector<1x128xf32>
    %106 = vector.broadcast %105 : vector<1x128xf32> to vector<16x128xf32>
    %107 = arith.addf %103, %106 : vector<16x128xf32>
    %108 = arith.truncf %107 : vector<16x128xf32> to vector<16x128xbf16>
    %109 = math.tanh %108 : vector<16x128xbf16>
    %cst_119 = arith.constant 0.000000e+00 : bf16
    %110 = vector.broadcast %cst_119 : bf16 to vector<16x128xbf16>
    %111 = vector.shape_cast %9 : vector<16x1xi1> to vector<16x1xi1>
    %112 = vector.broadcast %111 : vector<16x1xi1> to vector<16x128xi1>
    %113 = arith.select %112, %109, %110 : vector<16x128xi1>, vector<16x128xbf16>
    %c2_120 = arith.constant 2 : index
    %c0_121 = arith.constant 0 : index
    %114 = vector.load %arg8[%c2_120, %c0_121] : memref<32x128xbf16, #tpu.memory_space<vmem>>, vector<16x128xbf16>
    tpu.vector_store %arg8[%c2_120, %c0_121], %113 {strides = array<i32>} : memref<32x128xbf16, #tpu.memory_space<vmem>>, vector<16x128xbf16>,
    %c0_122 = arith.constant 0 : index
    %c0_123 = arith.constant 0 : index
    %115 = vector.load %arg8[%c0_122, %c0_123] : memref<32x128xbf16, #tpu.memory_space<vmem>>, vector<16x128xbf16>
    %c2_124 = arith.constant 2 : index
    %c0_125 = arith.constant 0 : index
    %c0_126 = arith.constant 0 : index
    %c0_127 = arith.constant 0 : index
    %116 = vector.load %arg3[%c2_124, %c0_125, %c0_126, %c0_127] : memref<3x5x128x128xbf16, #tpu.memory_space<vmem>>, vector<1x1x128x128xbf16>
    %117 = vector.shape_cast %116 : vector<1x1x128x128xbf16> to vector<128x128xbf16>
    %cst_128 = arith.constant dense<0.000000e+00> : vector<16x128xf32>
    %118 = tpu.matmul %115, %117, %cst_128 {dimension_numbers = #tpu.dot_dimension_numbers<[1], [0], [0], [1], [0, 0, 1, 1], [], []>} : vector<16x128xbf16>, vector<128x128xbf16>, vector<16x128xf32> -> vector<16x128xf32>
    %c1_129 = arith.constant 1 : index
    %c0_130 = arith.constant 0 : index
    %119 = vector.load %arg8[%c1_129, %c0_130] : memref<32x128xbf16, #tpu.memory_space<vmem>>, vector<16x128xbf16>
    %c2_131 = arith.constant 2 : index
    %c1_132 = arith.constant 1 : index
    %c0_133 = arith.constant 0 : index
    %c0_134 = arith.constant 0 : index
    %120 = vector.load %arg3[%c2_131, %c1_132, %c0_133, %c0_134] : memref<3x5x128x128xbf16, #tpu.memory_space<vmem>>, vector<1x1x128x128xbf16>
    %121 = vector.shape_cast %120 : vector<1x1x128x128xbf16> to vector<128x128xbf16>
    %cst_135 = arith.constant dense<0.000000e+00> : vector<16x128xf32>
    %122 = tpu.matmul %119, %121, %cst_135 {dimension_numbers = #tpu.dot_dimension_numbers<[1], [0], [0], [1], [0, 0, 1, 1], [], []>} : vector<16x128xbf16>, vector<128x128xbf16>, vector<16x128xf32> -> vector<16x128xf32>
    %123 = arith.addf %118, %122 : vector<16x128xf32>
    %c2_136 = arith.constant 2 : index
    %c0_137 = arith.constant 0 : index
    %124 = vector.load %arg8[%c2_136, %c0_137] : memref<32x128xbf16, #tpu.memory_space<vmem>>, vector<16x128xbf16>
    %c2_138 = arith.constant 2 : index
    %c2_139 = arith.constant 2 : index
    %c0_140 = arith.constant 0 : index
    %c0_141 = arith.constant 0 : index
    %125 = vector.load %arg3[%c2_138, %c2_139, %c0_140, %c0_141] : memref<3x5x128x128xbf16, #tpu.memory_space<vmem>>, vector<1x1x128x128xbf16>
    %126 = vector.shape_cast %125 : vector<1x1x128x128xbf16> to vector<128x128xbf16>
    %cst_142 = arith.constant dense<0.000000e+00> : vector<16x128xf32>
    %127 = tpu.matmul %124, %126, %cst_142 {dimension_numbers = #tpu.dot_dimension_numbers<[1], [0], [0], [1], [0, 0, 1, 1], [], []>} : vector<16x128xbf16>, vector<128x128xbf16>, vector<16x128xf32> -> vector<16x128xf32>
    %128 = arith.addf %123, %127 : vector<16x128xf32>
    %c3_143 = arith.constant 3 : index
    %c0_144 = arith.constant 0 : index
    %129 = vector.load %arg8[%c3_143, %c0_144] : memref<32x128xbf16, #tpu.memory_space<vmem>>, vector<16x128xbf16>
    %c2_145 = arith.constant 2 : index
    %c3_146 = arith.constant 3 : index
    %c0_147 = arith.constant 0 : index
    %c0_148 = arith.constant 0 : index
    %130 = vector.load %arg3[%c2_145, %c3_146, %c0_147, %c0_148] : memref<3x5x128x128xbf16, #tpu.memory_space<vmem>>, vector<1x1x128x128xbf16>
    %131 = vector.shape_cast %130 : vector<1x1x128x128xbf16> to vector<128x128xbf16>
    %cst_149 = arith.constant dense<0.000000e+00> : vector<16x128xf32>
    %132 = tpu.matmul %129, %131, %cst_149 {dimension_numbers = #tpu.dot_dimension_numbers<[1], [0], [0], [1], [0, 0, 1, 1], [], []>} : vector<16x128xbf16>, vector<128x128xbf16>, vector<16x128xf32> -> vector<16x128xf32>
    %133 = arith.addf %128, %132 : vector<16x128xf32>
    %c4_150 = arith.constant 4 : index
    %c0_151 = arith.constant 0 : index
    %134 = vector.load %arg8[%c4_150, %c0_151] : memref<32x128xbf16, #tpu.memory_space<vmem>>, vector<16x128xbf16>
    %c2_152 = arith.constant 2 : index
    %c4_153 = arith.constant 4 : index
    %c0_154 = arith.constant 0 : index
    %c0_155 = arith.constant 0 : index
    %135 = vector.load %arg3[%c2_152, %c4_153, %c0_154, %c0_155] : memref<3x5x128x128xbf16, #tpu.memory_space<vmem>>, vector<1x1x128x128xbf16>
    %136 = vector.shape_cast %135 : vector<1x1x128x128xbf16> to vector<128x128xbf16>
    %cst_156 = arith.constant dense<0.000000e+00> : vector<16x128xf32>
    %137 = tpu.matmul %134, %136, %cst_156 {dimension_numbers = #tpu.dot_dimension_numbers<[1], [0], [0], [1], [0, 0, 1, 1], [], []>} : vector<16x128xbf16>, vector<128x128xbf16>, vector<16x128xf32> -> vector<16x128xf32>
    %138 = arith.addf %133, %137 : vector<16x128xf32>
    %c3_157 = arith.constant 3 : index
    %c0_158 = arith.constant 0 : index
    %c0_159 = arith.constant 0 : index
    %139 = vector.load %arg5[%c3_157, %c0_158, %c0_159] : memref<4x1x128xf32, #tpu.memory_space<vmem>>, vector<1x1x128xf32>
    %140 = vector.shape_cast %139 : vector<1x1x128xf32> to vector<1x128xf32>
    %141 = vector.broadcast %140 : vector<1x128xf32> to vector<16x128xf32>
    %142 = arith.addf %138, %141 : vector<16x128xf32>
    %143 = arith.truncf %142 : vector<16x128xf32> to vector<16x128xbf16>
    %144 = math.tanh %143 : vector<16x128xbf16>
    %cst_160 = arith.constant 0.000000e+00 : bf16
    %145 = vector.broadcast %cst_160 : bf16 to vector<16x128xbf16>
    %146 = vector.shape_cast %9 : vector<16x1xi1> to vector<16x1xi1>
    %147 = vector.broadcast %146 : vector<16x1xi1> to vector<16x128xi1>
    %148 = arith.select %147, %144, %145 : vector<16x128xi1>, vector<16x128xbf16>
    %c2_161 = arith.constant 2 : index
    %c0_162 = arith.constant 0 : index
    %149 = vector.load %arg8[%c2_161, %c0_162] : memref<32x128xbf16, #tpu.memory_space<vmem>>, vector<16x128xbf16>
    tpu.vector_store %arg8[%c2_161, %c0_162], %148 {strides = array<i32>} : memref<32x128xbf16, #tpu.memory_space<vmem>>, vector<16x128xbf16>,
    %c0_163 = arith.constant 0 : index
    %c0_164 = arith.constant 0 : index
    %150 = vector.load %arg8[%c0_163, %c0_164] : memref<32x128xbf16, #tpu.memory_space<vmem>>, vector<16x128xbf16>
    %c0_165 = arith.constant 0 : index
    %c0_166 = arith.constant 0 : index
    %c0_167 = arith.constant 0 : index
    %151 = vector.load %arg4[%c0_165, %c0_166, %c0_167] : memref<5x128x128xbf16, #tpu.memory_space<vmem>>, vector<1x128x128xbf16>
    %152 = vector.shape_cast %151 : vector<1x128x128xbf16> to vector<128x128xbf16>
    %cst_168 = arith.constant dense<0.000000e+00> : vector<16x128xf32>
    %153 = tpu.matmul %150, %152, %cst_168 {dimension_numbers = #tpu.dot_dimension_numbers<[1], [0], [0], [1], [0, 0, 1, 1], [], []>} : vector<16x128xbf16>, vector<128x128xbf16>, vector<16x128xf32> -> vector<16x128xf32>
    %c1_169 = arith.constant 1 : index
    %c0_170 = arith.constant 0 : index
    %154 = vector.load %arg8[%c1_169, %c0_170] : memref<32x128xbf16, #tpu.memory_space<vmem>>, vector<16x128xbf16>
    %c1_171 = arith.constant 1 : index
    %c0_172 = arith.constant 0 : index
    %c0_173 = arith.constant 0 : index
    %155 = vector.load %arg4[%c1_171, %c0_172, %c0_173] : memref<5x128x128xbf16, #tpu.memory_space<vmem>>, vector<1x128x128xbf16>
    %156 = vector.shape_cast %155 : vector<1x128x128xbf16> to vector<128x128xbf16>
    %cst_174 = arith.constant dense<0.000000e+00> : vector<16x128xf32>
    %157 = tpu.matmul %154, %156, %cst_174 {dimension_numbers = #tpu.dot_dimension_numbers<[1], [0], [0], [1], [0, 0, 1, 1], [], []>} : vector<16x128xbf16>, vector<128x128xbf16>, vector<16x128xf32> -> vector<16x128xf32>
    %158 = arith.addf %153, %157 : vector<16x128xf32>
    %c2_175 = arith.constant 2 : index
    %c0_176 = arith.constant 0 : index
    %159 = vector.load %arg8[%c2_175, %c0_176] : memref<32x128xbf16, #tpu.memory_space<vmem>>, vector<16x128xbf16>
    %c2_177 = arith.constant 2 : index
    %c0_178 = arith.constant 0 : index
    %c0_179 = arith.constant 0 : index
    %160 = vector.load %arg4[%c2_177, %c0_178, %c0_179] : memref<5x128x128xbf16, #tpu.memory_space<vmem>>, vector<1x128x128xbf16>
    %161 = vector.shape_cast %160 : vector<1x128x128xbf16> to vector<128x128xbf16>
    %cst_180 = arith.constant dense<0.000000e+00> : vector<16x128xf32>
    %162 = tpu.matmul %159, %161, %cst_180 {dimension_numbers = #tpu.dot_dimension_numbers<[1], [0], [0], [1], [0, 0, 1, 1], [], []>} : vector<16x128xbf16>, vector<128x128xbf16>, vector<16x128xf32> -> vector<16x128xf32>
    %163 = arith.addf %158, %162 : vector<16x128xf32>
    %c3_181 = arith.constant 3 : index
    %c0_182 = arith.constant 0 : index
    %164 = vector.load %arg8[%c3_181, %c0_182] : memref<32x128xbf16, #tpu.memory_space<vmem>>, vector<16x128xbf16>
    %c3_183 = arith.constant 3 : index
    %c0_184 = arith.constant 0 : index
    %c0_185 = arith.constant 0 : index
    %165 = vector.load %arg4[%c3_183, %c0_184, %c0_185] : memref<5x128x128xbf16, #tpu.memory_space<vmem>>, vector<1x128x128xbf16>
    %166 = vector.shape_cast %165 : vector<1x128x128xbf16> to vector<128x128xbf16>
    %cst_186 = arith.constant dense<0.000000e+00> : vector<16x128xf32>
    %167 = tpu.matmul %164, %166, %cst_186 {dimension_numbers = #tpu.dot_dimension_numbers<[1], [0], [0], [1], [0, 0, 1, 1], [], []>} : vector<16x128xbf16>, vector<128x128xbf16>, vector<16x128xf32> -> vector<16x128xf32>
    %168 = arith.addf %163, %167 : vector<16x128xf32>
    %c4_187 = arith.constant 4 : index
    %c0_188 = arith.constant 0 : index
    %169 = vector.load %arg8[%c4_187, %c0_188] : memref<32x128xbf16, #tpu.memory_space<vmem>>, vector<16x128xbf16>
    %c4_189 = arith.constant 4 : index
    %c0_190 = arith.constant 0 : index
    %c0_191 = arith.constant 0 : index
    %170 = vector.load %arg4[%c4_189, %c0_190, %c0_191] : memref<5x128x128xbf16, #tpu.memory_space<vmem>>, vector<1x128x128xbf16>
    %171 = vector.shape_cast %170 : vector<1x128x128xbf16> to vector<128x128xbf16>
    %cst_192 = arith.constant dense<0.000000e+00> : vector<16x128xf32>
    %172 = tpu.matmul %169, %171, %cst_192 {dimension_numbers = #tpu.dot_dimension_numbers<[1], [0], [0], [1], [0, 0, 1, 1], [], []>} : vector<16x128xbf16>, vector<128x128xbf16>, vector<16x128xf32> -> vector<16x128xf32>
    %173 = arith.addf %168, %172 : vector<16x128xf32>
    %c0_193 = arith.constant 0 : index
    %c0_194 = arith.constant 0 : index
    %174 = vector.load %arg6[%c0_193, %c0_194] : memref<1x128xf32, #tpu.memory_space<vmem>>, vector<1x128xf32>
    %175 = vector.broadcast %174 : vector<1x128xf32> to vector<16x128xf32>
    %176 = arith.addf %173, %175 : vector<16x128xf32>
    %c0_195 = arith.constant 0 : index
    %c0_196 = arith.constant 0 : index
    %c0_197 = arith.constant 0 : index
    %177 = vector.load %arg7[%c0_195, %c0_196, %c0_197] : memref<1x16x128xf32, #tpu.memory_space<vmem>>, vector<1x16x128xf32>
    %178 = vector.shape_cast %177 : vector<1x16x128xf32> to vector<16x128xf32>
    %179 = vector.shape_cast %176 : vector<16x128xf32> to vector<1x16x128xf32>
    tpu.vector_store %arg7[%c0_195, %c0_196, %c0_197], %179 {strides = array<i32>} : memref<1x16x128xf32, #tpu.memory_space<vmem>>, vector<1x16x128xf32>,
    return
  }
  func.func @transform_0(%arg0: i32) -> (i32, i32, i32) {
    %c0_i32 = arith.constant 0 : i32
    %c0_i32_0 = arith.constant 0 : i32
    %c0_i32_1 = arith.constant 0 : i32
    return %arg0, %c0_i32, %c0_i32_0 : i32, i32, i32
  }
  func.func @transform_1(%arg0: i32) -> (i32, i32, i32) {
    %c0_i32 = arith.constant 0 : i32
    %c0_i32_0 = arith.constant 0 : i32
    %c0_i32_1 = arith.constant 0 : i32
    %c0_i32_2 = arith.constant 0 : i32
    return %c0_i32, %c0_i32_0, %c0_i32_1 : i32, i32, i32
  }
  func.func @transform_2(%arg0: i32) -> (i32, i32, i32, i32) {
    %c0_i32 = arith.constant 0 : i32
    %c0_i32_0 = arith.constant 0 : i32
    %c0_i32_1 = arith.constant 0 : i32
    %c0_i32_2 = arith.constant 0 : i32
    %c0_i32_3 = arith.constant 0 : i32
    return %c0_i32, %c0_i32_0, %c0_i32_1, %c0_i32_2 : i32, i32, i32, i32
  }
  func.func @transform_3(%arg0: i32) -> (i32, i32, i32) {
    %c0_i32 = arith.constant 0 : i32
    %c0_i32_0 = arith.constant 0 : i32
    %c0_i32_1 = arith.constant 0 : i32
    %c0_i32_2 = arith.constant 0 : i32
    return %c0_i32, %c0_i32_0, %c0_i32_1 : i32, i32, i32
  }
  func.func @transform_4(%arg0: i32) -> (i32, i32, i32) {
    %c0_i32 = arith.constant 0 : i32
    %c0_i32_0 = arith.constant 0 : i32
    %c0_i32_1 = arith.constant 0 : i32
    %c0_i32_2 = arith.constant 0 : i32
    return %c0_i32, %c0_i32_0, %c0_i32_1 : i32, i32, i32
  }
  func.func @transform_5(%arg0: i32) -> (i32, i32) {
    %c0_i32 = arith.constant 0 : i32
    %c0_i32_0 = arith.constant 0 : i32
    %c0_i32_1 = arith.constant 0 : i32
    return %c0_i32, %c0_i32_0 : i32, i32
  }
  func.func @transform_6(%arg0: i32) -> (i32, i32, i32) {
    %c0_i32 = arith.constant 0 : i32
    %c0_i32_0 = arith.constant 0 : i32
    %c0_i32_1 = arith.constant 0 : i32
    return %arg0, %c0_i32, %c0_i32_0 : i32, i32, i32
  }
}

module attributes {stable_mosaic.version = 11 : i64} {
  func.func @_postnet_fused_kernel(%arg0: i32, %arg1: memref<1x16x128xbf16, #tpu.memory_space<vmem>>, %arg2: memref<5x128x128xbf16, #tpu.memory_space<vmem>>, %arg3: memref<3x5x128x128xbf16, #tpu.memory_space<vmem>>, %arg4: memref<5x128x128xbf16, #tpu.memory_space<vmem>>, %arg5: memref<4x1x128xf32, #tpu.memory_space<vmem>>, %arg6: memref<1x128xf32, #tpu.memory_space<vmem>>, %arg7: memref<1x16x128xf32, #tpu.memory_space<vmem>>, %arg8: memref<32x128xbf16, #tpu.memory_space<vmem>>) attributes {dimension_semantics = [#tpu.dimension_semantics<parallel>], iteration_bounds = array<i64: 2>, scalar_prefetch = 0 : i64, scratch_operands = 1 : i64, tpu.core_type = #tpu.core_type<tc>, window_params = [{transform_indices = @transform_0, window_bounds = array<i64: 1, 16, 128>}, {pipeline_mode = #tpu.pipeline_mode<synchronous>, transform_indices = @transform_1, window_bounds = array<i64: 5, 128, 128>}, {pipeline_mode = #tpu.pipeline_mode<synchronous>, transform_indices = @transform_2, window_bounds = array<i64: 3, 5, 128, 128>}, {pipeline_mode = #tpu.pipeline_mode<synchronous>, transform_indices = @transform_3, window_bounds = array<i64: 5, 128, 128>}, {pipeline_mode = #tpu.pipeline_mode<synchronous>, transform_indices = @transform_4, window_bounds = array<i64: 4, 1, 128>}, {pipeline_mode = #tpu.pipeline_mode<synchronous>, transform_indices = @transform_5, window_bounds = array<i64: 1, 128>}, {transform_indices = @transform_6, window_bounds = array<i64: 1, 16, 128>}]} {
    %cst = arith.constant 0.000000e+00 : bf16
    %0 = vector.broadcast %cst : bf16 to vector<2x128xbf16>
    %c0 = arith.constant 0 : index
    %c0_0 = arith.constant 0 : index
    %1 = vector.load %arg8[%c0, %c0_0] : memref<32x128xbf16, #tpu.memory_space<vmem>>, vector<2x128xbf16>
    tpu.vector_store %arg8[%c0, %c0_0], %0 {strides = array<i32>} : memref<32x128xbf16, #tpu.memory_space<vmem>>, vector<2x128xbf16>,
    %cst_1 = arith.constant 0.000000e+00 : bf16
    %2 = vector.broadcast %cst_1 : bf16 to vector<2x128xbf16>
    %c18 = arith.constant 18 : index
    %c0_2 = arith.constant 0 : index
    %3 = vector.load %arg8[%c18, %c0_2] : memref<32x128xbf16, #tpu.memory_space<vmem>>, vector<2x128xbf16>
    tpu.vector_store %arg8[%c18, %c0_2], %2 {strides = array<i32>} : memref<32x128xbf16, #tpu.memory_space<vmem>>, vector<2x128xbf16>,
    %c0_3 = arith.constant 0 : index
    %c0_4 = arith.constant 0 : index
    %c0_5 = arith.constant 0 : index
    %4 = vector.load %arg1[%c0_3, %c0_4, %c0_5] : memref<1x16x128xbf16, #tpu.memory_space<vmem>>, vector<1x16x128xbf16>
    %5 = vector.shape_cast %4 : vector<1x16x128xbf16> to vector<16x128xbf16>
    %c2 = arith.constant 2 : index
    %c0_6 = arith.constant 0 : index
    %6 = vector.load %arg8[%c2, %c0_6] : memref<32x128xbf16, #tpu.memory_space<vmem>>, vector<16x128xbf16>
    tpu.vector_store %arg8[%c2, %c0_6], %5 {strides = array<i32>} : memref<32x128xbf16, #tpu.memory_space<vmem>>, vector<16x128xbf16>,
    %7 = tpu.iota {dimensions = array<i32: 0>} : vector<16x1xi32>
    %c8_i32 = arith.constant 8 : i32
    %8 = vector.broadcast %c8_i32 : i32 to vector<16x1xi32>
    %9 = arith.cmpi slt, %7, %8 : vector<16x1xi32>
    %c0_7 = arith.constant 0 : index
    %c0_8 = arith.constant 0 : index
    %10 = vector.load %arg8[%c0_7, %c0_8] : memref<32x128xbf16, #tpu.memory_space<vmem>>, vector<16x128xbf16>
    %c0_9 = arith.constant 0 : index
    %c0_10 = arith.constant 0 : index
    %c0_11 = arith.constant 0 : index
    %11 = vector.load %arg2[%c0_9, %c0_10, %c0_11] : memref<5x128x128xbf16, #tpu.memory_space<vmem>>, vector<1x128x128xbf16>
    %12 = vector.shape_cast %11 : vector<1x128x128xbf16> to vector<128x128xbf16>
    %cst_12 = arith.constant dense<0.000000e+00> : vector<16x128xf32>
    %13 = tpu.matmul %10, %12, %cst_12 {dimension_numbers = #tpu.dot_dimension_numbers<[1], [0], [0], [1], [0, 0, 1, 1], [], []>} : vector<16x128xbf16>, vector<128x128xbf16>, vector<16x128xf32> -> vector<16x128xf32>
    %c1 = arith.constant 1 : index
    %c0_13 = arith.constant 0 : index
    %14 = vector.load %arg8[%c1, %c0_13] : memref<32x128xbf16, #tpu.memory_space<vmem>>, vector<16x128xbf16>
    %c1_14 = arith.constant 1 : index
    %c0_15 = arith.constant 0 : index
    %c0_16 = arith.constant 0 : index
    %15 = vector.load %arg2[%c1_14, %c0_15, %c0_16] : memref<5x128x128xbf16, #tpu.memory_space<vmem>>, vector<1x128x128xbf16>
    %16 = vector.shape_cast %15 : vector<1x128x128xbf16> to vector<128x128xbf16>
    %cst_17 = arith.constant dense<0.000000e+00> : vector<16x128xf32>
    %17 = tpu.matmul %14, %16, %cst_17 {dimension_numbers = #tpu.dot_dimension_numbers<[1], [0], [0], [1], [0, 0, 1, 1], [], []>} : vector<16x128xbf16>, vector<128x128xbf16>, vector<16x128xf32> -> vector<16x128xf32>
    %18 = arith.addf %13, %17 : vector<16x128xf32>
    %c2_18 = arith.constant 2 : index
    %c0_19 = arith.constant 0 : index
    %19 = vector.load %arg8[%c2_18, %c0_19] : memref<32x128xbf16, #tpu.memory_space<vmem>>, vector<16x128xbf16>
    %c2_20 = arith.constant 2 : index
    %c0_21 = arith.constant 0 : index
    %c0_22 = arith.constant 0 : index
    %20 = vector.load %arg2[%c2_20, %c0_21, %c0_22] : memref<5x128x128xbf16, #tpu.memory_space<vmem>>, vector<1x128x128xbf16>
    %21 = vector.shape_cast %20 : vector<1x128x128xbf16> to vector<128x128xbf16>
    %cst_23 = arith.constant dense<0.000000e+00> : vector<16x128xf32>
    %22 = tpu.matmul %19, %21, %cst_23 {dimension_numbers = #tpu.dot_dimension_numbers<[1], [0], [0], [1], [0, 0, 1, 1], [], []>} : vector<16x128xbf16>, vector<128x128xbf16>, vector<16x128xf32> -> vector<16x128xf32>
    %23 = arith.addf %18, %22 : vector<16x128xf32>
    %c3 = arith.constant 3 : index
    %c0_24 = arith.constant 0 : index
    %24 = vector.load %arg8[%c3, %c0_24] : memref<32x128xbf16, #tpu.memory_space<vmem>>, vector<16x128xbf16>
    %c3_25 = arith.constant 3 : index
    %c0_26 = arith.constant 0 : index
    %c0_27 = arith.constant 0 : index
    %25 = vector.load %arg2[%c3_25, %c0_26, %c0_27] : memref<5x128x128xbf16, #tpu.memory_space<vmem>>, vector<1x128x128xbf16>
    %26 = vector.shape_cast %25 : vector<1x128x128xbf16> to vector<128x128xbf16>
    %cst_28 = arith.constant dense<0.000000e+00> : vector<16x128xf32>
    %27 = tpu.matmul %24, %26, %cst_28 {dimension_numbers = #tpu.dot_dimension_numbers<[1], [0], [0], [1], [0, 0, 1, 1], [], []>} : vector<16x128xbf16>, vector<128x128xbf16>, vector<16x128xf32> -> vector<16x128xf32>
    %28 = arith.addf %23, %27 : vector<16x128xf32>
    %c4 = arith.constant 4 : index
    %c0_29 = arith.constant 0 : index
    %29 = vector.load %arg8[%c4, %c0_29] : memref<32x128xbf16, #tpu.memory_space<vmem>>, vector<16x128xbf16>
    %c4_30 = arith.constant 4 : index
    %c0_31 = arith.constant 0 : index
    %c0_32 = arith.constant 0 : index
    %30 = vector.load %arg2[%c4_30, %c0_31, %c0_32] : memref<5x128x128xbf16, #tpu.memory_space<vmem>>, vector<1x128x128xbf16>
    %31 = vector.shape_cast %30 : vector<1x128x128xbf16> to vector<128x128xbf16>
    %cst_33 = arith.constant dense<0.000000e+00> : vector<16x128xf32>
    %32 = tpu.matmul %29, %31, %cst_33 {dimension_numbers = #tpu.dot_dimension_numbers<[1], [0], [0], [1], [0, 0, 1, 1], [], []>} : vector<16x128xbf16>, vector<128x128xbf16>, vector<16x128xf32> -> vector<16x128xf32>
    %33 = arith.addf %28, %32 : vector<16x128xf32>
    %c0_34 = arith.constant 0 : index
    %c0_35 = arith.constant 0 : index
    %c0_36 = arith.constant 0 : index
    %34 = vector.load %arg5[%c0_34, %c0_35, %c0_36] : memref<4x1x128xf32, #tpu.memory_space<vmem>>, vector<1x1x128xf32>
    %35 = vector.shape_cast %34 : vector<1x1x128xf32> to vector<1x128xf32>
    %36 = vector.broadcast %35 : vector<1x128xf32> to vector<16x128xf32>
    %37 = arith.addf %33, %36 : vector<16x128xf32>
    %38 = arith.truncf %37 : vector<16x128xf32> to vector<16x128xbf16>
    %39 = math.tanh %38 : vector<16x128xbf16>
    %cst_37 = arith.constant 0.000000e+00 : bf16
    %40 = vector.broadcast %cst_37 : bf16 to vector<16x128xbf16>
    %41 = vector.shape_cast %9 : vector<16x1xi1> to vector<16x1xi1>
    %42 = vector.broadcast %41 : vector<16x1xi1> to vector<16x128xi1>
    %43 = arith.select %42, %39, %40 : vector<16x128xi1>, vector<16x128xbf16>
    %c2_38 = arith.constant 2 : index
    %c0_39 = arith.constant 0 : index
    %44 = vector.load %arg8[%c2_38, %c0_39] : memref<32x128xbf16, #tpu.memory_space<vmem>>, vector<16x128xbf16>
    tpu.vector_store %arg8[%c2_38, %c0_39], %43 {strides = array<i32>} : memref<32x128xbf16, #tpu.memory_space<vmem>>, vector<16x128xbf16>,
    %c0_40 = arith.constant 0 : index
    %c0_41 = arith.constant 0 : index
    %45 = vector.load %arg8[%c0_40, %c0_41] : memref<32x128xbf16, #tpu.memory_space<vmem>>, vector<16x128xbf16>
    %c0_42 = arith.constant 0 : index
    %c0_43 = arith.constant 0 : index
    %c0_44 = arith.constant 0 : index
    %c0_45 = arith.constant 0 : index
    %46 = vector.load %arg3[%c0_42, %c0_43, %c0_44, %c0_45] : memref<3x5x128x128xbf16, #tpu.memory_space<vmem>>, vector<1x1x128x128xbf16>
    %47 = vector.shape_cast %46 : vector<1x1x128x128xbf16> to vector<128x128xbf16>
    %cst_46 = arith.constant dense<0.000000e+00> : vector<16x128xf32>
    %48 = tpu.matmul %45, %47, %cst_46 {dimension_numbers = #tpu.dot_dimension_numbers<[1], [0], [0], [1], [0, 0, 1, 1], [], []>} : vector<16x128xbf16>, vector<128x128xbf16>, vector<16x128xf32> -> vector<16x128xf32>
    %c1_47 = arith.constant 1 : index
    %c0_48 = arith.constant 0 : index
    %49 = vector.load %arg8[%c1_47, %c0_48] : memref<32x128xbf16, #tpu.memory_space<vmem>>, vector<16x128xbf16>
    %c0_49 = arith.constant 0 : index
    %c1_50 = arith.constant 1 : index
    %c0_51 = arith.constant 0 : index
    %c0_52 = arith.constant 0 : index
    %50 = vector.load %arg3[%c0_49, %c1_50, %c0_51, %c0_52] : memref<3x5x128x128xbf16, #tpu.memory_space<vmem>>, vector<1x1x128x128xbf16>
    %51 = vector.shape_cast %50 : vector<1x1x128x128xbf16> to vector<128x128xbf16>
    %cst_53 = arith.constant dense<0.000000e+00> : vector<16x128xf32>
    %52 = tpu.matmul %49, %51, %cst_53 {dimension_numbers = #tpu.dot_dimension_numbers<[1], [0], [0], [1], [0, 0, 1, 1], [], []>} : vector<16x128xbf16>, vector<128x128xbf16>, vector<16x128xf32> -> vector<16x128xf32>
    %53 = arith.addf %48, %52 : vector<16x128xf32>
    %c2_54 = arith.constant 2 : index
    %c0_55 = arith.constant 0 : index
    %54 = vector.load %arg8[%c2_54, %c0_55] : memref<32x128xbf16, #tpu.memory_space<vmem>>, vector<16x128xbf16>
    %c0_56 = arith.constant 0 : index
    %c2_57 = arith.constant 2 : index
    %c0_58 = arith.constant 0 : index
    %c0_59 = arith.constant 0 : index
    %55 = vector.load %arg3[%c0_56, %c2_57, %c0_58, %c0_59] : memref<3x5x128x128xbf16, #tpu.memory_space<vmem>>, vector<1x1x128x128xbf16>
    %56 = vector.shape_cast %55 : vector<1x1x128x128xbf16> to vector<128x128xbf16>
    %cst_60 = arith.constant dense<0.000000e+00> : vector<16x128xf32>
    %57 = tpu.matmul %54, %56, %cst_60 {dimension_numbers = #tpu.dot_dimension_numbers<[1], [0], [0], [1], [0, 0, 1, 1], [], []>} : vector<16x128xbf16>, vector<128x128xbf16>, vector<16x128xf32> -> vector<16x128xf32>
    %58 = arith.addf %53, %57 : vector<16x128xf32>
    %c3_61 = arith.constant 3 : index
    %c0_62 = arith.constant 0 : index
    %59 = vector.load %arg8[%c3_61, %c0_62] : memref<32x128xbf16, #tpu.memory_space<vmem>>, vector<16x128xbf16>
    %c0_63 = arith.constant 0 : index
    %c3_64 = arith.constant 3 : index
    %c0_65 = arith.constant 0 : index
    %c0_66 = arith.constant 0 : index
    %60 = vector.load %arg3[%c0_63, %c3_64, %c0_65, %c0_66] : memref<3x5x128x128xbf16, #tpu.memory_space<vmem>>, vector<1x1x128x128xbf16>
    %61 = vector.shape_cast %60 : vector<1x1x128x128xbf16> to vector<128x128xbf16>
    %cst_67 = arith.constant dense<0.000000e+00> : vector<16x128xf32>
    %62 = tpu.matmul %59, %61, %cst_67 {dimension_numbers = #tpu.dot_dimension_numbers<[1], [0], [0], [1], [0, 0, 1, 1], [], []>} : vector<16x128xbf16>, vector<128x128xbf16>, vector<16x128xf32> -> vector<16x128xf32>
    %63 = arith.addf %58, %62 : vector<16x128xf32>
    %c4_68 = arith.constant 4 : index
    %c0_69 = arith.constant 0 : index
    %64 = vector.load %arg8[%c4_68, %c0_69] : memref<32x128xbf16, #tpu.memory_space<vmem>>, vector<16x128xbf16>
    %c0_70 = arith.constant 0 : index
    %c4_71 = arith.constant 4 : index
    %c0_72 = arith.constant 0 : index
    %c0_73 = arith.constant 0 : index
    %65 = vector.load %arg3[%c0_70, %c4_71, %c0_72, %c0_73] : memref<3x5x128x128xbf16, #tpu.memory_space<vmem>>, vector<1x1x128x128xbf16>
    %66 = vector.shape_cast %65 : vector<1x1x128x128xbf16> to vector<128x128xbf16>
    %cst_74 = arith.constant dense<0.000000e+00> : vector<16x128xf32>
    %67 = tpu.matmul %64, %66, %cst_74 {dimension_numbers = #tpu.dot_dimension_numbers<[1], [0], [0], [1], [0, 0, 1, 1], [], []>} : vector<16x128xbf16>, vector<128x128xbf16>, vector<16x128xf32> -> vector<16x128xf32>
    %68 = arith.addf %63, %67 : vector<16x128xf32>
    %c1_75 = arith.constant 1 : index
    %c0_76 = arith.constant 0 : index
    %c0_77 = arith.constant 0 : index
    %69 = vector.load %arg5[%c1_75, %c0_76, %c0_77] : memref<4x1x128xf32, #tpu.memory_space<vmem>>, vector<1x1x128xf32>
    %70 = vector.shape_cast %69 : vector<1x1x128xf32> to vector<1x128xf32>
    %71 = vector.broadcast %70 : vector<1x128xf32> to vector<16x128xf32>
    %72 = arith.addf %68, %71 : vector<16x128xf32>
    %73 = arith.truncf %72 : vector<16x128xf32> to vector<16x128xbf16>
    %74 = math.tanh %73 : vector<16x128xbf16>
    %cst_78 = arith.constant 0.000000e+00 : bf16
    %75 = vector.broadcast %cst_78 : bf16 to vector<16x128xbf16>
    %76 = vector.shape_cast %9 : vector<16x1xi1> to vector<16x1xi1>
    %77 = vector.broadcast %76 : vector<16x1xi1> to vector<16x128xi1>
    %78 = arith.select %77, %74, %75 : vector<16x128xi1>, vector<16x128xbf16>
    %c2_79 = arith.constant 2 : index
    %c0_80 = arith.constant 0 : index
    %79 = vector.load %arg8[%c2_79, %c0_80] : memref<32x128xbf16, #tpu.memory_space<vmem>>, vector<16x128xbf16>
    tpu.vector_store %arg8[%c2_79, %c0_80], %78 {strides = array<i32>} : memref<32x128xbf16, #tpu.memory_space<vmem>>, vector<16x128xbf16>,
    %c0_81 = arith.constant 0 : index
    %c0_82 = arith.constant 0 : index
    %80 = vector.load %arg8[%c0_81, %c0_82] : memref<32x128xbf16, #tpu.memory_space<vmem>>, vector<16x128xbf16>
    %c1_83 = arith.constant 1 : index
    %c0_84 = arith.constant 0 : index
    %c0_85 = arith.constant 0 : index
    %c0_86 = arith.constant 0 : index
    %81 = vector.load %arg3[%c1_83, %c0_84, %c0_85, %c0_86] : memref<3x5x128x128xbf16, #tpu.memory_space<vmem>>, vector<1x1x128x128xbf16>
    %82 = vector.shape_cast %81 : vector<1x1x128x128xbf16> to vector<128x128xbf16>
    %cst_87 = arith.constant dense<0.000000e+00> : vector<16x128xf32>
    %83 = tpu.matmul %80, %82, %cst_87 {dimension_numbers = #tpu.dot_dimension_numbers<[1], [0], [0], [1], [0, 0, 1, 1], [], []>} : vector<16x128xbf16>, vector<128x128xbf16>, vector<16x128xf32> -> vector<16x128xf32>
    %c1_88 = arith.constant 1 : index
    %c0_89 = arith.constant 0 : index
    %84 = vector.load %arg8[%c1_88, %c0_89] : memref<32x128xbf16, #tpu.memory_space<vmem>>, vector<16x128xbf16>
    %c1_90 = arith.constant 1 : index
    %c1_91 = arith.constant 1 : index
    %c0_92 = arith.constant 0 : index
    %c0_93 = arith.constant 0 : index
    %85 = vector.load %arg3[%c1_90, %c1_91, %c0_92, %c0_93] : memref<3x5x128x128xbf16, #tpu.memory_space<vmem>>, vector<1x1x128x128xbf16>
    %86 = vector.shape_cast %85 : vector<1x1x128x128xbf16> to vector<128x128xbf16>
    %cst_94 = arith.constant dense<0.000000e+00> : vector<16x128xf32>
    %87 = tpu.matmul %84, %86, %cst_94 {dimension_numbers = #tpu.dot_dimension_numbers<[1], [0], [0], [1], [0, 0, 1, 1], [], []>} : vector<16x128xbf16>, vector<128x128xbf16>, vector<16x128xf32> -> vector<16x128xf32>
    %88 = arith.addf %83, %87 : vector<16x128xf32>
    %c2_95 = arith.constant 2 : index
    %c0_96 = arith.constant 0 : index
    %89 = vector.load %arg8[%c2_95, %c0_96] : memref<32x128xbf16, #tpu.memory_space<vmem>>, vector<16x128xbf16>
    %c1_97 = arith.constant 1 : index
    %c2_98 = arith.constant 2 : index
    %c0_99 = arith.constant 0 : index
    %c0_100 = arith.constant 0 : index
    %90 = vector.load %arg3[%c1_97, %c2_98, %c0_99, %c0_100] : memref<3x5x128x128xbf16, #tpu.memory_space<vmem>>, vector<1x1x128x128xbf16>
    %91 = vector.shape_cast %90 : vector<1x1x128x128xbf16> to vector<128x128xbf16>
    %cst_101 = arith.constant dense<0.000000e+00> : vector<16x128xf32>
    %92 = tpu.matmul %89, %91, %cst_101 {dimension_numbers = #tpu.dot_dimension_numbers<[1], [0], [0], [1], [0, 0, 1, 1], [], []>} : vector<16x128xbf16>, vector<128x128xbf16>, vector<16x128xf32> -> vector<16x128xf32>
    %93 = arith.addf %88, %92 : vector<16x128xf32>
    %c3_102 = arith.constant 3 : index
    %c0_103 = arith.constant 0 : index
    %94 = vector.load %arg8[%c3_102, %c0_103] : memref<32x128xbf16, #tpu.memory_space<vmem>>, vector<16x128xbf16>
    %c1_104 = arith.constant 1 : index
    %c3_105 = arith.constant 3 : index
    %c0_106 = arith.constant 0 : index
    %c0_107 = arith.constant 0 : index
    %95 = vector.load %arg3[%c1_104, %c3_105, %c0_106, %c0_107] : memref<3x5x128x128xbf16, #tpu.memory_space<vmem>>, vector<1x1x128x128xbf16>
    %96 = vector.shape_cast %95 : vector<1x1x128x128xbf16> to vector<128x128xbf16>
    %cst_108 = arith.constant dense<0.000000e+00> : vector<16x128xf32>
    %97 = tpu.matmul %94, %96, %cst_108 {dimension_numbers = #tpu.dot_dimension_numbers<[1], [0], [0], [1], [0, 0, 1, 1], [], []>} : vector<16x128xbf16>, vector<128x128xbf16>, vector<16x128xf32> -> vector<16x128xf32>
    %98 = arith.addf %93, %97 : vector<16x128xf32>
    %c4_109 = arith.constant 4 : index
    %c0_110 = arith.constant 0 : index
    %99 = vector.load %arg8[%c4_109, %c0_110] : memref<32x128xbf16, #tpu.memory_space<vmem>>, vector<16x128xbf16>
    %c1_111 = arith.constant 1 : index
    %c4_112 = arith.constant 4 : index
    %c0_113 = arith.constant 0 : index
    %c0_114 = arith.constant 0 : index
    %100 = vector.load %arg3[%c1_111, %c4_112, %c0_113, %c0_114] : memref<3x5x128x128xbf16, #tpu.memory_space<vmem>>, vector<1x1x128x128xbf16>
    %101 = vector.shape_cast %100 : vector<1x1x128x128xbf16> to vector<128x128xbf16>
    %cst_115 = arith.constant dense<0.000000e+00> : vector<16x128xf32>
    %102 = tpu.matmul %99, %101, %cst_115 {dimension_numbers = #tpu.dot_dimension_numbers<[1], [0], [0], [1], [0, 0, 1, 1], [], []>} : vector<16x128xbf16>, vector<128x128xbf16>, vector<16x128xf32> -> vector<16x128xf32>
    %103 = arith.addf %98, %102 : vector<16x128xf32>
    %c2_116 = arith.constant 2 : index
    %c0_117 = arith.constant 0 : index
    %c0_118 = arith.constant 0 : index
    %104 = vector.load %arg5[%c2_116, %c0_117, %c0_118] : memref<4x1x128xf32, #tpu.memory_space<vmem>>, vector<1x1x128xf32>
    %105 = vector.shape_cast %104 : vector<1x1x128xf32> to vector<1x128xf32>
    %106 = vector.broadcast %105 : vector<1x128xf32> to vector<16x128xf32>
    %107 = arith.addf %103, %106 : vector<16x128xf32>
    %108 = arith.truncf %107 : vector<16x128xf32> to vector<16x128xbf16>
    %109 = math.tanh %108 : vector<16x128xbf16>
    %cst_119 = arith.constant 0.000000e+00 : bf16
    %110 = vector.broadcast %cst_119 : bf16 to vector<16x128xbf16>
    %111 = vector.shape_cast %9 : vector<16x1xi1> to vector<16x1xi1>
    %112 = vector.broadcast %111 : vector<16x1xi1> to vector<16x128xi1>
    %113 = arith.select %112, %109, %110 : vector<16x128xi1>, vector<16x128xbf16>
    %c2_120 = arith.constant 2 : index
    %c0_121 = arith.constant 0 : index
    %114 = vector.load %arg8[%c2_120, %c0_121] : memref<32x128xbf16, #tpu.memory_space<vmem>>, vector<16x128xbf16>
    tpu.vector_store %arg8[%c2_120, %c0_121], %113 {strides = array<i32>} : memref<32x128xbf16, #tpu.memory_space<vmem>>, vector<16x128xbf16>,
    %c0_122 = arith.constant 0 : index
    %c0_123 = arith.constant 0 : index
    %115 = vector.load %arg8[%c0_122, %c0_123] : memref<32x128xbf16, #tpu.memory_space<vmem>>, vector<16x128xbf16>
    %c2_124 = arith.constant 2 : index
    %c0_125 = arith.constant 0 : index
    %c0_126 = arith.constant 0 : index
    %c0_127 = arith.constant 0 : index
    %116 = vector.load %arg3[%c2_124, %c0_125, %c0_126, %c0_127] : memref<3x5x128x128xbf16, #tpu.memory_space<vmem>>, vector<1x1x128x128xbf16>
    %117 = vector.shape_cast %116 : vector<1x1x128x128xbf16> to vector<128x128xbf16>
    %cst_128 = arith.constant dense<0.000000e+00> : vector<16x128xf32>
    %118 = tpu.matmul %115, %117, %cst_128 {dimension_numbers = #tpu.dot_dimension_numbers<[1], [0], [0], [1], [0, 0, 1, 1], [], []>} : vector<16x128xbf16>, vector<128x128xbf16>, vector<16x128xf32> -> vector<16x128xf32>
    %c1_129 = arith.constant 1 : index
    %c0_130 = arith.constant 0 : index
    %119 = vector.load %arg8[%c1_129, %c0_130] : memref<32x128xbf16, #tpu.memory_space<vmem>>, vector<16x128xbf16>
    %c2_131 = arith.constant 2 : index
    %c1_132 = arith.constant 1 : index
    %c0_133 = arith.constant 0 : index
    %c0_134 = arith.constant 0 : index
    %120 = vector.load %arg3[%c2_131, %c1_132, %c0_133, %c0_134] : memref<3x5x128x128xbf16, #tpu.memory_space<vmem>>, vector<1x1x128x128xbf16>
    %121 = vector.shape_cast %120 : vector<1x1x128x128xbf16> to vector<128x128xbf16>
    %cst_135 = arith.constant dense<0.000000e+00> : vector<16x128xf32>
    %122 = tpu.matmul %119, %121, %cst_135 {dimension_numbers = #tpu.dot_dimension_numbers<[1], [0], [0], [1], [0, 0, 1, 1], [], []>} : vector<16x128xbf16>, vector<128x128xbf16>, vector<16x128xf32> -> vector<16x128xf32>
    %123 = arith.addf %118, %122 : vector<16x128xf32>
    %c2_136 = arith.constant 2 : index
    %c0_137 = arith.constant 0 : index
    %124 = vector.load %arg8[%c2_136, %c0_137] : memref<32x128xbf16, #tpu.memory_space<vmem>>, vector<16x128xbf16>
    %c2_138 = arith.constant 2 : index
    %c2_139 = arith.constant 2 : index
    %c0_140 = arith.constant 0 : index
    %c0_141 = arith.constant 0 : index
    %125 = vector.load %arg3[%c2_138, %c2_139, %c0_140, %c0_141] : memref<3x5x128x128xbf16, #tpu.memory_space<vmem>>, vector<1x1x128x128xbf16>
    %126 = vector.shape_cast %125 : vector<1x1x128x128xbf16> to vector<128x128xbf16>
    %cst_142 = arith.constant dense<0.000000e+00> : vector<16x128xf32>
    %127 = tpu.matmul %124, %126, %cst_142 {dimension_numbers = #tpu.dot_dimension_numbers<[1], [0], [0], [1], [0, 0, 1, 1], [], []>} : vector<16x128xbf16>, vector<128x128xbf16>, vector<16x128xf32> -> vector<16x128xf32>
    %128 = arith.addf %123, %127 : vector<16x128xf32>
    %c3_143 = arith.constant 3 : index
    %c0_144 = arith.constant 0 : index
    %129 = vector.load %arg8[%c3_143, %c0_144] : memref<32x128xbf16, #tpu.memory_space<vmem>>, vector<16x128xbf16>
    %c2_145 = arith.constant 2 : index
    %c3_146 = arith.constant 3 : index
    %c0_147 = arith.constant 0 : index
    %c0_148 = arith.constant 0 : index
    %130 = vector.load %arg3[%c2_145, %c3_146, %c0_147, %c0_148] : memref<3x5x128x128xbf16, #tpu.memory_space<vmem>>, vector<1x1x128x128xbf16>
    %131 = vector.shape_cast %130 : vector<1x1x128x128xbf16> to vector<128x128xbf16>
    %cst_149 = arith.constant dense<0.000000e+00> : vector<16x128xf32>
    %132 = tpu.matmul %129, %131, %cst_149 {dimension_numbers = #tpu.dot_dimension_numbers<[1], [0], [0], [1], [0, 0, 1, 1], [], []>} : vector<16x128xbf16>, vector<128x128xbf16>, vector<16x128xf32> -> vector<16x128xf32>
    %133 = arith.addf %128, %132 : vector<16x128xf32>
    %c4_150 = arith.constant 4 : index
    %c0_151 = arith.constant 0 : index
    %134 = vector.load %arg8[%c4_150, %c0_151] : memref<32x128xbf16, #tpu.memory_space<vmem>>, vector<16x128xbf16>
    %c2_152 = arith.constant 2 : index
    %c4_153 = arith.constant 4 : index
    %c0_154 = arith.constant 0 : index
    %c0_155 = arith.constant 0 : index
    %135 = vector.load %arg3[%c2_152, %c4_153, %c0_154, %c0_155] : memref<3x5x128x128xbf16, #tpu.memory_space<vmem>>, vector<1x1x128x128xbf16>
    %136 = vector.shape_cast %135 : vector<1x1x128x128xbf16> to vector<128x128xbf16>
    %cst_156 = arith.constant dense<0.000000e+00> : vector<16x128xf32>
    %137 = tpu.matmul %134, %136, %cst_156 {dimension_numbers = #tpu.dot_dimension_numbers<[1], [0], [0], [1], [0, 0, 1, 1], [], []>} : vector<16x128xbf16>, vector<128x128xbf16>, vector<16x128xf32> -> vector<16x128xf32>
    %138 = arith.addf %133, %137 : vector<16x128xf32>
    %c3_157 = arith.constant 3 : index
    %c0_158 = arith.constant 0 : index
    %c0_159 = arith.constant 0 : index
    %139 = vector.load %arg5[%c3_157, %c0_158, %c0_159] : memref<4x1x128xf32, #tpu.memory_space<vmem>>, vector<1x1x128xf32>
    %140 = vector.shape_cast %139 : vector<1x1x128xf32> to vector<1x128xf32>
    %141 = vector.broadcast %140 : vector<1x128xf32> to vector<16x128xf32>
    %142 = arith.addf %138, %141 : vector<16x128xf32>
    %143 = arith.truncf %142 : vector<16x128xf32> to vector<16x128xbf16>
    %144 = math.tanh %143 : vector<16x128xbf16>
    %cst_160 = arith.constant 0.000000e+00 : bf16
    %145 = vector.broadcast %cst_160 : bf16 to vector<16x128xbf16>
    %146 = vector.shape_cast %9 : vector<16x1xi1> to vector<16x1xi1>
    %147 = vector.broadcast %146 : vector<16x1xi1> to vector<16x128xi1>
    %148 = arith.select %147, %144, %145 : vector<16x128xi1>, vector<16x128xbf16>
    %c2_161 = arith.constant 2 : index
    %c0_162 = arith.constant 0 : index
    %149 = vector.load %arg8[%c2_161, %c0_162] : memref<32x128xbf16, #tpu.memory_space<vmem>>, vector<16x128xbf16>
    tpu.vector_store %arg8[%c2_161, %c0_162], %148 {strides = array<i32>} : memref<32x128xbf16, #tpu.memory_space<vmem>>, vector<16x128xbf16>,
    %c0_163 = arith.constant 0 : index
    %c0_164 = arith.constant 0 : index
    %150 = vector.load %arg8[%c0_163, %c0_164] : memref<32x128xbf16, #tpu.memory_space<vmem>>, vector<16x128xbf16>
    %c0_165 = arith.constant 0 : index
    %c0_166 = arith.constant 0 : index
    %c0_167 = arith.constant 0 : index
    %151 = vector.load %arg4[%c0_165, %c0_166, %c0_167] : memref<5x128x128xbf16, #tpu.memory_space<vmem>>, vector<1x128x128xbf16>
    %152 = vector.shape_cast %151 : vector<1x128x128xbf16> to vector<128x128xbf16>
    %cst_168 = arith.constant dense<0.000000e+00> : vector<16x128xf32>
    %153 = tpu.matmul %150, %152, %cst_168 {dimension_numbers = #tpu.dot_dimension_numbers<[1], [0], [0], [1], [0, 0, 1, 1], [], []>} : vector<16x128xbf16>, vector<128x128xbf16>, vector<16x128xf32> -> vector<16x128xf32>
    %c1_169 = arith.constant 1 : index
    %c0_170 = arith.constant 0 : index
    %154 = vector.load %arg8[%c1_169, %c0_170] : memref<32x128xbf16, #tpu.memory_space<vmem>>, vector<16x128xbf16>
    %c1_171 = arith.constant 1 : index
    %c0_172 = arith.constant 0 : index
    %c0_173 = arith.constant 0 : index
    %155 = vector.load %arg4[%c1_171, %c0_172, %c0_173] : memref<5x128x128xbf16, #tpu.memory_space<vmem>>, vector<1x128x128xbf16>
    %156 = vector.shape_cast %155 : vector<1x128x128xbf16> to vector<128x128xbf16>
    %cst_174 = arith.constant dense<0.000000e+00> : vector<16x128xf32>
    %157 = tpu.matmul %154, %156, %cst_174 {dimension_numbers = #tpu.dot_dimension_numbers<[1], [0], [0], [1], [0, 0, 1, 1], [], []>} : vector<16x128xbf16>, vector<128x128xbf16>, vector<16x128xf32> -> vector<16x128xf32>
    %158 = arith.addf %153, %157 : vector<16x128xf32>
    %c2_175 = arith.constant 2 : index
    %c0_176 = arith.constant 0 : index
    %159 = vector.load %arg8[%c2_175, %c0_176] : memref<32x128xbf16, #tpu.memory_space<vmem>>, vector<16x128xbf16>
    %c2_177 = arith.constant 2 : index
    %c0_178 = arith.constant 0 : index
    %c0_179 = arith.constant 0 : index
    %160 = vector.load %arg4[%c2_177, %c0_178, %c0_179] : memref<5x128x128xbf16, #tpu.memory_space<vmem>>, vector<1x128x128xbf16>
    %161 = vector.shape_cast %160 : vector<1x128x128xbf16> to vector<128x128xbf16>
    %cst_180 = arith.constant dense<0.000000e+00> : vector<16x128xf32>
    %162 = tpu.matmul %159, %161, %cst_180 {dimension_numbers = #tpu.dot_dimension_numbers<[1], [0], [0], [1], [0, 0, 1, 1], [], []>} : vector<16x128xbf16>, vector<128x128xbf16>, vector<16x128xf32> -> vector<16x128xf32>
    %163 = arith.addf %158, %162 : vector<16x128xf32>
    %c3_181 = arith.constant 3 : index
    %c0_182 = arith.constant 0 : index
    %164 = vector.load %arg8[%c3_181, %c0_182] : memref<32x128xbf16, #tpu.memory_space<vmem>>, vector<16x128xbf16>
    %c3_183 = arith.constant 3 : index
    %c0_184 = arith.constant 0 : index
    %c0_185 = arith.constant 0 : index
    %165 = vector.load %arg4[%c3_183, %c0_184, %c0_185] : memref<5x128x128xbf16, #tpu.memory_space<vmem>>, vector<1x128x128xbf16>
    %166 = vector.shape_cast %165 : vector<1x128x128xbf16> to vector<128x128xbf16>
    %cst_186 = arith.constant dense<0.000000e+00> : vector<16x128xf32>
    %167 = tpu.matmul %164, %166, %cst_186 {dimension_numbers = #tpu.dot_dimension_numbers<[1], [0], [0], [1], [0, 0, 1, 1], [], []>} : vector<16x128xbf16>, vector<128x128xbf16>, vector<16x128xf32> -> vector<16x128xf32>
    %168 = arith.addf %163, %167 : vector<16x128xf32>
    %c4_187 = arith.constant 4 : index
    %c0_188 = arith.constant 0 : index
    %169 = vector.load %arg8[%c4_187, %c0_188] : memref<32x128xbf16, #tpu.memory_space<vmem>>, vector<16x128xbf16>
    %c4_189 = arith.constant 4 : index
    %c0_190 = arith.constant 0 : index
    %c0_191 = arith.constant 0 : index
    %170 = vector.load %arg4[%c4_189, %c0_190, %c0_191] : memref<5x128x128xbf16, #tpu.memory_space<vmem>>, vector<1x128x128xbf16>
    %171 = vector.shape_cast %170 : vector<1x128x128xbf16> to vector<128x128xbf16>
    %cst_192 = arith.constant dense<0.000000e+00> : vector<16x128xf32>
    %172 = tpu.matmul %169, %171, %cst_192 {dimension_numbers = #tpu.dot_dimension_numbers<[1], [0], [0], [1], [0, 0, 1, 1], [], []>} : vector<16x128xbf16>, vector<128x128xbf16>, vector<16x128xf32> -> vector<16x128xf32>
    %173 = arith.addf %168, %172 : vector<16x128xf32>
    %c0_193 = arith.constant 0 : index
    %c0_194 = arith.constant 0 : index
    %174 = vector.load %arg6[%c0_193, %c0_194] : memref<1x128xf32, #tpu.memory_space<vmem>>, vector<1x128xf32>
    %175 = vector.broadcast %174 : vector<1x128xf32> to vector<16x128xf32>
    %176 = arith.addf %173, %175 : vector<16x128xf32>
    %c0_195 = arith.constant 0 : index
    %c0_196 = arith.constant 0 : index
    %c0_197 = arith.constant 0 : index
    %177 = vector.load %arg7[%c0_195, %c0_196, %c0_197] : memref<1x16x128xf32, #tpu.memory_space<vmem>>, vector<1x16x128xf32>
    %178 = vector.shape_cast %177 : vector<1x16x128xf32> to vector<16x128xf32>
    %179 = vector.shape_cast %176 : vector<16x128xf32> to vector<1x16x128xf32>
    tpu.vector_store %arg7[%c0_195, %c0_196, %c0_197], %179 {strides = array<i32>} : memref<1x16x128xf32, #tpu.memory_space<vmem>>, vector<1x16x128xf32>,
    return
  }
  func.func @transform_0(%arg0: i32) -> (i32, i32, i32) {
    %c0_i32 = arith.constant 0 : i32
    %c0_i32_0 = arith.constant 0 : i32
    %c0_i32_1 = arith.constant 0 : i32
    return %arg0, %c0_i32, %c0_i32_0 : i32, i32, i32
  }
  func.func @transform_1(%arg0: i32) -> (i32, i32, i32) {
    %c0_i32 = arith.constant 0 : i32
    %c0_i32_0 = arith.constant 0 : i32
    %c0_i32_1 = arith.constant 0 : i32
    %c0_i32_2 = arith.constant 0 : i32
    return %c0_i32, %c0_i32_0, %c0_i32_1 : i32, i32, i32
  }
  func.func @transform_2(%arg0: i32) -> (i32, i32, i32, i32) {
    %c0_i32 = arith.constant 0 : i32
    %c0_i32_0 = arith.constant 0 : i32
    %c0_i32_1 = arith.constant 0 : i32
    %c0_i32_2 = arith.constant 0 : i32
    %c0_i32_3 = arith.constant 0 : i32
    return %c0_i32, %c0_i32_0, %c0_i32_1, %c0_i32_2 : i32, i32, i32, i32
  }
  func.func @transform_3(%arg0: i32) -> (i32, i32, i32) {
    %c0_i32 = arith.constant 0 : i32
    %c0_i32_0 = arith.constant 0 : i32
    %c0_i32_1 = arith.constant 0 : i32
    %c0_i32_2 = arith.constant 0 : i32
    return %c0_i32, %c0_i32_0, %c0_i32_1 : i32, i32, i32
  }
  func.func @transform_4(%arg0: i32) -> (i32, i32, i32) {
    %c0_i32 = arith.constant 0 : i32
    %c0_i32_0 = arith.constant 0 : i32
    %c0_i32_1 = arith.constant 0 : i32
    %c0_i32_2 = arith.constant 0 : i32
    return %c0_i32, %c0_i32_0, %c0_i32_1 : i32, i32, i32
  }
  func.func @transform_5(%arg0: i32) -> (i32, i32) {
    %c0_i32 = arith.constant 0 : i32
    %c0_i32_0 = arith.constant 0 : i32
    %c0_i32_1 = arith.constant 0 : i32
    return %c0_i32, %c0_i32_0 : i32, i32
  }
  func.func @transform_6(%arg0: i32) -> (i32, i32, i32) {
    %c0_i32 = arith.constant 0 : i32
    %c0_i32_0 = arith.constant 0 : i32
    %c0_i32_1 = arith.constant 0 : i32
    return %arg0, %c0_i32, %c0_i32_0 : i32, i32, i32
  }
}

</mosaic_0001>

<llo_original>
// kernel: tpu_custom_call.1
$region0: #{tpu_custom_call.1}
  #allocation0 [shape = 'u32[]', space=smem, size = 0x4, offset = 0x4, fixed_abs, tag = 'smem constant byte address 0x4 - core index']
  #allocation1 [shape = 'u32[144,128]{1,0:T(1,128)}', space=vmem, size = 0x12000, scoped, tag = 'internal scratch']
  #allocation2 [shape = 'bf16[32,128]{1,0:T(8,128)(2,1)}', space=vmem, size = 0x2000, scoped, tag = 'scratch operand']
  %s0 = inlined_call_operand.hbm [shape: bf16[2,16,128], index: 0, kind: input, shape index: {}]
  %s1 = inlined_call_operand.hbm [shape: bf16[5,128,128], index: 1, kind: input, shape index: {}]
  %s2 = inlined_call_operand.hbm [shape: bf16[3,5,128,128], index: 2, kind: input, shape index: {}]
  %s3 = inlined_call_operand.hbm [shape: bf16[5,128,128], index: 3, kind: input, shape index: {}]
  %s4 = inlined_call_operand.vmem [shape: f32[4,1,128], index: 4, kind: input, shape index: {}]
  %s5 = inlined_call_operand.vmem [shape: f32[1,128], index: 5, kind: input, shape index: {}]
  %s6 = inlined_call_operand.hbm [shape: f32[2,16,128], index: 6, kind: output, shape index: {}]
  %s7 = sld [smem:[#allocation0]]
  $region73: #{tpu_custom_call.1} parent=0
    _
  %s9 = ssub.s32 1, %s7
  %s10 = scalar_select 0, %s9, %s7
  $region1: #{tpu_custom_call.1} parent=0
    #allocation3 [shape = 'u8[8192]{0}', space=vmem, size = 0x2000, scoped, tag = 'input window, operand 0']
    #allocation4 [shape = 's32[2]{0}', space=sflag, size = 0x8, scoped, tag = 'scoped memory for tpu_custom_call.1']
    #allocation5 [shape = 's32[2]{0}', space=sflag, size = 0x8, scoped, tag = 'scoped memory for tpu_custom_call.1']
    #allocation6 [shape = 'u8[163840]{0}', space=vmem, size = 0x28000, scoped, tag = 'input window, operand 1, single buffered']
    #allocation7 [shape = 's32[1]{0}', space=sflag, size = 0x4, scoped, tag = 'scoped memory for tpu_custom_call.1']
    #allocation8 [shape = 'u8[491520]{0}', space=vmem, size = 0x78000, scoped, tag = 'input window, operand 2, single buffered']
    #allocation9 [shape = 'u8[163840]{0}', space=vmem, size = 0x28000, scoped, tag = 'input window, operand 3, single buffered']
    #allocation10 [shape = 's32[1]{0}', space=sflag, size = 0x4, scoped, tag = 'scoped memory for tpu_custom_call.1']
    #allocation11 [shape = 'u8[16384]{0}', space=vmem, size = 0x4000, scoped, tag = 'output window, operand 0']
    %11 = vsyncpa [#allocation4], 0
    %s12 = scalar_lea.sflag [#allocation4], 1
    %13 = vsyncpa %s12, 0
    %14 = vsyncpa [#allocation7], 0
    %15 = vsyncpa [#allocation10], 0
    %16 = vsyncpa [#allocation5], 0
    %s17 = scalar_lea.sflag [#allocation5], 1
    %18 = vsyncpa %s17, 0
    loop: start=0, step=1, limit=4
    $region2: #{tpu_custom_call.1} parent=1 // loop_pre_header
      _
    $region3: #{tpu_custom_call.1} parent=1 // loop_header
      %s20 = sphi 0, %s24
      %p21 = scmp.ge.s32.totalorder %s20, 4
      %s30 = sphi 0, %s32
      %s33 = sphi 0, %s30
      %s34 = sphi 0, %s33
      %s50 = sphi 0, %s34
      %s54 = sphi 0, %s54
      %s56 = sphi 0, %s54
      %s57 = sphi 0, %s56
      %s71 = sphi 0, %s57
      %s75 = sphi 0, %s75
      %s77 = sphi 0, %s75
      %s78 = sphi 0, %s77
      %s92 = sphi 0, %s78
      %s96 = sphi 0, %s96
      %s98 = sphi 0, %s96
      %s99 = sphi 0, %s98
      %s113 = sphi 0, %s99
      %s117 = sphi 0, %s117
      %s119 = sphi 0, %s117
      %s120 = sphi 0, %s119
      %s134 = sphi 0, %s120
      %s138 = sphi 0, %s138
      %s140 = sphi 0, %s138
      %s141 = sphi 0, %s140
      %s155 = sphi 0, %s141
      %s161 = sphi 0, %s163
      %s164 = sphi 0, %s161
      %s165 = sphi 0, %s164
      %s181 = sphi 0, %s165
    $region4: #{tpu_custom_call.1} parent=1 // loop_header_branch
      %23 = sbr.rel (%p21) target = $region8
    $region5: #{tpu_custom_call.1} parent=1 // loop_body
      %s25 = ssub.s32 %s20, 1
      %s26 = ssub.s32 %s20, 2
      %s27 = sadd.s32 %s20, 1
      %s28 = ssub.s32 %s20, %s27
      %p29 = scmp.eq.s32.totalorder %s28, 0
      %s31 = sadd.s32 %s30, 1
      %s32 = scalar_select %p29, %s30, %s31
      %p35 = pneg %p29
      %p36 = scmp.eq.s32.totalorder %s20, 1
      %p37 = por %p35, %p36
      %p38 = scmp.ne.s32.totalorder %s30, %s33
      %p39 = scmp.eq.s32.totalorder %s20, 0
      %p40 = por %p38, %p39
      %p41 = scmp.ne.s32.totalorder %s30, %s33
      %p42 = scmp.eq.s32.totalorder %s25, 1
      %p43 = por %p41, %p42
      %p44 = scmp.ne.s32.totalorder %s33, %s34
      %p45 = scmp.eq.s32.totalorder %s25, 0
      %p46 = por %p44, %p45
      %p47 = scmp.ne.s32.totalorder %s33, %s34
      %p48 = scmp.eq.s32.totalorder %s26, 1
      %p49 = por %p47, %p48
      %p51 = scmp.ne.s32.totalorder %s34, %s50
      %p52 = scmp.eq.s32.totalorder %s26, 0
      %p53 = por %p51, %p52
      %s55 = sadd.s32 %s54, 1
      %p58 = scmp.eq.s32.totalorder %s20, 1
      %p59 = scmp.ne.s32.totalorder %s54, %s56
      %p60 = scmp.eq.s32.totalorder %s20, 0
      %p61 = por %p59, %p60
      %p62 = scmp.ne.s32.totalorder %s54, %s56
      %p63 = scmp.eq.s32.totalorder %s25, 1
      %p64 = por %p62, %p63
      %p65 = scmp.ne.s32.totalorder %s56, %s57
      %p66 = scmp.eq.s32.totalorder %s25, 0
      %p67 = por %p65, %p66
      %p68 = scmp.ne.s32.totalorder %s56, %s57
      %p69 = scmp.eq.s32.totalorder %s26, 1
      %p70 = por %p68, %p69
      %p72 = scmp.ne.s32.totalorder %s57, %s71
      %p73 = scmp.eq.s32.totalorder %s26, 0
      %p74 = por %p72, %p73
      %s76 = sadd.s32 %s75, 1
      %p79 = scmp.eq.s32.totalorder %s20, 1
      %p80 = scmp.ne.s32.totalorder %s75, %s77
      %p81 = scmp.eq.s32.totalorder %s20, 0
      %p82 = por %p80, %p81
      %p83 = scmp.ne.s32.totalorder %s75, %s77
      %p84 = scmp.eq.s32.totalorder %s25, 1
      %p85 = por %p83, %p84
      %p86 = scmp.ne.s32.totalorder %s77, %s78
      %p87 = scmp.eq.s32.totalorder %s25, 0
      %p88 = por %p86, %p87
      %p89 = scmp.ne.s32.totalorder %s77, %s78
      %p90 = scmp.eq.s32.totalorder %s26, 1
      %p91 = por %p89, %p90
      %p93 = scmp.ne.s32.totalorder %s78, %s92
      %p94 = scmp.eq.s32.totalorder %s26, 0
      %p95 = por %p93, %p94
      %s97 = sadd.s32 %s96, 1
      %p100 = scmp.eq.s32.totalorder %s20, 1
      %p101 = scmp.ne.s32.totalorder %s96, %s98
      %p102 = scmp.eq.s32.totalorder %s20, 0
      %p103 = por %p101, %p102
      %p104 = scmp.ne.s32.totalorder %s96, %s98
      %p105 = scmp.eq.s32.totalorder %s25, 1
      %p106 = por %p104, %p105
      %p107 = scmp.ne.s32.totalorder %s98, %s99
      %p108 = scmp.eq.s32.totalorder %s25, 0
      %p109 = por %p107, %p108
      %p110 = scmp.ne.s32.totalorder %s98, %s99
      %p111 = scmp.eq.s32.totalorder %s26, 1
      %p112 = por %p110, %p111
      %p114 = scmp.ne.s32.totalorder %s99, %s113
      %p115 = scmp.eq.s32.totalorder %s26, 0
      %p116 = por %p114, %p115
      %s118 = sadd.s32 %s117, 1
      %p121 = scmp.eq.s32.totalorder %s20, 1
      %p122 = scmp.ne.s32.totalorder %s117, %s119
      %p123 = scmp.eq.s32.totalorder %s20, 0
      %p124 = por %p122, %p123
      %p125 = scmp.ne.s32.totalorder %s117, %s119
      %p126 = scmp.eq.s32.totalorder %s25, 1
      %p127 = por %p125, %p126
      %p128 = scmp.ne.s32.totalorder %s119, %s120
      %p129 = scmp.eq.s32.totalorder %s25, 0
      %p130 = por %p128, %p129
      %p131 = scmp.ne.s32.totalorder %s119, %s120
      %p132 = scmp.eq.s32.totalorder %s26, 1
      %p133 = por %p131, %p132
      %p135 = scmp.ne.s32.totalorder %s120, %s134
      %p136 = scmp.eq.s32.totalorder %s26, 0
      %p137 = por %p135, %p136
      %s139 = sadd.s32 %s138, 1
      %p142 = scmp.eq.s32.totalorder %s20, 1
      %p143 = scmp.ne.s32.totalorder %s138, %s140
      %p144 = scmp.eq.s32.totalorder %s20, 0
      %p145 = por %p143, %p144
      %p146 = scmp.ne.s32.totalorder %s138, %s140
      %p147 = scmp.eq.s32.totalorder %s25, 1
      %p148 = por %p146, %p147
      %p149 = scmp.ne.s32.totalorder %s140, %s141
      %p150 = scmp.eq.s32.totalorder %s25, 0
      %p151 = por %p149, %p150
      %p152 = scmp.ne.s32.totalorder %s140, %s141
      %p153 = scmp.eq.s32.totalorder %s26, 1
      %p154 = por %p152, %p153
      %p156 = scmp.ne.s32.totalorder %s141, %s155
      %p157 = scmp.eq.s32.totalorder %s26, 0
      %p158 = por %p156, %p157
      %s159 = ssub.s32 %s20, %s27
      %p160 = scmp.eq.s32.totalorder %s159, 0
      %s162 = sadd.s32 %s161, 1
      %s163 = scalar_select %p160, %s161, %s162
      %p166 = pneg %p160
      %p167 = scmp.eq.s32.totalorder %s20, 1
      %p168 = por %p166, %p167
      %p169 = scmp.ne.s32.totalorder %s161, %s164
      %p170 = scmp.eq.s32.totalorder %s20, 0
      %p171 = por %p169, %p170
      %p172 = scmp.ne.s32.totalorder %s161, %s164
      %p173 = scmp.eq.s32.totalorder %s25, 1
      %p174 = por %p172, %p173
      %p175 = scmp.ne.s32.totalorder %s164, %s165
      %p176 = scmp.eq.s32.totalorder %s25, 0
      %p177 = por %p175, %p176
      %p178 = scmp.ne.s32.totalorder %s164, %s165
      %p179 = scmp.eq.s32.totalorder %s26, 1
      %p180 = por %p178, %p179
      %p182 = scmp.ne.s32.totalorder %s165, %s181
      %p183 = scmp.eq.s32.totalorder %s26, 0
      %p184 = por %p182, %p183
      %p185 = scmp.le.s32.totalorder 1, %s20
      %p186 = scmp.lt.s32.totalorder %s20, 3
      %p187 = pnand %p185, %p186
      %p188 = pneg %p187
      // Predicated region
      $region9: #{tpu_custom_call.1} parent=5 // pred_check
        _
      $region10: #{tpu_custom_call.1} parent=5 // pred_check_branch
        %190 = sbr.rel (%p187) target = $region12
      $region11: #{tpu_custom_call.1} parent=5 // pred_region
        %s191 = ssub.s32 %s20, 1
        // Predicated region
        $region13: #{tpu_custom_call.1} parent=11 // pred_check
          %p192 = pneg %p67
        $region14: #{tpu_custom_call.1} parent=11 // pred_check_branch
          %194 = sbr.rel (%p192) target = $region16
        $region15: #{tpu_custom_call.1} parent=11 // pred_region
          %s196 = ssub.s32 5120, 5120
          %197 = vsyncadd [#allocation7], %s196
          %s198 = sshll.u32 [#allocation6], 4
          %s199 = int_to_ptr.vmem [resolvable:$true] %s198
          %204 = dma.hbm_to_vmem [thread:$0]  %s1, 5120, %s199, [#allocation7], 64, 64, 4
        $region16: #{tpu_custom_call.1} parent=11 // pred_fallthru
          _
        // Predicated region
        $region17: #{tpu_custom_call.1} parent=11 // pred_check
          %p205 = pneg %p88
        $region18: #{tpu_custom_call.1} parent=11 // pred_check_branch
          %207 = sbr.rel (%p205) target = $region20
        $region19: #{tpu_custom_call.1} parent=11 // pred_region
          %s209 = ssub.s32 15360, 15360
          %210 = vsyncadd [#allocation7], %s209
          %s211 = sshll.u32 [#allocation8], 4
          %s212 = int_to_ptr.vmem [resolvable:$true] %s211
          %217 = dma.hbm_to_vmem [thread:$0]  %s2, 15360, %s212, [#allocation7], 64, 64, 4
        $region20: #{tpu_custom_call.1} parent=11 // pred_fallthru
          _
        // Predicated region
        $region21: #{tpu_custom_call.1} parent=11 // pred_check
          %p218 = pneg %p109
        $region22: #{tpu_custom_call.1} parent=11 // pred_check_branch
          %220 = sbr.rel (%p218) target = $region24
        $region23: #{tpu_custom_call.1} parent=11 // pred_region
          %s222 = ssub.s32 5120, 5120
          %223 = vsyncadd [#allocation10], %s222
          %s224 = sshll.u32 [#allocation9], 4
          %s225 = int_to_ptr.vmem [resolvable:$true] %s224
          %230 = dma.hbm_to_vmem [thread:$0]  %s3, 5120, %s225, [#allocation10], 64, 64, 4
        $region24: #{tpu_custom_call.1} parent=11 // pred_fallthru
          _
        // Predicated region
        $region25: #{tpu_custom_call.1} parent=11 // pred_check
          %p231 = pneg %p130
        $region26: #{tpu_custom_call.1} parent=11 // pred_check_branch
          %233 = sbr.rel (%p231) target = $region28
        $region27: #{tpu_custom_call.1} parent=11 // pred_region
          _
        $region28: #{tpu_custom_call.1} parent=11 // pred_fallthru
          _
        // Predicated region
        $region29: #{tpu_custom_call.1} parent=11 // pred_check
          %p234 = pneg %p151
        $region30: #{tpu_custom_call.1} parent=11 // pred_check_branch
          %236 = sbr.rel (%p234) target = $region32
        $region31: #{tpu_custom_call.1} parent=11 // pred_region
          _
        $region32: #{tpu_custom_call.1} parent=11 // pred_fallthru
          _
      $region12: #{tpu_custom_call.1} parent=5 // pred_fallthru
        _
      %p237 = scmp.lt.s32.totalorder %s20, 2
      // Predicated region
      $region33: #{tpu_custom_call.1} parent=5 // pred_check
        %p238 = pneg %p237
      $region34: #{tpu_custom_call.1} parent=5 // pred_check_branch
        %240 = sbr.rel (%p238) target = $region36
      $region35: #{tpu_custom_call.1} parent=5 // pred_region
        // Predicated region
        $region37: #{tpu_custom_call.1} parent=35 // pred_check
          %p241 = pneg %p40
        $region38: #{tpu_custom_call.1} parent=35 // pred_check_branch
          %243 = sbr.rel (%p241) target = $region40
        $region39: #{tpu_custom_call.1} parent=35 // pred_region
          %s244 = sand.u32 %s30, 1
          %s245 = scalar_lea.sflag [#allocation4], %s244
          %s246 = sand.u32 %s30, 1
          %s247 = smul.addr %s246, 8
          %s248 = scalar_lea.vmem [#allocation3], %s247
          %s250 = ssub.s32 128, 128
          %251 = vsyncadd %s245, %s250
          %s252 = smul.addr %s20, 2
          %s253 = smul.addr %s252, 64
          %s254 = scalar_lea.hbm %s0, %s253
          %s255 = sshll.u32 %s248, 4
          %s256 = int_to_ptr.vmem [resolvable:$true] %s255
          %261 = dma.hbm_to_vmem [thread:$0]  %s254, 128, %s256, %s245, 64, 64, 4
        $region40: #{tpu_custom_call.1} parent=35 // pred_fallthru
          _
      $region36: #{tpu_custom_call.1} parent=5 // pred_fallthru
        _
      %p262 = scmp.le.s32.totalorder 1, %s20
      %p263 = scmp.lt.s32.totalorder %s20, 3
      %p264 = pnand %p262, %p263
      %p265 = pneg %p264
      // Predicated region
      $region41: #{tpu_custom_call.1} parent=5 // pred_check
        _
      $region42: #{tpu_custom_call.1} parent=5 // pred_check_branch
        %267 = sbr.rel (%p264) target = $region44
      $region43: #{tpu_custom_call.1} parent=5 // pred_region
        %s268 = ssub.s32 %s20, 1
        %s269 = sand.u32 %s33, 1
        %s270 = scalar_lea.sflag [#allocation4], %s269
        %s271 = sand.u32 %s33, 1
        %s272 = smul.addr %s271, 8
        %s273 = scalar_lea.vmem [#allocation3], %s272
        // Predicated region
        $region45: #{tpu_custom_call.1} parent=43 // pred_check
          %p274 = pneg %p46
        $region46: #{tpu_custom_call.1} parent=43 // pred_check_branch
          %276 = sbr.rel (%p274) target = $region48
        $region47: #{tpu_custom_call.1} parent=43 // pred_region
          %277 = dma.done %s270, 128
        $region48: #{tpu_custom_call.1} parent=43 // pred_fallthru
          _
        // Predicated region
        $region49: #{tpu_custom_call.1} parent=43 // pred_check
          %p278 = pneg %p67
        $region50: #{tpu_custom_call.1} parent=43 // pred_check_branch
          %280 = sbr.rel (%p278) target = $region52
        $region51: #{tpu_custom_call.1} parent=43 // pred_region
          %281 = dma.done [#allocation7], 5120
        $region52: #{tpu_custom_call.1} parent=43 // pred_fallthru
          _
        // Predicated region
        $region53: #{tpu_custom_call.1} parent=43 // pred_check
          %p282 = pneg %p88
        $region54: #{tpu_custom_call.1} parent=43 // pred_check_branch
          %284 = sbr.rel (%p282) target = $region56
        $region55: #{tpu_custom_call.1} parent=43 // pred_region
          %285 = dma.done [#allocation7], 15360
        $region56: #{tpu_custom_call.1} parent=43 // pred_fallthru
          _
        // Predicated region
        $region57: #{tpu_custom_call.1} parent=43 // pred_check
          %p286 = pneg %p109
        $region58: #{tpu_custom_call.1} parent=43 // pred_check_branch
          %288 = sbr.rel (%p286) target = $region60
        $region59: #{tpu_custom_call.1} parent=43 // pred_region
          %289 = dma.done [#allocation10], 5120
        $region60: #{tpu_custom_call.1} parent=43 // pred_fallthru
          _
        %s290 = sand.u32 %s33, 1
        %s291 = scalar_lea.sflag [#allocation4], %s290
        %s292 = sand.u32 %s33, 1
        %s293 = smul.addr %s292, 8
        %s294 = scalar_lea.vmem [#allocation3], %s293
        %p295 = pneg %p46
        %p296 = pneg %p43
        %p297 = pneg %p67
        %p298 = pneg %p64
        %p299 = pneg %p88
        %p300 = pneg %p85
        %p301 = pneg %p109
        %p302 = pneg %p106
        %p303 = pneg %p130
        %p304 = pneg %p127
        %p305 = pneg %p151
        %p306 = pneg %p148
        %p307 = pneg %p177
        %p308 = pneg %p174
        %s309 = sand.u32 %s164, 1
        %s310 = scalar_lea.sflag [#allocation5], %s309
        %s311 = sand.u32 %s164, 1
        %s312 = smul.addr %s311, 16
        %s313 = scalar_lea.vmem [#allocation11], %s312
        %317 = vst [vmem:[#allocation2] sm:$0x1] 0
        %318 = vst [vmem:[#allocation2 + $0x8] sm:$0x2] 0
        %v319 = vld [vmem:[%s273] sm:$0xf]
        %v320 = vld [vmem:[%s273 + $0x4] sm:$0xf]
        %vm323 = vcmask 1040384
        %vm324 = vcmask 1044484
        %vm325 = vmor %vm323, %vm324
        %v326 = vrot.slane %v319, 7
        %v327 = vrot.slane %v326, 4
        %v328 = vrot.slane %v320, 7
        %v329 = vsel %vm325, %v327, %v328
        %v330 = vrot.slane %v328, 4
        %334 = vst [vmem:[#allocation2] sm:$0xe] %v326
        %335 = vst [vmem:[#allocation2 + $0x4] sm:$0xf] %v329
        %336 = vst [vmem:[#allocation2 + $0x8] sm:$0x1] %v330
        %v337 = vlaneseq
        %v338 = vshrl.u32 %v337, 7
        %v339 = vadd.s32 %v338, 8
        %vm340 = vcmp.lt.s32.totalorder %v338, 8
        %vm341 = vcmp.lt.s32.totalorder %v339, 8
        %v342 = vld [vmem:[#allocation2] sm:$0xf]
        %v343 = vld [vmem:[#allocation2 + $0x4] sm:$0xf]
        %v344 = vld [vmem:[#allocation6] sm:$0xf]
        %v345 = vld [vmem:[#allocation6 + $0x4] sm:$0xf]
        %v346 = vld [vmem:[#allocation6 + $0x8] sm:$0xf]
        %v347 = vld [vmem:[#allocation6 + $0xc] sm:$0xf]
        %v348 = vld [vmem:[#allocation6 + $0x10] sm:$0xf]
        %v349 = vld [vmem:[#allocation6 + $0x14] sm:$0xf]
        %v350 = vld [vmem:[#allocation6 + $0x18] sm:$0xf]
        %v351 = vld [vmem:[#allocation6 + $0x1c] sm:$0xf]
        %v352 = vld [vmem:[#allocation6 + $0x20] sm:$0xf]
        %v353 = vld [vmem:[#allocation6 + $0x24] sm:$0xf]
        %v354 = vld [vmem:[#allocation6 + $0x28] sm:$0xf]
        %v355 = vld [vmem:[#allocation6 + $0x2c] sm:$0xf]
        %v356 = vld [vmem:[#allocation6 + $0x30] sm:$0xf]
        %v357 = vld [vmem:[#allocation6 + $0x34] sm:$0xf]
        %v358 = vld [vmem:[#allocation6 + $0x38] sm:$0xf]
        %v359 = vld [vmem:[#allocation6 + $0x3c] sm:$0xf]
        %v360 = vld [vmem:[#allocation2 + $0x8] sm:$0x1]
        %s361 = scalar_lea.vmem [#allocation6], 64
        %v362 = vld [vmem:[%s361] sm:$0xf]
        %v363 = vld [vmem:[%s361 + $0x4] sm:$0xf]
        %v364 = vld [vmem:[%s361 + $0x8] sm:$0xf]
        %v365 = vld [vmem:[%s361 + $0xc] sm:$0xf]
        %v366 = vld [vmem:[%s361 + $0x10] sm:$0xf]
        %v367 = vld [vmem:[%s361 + $0x14] sm:$0xf]
        %v368 = vld [vmem:[%s361 + $0x18] sm:$0xf]
        %v369 = vld [vmem:[%s361 + $0x1c] sm:$0xf]
        %v370 = vld [vmem:[%s361 + $0x20] sm:$0xf]
        %v371 = vld [vmem:[%s361 + $0x24] sm:$0xf]
        %v372 = vld [vmem:[%s361 + $0x28] sm:$0xf]
        %v373 = vld [vmem:[%s361 + $0x2c] sm:$0xf]
        %v374 = vld [vmem:[%s361 + $0x30] sm:$0xf]
        %v375 = vld [vmem:[%s361 + $0x34] sm:$0xf]
        %v376 = vld [vmem:[%s361 + $0x38] sm:$0xf]
        %v377 = vld [vmem:[%s361 + $0x3c] sm:$0xf]
        %v381 = vunpack.c.l.b16 %v342
        %v382 = vunpack.c.l.b16 %v343
        %v383 = vunpack.c.l.b16 %v360
        %v384 = vpack.c.b16 %v382, %v381
        %v385 = vpack.c.b16 %v383, %v383
        %vm386 = vsmask.f32 7424
        %v388 = vshrl.u32 %v384, 16
        %v390 = vshll.u32 %v384, 16
        %v392 = vrot.slane %v390, 1
        %v393 = vor.u32 %v388, %v392
        %v395 = vshll.u32 %v385, 16
        %v397 = vrot.slane %v395, 1
        %v398 = vsel %vm386, %v393, %v397
        %v416 = vunpack.c.l.b16 %v362
        %v417 = vunpack.c.l.b16 %v363
        %v418 = vunpack.c.l.b16 %v364
        %v419 = vunpack.c.l.b16 %v365
        %v420 = vunpack.c.l.b16 %v366
        %v421 = vunpack.c.l.b16 %v367
        %v422 = vunpack.c.l.b16 %v368
        %v423 = vunpack.c.l.b16 %v369
        %v424 = vunpack.c.l.b16 %v370
        %v425 = vunpack.c.l.b16 %v371
        %v426 = vunpack.c.l.b16 %v372
        %v427 = vunpack.c.l.b16 %v373
        %v428 = vunpack.c.l.b16 %v374
        %v429 = vunpack.c.l.b16 %v375
        %v430 = vunpack.c.l.b16 %v376
        %v431 = vunpack.c.l.b16 %v377
        %v432 = vpack.c.b16 %v417, %v416
        %v433 = vpack.c.b16 %v419, %v418
        %v434 = vpack.c.b16 %v421, %v420
        %v435 = vpack.c.b16 %v423, %v422
        %v436 = vpack.c.b16 %v425, %v424
        %v437 = vpack.c.b16 %v427, %v426
        %v438 = vpack.c.b16 %v429, %v428
        %v439 = vpack.c.b16 %v431, %v430
        %448 = vmatprep.subr.bf16.mxu0 0
        %449 = vmatpush1.bf16.msra.mxu0 %v439
        %450 = vmatprep.subr.bf16.mxu0 0
        %451 = vmatpush1.bf16.msra.mxu0 %v438
        %452 = vmatprep.subr.bf16.mxu0 0
        %453 = vmatpush1.bf16.msra.mxu0 %v437
        %454 = vmatprep.subr.bf16.mxu0 0
        %455 = vmatpush1.bf16.msra.mxu0 %v436
        %456 = vmatprep.subr.bf16.mxu0 0
        %457 = vmatpush1.bf16.msra.mxu0 %v435
        %458 = vmatprep.subr.bf16.mxu0 0
        %459 = vmatpush1.bf16.msra.mxu0 %v434
        %460 = vmatprep.subr.bf16.mxu0 0
        %461 = vmatpush1.bf16.msra.mxu0 %v433
        %462 = vmatprep.subr.bf16.mxu0 0
        %463 = vmatpush1.bf16.msra.mxu0 %v432
        %464 = vmatprep.subr.bf16.mxu0 0
        %465 = vmatpush2.bf16.msra.mxu0 0
        %466 = vmatprep.subr.bf16.mxu0 0
        %467 = vmatpush2.bf16.msra.mxu0 0
        %468 = vmatprep.subr.bf16.mxu0 0
        %469 = vmatpush2.bf16.msra.mxu0 0
        %470 = vmatprep.subr.bf16.mxu0 0
        %471 = vmatpush2.bf16.msra.mxu0 0
        %472 = vmatprep.subr.bf16.mxu0 0
        %473 = vmatpush2.bf16.msra.mxu0 0
        %474 = vmatprep.subr.bf16.mxu0 0
        %475 = vmatpush2.bf16.msra.mxu0 0
        %476 = vmatprep.subr.bf16.mxu0 0
        %477 = vmatpush2.bf16.msra.mxu0 0
        %478 = vmatprep.subr.bf16.mxu0 0
        %479 = vmatpush2.bf16.msra.mxu0 0
        %480 = vmatprep.mubr.bf16.mxu0 0
        %481 = vmatmul.mubr.bf16.gmra.mxu0 %v398
        %v482 = vpop.f32.mrf.mxu0
        %v483 = vadd.f32 0.0, %v482
        %v484 = vpop.f32.mrf.mxu0
        %v485 = vpop.f32.mrf.mxu0
        %v486 = vadd.f32 0.0, %v485
        %v487 = vpop.f32.mrf.mxu0
        %488 = vdwg.mxu0
        %v506 = vunpack.c.l.b16 %v344
        %v507 = vunpack.c.l.b16 %v345
        %v508 = vunpack.c.l.b16 %v346
        %v509 = vunpack.c.l.b16 %v347
        %v510 = vunpack.c.l.b16 %v348
        %v511 = vunpack.c.l.b16 %v349
        %v512 = vunpack.c.l.b16 %v350
        %v513 = vunpack.c.l.b16 %v351
        %v514 = vunpack.c.l.b16 %v352
        %v515 = vunpack.c.l.b16 %v353
        %v516 = vunpack.c.l.b16 %v354
        %v517 = vunpack.c.l.b16 %v355
        %v518 = vunpack.c.l.b16 %v356
        %v519 = vunpack.c.l.b16 %v357
        %v520 = vunpack.c.l.b16 %v358
        %v521 = vunpack.c.l.b16 %v359
        %v522 = vpack.c.b16 %v507, %v506
        %v523 = vpack.c.b16 %v509, %v508
        %v524 = vpack.c.b16 %v511, %v510
        %v525 = vpack.c.b16 %v513, %v512
        %v526 = vpack.c.b16 %v515, %v514
        %v527 = vpack.c.b16 %v517, %v516
        %v528 = vpack.c.b16 %v519, %v518
        %v529 = vpack.c.b16 %v521, %v520
        %538 = vmatprep.subr.bf16.mxu0 0
        %539 = vmatpush1.bf16.msra.mxu0 %v529
        %540 = vmatprep.subr.bf16.mxu0 0
        %541 = vmatpush1.bf16.msra.mxu0 %v528
        %542 = vmatprep.subr.bf16.mxu0 0
        %543 = vmatpush1.bf16.msra.mxu0 %v527
        %544 = vmatprep.subr.bf16.mxu0 0
        %545 = vmatpush1.bf16.msra.mxu0 %v526
        %546 = vmatprep.subr.bf16.mxu0 0
        %547 = vmatpush1.bf16.msra.mxu0 %v525
        %548 = vmatprep.subr.bf16.mxu0 0
        %549 = vmatpush1.bf16.msra.mxu0 %v524
        %550 = vmatprep.subr.bf16.mxu0 0
        %551 = vmatpush1.bf16.msra.mxu0 %v523
        %552 = vmatprep.subr.bf16.mxu0 0
        %553 = vmatpush1.bf16.msra.mxu0 %v522
        %554 = vmatprep.subr.bf16.mxu0 0
        %555 = vmatpush2.bf16.msra.mxu0 0
        %556 = vmatprep.subr.bf16.mxu0 0
        %557 = vmatpush2.bf16.msra.mxu0 0
        %558 = vmatprep.subr.bf16.mxu0 0
        %559 = vmatpush2.bf16.msra.mxu0 0
        %560 = vmatprep.subr.bf16.mxu0 0
        %561 = vmatpush2.bf16.msra.mxu0 0
        %562 = vmatprep.subr.bf16.mxu0 0
        %563 = vmatpush2.bf16.msra.mxu0 0
        %564 = vmatprep.subr.bf16.mxu0 0
        %565 = vmatpush2.bf16.msra.mxu0 0
        %566 = vmatprep.subr.bf16.mxu0 0
        %567 = vmatpush2.bf16.msra.mxu0 0
        %568 = vmatprep.subr.bf16.mxu0 0
        %569 = vmatpush2.bf16.msra.mxu0 0
        %570 = vmatprep.mubr.bf16.mxu0 0
        %571 = vmatmul.mubr.bf16.gmra.mxu0 %v384
        %v572 = vpop.f32.mrf.mxu0
        %v573 = vadd.f32 %v483, %v572
        %v574 = vpop.f32.mrf.mxu0
        %v575 = vpop.f32.mrf.mxu0
        %v576 = vadd.f32 %v486, %v575
        %v577 = vpop.f32.mrf.mxu0
        %578 = vdwg.mxu0
        %v579 = vld [vmem:[#allocation2] sm:$0xe]
        %s580 = scalar_lea.vmem [#allocation6], 128
        %v581 = vld [vmem:[%s580] sm:$0xf]
        %v582 = vld [vmem:[%s580 + $0x4] sm:$0xf]
        %v583 = vld [vmem:[%s580 + $0x8] sm:$0xf]
        %v584 = vld [vmem:[%s580 + $0xc] sm:$0xf]
        %v585 = vld [vmem:[%s580 + $0x10] sm:$0xf]
        %v586 = vld [vmem:[%s580 + $0x14] sm:$0xf]
        %v587 = vld [vmem:[%s580 + $0x18] sm:$0xf]
        %v588 = vld [vmem:[%s580 + $0x1c] sm:$0xf]
        %v589 = vld [vmem:[%s580 + $0x20] sm:$0xf]
        %v590 = vld [vmem:[%s580 + $0x24] sm:$0xf]
        %v591 = vld [vmem:[%s580 + $0x28] sm:$0xf]
        %v592 = vld [vmem:[%s580 + $0x2c] sm:$0xf]
        %v593 = vld [vmem:[%s580 + $0x30] sm:$0xf]
        %v594 = vld [vmem:[%s580 + $0x34] sm:$0xf]
        %v595 = vld [vmem:[%s580 + $0x38] sm:$0xf]
        %v596 = vld [vmem:[%s580 + $0x3c] sm:$0xf]
        %v598 = vunpack.c.l.b16 %v579
        %v599 = vpack.c.b16 %v382, %v598
        %vm600 = vcmask 1046528
        %v601 = vrot.slane %v599, 1
        %v602 = vrot.slane %v385, 1
        %v603 = vsel %vm600, %v601, %v602
        %v621 = vunpack.c.l.b16 %v581
        %v622 = vunpack.c.l.b16 %v582
        %v623 = vunpack.c.l.b16 %v583
        %v624 = vunpack.c.l.b16 %v584
        %v625 = vunpack.c.l.b16 %v585
        %v626 = vunpack.c.l.b16 %v586
        %v627 = vunpack.c.l.b16 %v587
        %v628 = vunpack.c.l.b16 %v588
        %v629 = vunpack.c.l.b16 %v589
        %v630 = vunpack.c.l.b16 %v590
        %v631 = vunpack.c.l.b16 %v591
        %v632 = vunpack.c.l.b16 %v592
        %v633 = vunpack.c.l.b16 %v593
        %v634 = vunpack.c.l.b16 %v594
        %v635 = vunpack.c.l.b16 %v595
        %v636 = vunpack.c.l.b16 %v596
        %v637 = vpack.c.b16 %v622, %v621
        %v638 = vpack.c.b16 %v624, %v623
        %v639 = vpack.c.b16 %v626, %v625
        %v640 = vpack.c.b16 %v628, %v627
        %v641 = vpack.c.b16 %v630, %v629
        %v642 = vpack.c.b16 %v632, %v631
        %v643 = vpack.c.b16 %v634, %v633
        %v644 = vpack.c.b16 %v636, %v635
        %653 = vmatprep.subr.bf16.mxu0 0
        %654 = vmatpush1.bf16.msra.mxu0 %v644
        %655 = vmatprep.subr.bf16.mxu0 0
        %656 = vmatpush1.bf16.msra.mxu0 %v643
        %657 = vmatprep.subr.bf16.mxu0 0
        %658 = vmatpush1.bf16.msra.mxu0 %v642
        %659 = vmatprep.subr.bf16.mxu0 0
        %660 = vmatpush1.bf16.msra.mxu0 %v641
        %661 = vmatprep.subr.bf16.mxu0 0
        %662 = vmatpush1.bf16.msra.mxu0 %v640
        %663 = vmatprep.subr.bf16.mxu0 0
        %664 = vmatpush1.bf16.msra.mxu0 %v639
        %665 = vmatprep.subr.bf16.mxu0 0
        %666 = vmatpush1.bf16.msra.mxu0 %v638
        %667 = vmatprep.subr.bf16.mxu0 0
        %668 = vmatpush1.bf16.msra.mxu0 %v637
        %669 = vmatprep.subr.bf16.mxu0 0
        %670 = vmatpush2.bf16.msra.mxu0 0
        %671 = vmatprep.subr.bf16.mxu0 0
        %672 = vmatpush2.bf16.msra.mxu0 0
        %673 = vmatprep.subr.bf16.mxu0 0
        %674 = vmatpush2.bf16.msra.mxu0 0
        %675 = vmatprep.subr.bf16.mxu0 0
        %676 = vmatpush2.bf16.msra.mxu0 0
        %677 = vmatprep.subr.bf16.mxu0 0
        %678 = vmatpush2.bf16.msra.mxu0 0
        %679 = vmatprep.subr.bf16.mxu0 0
        %680 = vmatpush2.bf16.msra.mxu0 0
        %681 = vmatprep.subr.bf16.mxu0 0
        %682 = vmatpush2.bf16.msra.mxu0 0
        %683 = vmatprep.subr.bf16.mxu0 0
        %684 = vmatpush2.bf16.msra.mxu0 0
        %685 = vmatprep.mubr.bf16.mxu0 0
        %686 = vmatmul.mubr.bf16.gmra.mxu0 %v603
        %v687 = vpop.f32.mrf.mxu0
        %v688 = vadd.f32 0.0, %v687
        %v689 = vpop.f32.mrf.mxu0
        %v690 = vpop.f32.mrf.mxu0
        %v691 = vadd.f32 0.0, %v690
        %v692 = vpop.f32.mrf.mxu0
        %693 = vdwg.mxu0
        %v694 = vadd.f32 %v573, %v688
        %v695 = vadd.f32 %v576, %v691
        %v696 = vld [vmem:[#allocation2 + $0x8] sm:$0x3]
        %s697 = scalar_lea.vmem [#allocation6], 192
        %v698 = vld [vmem:[%s697] sm:$0xf]
        %v699 = vld [vmem:[%s697 + $0x4] sm:$0xf]
        %v700 = vld [vmem:[%s697 + $0x8] sm:$0xf]
        %v701 = vld [vmem:[%s697 + $0xc] sm:$0xf]
        %v702 = vld [vmem:[%s697 + $0x10] sm:$0xf]
        %v703 = vld [vmem:[%s697 + $0x14] sm:$0xf]
        %v704 = vld [vmem:[%s697 + $0x18] sm:$0xf]
        %v705 = vld [vmem:[%s697 + $0x1c] sm:$0xf]
        %v706 = vld [vmem:[%s697 + $0x20] sm:$0xf]
        %v707 = vld [vmem:[%s697 + $0x24] sm:$0xf]
        %v708 = vld [vmem:[%s697 + $0x28] sm:$0xf]
        %v709 = vld [vmem:[%s697 + $0x2c] sm:$0xf]
        %v710 = vld [vmem:[%s697 + $0x30] sm:$0xf]
        %v711 = vld [vmem:[%s697 + $0x34] sm:$0xf]
        %v712 = vld [vmem:[%s697 + $0x38] sm:$0xf]
        %v713 = vld [vmem:[%s697 + $0x3c] sm:$0xf]
        %v715 = vunpack.c.l.b16 %v696
        %v716 = vpack.c.b16 %v715, %v715
        %vm717 = vsmask.f32 6400
        %v719 = vshrl.u32 %v599, 16
        %v721 = vrot.slane %v719, 1
        %v722 = vshll.u32 %v599, 16
        %v724 = vrot.slane %v722, 2
        %v725 = vor.u32 %v721, %v724
        %v727 = vshrl.u32 %v716, 16
        %v729 = vrot.slane %v727, 1
        %v730 = vshll.u32 %v716, 16
        %v732 = vrot.slane %v730, 2
        %v733 = vor.u32 %v729, %v732
        %v734 = vsel %vm717, %v725, %v733
        %v752 = vunpack.c.l.b16 %v698
        %v753 = vunpack.c.l.b16 %v699
        %v754 = vunpack.c.l.b16 %v700
        %v755 = vunpack.c.l.b16 %v701
        %v756 = vunpack.c.l.b16 %v702
        %v757 = vunpack.c.l.b16 %v703
        %v758 = vunpack.c.l.b16 %v704
        %v759 = vunpack.c.l.b16 %v705
        %v760 = vunpack.c.l.b16 %v706
        %v761 = vunpack.c.l.b16 %v707
        %v762 = vunpack.c.l.b16 %v708
        %v763 = vunpack.c.l.b16 %v709
        %v764 = vunpack.c.l.b16 %v710
        %v765 = vunpack.c.l.b16 %v711
        %v766 = vunpack.c.l.b16 %v712
        %v767 = vunpack.c.l.b16 %v713
        %v768 = vpack.c.b16 %v753, %v752
        %v769 = vpack.c.b16 %v755, %v754
        %v770 = vpack.c.b16 %v757, %v756
        %v771 = vpack.c.b16 %v759, %v758
        %v772 = vpack.c.b16 %v761, %v760
        %v773 = vpack.c.b16 %v763, %v762
        %v774 = vpack.c.b16 %v765, %v764
        %v775 = vpack.c.b16 %v767, %v766
        %784 = vmatprep.subr.bf16.mxu0 0
        %785 = vmatpush1.bf16.msra.mxu0 %v775
        %786 = vmatprep.subr.bf16.mxu0 0
        %787 = vmatpush1.bf16.msra.mxu0 %v774
        %788 = vmatprep.subr.bf16.mxu0 0
        %789 = vmatpush1.bf16.msra.mxu0 %v773
        %790 = vmatprep.subr.bf16.mxu0 0
        %791 = vmatpush1.bf16.msra.mxu0 %v772
        %792 = vmatprep.subr.bf16.mxu0 0
        %793 = vmatpush1.bf16.msra.mxu0 %v771
        %794 = vmatprep.subr.bf16.mxu0 0
        %795 = vmatpush1.bf16.msra.mxu0 %v770
        %796 = vmatprep.subr.bf16.mxu0 0
        %797 = vmatpush1.bf16.msra.mxu0 %v769
        %798 = vmatprep.subr.bf16.mxu0 0
        %799 = vmatpush1.bf16.msra.mxu0 %v768
        %800 = vmatprep.subr.bf16.mxu0 0
        %801 = vmatpush2.bf16.msra.mxu0 0
        %802 = vmatprep.subr.bf16.mxu0 0
        %803 = vmatpush2.bf16.msra.mxu0 0
        %804 = vmatprep.subr.bf16.mxu0 0
        %805 = vmatpush2.bf16.msra.mxu0 0
        %806 = vmatprep.subr.bf16.mxu0 0
        %807 = vmatpush2.bf16.msra.mxu0 0
        %808 = vmatprep.subr.bf16.mxu0 0
        %809 = vmatpush2.bf16.msra.mxu0 0
        %810 = vmatprep.subr.bf16.mxu0 0
        %811 = vmatpush2.bf16.msra.mxu0 0
        %812 = vmatprep.subr.bf16.mxu0 0
        %813 = vmatpush2.bf16.msra.mxu0 0
        %814 = vmatprep.subr.bf16.mxu0 0
        %815 = vmatpush2.bf16.msra.mxu0 0
        %816 = vmatprep.mubr.bf16.mxu0 0
        %817 = vmatmul.mubr.bf16.gmra.mxu0 %v734
        %v818 = vpop.f32.mrf.mxu0
        %v819 = vadd.f32 0.0, %v818
        %v820 = vpop.f32.mrf.mxu0
        %v821 = vpop.f32.mrf.mxu0
        %v822 = vadd.f32 0.0, %v821
        %v823 = vpop.f32.mrf.mxu0
        %824 = vdwg.mxu0
        %v825 = vadd.f32 %v694, %v819
        %v826 = vadd.f32 %v695, %v822
        %v827 = vld [vmem:[#allocation2] sm:$0xc]
        %s828 = scalar_lea.vmem [#allocation6], 256
        %v829 = vld [vmem:[%s828] sm:$0xf]
        %v830 = vld [vmem:[%s828 + $0x4] sm:$0xf]
        %v831 = vld [vmem:[%s828 + $0x8] sm:$0xf]
        %v832 = vld [vmem:[%s828 + $0xc] sm:$0xf]
        %v833 = vld [vmem:[%s828 + $0x10] sm:$0xf]
        %v834 = vld [vmem:[%s828 + $0x14] sm:$0xf]
        %v835 = vld [vmem:[%s828 + $0x18] sm:$0xf]
        %v836 = vld [vmem:[%s828 + $0x1c] sm:$0xf]
        %v837 = vld [vmem:[%s828 + $0x20] sm:$0xf]
        %v838 = vld [vmem:[%s828 + $0x24] sm:$0xf]
        %v839 = vld [vmem:[%s828 + $0x28] sm:$0xf]
        %v840 = vld [vmem:[%s828 + $0x2c] sm:$0xf]
        %v841 = vld [vmem:[%s828 + $0x30] sm:$0xf]
        %v842 = vld [vmem:[%s828 + $0x34] sm:$0xf]
        %v843 = vld [vmem:[%s828 + $0x38] sm:$0xf]
        %v844 = vld [vmem:[%s828 + $0x3c] sm:$0xf]
        %v846 = vunpack.c.l.b16 %v827
        %v847 = vpack.c.b16 %v382, %v846
        %vm848 = vcmask 1045504
        %v849 = vrot.slane %v847, 2
        %v850 = vrot.slane %v716, 2
        %v851 = vsel %vm848, %v849, %v850
        %v869 = vunpack.c.l.b16 %v829
        %v870 = vunpack.c.l.b16 %v830
        %v871 = vunpack.c.l.b16 %v831
        %v872 = vunpack.c.l.b16 %v832
        %v873 = vunpack.c.l.b16 %v833
        %v874 = vunpack.c.l.b16 %v834
        %v875 = vunpack.c.l.b16 %v835
        %v876 = vunpack.c.l.b16 %v836
        %v877 = vunpack.c.l.b16 %v837
        %v878 = vunpack.c.l.b16 %v838
        %v879 = vunpack.c.l.b16 %v839
        %v880 = vunpack.c.l.b16 %v840
        %v881 = vunpack.c.l.b16 %v841
        %v882 = vunpack.c.l.b16 %v842
        %v883 = vunpack.c.l.b16 %v843
        %v884 = vunpack.c.l.b16 %v844
        %v885 = vpack.c.b16 %v870, %v869
        %v886 = vpack.c.b16 %v872, %v871
        %v887 = vpack.c.b16 %v874, %v873
        %v888 = vpack.c.b16 %v876, %v875
        %v889 = vpack.c.b16 %v878, %v877
        %v890 = vpack.c.b16 %v880, %v879
        %v891 = vpack.c.b16 %v882, %v881
        %v892 = vpack.c.b16 %v884, %v883
        %901 = vmatprep.subr.bf16.mxu0 0
        %902 = vmatpush1.bf16.msra.mxu0 %v892
        %903 = vmatprep.subr.bf16.mxu0 0
        %904 = vmatpush1.bf16.msra.mxu0 %v891
        %905 = vmatprep.subr.bf16.mxu0 0
        %906 = vmatpush1.bf16.msra.mxu0 %v890
        %907 = vmatprep.subr.bf16.mxu0 0
        %908 = vmatpush1.bf16.msra.mxu0 %v889
        %909 = vmatprep.subr.bf16.mxu0 0
        %910 = vmatpush1.bf16.msra.mxu0 %v888
        %911 = vmatprep.subr.bf16.mxu0 0
        %912 = vmatpush1.bf16.msra.mxu0 %v887
        %913 = vmatprep.subr.bf16.mxu0 0
        %914 = vmatpush1.bf16.msra.mxu0 %v886
        %915 = vmatprep.subr.bf16.mxu0 0
        %916 = vmatpush1.bf16.msra.mxu0 %v885
        %917 = vmatprep.subr.bf16.mxu0 0
        %918 = vmatpush2.bf16.msra.mxu0 0
        %919 = vmatprep.subr.bf16.mxu0 0
        %920 = vmatpush2.bf16.msra.mxu0 0
        %921 = vmatprep.subr.bf16.mxu0 0
        %922 = vmatpush2.bf16.msra.mxu0 0
        %923 = vmatprep.subr.bf16.mxu0 0
        %924 = vmatpush2.bf16.msra.mxu0 0
        %925 = vmatprep.subr.bf16.mxu0 0
        %926 = vmatpush2.bf16.msra.mxu0 0
        %927 = vmatprep.subr.bf16.mxu0 0
        %928 = vmatpush2.bf16.msra.mxu0 0
        %929 = vmatprep.subr.bf16.mxu0 0
        %930 = vmatpush2.bf16.msra.mxu0 0
        %931 = vmatprep.subr.bf16.mxu0 0
        %932 = vmatpush2.bf16.msra.mxu0 0
        %933 = vmatprep.mubr.bf16.mxu0 0
        %934 = vmatmul.mubr.bf16.gmra.mxu0 %v851
        %v935 = vpop.f32.mrf.mxu0
        %v936 = vadd.f32 0.0, %v935
        %v937 = vpop.f32.mrf.mxu0
        %v938 = vpop.f32.mrf.mxu0
        %v939 = vadd.f32 0.0, %v938
        %v940 = vpop.f32.mrf.mxu0
        %941 = vdwg.mxu0
        %v942 = vadd.f32 %v825, %v936
        %v943 = vadd.f32 %v826, %v939
        %v944 = vld [vmem:[%s4] sm:$0x1]
        %v946 = vlaneseq
        %v947 = vshrl.u32 %v946, 7
        %v948 = vsub.s32 0, %v947
        %v949 = vrot.slane %v944, %v948
        %v951 = vadd.f32 %v942, %v949
        %v952 = vadd.f32 %v943, %v949
        %v953 = vpack.c.bf16 %v952, %v951
        %v954 = vtanh.bf16.pop %v953
        %v955 = vsel %vm340, 1, 0
        %v956 = vsel %vm341, 1, 0
        %vm957 = vcmp.eq.s32.totalorder %v955, 1
        %vm958 = vcmp.eq.s32.totalorder %v956, 1
        %vm959 = vmpackc.low %vm957, %vm957
        %vm960 = vmpackc.low %vm958, %vm958
        %v961 = vsel %vm959, 65537, 0
        %v962 = vsel %vm960, 65537, 0
        %v963 = vunpack.c.l.b16 %v961
        %v964 = vunpack.c.l.b16 %v962
        %v965 = vpack.c.b16 %v964, %v963
        %vm966 = vcmp.ne.s16.totalorder %v965, 0
        %v967 = vsel %vm966, %v954, 0
        %v969 = vunpack.c.l.b16 %v967
        %v970 = vunpack.c.h.b16 %v967
        %v971 = vpack.c.b16 %v969, %v969
        %v972 = vpack.c.b16 %v970, %v970
        %v973 = vrot.slane %v971, 7
        %v974 = vrot.slane %v973, 4
        %v975 = vrot.slane %v972, 7
        %v976 = vsel %vm325, %v974, %v975
        %v977 = vrot.slane %v975, 4
        %981 = vst [vmem:[#allocation2] sm:$0xe] %v973
        %982 = vst [vmem:[#allocation2 + $0x4] sm:$0xf] %v976
        %983 = vst [vmem:[#allocation2 + $0x8] sm:$0x1] %v977
        %v984 = vld [vmem:[#allocation2] sm:$0xf]
        %v985 = vld [vmem:[#allocation2 + $0x4] sm:$0xf]
        %v986 = vld [vmem:[#allocation8] sm:$0xf]
        %v987 = vld [vmem:[#allocation8 + $0x4] sm:$0xf]
        %v988 = vld [vmem:[#allocation8 + $0x8] sm:$0xf]
        %v989 = vld [vmem:[#allocation8 + $0xc] sm:$0xf]
        %v990 = vld [vmem:[#allocation8 + $0x10] sm:$0xf]
        %v991 = vld [vmem:[#allocation8 + $0x14] sm:$0xf]
        %v992 = vld [vmem:[#allocation8 + $0x18] sm:$0xf]
        %v993 = vld [vmem:[#allocation8 + $0x1c] sm:$0xf]
        %v994 = vld [vmem:[#allocation8 + $0x20] sm:$0xf]
        %v995 = vld [vmem:[#allocation8 + $0x24] sm:$0xf]
        %v996 = vld [vmem:[#allocation8 + $0x28] sm:$0xf]
        %v997 = vld [vmem:[#allocation8 + $0x2c] sm:$0xf]
        %v998 = vld [vmem:[#allocation8 + $0x30] sm:$0xf]
        %v999 = vld [vmem:[#allocation8 + $0x34] sm:$0xf]
        %v1000 = vld [vmem:[#allocation8 + $0x38] sm:$0xf]
        %v1001 = vld [vmem:[#allocation8 + $0x3c] sm:$0xf]
        %v1002 = vld [vmem:[#allocation2 + $0x8] sm:$0x1]
        %s1003 = scalar_lea.vmem [#allocation8], 64
        %v1004 = vld [vmem:[%s1003] sm:$0xf]
        %v1005 = vld [vmem:[%s1003 + $0x4] sm:$0xf]
        %v1006 = vld [vmem:[%s1003 + $0x8] sm:$0xf]
        %v1007 = vld [vmem:[%s1003 + $0xc] sm:$0xf]
        %v1008 = vld [vmem:[%s1003 + $0x10] sm:$0xf]
        %v1009 = vld [vmem:[%s1003 + $0x14] sm:$0xf]
        %v1010 = vld [vmem:[%s1003 + $0x18] sm:$0xf]
        %v1011 = vld [vmem:[%s1003 + $0x1c] sm:$0xf]
        %v1012 = vld [vmem:[%s1003 + $0x20] sm:$0xf]
        %v1013 = vld [vmem:[%s1003 + $0x24] sm:$0xf]
        %v1014 = vld [vmem:[%s1003 + $0x28] sm:$0xf]
        %v1015 = vld [vmem:[%s1003 + $0x2c] sm:$0xf]
        %v1016 = vld [vmem:[%s1003 + $0x30] sm:$0xf]
        %v1017 = vld [vmem:[%s1003 + $0x34] sm:$0xf]
        %v1018 = vld [vmem:[%s1003 + $0x38] sm:$0xf]
        %v1019 = vld [vmem:[%s1003 + $0x3c] sm:$0xf]
        %v1023 = vunpack.c.l.b16 %v984
        %v1024 = vunpack.c.l.b16 %v985
        %v1025 = vunpack.c.l.b16 %v1002
        %v1026 = vpack.c.b16 %v1024, %v1023
        %v1027 = vpack.c.b16 %v1025, %v1025
        %v1029 = vshrl.u32 %v1026, 16
        %v1031 = vshll.u32 %v1026, 16
        %v1033 = vrot.slane %v1031, 1
        %v1034 = vor.u32 %v1029, %v1033
        %v1036 = vshll.u32 %v1027, 16
        %v1038 = vrot.slane %v1036, 1
        %v1039 = vsel %vm386, %v1034, %v1038
        %v1057 = vunpack.c.l.b16 %v1004
        %v1058 = vunpack.c.l.b16 %v1005
        %v1059 = vunpack.c.l.b16 %v1006
        %v1060 = vunpack.c.l.b16 %v1007
        %v1061 = vunpack.c.l.b16 %v1008
        %v1062 = vunpack.c.l.b16 %v1009
        %v1063 = vunpack.c.l.b16 %v1010
        %v1064 = vunpack.c.l.b16 %v1011
        %v1065 = vunpack.c.l.b16 %v1012
        %v1066 = vunpack.c.l.b16 %v1013
        %v1067 = vunpack.c.l.b16 %v1014
        %v1068 = vunpack.c.l.b16 %v1015
        %v1069 = vunpack.c.l.b16 %v1016
        %v1070 = vunpack.c.l.b16 %v1017
        %v1071 = vunpack.c.l.b16 %v1018
        %v1072 = vunpack.c.l.b16 %v1019
        %v1073 = vpack.c.b16 %v1058, %v1057
        %v1074 = vpack.c.b16 %v1060, %v1059
        %v1075 = vpack.c.b16 %v1062, %v1061
        %v1076 = vpack.c.b16 %v1064, %v1063
        %v1077 = vpack.c.b16 %v1066, %v1065
        %v1078 = vpack.c.b16 %v1068, %v1067
        %v1079 = vpack.c.b16 %v1070, %v1069
        %v1080 = vpack.c.b16 %v1072, %v1071
        %1089 = vmatprep.subr.bf16.mxu0 0
        %1090 = vmatpush1.bf16.msra.mxu0 %v1080
        %1091 = vmatprep.subr.bf16.mxu0 0
        %1092 = vmatpush1.bf16.msra.mxu0 %v1079
        %1093 = vmatprep.subr.bf16.mxu0 0
        %1094 = vmatpush1.bf16.msra.mxu0 %v1078
        %1095 = vmatprep.subr.bf16.mxu0 0
        %1096 = vmatpush1.bf16.msra.mxu0 %v1077
        %1097 = vmatprep.subr.bf16.mxu0 0
        %1098 = vmatpush1.bf16.msra.mxu0 %v1076
        %1099 = vmatprep.subr.bf16.mxu0 0
        %1100 = vmatpush1.bf16.msra.mxu0 %v1075
        %1101 = vmatprep.subr.bf16.mxu0 0
        %1102 = vmatpush1.bf16.msra.mxu0 %v1074
        %1103 = vmatprep.subr.bf16.mxu0 0
        %1104 = vmatpush1.bf16.msra.mxu0 %v1073
        %1105 = vmatprep.subr.bf16.mxu0 0
        %1106 = vmatpush2.bf16.msra.mxu0 0
        %1107 = vmatprep.subr.bf16.mxu0 0
        %1108 = vmatpush2.bf16.msra.mxu0 0
        %1109 = vmatprep.subr.bf16.mxu0 0
        %1110 = vmatpush2.bf16.msra.mxu0 0
        %1111 = vmatprep.subr.bf16.mxu0 0
        %1112 = vmatpush2.bf16.msra.mxu0 0
        %1113 = vmatprep.subr.bf16.mxu0 0
        %1114 = vmatpush2.bf16.msra.mxu0 0
        %1115 = vmatprep.subr.bf16.mxu0 0
        %1116 = vmatpush2.bf16.msra.mxu0 0
        %1117 = vmatprep.subr.bf16.mxu0 0
        %1118 = vmatpush2.bf16.msra.mxu0 0
        %1119 = vmatprep.subr.bf16.mxu0 0
        %1120 = vmatpush2.bf16.msra.mxu0 0
        %1121 = vmatprep.mubr.bf16.mxu0 0
        %1122 = vmatmul.mubr.bf16.gmra.mxu0 %v1039
        %v1123 = vpop.f32.mrf.mxu0
        %v1124 = vadd.f32 0.0, %v1123
        %v1125 = vpop.f32.mrf.mxu0
        %v1126 = vpop.f32.mrf.mxu0
        %v1127 = vadd.f32 0.0, %v1126
        %v1128 = vpop.f32.mrf.mxu0
        %1129 = vdwg.mxu0
        %v1147 = vunpack.c.l.b16 %v986
        %v1148 = vunpack.c.l.b16 %v987
        %v1149 = vunpack.c.l.b16 %v988
        %v1150 = vunpack.c.l.b16 %v989
        %v1151 = vunpack.c.l.b16 %v990
        %v1152 = vunpack.c.l.b16 %v991
        %v1153 = vunpack.c.l.b16 %v992
        %v1154 = vunpack.c.l.b16 %v993
        %v1155 = vunpack.c.l.b16 %v994
        %v1156 = vunpack.c.l.b16 %v995
        %v1157 = vunpack.c.l.b16 %v996
        %v1158 = vunpack.c.l.b16 %v997
        %v1159 = vunpack.c.l.b16 %v998
        %v1160 = vunpack.c.l.b16 %v999
        %v1161 = vunpack.c.l.b16 %v1000
        %v1162 = vunpack.c.l.b16 %v1001
        %v1163 = vpack.c.b16 %v1148, %v1147
        %v1164 = vpack.c.b16 %v1150, %v1149
        %v1165 = vpack.c.b16 %v1152, %v1151
        %v1166 = vpack.c.b16 %v1154, %v1153
        %v1167 = vpack.c.b16 %v1156, %v1155
        %v1168 = vpack.c.b16 %v1158, %v1157
        %v1169 = vpack.c.b16 %v1160, %v1159
        %v1170 = vpack.c.b16 %v1162, %v1161
        %1179 = vmatprep.subr.bf16.mxu0 0
        %1180 = vmatpush1.bf16.msra.mxu0 %v1170
        %1181 = vmatprep.subr.bf16.mxu0 0
        %1182 = vmatpush1.bf16.msra.mxu0 %v1169
        %1183 = vmatprep.subr.bf16.mxu0 0
        %1184 = vmatpush1.bf16.msra.mxu0 %v1168
        %1185 = vmatprep.subr.bf16.mxu0 0
        %1186 = vmatpush1.bf16.msra.mxu0 %v1167
        %1187 = vmatprep.subr.bf16.mxu0 0
        %1188 = vmatpush1.bf16.msra.mxu0 %v1166
        %1189 = vmatprep.subr.bf16.mxu0 0
        %1190 = vmatpush1.bf16.msra.mxu0 %v1165
        %1191 = vmatprep.subr.bf16.mxu0 0
        %1192 = vmatpush1.bf16.msra.mxu0 %v1164
        %1193 = vmatprep.subr.bf16.mxu0 0
        %1194 = vmatpush1.bf16.msra.mxu0 %v1163
        %1195 = vmatprep.subr.bf16.mxu0 0
        %1196 = vmatpush2.bf16.msra.mxu0 0
        %1197 = vmatprep.subr.bf16.mxu0 0
        %1198 = vmatpush2.bf16.msra.mxu0 0
        %1199 = vmatprep.subr.bf16.mxu0 0
        %1200 = vmatpush2.bf16.msra.mxu0 0
        %1201 = vmatprep.subr.bf16.mxu0 0
        %1202 = vmatpush2.bf16.msra.mxu0 0
        %1203 = vmatprep.subr.bf16.mxu0 0
        %1204 = vmatpush2.bf16.msra.mxu0 0
        %1205 = vmatprep.subr.bf16.mxu0 0
        %1206 = vmatpush2.bf16.msra.mxu0 0
        %1207 = vmatprep.subr.bf16.mxu0 0
        %1208 = vmatpush2.bf16.msra.mxu0 0
        %1209 = vmatprep.subr.bf16.mxu0 0
        %1210 = vmatpush2.bf16.msra.mxu0 0
        %1211 = vmatprep.mubr.bf16.mxu0 0
        %1212 = vmatmul.mubr.bf16.gmra.mxu0 %v1026
        %v1213 = vpop.f32.mrf.mxu0
        %v1214 = vadd.f32 %v1124, %v1213
        %v1215 = vpop.f32.mrf.mxu0
        %v1216 = vpop.f32.mrf.mxu0
        %v1217 = vadd.f32 %v1127, %v1216
        %v1218 = vpop.f32.mrf.mxu0
        %1219 = vdwg.mxu0
        %v1220 = vld [vmem:[#allocation2] sm:$0xe]
        %s1221 = scalar_lea.vmem [#allocation8], 128
        %v1222 = vld [vmem:[%s1221] sm:$0xf]
        %v1223 = vld [vmem:[%s1221 + $0x4] sm:$0xf]
        %v1224 = vld [vmem:[%s1221 + $0x8] sm:$0xf]
        %v1225 = vld [vmem:[%s1221 + $0xc] sm:$0xf]
        %v1226 = vld [vmem:[%s1221 + $0x10] sm:$0xf]
        %v1227 = vld [vmem:[%s1221 + $0x14] sm:$0xf]
        %v1228 = vld [vmem:[%s1221 + $0x18] sm:$0xf]
        %v1229 = vld [vmem:[%s1221 + $0x1c] sm:$0xf]
        %v1230 = vld [vmem:[%s1221 + $0x20] sm:$0xf]
        %v1231 = vld [vmem:[%s1221 + $0x24] sm:$0xf]
        %v1232 = vld [vmem:[%s1221 + $0x28] sm:$0xf]
        %v1233 = vld [vmem:[%s1221 + $0x2c] sm:$0xf]
        %v1234 = vld [vmem:[%s1221 + $0x30] sm:$0xf]
        %v1235 = vld [vmem:[%s1221 + $0x34] sm:$0xf]
        %v1236 = vld [vmem:[%s1221 + $0x38] sm:$0xf]
        %v1237 = vld [vmem:[%s1221 + $0x3c] sm:$0xf]
        %v1239 = vunpack.c.l.b16 %v1220
        %v1240 = vpack.c.b16 %v1024, %v1239
        %v1241 = vrot.slane %v1240, 1
        %v1242 = vrot.slane %v1027, 1
        %v1243 = vsel %vm600, %v1241, %v1242
        %v1261 = vunpack.c.l.b16 %v1222
        %v1262 = vunpack.c.l.b16 %v1223
        %v1263 = vunpack.c.l.b16 %v1224
        %v1264 = vunpack.c.l.b16 %v1225
        %v1265 = vunpack.c.l.b16 %v1226
        %v1266 = vunpack.c.l.b16 %v1227
        %v1267 = vunpack.c.l.b16 %v1228
        %v1268 = vunpack.c.l.b16 %v1229
        %v1269 = vunpack.c.l.b16 %v1230
        %v1270 = vunpack.c.l.b16 %v1231
        %v1271 = vunpack.c.l.b16 %v1232
        %v1272 = vunpack.c.l.b16 %v1233
        %v1273 = vunpack.c.l.b16 %v1234
        %v1274 = vunpack.c.l.b16 %v1235
        %v1275 = vunpack.c.l.b16 %v1236
        %v1276 = vunpack.c.l.b16 %v1237
        %v1277 = vpack.c.b16 %v1262, %v1261
        %v1278 = vpack.c.b16 %v1264, %v1263
        %v1279 = vpack.c.b16 %v1266, %v1265
        %v1280 = vpack.c.b16 %v1268, %v1267
        %v1281 = vpack.c.b16 %v1270, %v1269
        %v1282 = vpack.c.b16 %v1272, %v1271
        %v1283 = vpack.c.b16 %v1274, %v1273
        %v1284 = vpack.c.b16 %v1276, %v1275
        %1293 = vmatprep.subr.bf16.mxu0 0
        %1294 = vmatpush1.bf16.msra.mxu0 %v1284
        %1295 = vmatprep.subr.bf16.mxu0 0
        %1296 = vmatpush1.bf16.msra.mxu0 %v1283
        %1297 = vmatprep.subr.bf16.mxu0 0
        %1298 = vmatpush1.bf16.msra.mxu0 %v1282
        %1299 = vmatprep.subr.bf16.mxu0 0
        %1300 = vmatpush1.bf16.msra.mxu0 %v1281
        %1301 = vmatprep.subr.bf16.mxu0 0
        %1302 = vmatpush1.bf16.msra.mxu0 %v1280
        %1303 = vmatprep.subr.bf16.mxu0 0
        %1304 = vmatpush1.bf16.msra.mxu0 %v1279
        %1305 = vmatprep.subr.bf16.mxu0 0
        %1306 = vmatpush1.bf16.msra.mxu0 %v1278
        %1307 = vmatprep.subr.bf16.mxu0 0
        %1308 = vmatpush1.bf16.msra.mxu0 %v1277
        %1309 = vmatprep.subr.bf16.mxu0 0
        %1310 = vmatpush2.bf16.msra.mxu0 0
        %1311 = vmatprep.subr.bf16.mxu0 0
        %1312 = vmatpush2.bf16.msra.mxu0 0
        %1313 = vmatprep.subr.bf16.mxu0 0
        %1314 = vmatpush2.bf16.msra.mxu0 0
        %1315 = vmatprep.subr.bf16.mxu0 0
        %1316 = vmatpush2.bf16.msra.mxu0 0
        %1317 = vmatprep.subr.bf16.mxu0 0
        %1318 = vmatpush2.bf16.msra.mxu0 0
        %1319 = vmatprep.subr.bf16.mxu0 0
        %1320 = vmatpush2.bf16.msra.mxu0 0
        %1321 = vmatprep.subr.bf16.mxu0 0
        %1322 = vmatpush2.bf16.msra.mxu0 0
        %1323 = vmatprep.subr.bf16.mxu0 0
        %1324 = vmatpush2.bf16.msra.mxu0 0
        %1325 = vmatprep.mubr.bf16.mxu0 0
        %1326 = vmatmul.mubr.bf16.gmra.mxu0 %v1243
        %v1327 = vpop.f32.mrf.mxu0
        %v1328 = vadd.f32 0.0, %v1327
        %v1329 = vpop.f32.mrf.mxu0
        %v1330 = vpop.f32.mrf.mxu0
        %v1331 = vadd.f32 0.0, %v1330
        %v1332 = vpop.f32.mrf.mxu0
        %1333 = vdwg.mxu0
        %v1334 = vadd.f32 %v1214, %v1328
        %v1335 = vadd.f32 %v1217, %v1331
        %v1336 = vld [vmem:[#allocation2 + $0x8] sm:$0x3]
        %s1337 = scalar_lea.vmem [#allocation8], 192
        %v1338 = vld [vmem:[%s1337] sm:$0xf]
        %v1339 = vld [vmem:[%s1337 + $0x4] sm:$0xf]
        %v1340 = vld [vmem:[%s1337 + $0x8] sm:$0xf]
        %v1341 = vld [vmem:[%s1337 + $0xc] sm:$0xf]
        %v1342 = vld [vmem:[%s1337 + $0x10] sm:$0xf]
        %v1343 = vld [vmem:[%s1337 + $0x14] sm:$0xf]
        %v1344 = vld [vmem:[%s1337 + $0x18] sm:$0xf]
        %v1345 = vld [vmem:[%s1337 + $0x1c] sm:$0xf]
        %v1346 = vld [vmem:[%s1337 + $0x20] sm:$0xf]
        %v1347 = vld [vmem:[%s1337 + $0x24] sm:$0xf]
        %v1348 = vld [vmem:[%s1337 + $0x28] sm:$0xf]
        %v1349 = vld [vmem:[%s1337 + $0x2c] sm:$0xf]
        %v1350 = vld [vmem:[%s1337 + $0x30] sm:$0xf]
        %v1351 = vld [vmem:[%s1337 + $0x34] sm:$0xf]
        %v1352 = vld [vmem:[%s1337 + $0x38] sm:$0xf]
        %v1353 = vld [vmem:[%s1337 + $0x3c] sm:$0xf]
        %v1355 = vunpack.c.l.b16 %v1336
        %v1356 = vpack.c.b16 %v1355, %v1355
        %v1358 = vshrl.u32 %v1240, 16
        %v1360 = vrot.slane %v1358, 1
        %v1361 = vshll.u32 %v1240, 16
        %v1363 = vrot.slane %v1361, 2
        %v1364 = vor.u32 %v1360, %v1363
        %v1366 = vshrl.u32 %v1356, 16
        %v1368 = vrot.slane %v1366, 1
        %v1369 = vshll.u32 %v1356, 16
        %v1371 = vrot.slane %v1369, 2
        %v1372 = vor.u32 %v1368, %v1371
        %v1373 = vsel %vm717, %v1364, %v1372
        %v1391 = vunpack.c.l.b16 %v1338
        %v1392 = vunpack.c.l.b16 %v1339
        %v1393 = vunpack.c.l.b16 %v1340
        %v1394 = vunpack.c.l.b16 %v1341
        %v1395 = vunpack.c.l.b16 %v1342
        %v1396 = vunpack.c.l.b16 %v1343
        %v1397 = vunpack.c.l.b16 %v1344
        %v1398 = vunpack.c.l.b16 %v1345
        %v1399 = vunpack.c.l.b16 %v1346
        %v1400 = vunpack.c.l.b16 %v1347
        %v1401 = vunpack.c.l.b16 %v1348
        %v1402 = vunpack.c.l.b16 %v1349
        %v1403 = vunpack.c.l.b16 %v1350
        %v1404 = vunpack.c.l.b16 %v1351
        %v1405 = vunpack.c.l.b16 %v1352
        %v1406 = vunpack.c.l.b16 %v1353
        %v1407 = vpack.c.b16 %v1392, %v1391
        %v1408 = vpack.c.b16 %v1394, %v1393
        %v1409 = vpack.c.b16 %v1396, %v1395
        %v1410 = vpack.c.b16 %v1398, %v1397
        %v1411 = vpack.c.b16 %v1400, %v1399
        %v1412 = vpack.c.b16 %v1402, %v1401
        %v1413 = vpack.c.b16 %v1404, %v1403
        %v1414 = vpack.c.b16 %v1406, %v1405
        %1423 = vmatprep.subr.bf16.mxu0 0
        %1424 = vmatpush1.bf16.msra.mxu0 %v1414
        %1425 = vmatprep.subr.bf16.mxu0 0
        %1426 = vmatpush1.bf16.msra.mxu0 %v1413
        %1427 = vmatprep.subr.bf16.mxu0 0
        %1428 = vmatpush1.bf16.msra.mxu0 %v1412
        %1429 = vmatprep.subr.bf16.mxu0 0
        %1430 = vmatpush1.bf16.msra.mxu0 %v1411
        %1431 = vmatprep.subr.bf16.mxu0 0
        %1432 = vmatpush1.bf16.msra.mxu0 %v1410
        %1433 = vmatprep.subr.bf16.mxu0 0
        %1434 = vmatpush1.bf16.msra.mxu0 %v1409
        %1435 = vmatprep.subr.bf16.mxu0 0
        %1436 = vmatpush1.bf16.msra.mxu0 %v1408
        %1437 = vmatprep.subr.bf16.mxu0 0
        %1438 = vmatpush1.bf16.msra.mxu0 %v1407
        %1439 = vmatprep.subr.bf16.mxu0 0
        %1440 = vmatpush2.bf16.msra.mxu0 0
        %1441 = vmatprep.subr.bf16.mxu0 0
        %1442 = vmatpush2.bf16.msra.mxu0 0
        %1443 = vmatprep.subr.bf16.mxu0 0
        %1444 = vmatpush2.bf16.msra.mxu0 0
        %1445 = vmatprep.subr.bf16.mxu0 0
        %1446 = vmatpush2.bf16.msra.mxu0 0
        %1447 = vmatprep.subr.bf16.mxu0 0
        %1448 = vmatpush2.bf16.msra.mxu0 0
        %1449 = vmatprep.subr.bf16.mxu0 0
        %1450 = vmatpush2.bf16.msra.mxu0 0
        %1451 = vmatprep.subr.bf16.mxu0 0
        %1452 = vmatpush2.bf16.msra.mxu0 0
        %1453 = vmatprep.subr.bf16.mxu0 0
        %1454 = vmatpush2.bf16.msra.mxu0 0
        %1455 = vmatprep.mubr.bf16.mxu0 0
        %1456 = vmatmul.mubr.bf16.gmra.mxu0 %v1373
        %v1457 = vpop.f32.mrf.mxu0
        %v1458 = vadd.f32 0.0, %v1457
        %v1459 = vpop.f32.mrf.mxu0
        %v1460 = vpop.f32.mrf.mxu0
        %v1461 = vadd.f32 0.0, %v1460
        %v1462 = vpop.f32.mrf.mxu0
        %1463 = vdwg.mxu0
        %v1464 = vadd.f32 %v1334, %v1458
        %v1465 = vadd.f32 %v1335, %v1461
        %v1466 = vld [vmem:[#allocation2] sm:$0xc]
        %s1467 = scalar_lea.vmem [#allocation8], 256
        %v1468 = vld [vmem:[%s1467] sm:$0xf]
        %v1469 = vld [vmem:[%s1467 + $0x4] sm:$0xf]
        %v1470 = vld [vmem:[%s1467 + $0x8] sm:$0xf]
        %v1471 = vld [vmem:[%s1467 + $0xc] sm:$0xf]
        %v1472 = vld [vmem:[%s1467 + $0x10] sm:$0xf]
        %v1473 = vld [vmem:[%s1467 + $0x14] sm:$0xf]
        %v1474 = vld [vmem:[%s1467 + $0x18] sm:$0xf]
        %v1475 = vld [vmem:[%s1467 + $0x1c] sm:$0xf]
        %v1476 = vld [vmem:[%s1467 + $0x20] sm:$0xf]
        %v1477 = vld [vmem:[%s1467 + $0x24] sm:$0xf]
        %v1478 = vld [vmem:[%s1467 + $0x28] sm:$0xf]
        %v1479 = vld [vmem:[%s1467 + $0x2c] sm:$0xf]
        %v1480 = vld [vmem:[%s1467 + $0x30] sm:$0xf]
        %v1481 = vld [vmem:[%s1467 + $0x34] sm:$0xf]
        %v1482 = vld [vmem:[%s1467 + $0x38] sm:$0xf]
        %v1483 = vld [vmem:[%s1467 + $0x3c] sm:$0xf]
        %v1485 = vunpack.c.l.b16 %v1466
        %v1486 = vpack.c.b16 %v1024, %v1485
        %v1487 = vrot.slane %v1486, 2
        %v1488 = vrot.slane %v1356, 2
        %v1489 = vsel %vm848, %v1487, %v1488
        %v1507 = vunpack.c.l.b16 %v1468
        %v1508 = vunpack.c.l.b16 %v1469
        %v1509 = vunpack.c.l.b16 %v1470
        %v1510 = vunpack.c.l.b16 %v1471
        %v1511 = vunpack.c.l.b16 %v1472
        %v1512 = vunpack.c.l.b16 %v1473
        %v1513 = vunpack.c.l.b16 %v1474
        %v1514 = vunpack.c.l.b16 %v1475
        %v1515 = vunpack.c.l.b16 %v1476
        %v1516 = vunpack.c.l.b16 %v1477
        %v1517 = vunpack.c.l.b16 %v1478
        %v1518 = vunpack.c.l.b16 %v1479
        %v1519 = vunpack.c.l.b16 %v1480
        %v1520 = vunpack.c.l.b16 %v1481
        %v1521 = vunpack.c.l.b16 %v1482
        %v1522 = vunpack.c.l.b16 %v1483
        %v1523 = vpack.c.b16 %v1508, %v1507
        %v1524 = vpack.c.b16 %v1510, %v1509
        %v1525 = vpack.c.b16 %v1512, %v1511
        %v1526 = vpack.c.b16 %v1514, %v1513
        %v1527 = vpack.c.b16 %v1516, %v1515
        %v1528 = vpack.c.b16 %v1518, %v1517
        %v1529 = vpack.c.b16 %v1520, %v1519
        %v1530 = vpack.c.b16 %v1522, %v1521
        %1539 = vmatprep.subr.bf16.mxu0 0
        %1540 = vmatpush1.bf16.msra.mxu0 %v1530
        %1541 = vmatprep.subr.bf16.mxu0 0
        %1542 = vmatpush1.bf16.msra.mxu0 %v1529
        %1543 = vmatprep.subr.bf16.mxu0 0
        %1544 = vmatpush1.bf16.msra.mxu0 %v1528
        %1545 = vmatprep.subr.bf16.mxu0 0
        %1546 = vmatpush1.bf16.msra.mxu0 %v1527
        %1547 = vmatprep.subr.bf16.mxu0 0
        %1548 = vmatpush1.bf16.msra.mxu0 %v1526
        %1549 = vmatprep.subr.bf16.mxu0 0
        %1550 = vmatpush1.bf16.msra.mxu0 %v1525
        %1551 = vmatprep.subr.bf16.mxu0 0
        %1552 = vmatpush1.bf16.msra.mxu0 %v1524
        %1553 = vmatprep.subr.bf16.mxu0 0
        %1554 = vmatpush1.bf16.msra.mxu0 %v1523
        %1555 = vmatprep.subr.bf16.mxu0 0
        %1556 = vmatpush2.bf16.msra.mxu0 0
        %1557 = vmatprep.subr.bf16.mxu0 0
        %1558 = vmatpush2.bf16.msra.mxu0 0
        %1559 = vmatprep.subr.bf16.mxu0 0
        %1560 = vmatpush2.bf16.msra.mxu0 0
        %1561 = vmatprep.subr.bf16.mxu0 0
        %1562 = vmatpush2.bf16.msra.mxu0 0
        %1563 = vmatprep.subr.bf16.mxu0 0
        %1564 = vmatpush2.bf16.msra.mxu0 0
        %1565 = vmatprep.subr.bf16.mxu0 0
        %1566 = vmatpush2.bf16.msra.mxu0 0
        %1567 = vmatprep.subr.bf16.mxu0 0
        %1568 = vmatpush2.bf16.msra.mxu0 0
        %1569 = vmatprep.subr.bf16.mxu0 0
        %1570 = vmatpush2.bf16.msra.mxu0 0
        %1571 = vmatprep.mubr.bf16.mxu0 0
        %1572 = vmatmul.mubr.bf16.gmra.mxu0 %v1489
        %v1573 = vpop.f32.mrf.mxu0
        %v1574 = vadd.f32 0.0, %v1573
        %v1575 = vpop.f32.mrf.mxu0
        %v1576 = vpop.f32.mrf.mxu0
        %v1577 = vadd.f32 0.0, %v1576
        %v1578 = vpop.f32.mrf.mxu0
        %1579 = vdwg.mxu0
        %v1580 = vadd.f32 %v1464, %v1574
        %v1581 = vadd.f32 %v1465, %v1577
        %s1582 = scalar_lea.vmem %s4, 1
        %v1583 = vld [vmem:[%s1582] sm:$0x1]
        %v1585 = vlaneseq
        %v1586 = vshrl.u32 %v1585, 7
        %v1587 = vsub.s32 0, %v1586
        %v1588 = vrot.slane %v1583, %v1587
        %v1590 = vadd.f32 %v1580, %v1588
        %v1591 = vadd.f32 %v1581, %v1588
        %v1592 = vpack.c.bf16 %v1591, %v1590
        %v1593 = vtanh.bf16.pop %v1592
        %v1594 = vsel %vm966, %v1593, 0
        %v1596 = vunpack.c.l.b16 %v1594
        %v1597 = vunpack.c.h.b16 %v1594
        %v1598 = vpack.c.b16 %v1596, %v1596
        %v1599 = vpack.c.b16 %v1597, %v1597
        %v1600 = vrot.slane %v1598, 7
        %v1601 = vrot.slane %v1600, 4
        %v1602 = vrot.slane %v1599, 7
        %v1603 = vsel %vm325, %v1601, %v1602
        %v1604 = vrot.slane %v1602, 4
        %1608 = vst [vmem:[#allocation2] sm:$0xe] %v1600
        %1609 = vst [vmem:[#allocation2 + $0x4] sm:$0xf] %v1603
        %1610 = vst [vmem:[#allocation2 + $0x8] sm:$0x1] %v1604
        %v1611 = vld [vmem:[#allocation2] sm:$0xf]
        %v1612 = vld [vmem:[#allocation2 + $0x4] sm:$0xf]
        %s1613 = scalar_lea.vmem [#allocation8], 320
        %v1614 = vld [vmem:[%s1613] sm:$0xf]
        %v1615 = vld [vmem:[%s1613 + $0x4] sm:$0xf]
        %v1616 = vld [vmem:[%s1613 + $0x8] sm:$0xf]
        %v1617 = vld [vmem:[%s1613 + $0xc] sm:$0xf]
        %v1618 = vld [vmem:[%s1613 + $0x10] sm:$0xf]
        %v1619 = vld [vmem:[%s1613 + $0x14] sm:$0xf]
        %v1620 = vld [vmem:[%s1613 + $0x18] sm:$0xf]
        %v1621 = vld [vmem:[%s1613 + $0x1c] sm:$0xf]
        %v1622 = vld [vmem:[%s1613 + $0x20] sm:$0xf]
        %v1623 = vld [vmem:[%s1613 + $0x24] sm:$0xf]
        %v1624 = vld [vmem:[%s1613 + $0x28] sm:$0xf]
        %v1625 = vld [vmem:[%s1613 + $0x2c] sm:$0xf]
        %v1626 = vld [vmem:[%s1613 + $0x30] sm:$0xf]
        %v1627 = vld [vmem:[%s1613 + $0x34] sm:$0xf]
        %v1628 = vld [vmem:[%s1613 + $0x38] sm:$0xf]
        %v1629 = vld [vmem:[%s1613 + $0x3c] sm:$0xf]
        %v1630 = vld [vmem:[#allocation2 + $0x8] sm:$0x1]
        %s1631 = scalar_lea.vmem [#allocation8], 384
        %v1632 = vld [vmem:[%s1631] sm:$0xf]
        %v1633 = vld [vmem:[%s1631 + $0x4] sm:$0xf]
        %v1634 = vld [vmem:[%s1631 + $0x8] sm:$0xf]
        %v1635 = vld [vmem:[%s1631 + $0xc] sm:$0xf]
        %v1636 = vld [vmem:[%s1631 + $0x10] sm:$0xf]
        %v1637 = vld [vmem:[%s1631 + $0x14] sm:$0xf]
        %v1638 = vld [vmem:[%s1631 + $0x18] sm:$0xf]
        %v1639 = vld [vmem:[%s1631 + $0x1c] sm:$0xf]
        %v1640 = vld [vmem:[%s1631 + $0x20] sm:$0xf]
        %v1641 = vld [vmem:[%s1631 + $0x24] sm:$0xf]
        %v1642 = vld [vmem:[%s1631 + $0x28] sm:$0xf]
        %v1643 = vld [vmem:[%s1631 + $0x2c] sm:$0xf]
        %v1644 = vld [vmem:[%s1631 + $0x30] sm:$0xf]
        %v1645 = vld [vmem:[%s1631 + $0x34] sm:$0xf]
        %v1646 = vld [vmem:[%s1631 + $0x38] sm:$0xf]
        %v1647 = vld [vmem:[%s1631 + $0x3c] sm:$0xf]
        %v1651 = vunpack.c.l.b16 %v1611
        %v1652 = vunpack.c.l.b16 %v1612
        %v1653 = vunpack.c.l.b16 %v1630
        %v1654 = vpack.c.b16 %v1652, %v1651
        %v1655 = vpack.c.b16 %v1653, %v1653
        %v1657 = vshrl.u32 %v1654, 16
        %v1659 = vshll.u32 %v1654, 16
        %v1661 = vrot.slane %v1659, 1
        %v1662 = vor.u32 %v1657, %v1661
        %v1664 = vshll.u32 %v1655, 16
        %v1666 = vrot.slane %v1664, 1
        %v1667 = vsel %vm386, %v1662, %v1666
        %v1685 = vunpack.c.l.b16 %v1632
        %v1686 = vunpack.c.l.b16 %v1633
        %v1687 = vunpack.c.l.b16 %v1634
        %v1688 = vunpack.c.l.b16 %v1635
        %v1689 = vunpack.c.l.b16 %v1636
        %v1690 = vunpack.c.l.b16 %v1637
        %v1691 = vunpack.c.l.b16 %v1638
        %v1692 = vunpack.c.l.b16 %v1639
        %v1693 = vunpack.c.l.b16 %v1640
        %v1694 = vunpack.c.l.b16 %v1641
        %v1695 = vunpack.c.l.b16 %v1642
        %v1696 = vunpack.c.l.b16 %v1643
        %v1697 = vunpack.c.l.b16 %v1644
        %v1698 = vunpack.c.l.b16 %v1645
        %v1699 = vunpack.c.l.b16 %v1646
        %v1700 = vunpack.c.l.b16 %v1647
        %v1701 = vpack.c.b16 %v1686, %v1685
        %v1702 = vpack.c.b16 %v1688, %v1687
        %v1703 = vpack.c.b16 %v1690, %v1689
        %v1704 = vpack.c.b16 %v1692, %v1691
        %v1705 = vpack.c.b16 %v1694, %v1693
        %v1706 = vpack.c.b16 %v1696, %v1695
        %v1707 = vpack.c.b16 %v1698, %v1697
        %v1708 = vpack.c.b16 %v1700, %v1699
        %1717 = vmatprep.subr.bf16.mxu0 0
        %1718 = vmatpush1.bf16.msra.mxu0 %v1708
        %1719 = vmatprep.subr.bf16.mxu0 0
        %1720 = vmatpush1.bf16.msra.mxu0 %v1707
        %1721 = vmatprep.subr.bf16.mxu0 0
        %1722 = vmatpush1.bf16.msra.mxu0 %v1706
        %1723 = vmatprep.subr.bf16.mxu0 0
        %1724 = vmatpush1.bf16.msra.mxu0 %v1705
        %1725 = vmatprep.subr.bf16.mxu0 0
        %1726 = vmatpush1.bf16.msra.mxu0 %v1704
        %1727 = vmatprep.subr.bf16.mxu0 0
        %1728 = vmatpush1.bf16.msra.mxu0 %v1703
        %1729 = vmatprep.subr.bf16.mxu0 0
        %1730 = vmatpush1.bf16.msra.mxu0 %v1702
        %1731 = vmatprep.subr.bf16.mxu0 0
        %1732 = vmatpush1.bf16.msra.mxu0 %v1701
        %1733 = vmatprep.subr.bf16.mxu0 0
        %1734 = vmatpush2.bf16.msra.mxu0 0
        %1735 = vmatprep.subr.bf16.mxu0 0
        %1736 = vmatpush2.bf16.msra.mxu0 0
        %1737 = vmatprep.subr.bf16.mxu0 0
        %1738 = vmatpush2.bf16.msra.mxu0 0
        %1739 = vmatprep.subr.bf16.mxu0 0
        %1740 = vmatpush2.bf16.msra.mxu0 0
        %1741 = vmatprep.subr.bf16.mxu0 0
        %1742 = vmatpush2.bf16.msra.mxu0 0
        %1743 = vmatprep.subr.bf16.mxu0 0
        %1744 = vmatpush2.bf16.msra.mxu0 0
        %1745 = vmatprep.subr.bf16.mxu0 0
        %1746 = vmatpush2.bf16.msra.mxu0 0
        %1747 = vmatprep.subr.bf16.mxu0 0
        %1748 = vmatpush2.bf16.msra.mxu0 0
        %1749 = vmatprep.mubr.bf16.mxu0 0
        %1750 = vmatmul.mubr.bf16.gmra.mxu0 %v1667
        %v1751 = vpop.f32.mrf.mxu0
        %v1752 = vadd.f32 0.0, %v1751
        %v1753 = vpop.f32.mrf.mxu0
        %v1754 = vpop.f32.mrf.mxu0
        %v1755 = vadd.f32 0.0, %v1754
        %v1756 = vpop.f32.mrf.mxu0
        %1757 = vdwg.mxu0
        %v1775 = vunpack.c.l.b16 %v1614
        %v1776 = vunpack.c.l.b16 %v1615
        %v1777 = vunpack.c.l.b16 %v1616
        %v1778 = vunpack.c.l.b16 %v1617
        %v1779 = vunpack.c.l.b16 %v1618
        %v1780 = vunpack.c.l.b16 %v1619
        %v1781 = vunpack.c.l.b16 %v1620
        %v1782 = vunpack.c.l.b16 %v1621
        %v1783 = vunpack.c.l.b16 %v1622
        %v1784 = vunpack.c.l.b16 %v1623
        %v1785 = vunpack.c.l.b16 %v1624
        %v1786 = vunpack.c.l.b16 %v1625
        %v1787 = vunpack.c.l.b16 %v1626
        %v1788 = vunpack.c.l.b16 %v1627
        %v1789 = vunpack.c.l.b16 %v1628
        %v1790 = vunpack.c.l.b16 %v1629
        %v1791 = vpack.c.b16 %v1776, %v1775
        %v1792 = vpack.c.b16 %v1778, %v1777
        %v1793 = vpack.c.b16 %v1780, %v1779
        %v1794 = vpack.c.b16 %v1782, %v1781
        %v1795 = vpack.c.b16 %v1784, %v1783
        %v1796 = vpack.c.b16 %v1786, %v1785
        %v1797 = vpack.c.b16 %v1788, %v1787
        %v1798 = vpack.c.b16 %v1790, %v1789
        %1807 = vmatprep.subr.bf16.mxu0 0
        %1808 = vmatpush1.bf16.msra.mxu0 %v1798
        %1809 = vmatprep.subr.bf16.mxu0 0
        %1810 = vmatpush1.bf16.msra.mxu0 %v1797
        %1811 = vmatprep.subr.bf16.mxu0 0
        %1812 = vmatpush1.bf16.msra.mxu0 %v1796
        %1813 = vmatprep.subr.bf16.mxu0 0
        %1814 = vmatpush1.bf16.msra.mxu0 %v1795
        %1815 = vmatprep.subr.bf16.mxu0 0
        %1816 = vmatpush1.bf16.msra.mxu0 %v1794
        %1817 = vmatprep.subr.bf16.mxu0 0
        %1818 = vmatpush1.bf16.msra.mxu0 %v1793
        %1819 = vmatprep.subr.bf16.mxu0 0
        %1820 = vmatpush1.bf16.msra.mxu0 %v1792
        %1821 = vmatprep.subr.bf16.mxu0 0
        %1822 = vmatpush1.bf16.msra.mxu0 %v1791
        %1823 = vmatprep.subr.bf16.mxu0 0
        %1824 = vmatpush2.bf16.msra.mxu0 0
        %1825 = vmatprep.subr.bf16.mxu0 0
        %1826 = vmatpush2.bf16.msra.mxu0 0
        %1827 = vmatprep.subr.bf16.mxu0 0
        %1828 = vmatpush2.bf16.msra.mxu0 0
        %1829 = vmatprep.subr.bf16.mxu0 0
        %1830 = vmatpush2.bf16.msra.mxu0 0
        %1831 = vmatprep.subr.bf16.mxu0 0
        %1832 = vmatpush2.bf16.msra.mxu0 0
        %1833 = vmatprep.subr.bf16.mxu0 0
        %1834 = vmatpush2.bf16.msra.mxu0 0
        %1835 = vmatprep.subr.bf16.mxu0 0
        %1836 = vmatpush2.bf16.msra.mxu0 0
        %1837 = vmatprep.subr.bf16.mxu0 0
        %1838 = vmatpush2.bf16.msra.mxu0 0
        %1839 = vmatprep.mubr.bf16.mxu0 0
        %1840 = vmatmul.mubr.bf16.gmra.mxu0 %v1654
        %v1841 = vpop.f32.mrf.mxu0
        %v1842 = vadd.f32 %v1752, %v1841
        %v1843 = vpop.f32.mrf.mxu0
        %v1844 = vpop.f32.mrf.mxu0
        %v1845 = vadd.f32 %v1755, %v1844
        %v1846 = vpop.f32.mrf.mxu0
        %1847 = vdwg.mxu0
        %v1848 = vld [vmem:[#allocation2] sm:$0xe]
        %s1849 = scalar_lea.vmem [#allocation8], 448
        %v1850 = vld [vmem:[%s1849] sm:$0xf]
        %v1851 = vld [vmem:[%s1849 + $0x4] sm:$0xf]
        %v1852 = vld [vmem:[%s1849 + $0x8] sm:$0xf]
        %v1853 = vld [vmem:[%s1849 + $0xc] sm:$0xf]
        %v1854 = vld [vmem:[%s1849 + $0x10] sm:$0xf]
        %v1855 = vld [vmem:[%s1849 + $0x14] sm:$0xf]
        %v1856 = vld [vmem:[%s1849 + $0x18] sm:$0xf]
        %v1857 = vld [vmem:[%s1849 + $0x1c] sm:$0xf]
        %v1858 = vld [vmem:[%s1849 + $0x20] sm:$0xf]
        %v1859 = vld [vmem:[%s1849 + $0x24] sm:$0xf]
        %v1860 = vld [vmem:[%s1849 + $0x28] sm:$0xf]
        %v1861 = vld [vmem:[%s1849 + $0x2c] sm:$0xf]
        %v1862 = vld [vmem:[%s1849 + $0x30] sm:$0xf]
        %v1863 = vld [vmem:[%s1849 + $0x34] sm:$0xf]
        %v1864 = vld [vmem:[%s1849 + $0x38] sm:$0xf]
        %v1865 = vld [vmem:[%s1849 + $0x3c] sm:$0xf]
        %v1867 = vunpack.c.l.b16 %v1848
        %v1868 = vpack.c.b16 %v1652, %v1867
        %v1869 = vrot.slane %v1868, 1
        %v1870 = vrot.slane %v1655, 1
        %v1871 = vsel %vm600, %v1869, %v1870
        %v1889 = vunpack.c.l.b16 %v1850
        %v1890 = vunpack.c.l.b16 %v1851
        %v1891 = vunpack.c.l.b16 %v1852
        %v1892 = vunpack.c.l.b16 %v1853
        %v1893 = vunpack.c.l.b16 %v1854
        %v1894 = vunpack.c.l.b16 %v1855
        %v1895 = vunpack.c.l.b16 %v1856
        %v1896 = vunpack.c.l.b16 %v1857
        %v1897 = vunpack.c.l.b16 %v1858
        %v1898 = vunpack.c.l.b16 %v1859
        %v1899 = vunpack.c.l.b16 %v1860
        %v1900 = vunpack.c.l.b16 %v1861
        %v1901 = vunpack.c.l.b16 %v1862
        %v1902 = vunpack.c.l.b16 %v1863
        %v1903 = vunpack.c.l.b16 %v1864
        %v1904 = vunpack.c.l.b16 %v1865
        %v1905 = vpack.c.b16 %v1890, %v1889
        %v1906 = vpack.c.b16 %v1892, %v1891
        %v1907 = vpack.c.b16 %v1894, %v1893
        %v1908 = vpack.c.b16 %v1896, %v1895
        %v1909 = vpack.c.b16 %v1898, %v1897
        %v1910 = vpack.c.b16 %v1900, %v1899
        %v1911 = vpack.c.b16 %v1902, %v1901
        %v1912 = vpack.c.b16 %v1904, %v1903
        %1921 = vmatprep.subr.bf16.mxu0 0
        %1922 = vmatpush1.bf16.msra.mxu0 %v1912
        %1923 = vmatprep.subr.bf16.mxu0 0
        %1924 = vmatpush1.bf16.msra.mxu0 %v1911
        %1925 = vmatprep.subr.bf16.mxu0 0
        %1926 = vmatpush1.bf16.msra.mxu0 %v1910
        %1927 = vmatprep.subr.bf16.mxu0 0
        %1928 = vmatpush1.bf16.msra.mxu0 %v1909
        %1929 = vmatprep.subr.bf16.mxu0 0
        %1930 = vmatpush1.bf16.msra.mxu0 %v1908
        %1931 = vmatprep.subr.bf16.mxu0 0
        %1932 = vmatpush1.bf16.msra.mxu0 %v1907
        %1933 = vmatprep.subr.bf16.mxu0 0
        %1934 = vmatpush1.bf16.msra.mxu0 %v1906
        %1935 = vmatprep.subr.bf16.mxu0 0
        %1936 = vmatpush1.bf16.msra.mxu0 %v1905
        %1937 = vmatprep.subr.bf16.mxu0 0
        %1938 = vmatpush2.bf16.msra.mxu0 0
        %1939 = vmatprep.subr.bf16.mxu0 0
        %1940 = vmatpush2.bf16.msra.mxu0 0
        %1941 = vmatprep.subr.bf16.mxu0 0
        %1942 = vmatpush2.bf16.msra.mxu0 0
        %1943 = vmatprep.subr.bf16.mxu0 0
        %1944 = vmatpush2.bf16.msra.mxu0 0
        %1945 = vmatprep.subr.bf16.mxu0 0
        %1946 = vmatpush2.bf16.msra.mxu0 0
        %1947 = vmatprep.subr.bf16.mxu0 0
        %1948 = vmatpush2.bf16.msra.mxu0 0
        %1949 = vmatprep.subr.bf16.mxu0 0
        %1950 = vmatpush2.bf16.msra.mxu0 0
        %1951 = vmatprep.subr.bf16.mxu0 0
        %1952 = vmatpush2.bf16.msra.mxu0 0
        %1953 = vmatprep.mubr.bf16.mxu0 0
        %1954 = vmatmul.mubr.bf16.gmra.mxu0 %v1871
        %v1955 = vpop.f32.mrf.mxu0
        %v1956 = vadd.f32 0.0, %v1955
        %v1957 = vpop.f32.mrf.mxu0
        %v1958 = vpop.f32.mrf.mxu0
        %v1959 = vadd.f32 0.0, %v1958
        %v1960 = vpop.f32.mrf.mxu0
        %1961 = vdwg.mxu0
        %v1962 = vadd.f32 %v1842, %v1956
        %v1963 = vadd.f32 %v1845, %v1959
        %v1964 = vld [vmem:[#allocation2 + $0x8] sm:$0x3]
        %s1965 = scalar_lea.vmem [#allocation8], 512
        %v1966 = vld [vmem:[%s1965] sm:$0xf]
        %v1967 = vld [vmem:[%s1965 + $0x4] sm:$0xf]
        %v1968 = vld [vmem:[%s1965 + $0x8] sm:$0xf]
        %v1969 = vld [vmem:[%s1965 + $0xc] sm:$0xf]
        %v1970 = vld [vmem:[%s1965 + $0x10] sm:$0xf]
        %v1971 = vld [vmem:[%s1965 + $0x14] sm:$0xf]
        %v1972 = vld [vmem:[%s1965 + $0x18] sm:$0xf]
        %v1973 = vld [vmem:[%s1965 + $0x1c] sm:$0xf]
        %v1974 = vld [vmem:[%s1965 + $0x20] sm:$0xf]
        %v1975 = vld [vmem:[%s1965 + $0x24] sm:$0xf]
        %v1976 = vld [vmem:[%s1965 + $0x28] sm:$0xf]
        %v1977 = vld [vmem:[%s1965 + $0x2c] sm:$0xf]
        %v1978 = vld [vmem:[%s1965 + $0x30] sm:$0xf]
        %v1979 = vld [vmem:[%s1965 + $0x34] sm:$0xf]
        %v1980 = vld [vmem:[%s1965 + $0x38] sm:$0xf]
        %v1981 = vld [vmem:[%s1965 + $0x3c] sm:$0xf]
        %v1983 = vunpack.c.l.b16 %v1964
        %v1984 = vpack.c.b16 %v1983, %v1983
        %v1986 = vshrl.u32 %v1868, 16
        %v1988 = vrot.slane %v1986, 1
        %v1989 = vshll.u32 %v1868, 16
        %v1991 = vrot.slane %v1989, 2
        %v1992 = vor.u32 %v1988, %v1991
        %v1994 = vshrl.u32 %v1984, 16
        %v1996 = vrot.slane %v1994, 1
        %v1997 = vshll.u32 %v1984, 16
        %v1999 = vrot.slane %v1997, 2
        %v2000 = vor.u32 %v1996, %v1999
        %v2001 = vsel %vm717, %v1992, %v2000
        %v2019 = vunpack.c.l.b16 %v1966
        %v2020 = vunpack.c.l.b16 %v1967
        %v2021 = vunpack.c.l.b16 %v1968
        %v2022 = vunpack.c.l.b16 %v1969
        %v2023 = vunpack.c.l.b16 %v1970
        %v2024 = vunpack.c.l.b16 %v1971
        %v2025 = vunpack.c.l.b16 %v1972
        %v2026 = vunpack.c.l.b16 %v1973
        %v2027 = vunpack.c.l.b16 %v1974
        %v2028 = vunpack.c.l.b16 %v1975
        %v2029 = vunpack.c.l.b16 %v1976
        %v2030 = vunpack.c.l.b16 %v1977
        %v2031 = vunpack.c.l.b16 %v1978
        %v2032 = vunpack.c.l.b16 %v1979
        %v2033 = vunpack.c.l.b16 %v1980
        %v2034 = vunpack.c.l.b16 %v1981
        %v2035 = vpack.c.b16 %v2020, %v2019
        %v2036 = vpack.c.b16 %v2022, %v2021
        %v2037 = vpack.c.b16 %v2024, %v2023
        %v2038 = vpack.c.b16 %v2026, %v2025
        %v2039 = vpack.c.b16 %v2028, %v2027
        %v2040 = vpack.c.b16 %v2030, %v2029
        %v2041 = vpack.c.b16 %v2032, %v2031
        %v2042 = vpack.c.b16 %v2034, %v2033
        %2051 = vmatprep.subr.bf16.mxu0 0
        %2052 = vmatpush1.bf16.msra.mxu0 %v2042
        %2053 = vmatprep.subr.bf16.mxu0 0
        %2054 = vmatpush1.bf16.msra.mxu0 %v2041
        %2055 = vmatprep.subr.bf16.mxu0 0
        %2056 = vmatpush1.bf16.msra.mxu0 %v2040
        %2057 = vmatprep.subr.bf16.mxu0 0
        %2058 = vmatpush1.bf16.msra.mxu0 %v2039
        %2059 = vmatprep.subr.bf16.mxu0 0
        %2060 = vmatpush1.bf16.msra.mxu0 %v2038
        %2061 = vmatprep.subr.bf16.mxu0 0
        %2062 = vmatpush1.bf16.msra.mxu0 %v2037
        %2063 = vmatprep.subr.bf16.mxu0 0
        %2064 = vmatpush1.bf16.msra.mxu0 %v2036
        %2065 = vmatprep.subr.bf16.mxu0 0
        %2066 = vmatpush1.bf16.msra.mxu0 %v2035
        %2067 = vmatprep.subr.bf16.mxu0 0
        %2068 = vmatpush2.bf16.msra.mxu0 0
        %2069 = vmatprep.subr.bf16.mxu0 0
        %2070 = vmatpush2.bf16.msra.mxu0 0
        %2071 = vmatprep.subr.bf16.mxu0 0
        %2072 = vmatpush2.bf16.msra.mxu0 0
        %2073 = vmatprep.subr.bf16.mxu0 0
        %2074 = vmatpush2.bf16.msra.mxu0 0
        %2075 = vmatprep.subr.bf16.mxu0 0
        %2076 = vmatpush2.bf16.msra.mxu0 0
        %2077 = vmatprep.subr.bf16.mxu0 0
        %2078 = vmatpush2.bf16.msra.mxu0 0
        %2079 = vmatprep.subr.bf16.mxu0 0
        %2080 = vmatpush2.bf16.msra.mxu0 0
        %2081 = vmatprep.subr.bf16.mxu0 0
        %2082 = vmatpush2.bf16.msra.mxu0 0
        %2083 = vmatprep.mubr.bf16.mxu0 0
        %2084 = vmatmul.mubr.bf16.gmra.mxu0 %v2001
        %v2085 = vpop.f32.mrf.mxu0
        %v2086 = vadd.f32 0.0, %v2085
        %v2087 = vpop.f32.mrf.mxu0
        %v2088 = vpop.f32.mrf.mxu0
        %v2089 = vadd.f32 0.0, %v2088
        %v2090 = vpop.f32.mrf.mxu0
        %2091 = vdwg.mxu0
        %v2092 = vadd.f32 %v1962, %v2086
        %v2093 = vadd.f32 %v1963, %v2089
        %v2094 = vld [vmem:[#allocation2] sm:$0xc]
        %s2095 = scalar_lea.vmem [#allocation8], 576
        %v2096 = vld [vmem:[%s2095] sm:$0xf]
        %v2097 = vld [vmem:[%s2095 + $0x4] sm:$0xf]
        %v2098 = vld [vmem:[%s2095 + $0x8] sm:$0xf]
        %v2099 = vld [vmem:[%s2095 + $0xc] sm:$0xf]
        %v2100 = vld [vmem:[%s2095 + $0x10] sm:$0xf]
        %v2101 = vld [vmem:[%s2095 + $0x14] sm:$0xf]
        %v2102 = vld [vmem:[%s2095 + $0x18] sm:$0xf]
        %v2103 = vld [vmem:[%s2095 + $0x1c] sm:$0xf]
        %v2104 = vld [vmem:[%s2095 + $0x20] sm:$0xf]
        %v2105 = vld [vmem:[%s2095 + $0x24] sm:$0xf]
        %v2106 = vld [vmem:[%s2095 + $0x28] sm:$0xf]
        %v2107 = vld [vmem:[%s2095 + $0x2c] sm:$0xf]
        %v2108 = vld [vmem:[%s2095 + $0x30] sm:$0xf]
        %v2109 = vld [vmem:[%s2095 + $0x34] sm:$0xf]
        %v2110 = vld [vmem:[%s2095 + $0x38] sm:$0xf]
        %v2111 = vld [vmem:[%s2095 + $0x3c] sm:$0xf]
        %v2113 = vunpack.c.l.b16 %v2094
        %v2114 = vpack.c.b16 %v1652, %v2113
        %v2115 = vrot.slane %v2114, 2
        %v2116 = vrot.slane %v1984, 2
        %v2117 = vsel %vm848, %v2115, %v2116
        %v2135 = vunpack.c.l.b16 %v2096
        %v2136 = vunpack.c.l.b16 %v2097
        %v2137 = vunpack.c.l.b16 %v2098
        %v2138 = vunpack.c.l.b16 %v2099
        %v2139 = vunpack.c.l.b16 %v2100
        %v2140 = vunpack.c.l.b16 %v2101
        %v2141 = vunpack.c.l.b16 %v2102
        %v2142 = vunpack.c.l.b16 %v2103
        %v2143 = vunpack.c.l.b16 %v2104
        %v2144 = vunpack.c.l.b16 %v2105
        %v2145 = vunpack.c.l.b16 %v2106
        %v2146 = vunpack.c.l.b16 %v2107
        %v2147 = vunpack.c.l.b16 %v2108
        %v2148 = vunpack.c.l.b16 %v2109
        %v2149 = vunpack.c.l.b16 %v2110
        %v2150 = vunpack.c.l.b16 %v2111
        %v2151 = vpack.c.b16 %v2136, %v2135
        %v2152 = vpack.c.b16 %v2138, %v2137
        %v2153 = vpack.c.b16 %v2140, %v2139
        %v2154 = vpack.c.b16 %v2142, %v2141
        %v2155 = vpack.c.b16 %v2144, %v2143
        %v2156 = vpack.c.b16 %v2146, %v2145
        %v2157 = vpack.c.b16 %v2148, %v2147
        %v2158 = vpack.c.b16 %v2150, %v2149
        %2167 = vmatprep.subr.bf16.mxu0 0
        %2168 = vmatpush1.bf16.msra.mxu0 %v2158
        %2169 = vmatprep.subr.bf16.mxu0 0
        %2170 = vmatpush1.bf16.msra.mxu0 %v2157
        %2171 = vmatprep.subr.bf16.mxu0 0
        %2172 = vmatpush1.bf16.msra.mxu0 %v2156
        %2173 = vmatprep.subr.bf16.mxu0 0
        %2174 = vmatpush1.bf16.msra.mxu0 %v2155
        %2175 = vmatprep.subr.bf16.mxu0 0
        %2176 = vmatpush1.bf16.msra.mxu0 %v2154
        %2177 = vmatprep.subr.bf16.mxu0 0
        %2178 = vmatpush1.bf16.msra.mxu0 %v2153
        %2179 = vmatprep.subr.bf16.mxu0 0
        %2180 = vmatpush1.bf16.msra.mxu0 %v2152
        %2181 = vmatprep.subr.bf16.mxu0 0
        %2182 = vmatpush1.bf16.msra.mxu0 %v2151
        %2183 = vmatprep.subr.bf16.mxu0 0
        %2184 = vmatpush2.bf16.msra.mxu0 0
        %2185 = vmatprep.subr.bf16.mxu0 0
        %2186 = vmatpush2.bf16.msra.mxu0 0
        %2187 = vmatprep.subr.bf16.mxu0 0
        %2188 = vmatpush2.bf16.msra.mxu0 0
        %2189 = vmatprep.subr.bf16.mxu0 0
        %2190 = vmatpush2.bf16.msra.mxu0 0
        %2191 = vmatprep.subr.bf16.mxu0 0
        %2192 = vmatpush2.bf16.msra.mxu0 0
        %2193 = vmatprep.subr.bf16.mxu0 0
        %2194 = vmatpush2.bf16.msra.mxu0 0
        %2195 = vmatprep.subr.bf16.mxu0 0
        %2196 = vmatpush2.bf16.msra.mxu0 0
        %2197 = vmatprep.subr.bf16.mxu0 0
        %2198 = vmatpush2.bf16.msra.mxu0 0
        %2199 = vmatprep.mubr.bf16.mxu0 0
        %2200 = vmatmul.mubr.bf16.gmra.mxu0 %v2117
        %v2201 = vpop.f32.mrf.mxu0
        %v2202 = vadd.f32 0.0, %v2201
        %v2203 = vpop.f32.mrf.mxu0
        %v2204 = vpop.f32.mrf.mxu0
        %v2205 = vadd.f32 0.0, %v2204
        %v2206 = vpop.f32.mrf.mxu0
        %2207 = vdwg.mxu0
        %v2208 = vadd.f32 %v2092, %v2202
        %v2209 = vadd.f32 %v2093, %v2205
        %s2210 = scalar_lea.vmem %s4, 2
        %v2211 = vld [vmem:[%s2210] sm:$0x1]
        %v2213 = vlaneseq
        %v2214 = vshrl.u32 %v2213, 7
        %v2215 = vsub.s32 0, %v2214
        %v2216 = vrot.slane %v2211, %v2215
        %v2218 = vadd.f32 %v2208, %v2216
        %v2219 = vadd.f32 %v2209, %v2216
        %v2220 = vpack.c.bf16 %v2219, %v2218
        %v2221 = vtanh.bf16.pop %v2220
        %v2222 = vsel %vm966, %v2221, 0
        %v2224 = vunpack.c.l.b16 %v2222
        %v2225 = vunpack.c.h.b16 %v2222
        %v2226 = vpack.c.b16 %v2224, %v2224
        %v2227 = vpack.c.b16 %v2225, %v2225
        %v2228 = vrot.slane %v2226, 7
        %v2229 = vrot.slane %v2228, 4
        %v2230 = vrot.slane %v2227, 7
        %v2231 = vsel %vm325, %v2229, %v2230
        %v2232 = vrot.slane %v2230, 4
        %2236 = vst [vmem:[#allocation2] sm:$0xe] %v2228
        %2237 = vst [vmem:[#allocation2 + $0x4] sm:$0xf] %v2231
        %2238 = vst [vmem:[#allocation2 + $0x8] sm:$0x1] %v2232
        %v2239 = vld [vmem:[#allocation2] sm:$0xf]
        %v2240 = vld [vmem:[#allocation2 + $0x4] sm:$0xf]
        %s2241 = scalar_lea.vmem [#allocation8], 640
        %v2242 = vld [vmem:[%s2241] sm:$0xf]
        %v2243 = vld [vmem:[%s2241 + $0x4] sm:$0xf]
        %v2244 = vld [vmem:[%s2241 + $0x8] sm:$0xf]
        %v2245 = vld [vmem:[%s2241 + $0xc] sm:$0xf]
        %v2246 = vld [vmem:[%s2241 + $0x10] sm:$0xf]
        %v2247 = vld [vmem:[%s2241 + $0x14] sm:$0xf]
        %v2248 = vld [vmem:[%s2241 + $0x18] sm:$0xf]
        %v2249 = vld [vmem:[%s2241 + $0x1c] sm:$0xf]
        %v2250 = vld [vmem:[%s2241 + $0x20] sm:$0xf]
        %v2251 = vld [vmem:[%s2241 + $0x24] sm:$0xf]
        %v2252 = vld [vmem:[%s2241 + $0x28] sm:$0xf]
        %v2253 = vld [vmem:[%s2241 + $0x2c] sm:$0xf]
        %v2254 = vld [vmem:[%s2241 + $0x30] sm:$0xf]
        %v2255 = vld [vmem:[%s2241 + $0x34] sm:$0xf]
        %v2256 = vld [vmem:[%s2241 + $0x38] sm:$0xf]
        %v2257 = vld [vmem:[%s2241 + $0x3c] sm:$0xf]
        %v2258 = vld [vmem:[#allocation2 + $0x8] sm:$0x1]
        %s2259 = scalar_lea.vmem [#allocation8], 704
        %v2260 = vld [vmem:[%s2259] sm:$0xf]
        %v2261 = vld [vmem:[%s2259 + $0x4] sm:$0xf]
        %v2262 = vld [vmem:[%s2259 + $0x8] sm:$0xf]
        %v2263 = vld [vmem:[%s2259 + $0xc] sm:$0xf]
        %v2264 = vld [vmem:[%s2259 + $0x10] sm:$0xf]
        %v2265 = vld [vmem:[%s2259 + $0x14] sm:$0xf]
        %v2266 = vld [vmem:[%s2259 + $0x18] sm:$0xf]
        %v2267 = vld [vmem:[%s2259 + $0x1c] sm:$0xf]
        %v2268 = vld [vmem:[%s2259 + $0x20] sm:$0xf]
        %v2269 = vld [vmem:[%s2259 + $0x24] sm:$0xf]
        %v2270 = vld [vmem:[%s2259 + $0x28] sm:$0xf]
        %v2271 = vld [vmem:[%s2259 + $0x2c] sm:$0xf]
        %v2272 = vld [vmem:[%s2259 + $0x30] sm:$0xf]
        %v2273 = vld [vmem:[%s2259 + $0x34] sm:$0xf]
        %v2274 = vld [vmem:[%s2259 + $0x38] sm:$0xf]
        %v2275 = vld [vmem:[%s2259 + $0x3c] sm:$0xf]
        %v2279 = vunpack.c.l.b16 %v2239
        %v2280 = vunpack.c.l.b16 %v2240
        %v2281 = vunpack.c.l.b16 %v2258
        %v2282 = vpack.c.b16 %v2280, %v2279
        %v2283 = vpack.c.b16 %v2281, %v2281
        %v2285 = vshrl.u32 %v2282, 16
        %v2287 = vshll.u32 %v2282, 16
        %v2289 = vrot.slane %v2287, 1
        %v2290 = vor.u32 %v2285, %v2289
        %v2292 = vshll.u32 %v2283, 16
        %v2294 = vrot.slane %v2292, 1
        %v2295 = vsel %vm386, %v2290, %v2294
        %v2313 = vunpack.c.l.b16 %v2260
        %v2314 = vunpack.c.l.b16 %v2261
        %v2315 = vunpack.c.l.b16 %v2262
        %v2316 = vunpack.c.l.b16 %v2263
        %v2317 = vunpack.c.l.b16 %v2264
        %v2318 = vunpack.c.l.b16 %v2265
        %v2319 = vunpack.c.l.b16 %v2266
        %v2320 = vunpack.c.l.b16 %v2267
        %v2321 = vunpack.c.l.b16 %v2268
        %v2322 = vunpack.c.l.b16 %v2269
        %v2323 = vunpack.c.l.b16 %v2270
        %v2324 = vunpack.c.l.b16 %v2271
        %v2325 = vunpack.c.l.b16 %v2272
        %v2326 = vunpack.c.l.b16 %v2273
        %v2327 = vunpack.c.l.b16 %v2274
        %v2328 = vunpack.c.l.b16 %v2275
        %v2329 = vpack.c.b16 %v2314, %v2313
        %v2330 = vpack.c.b16 %v2316, %v2315
        %v2331 = vpack.c.b16 %v2318, %v2317
        %v2332 = vpack.c.b16 %v2320, %v2319
        %v2333 = vpack.c.b16 %v2322, %v2321
        %v2334 = vpack.c.b16 %v2324, %v2323
        %v2335 = vpack.c.b16 %v2326, %v2325
        %v2336 = vpack.c.b16 %v2328, %v2327
        %2345 = vmatprep.subr.bf16.mxu0 0
        %2346 = vmatpush1.bf16.msra.mxu0 %v2336
        %2347 = vmatprep.subr.bf16.mxu0 0
        %2348 = vmatpush1.bf16.msra.mxu0 %v2335
        %2349 = vmatprep.subr.bf16.mxu0 0
        %2350 = vmatpush1.bf16.msra.mxu0 %v2334
        %2351 = vmatprep.subr.bf16.mxu0 0
        %2352 = vmatpush1.bf16.msra.mxu0 %v2333
        %2353 = vmatprep.subr.bf16.mxu0 0
        %2354 = vmatpush1.bf16.msra.mxu0 %v2332
        %2355 = vmatprep.subr.bf16.mxu0 0
        %2356 = vmatpush1.bf16.msra.mxu0 %v2331
        %2357 = vmatprep.subr.bf16.mxu0 0
        %2358 = vmatpush1.bf16.msra.mxu0 %v2330
        %2359 = vmatprep.subr.bf16.mxu0 0
        %2360 = vmatpush1.bf16.msra.mxu0 %v2329
        %2361 = vmatprep.subr.bf16.mxu0 0
        %2362 = vmatpush2.bf16.msra.mxu0 0
        %2363 = vmatprep.subr.bf16.mxu0 0
        %2364 = vmatpush2.bf16.msra.mxu0 0
        %2365 = vmatprep.subr.bf16.mxu0 0
        %2366 = vmatpush2.bf16.msra.mxu0 0
        %2367 = vmatprep.subr.bf16.mxu0 0
        %2368 = vmatpush2.bf16.msra.mxu0 0
        %2369 = vmatprep.subr.bf16.mxu0 0
        %2370 = vmatpush2.bf16.msra.mxu0 0
        %2371 = vmatprep.subr.bf16.mxu0 0
        %2372 = vmatpush2.bf16.msra.mxu0 0
        %2373 = vmatprep.subr.bf16.mxu0 0
        %2374 = vmatpush2.bf16.msra.mxu0 0
        %2375 = vmatprep.subr.bf16.mxu0 0
        %2376 = vmatpush2.bf16.msra.mxu0 0
        %2377 = vmatprep.mubr.bf16.mxu0 0
        %2378 = vmatmul.mubr.bf16.gmra.mxu0 %v2295
        %v2379 = vpop.f32.mrf.mxu0
        %v2380 = vadd.f32 0.0, %v2379
        %v2381 = vpop.f32.mrf.mxu0
        %v2382 = vpop.f32.mrf.mxu0
        %v2383 = vadd.f32 0.0, %v2382
        %v2384 = vpop.f32.mrf.mxu0
        %2385 = vdwg.mxu0
        %v2403 = vunpack.c.l.b16 %v2242
        %v2404 = vunpack.c.l.b16 %v2243
        %v2405 = vunpack.c.l.b16 %v2244
        %v2406 = vunpack.c.l.b16 %v2245
        %v2407 = vunpack.c.l.b16 %v2246
        %v2408 = vunpack.c.l.b16 %v2247
        %v2409 = vunpack.c.l.b16 %v2248
        %v2410 = vunpack.c.l.b16 %v2249
        %v2411 = vunpack.c.l.b16 %v2250
        %v2412 = vunpack.c.l.b16 %v2251
        %v2413 = vunpack.c.l.b16 %v2252
        %v2414 = vunpack.c.l.b16 %v2253
        %v2415 = vunpack.c.l.b16 %v2254
        %v2416 = vunpack.c.l.b16 %v2255
        %v2417 = vunpack.c.l.b16 %v2256
        %v2418 = vunpack.c.l.b16 %v2257
        %v2419 = vpack.c.b16 %v2404, %v2403
        %v2420 = vpack.c.b16 %v2406, %v2405
        %v2421 = vpack.c.b16 %v2408, %v2407
        %v2422 = vpack.c.b16 %v2410, %v2409
        %v2423 = vpack.c.b16 %v2412, %v2411
        %v2424 = vpack.c.b16 %v2414, %v2413
        %v2425 = vpack.c.b16 %v2416, %v2415
        %v2426 = vpack.c.b16 %v2418, %v2417
        %2435 = vmatprep.subr.bf16.mxu0 0
        %2436 = vmatpush1.bf16.msra.mxu0 %v2426
        %2437 = vmatprep.subr.bf16.mxu0 0
        %2438 = vmatpush1.bf16.msra.mxu0 %v2425
        %2439 = vmatprep.subr.bf16.mxu0 0
        %2440 = vmatpush1.bf16.msra.mxu0 %v2424
        %2441 = vmatprep.subr.bf16.mxu0 0
        %2442 = vmatpush1.bf16.msra.mxu0 %v2423
        %2443 = vmatprep.subr.bf16.mxu0 0
        %2444 = vmatpush1.bf16.msra.mxu0 %v2422
        %2445 = vmatprep.subr.bf16.mxu0 0
        %2446 = vmatpush1.bf16.msra.mxu0 %v2421
        %2447 = vmatprep.subr.bf16.mxu0 0
        %2448 = vmatpush1.bf16.msra.mxu0 %v2420
        %2449 = vmatprep.subr.bf16.mxu0 0
        %2450 = vmatpush1.bf16.msra.mxu0 %v2419
        %2451 = vmatprep.subr.bf16.mxu0 0
        %2452 = vmatpush2.bf16.msra.mxu0 0
        %2453 = vmatprep.subr.bf16.mxu0 0
        %2454 = vmatpush2.bf16.msra.mxu0 0
        %2455 = vmatprep.subr.bf16.mxu0 0
        %2456 = vmatpush2.bf16.msra.mxu0 0
        %2457 = vmatprep.subr.bf16.mxu0 0
        %2458 = vmatpush2.bf16.msra.mxu0 0
        %2459 = vmatprep.subr.bf16.mxu0 0
        %2460 = vmatpush2.bf16.msra.mxu0 0
        %2461 = vmatprep.subr.bf16.mxu0 0
        %2462 = vmatpush2.bf16.msra.mxu0 0
        %2463 = vmatprep.subr.bf16.mxu0 0
        %2464 = vmatpush2.bf16.msra.mxu0 0
        %2465 = vmatprep.subr.bf16.mxu0 0
        %2466 = vmatpush2.bf16.msra.mxu0 0
        %2467 = vmatprep.mubr.bf16.mxu0 0
        %2468 = vmatmul.mubr.bf16.gmra.mxu0 %v2282
        %v2469 = vpop.f32.mrf.mxu0
        %v2470 = vadd.f32 %v2380, %v2469
        %v2471 = vpop.f32.mrf.mxu0
        %v2472 = vpop.f32.mrf.mxu0
        %v2473 = vadd.f32 %v2383, %v2472
        %v2474 = vpop.f32.mrf.mxu0
        %2475 = vdwg.mxu0
        %v2476 = vld [vmem:[#allocation2] sm:$0xe]
        %s2477 = scalar_lea.vmem [#allocation8], 768
        %v2478 = vld [vmem:[%s2477] sm:$0xf]
        %v2479 = vld [vmem:[%s2477 + $0x4] sm:$0xf]
        %v2480 = vld [vmem:[%s2477 + $0x8] sm:$0xf]
        %v2481 = vld [vmem:[%s2477 + $0xc] sm:$0xf]
        %v2482 = vld [vmem:[%s2477 + $0x10] sm:$0xf]
        %v2483 = vld [vmem:[%s2477 + $0x14] sm:$0xf]
        %v2484 = vld [vmem:[%s2477 + $0x18] sm:$0xf]
        %v2485 = vld [vmem:[%s2477 + $0x1c] sm:$0xf]
        %v2486 = vld [vmem:[%s2477 + $0x20] sm:$0xf]
        %v2487 = vld [vmem:[%s2477 + $0x24] sm:$0xf]
        %v2488 = vld [vmem:[%s2477 + $0x28] sm:$0xf]
        %v2489 = vld [vmem:[%s2477 + $0x2c] sm:$0xf]
        %v2490 = vld [vmem:[%s2477 + $0x30] sm:$0xf]
        %v2491 = vld [vmem:[%s2477 + $0x34] sm:$0xf]
        %v2492 = vld [vmem:[%s2477 + $0x38] sm:$0xf]
        %v2493 = vld [vmem:[%s2477 + $0x3c] sm:$0xf]
        %v2495 = vunpack.c.l.b16 %v2476
        %v2496 = vpack.c.b16 %v2280, %v2495
        %v2497 = vrot.slane %v2496, 1
        %v2498 = vrot.slane %v2283, 1
        %v2499 = vsel %vm600, %v2497, %v2498
        %v2517 = vunpack.c.l.b16 %v2478
        %v2518 = vunpack.c.l.b16 %v2479
        %v2519 = vunpack.c.l.b16 %v2480
        %v2520 = vunpack.c.l.b16 %v2481
        %v2521 = vunpack.c.l.b16 %v2482
        %v2522 = vunpack.c.l.b16 %v2483
        %v2523 = vunpack.c.l.b16 %v2484
        %v2524 = vunpack.c.l.b16 %v2485
        %v2525 = vunpack.c.l.b16 %v2486
        %v2526 = vunpack.c.l.b16 %v2487
        %v2527 = vunpack.c.l.b16 %v2488
        %v2528 = vunpack.c.l.b16 %v2489
        %v2529 = vunpack.c.l.b16 %v2490
        %v2530 = vunpack.c.l.b16 %v2491
        %v2531 = vunpack.c.l.b16 %v2492
        %v2532 = vunpack.c.l.b16 %v2493
        %v2533 = vpack.c.b16 %v2518, %v2517
        %v2534 = vpack.c.b16 %v2520, %v2519
        %v2535 = vpack.c.b16 %v2522, %v2521
        %v2536 = vpack.c.b16 %v2524, %v2523
        %v2537 = vpack.c.b16 %v2526, %v2525
        %v2538 = vpack.c.b16 %v2528, %v2527
        %v2539 = vpack.c.b16 %v2530, %v2529
        %v2540 = vpack.c.b16 %v2532, %v2531
        %2549 = vmatprep.subr.bf16.mxu0 0
        %2550 = vmatpush1.bf16.msra.mxu0 %v2540
        %2551 = vmatprep.subr.bf16.mxu0 0
        %2552 = vmatpush1.bf16.msra.mxu0 %v2539
        %2553 = vmatprep.subr.bf16.mxu0 0
        %2554 = vmatpush1.bf16.msra.mxu0 %v2538
        %2555 = vmatprep.subr.bf16.mxu0 0
        %2556 = vmatpush1.bf16.msra.mxu0 %v2537
        %2557 = vmatprep.subr.bf16.mxu0 0
        %2558 = vmatpush1.bf16.msra.mxu0 %v2536
        %2559 = vmatprep.subr.bf16.mxu0 0
        %2560 = vmatpush1.bf16.msra.mxu0 %v2535
        %2561 = vmatprep.subr.bf16.mxu0 0
        %2562 = vmatpush1.bf16.msra.mxu0 %v2534
        %2563 = vmatprep.subr.bf16.mxu0 0
        %2564 = vmatpush1.bf16.msra.mxu0 %v2533
        %2565 = vmatprep.subr.bf16.mxu0 0
        %2566 = vmatpush2.bf16.msra.mxu0 0
        %2567 = vmatprep.subr.bf16.mxu0 0
        %2568 = vmatpush2.bf16.msra.mxu0 0
        %2569 = vmatprep.subr.bf16.mxu0 0
        %2570 = vmatpush2.bf16.msra.mxu0 0
        %2571 = vmatprep.subr.bf16.mxu0 0
        %2572 = vmatpush2.bf16.msra.mxu0 0
        %2573 = vmatprep.subr.bf16.mxu0 0
        %2574 = vmatpush2.bf16.msra.mxu0 0
        %2575 = vmatprep.subr.bf16.mxu0 0
        %2576 = vmatpush2.bf16.msra.mxu0 0
        %2577 = vmatprep.subr.bf16.mxu0 0
        %2578 = vmatpush2.bf16.msra.mxu0 0
        %2579 = vmatprep.subr.bf16.mxu0 0
        %2580 = vmatpush2.bf16.msra.mxu0 0
        %2581 = vmatprep.mubr.bf16.mxu0 0
        %2582 = vmatmul.mubr.bf16.gmra.mxu0 %v2499
        %v2583 = vpop.f32.mrf.mxu0
        %v2584 = vadd.f32 0.0, %v2583
        %v2585 = vpop.f32.mrf.mxu0
        %v2586 = vpop.f32.mrf.mxu0
        %v2587 = vadd.f32 0.0, %v2586
        %v2588 = vpop.f32.mrf.mxu0
        %2589 = vdwg.mxu0
        %v2590 = vadd.f32 %v2470, %v2584
        %v2591 = vadd.f32 %v2473, %v2587
        %v2592 = vld [vmem:[#allocation2 + $0x8] sm:$0x3]
        %s2593 = scalar_lea.vmem [#allocation8], 832
        %v2594 = vld [vmem:[%s2593] sm:$0xf]
        %v2595 = vld [vmem:[%s2593 + $0x4] sm:$0xf]
        %v2596 = vld [vmem:[%s2593 + $0x8] sm:$0xf]
        %v2597 = vld [vmem:[%s2593 + $0xc] sm:$0xf]
        %v2598 = vld [vmem:[%s2593 + $0x10] sm:$0xf]
        %v2599 = vld [vmem:[%s2593 + $0x14] sm:$0xf]
        %v2600 = vld [vmem:[%s2593 + $0x18] sm:$0xf]
        %v2601 = vld [vmem:[%s2593 + $0x1c] sm:$0xf]
        %v2602 = vld [vmem:[%s2593 + $0x20] sm:$0xf]
        %v2603 = vld [vmem:[%s2593 + $0x24] sm:$0xf]
        %v2604 = vld [vmem:[%s2593 + $0x28] sm:$0xf]
        %v2605 = vld [vmem:[%s2593 + $0x2c] sm:$0xf]
        %v2606 = vld [vmem:[%s2593 + $0x30] sm:$0xf]
        %v2607 = vld [vmem:[%s2593 + $0x34] sm:$0xf]
        %v2608 = vld [vmem:[%s2593 + $0x38] sm:$0xf]
        %v2609 = vld [vmem:[%s2593 + $0x3c] sm:$0xf]
        %v2611 = vunpack.c.l.b16 %v2592
        %v2612 = vpack.c.b16 %v2611, %v2611
        %v2614 = vshrl.u32 %v2496, 16
        %v2616 = vrot.slane %v2614, 1
        %v2617 = vshll.u32 %v2496, 16
        %v2619 = vrot.slane %v2617, 2
        %v2620 = vor.u32 %v2616, %v2619
        %v2622 = vshrl.u32 %v2612, 16
        %v2624 = vrot.slane %v2622, 1
        %v2625 = vshll.u32 %v2612, 16
        %v2627 = vrot.slane %v2625, 2
        %v2628 = vor.u32 %v2624, %v2627
        %v2629 = vsel %vm717, %v2620, %v2628
        %v2647 = vunpack.c.l.b16 %v2594
        %v2648 = vunpack.c.l.b16 %v2595
        %v2649 = vunpack.c.l.b16 %v2596
        %v2650 = vunpack.c.l.b16 %v2597
        %v2651 = vunpack.c.l.b16 %v2598
        %v2652 = vunpack.c.l.b16 %v2599
        %v2653 = vunpack.c.l.b16 %v2600
        %v2654 = vunpack.c.l.b16 %v2601
        %v2655 = vunpack.c.l.b16 %v2602
        %v2656 = vunpack.c.l.b16 %v2603
        %v2657 = vunpack.c.l.b16 %v2604
        %v2658 = vunpack.c.l.b16 %v2605
        %v2659 = vunpack.c.l.b16 %v2606
        %v2660 = vunpack.c.l.b16 %v2607
        %v2661 = vunpack.c.l.b16 %v2608
        %v2662 = vunpack.c.l.b16 %v2609
        %v2663 = vpack.c.b16 %v2648, %v2647
        %v2664 = vpack.c.b16 %v2650, %v2649
        %v2665 = vpack.c.b16 %v2652, %v2651
        %v2666 = vpack.c.b16 %v2654, %v2653
        %v2667 = vpack.c.b16 %v2656, %v2655
        %v2668 = vpack.c.b16 %v2658, %v2657
        %v2669 = vpack.c.b16 %v2660, %v2659
        %v2670 = vpack.c.b16 %v2662, %v2661
        %2679 = vmatprep.subr.bf16.mxu0 0
        %2680 = vmatpush1.bf16.msra.mxu0 %v2670
        %2681 = vmatprep.subr.bf16.mxu0 0
        %2682 = vmatpush1.bf16.msra.mxu0 %v2669
        %2683 = vmatprep.subr.bf16.mxu0 0
        %2684 = vmatpush1.bf16.msra.mxu0 %v2668
        %2685 = vmatprep.subr.bf16.mxu0 0
        %2686 = vmatpush1.bf16.msra.mxu0 %v2667
        %2687 = vmatprep.subr.bf16.mxu0 0
        %2688 = vmatpush1.bf16.msra.mxu0 %v2666
        %2689 = vmatprep.subr.bf16.mxu0 0
        %2690 = vmatpush1.bf16.msra.mxu0 %v2665
        %2691 = vmatprep.subr.bf16.mxu0 0
        %2692 = vmatpush1.bf16.msra.mxu0 %v2664
        %2693 = vmatprep.subr.bf16.mxu0 0
        %2694 = vmatpush1.bf16.msra.mxu0 %v2663
        %2695 = vmatprep.subr.bf16.mxu0 0
        %2696 = vmatpush2.bf16.msra.mxu0 0
        %2697 = vmatprep.subr.bf16.mxu0 0
        %2698 = vmatpush2.bf16.msra.mxu0 0
        %2699 = vmatprep.subr.bf16.mxu0 0
        %2700 = vmatpush2.bf16.msra.mxu0 0
        %2701 = vmatprep.subr.bf16.mxu0 0
        %2702 = vmatpush2.bf16.msra.mxu0 0
        %2703 = vmatprep.subr.bf16.mxu0 0
        %2704 = vmatpush2.bf16.msra.mxu0 0
        %2705 = vmatprep.subr.bf16.mxu0 0
        %2706 = vmatpush2.bf16.msra.mxu0 0
        %2707 = vmatprep.subr.bf16.mxu0 0
        %2708 = vmatpush2.bf16.msra.mxu0 0
        %2709 = vmatprep.subr.bf16.mxu0 0
        %2710 = vmatpush2.bf16.msra.mxu0 0
        %2711 = vmatprep.mubr.bf16.mxu0 0
        %2712 = vmatmul.mubr.bf16.gmra.mxu0 %v2629
        %v2713 = vpop.f32.mrf.mxu0
        %v2714 = vadd.f32 0.0, %v2713
        %v2715 = vpop.f32.mrf.mxu0
        %v2716 = vpop.f32.mrf.mxu0
        %v2717 = vadd.f32 0.0, %v2716
        %v2718 = vpop.f32.mrf.mxu0
        %2719 = vdwg.mxu0
        %v2720 = vadd.f32 %v2590, %v2714
        %v2721 = vadd.f32 %v2591, %v2717
        %v2722 = vld [vmem:[#allocation2] sm:$0xc]
        %s2723 = scalar_lea.vmem [#allocation8], 896
        %v2724 = vld [vmem:[%s2723] sm:$0xf]
        %v2725 = vld [vmem:[%s2723 + $0x4] sm:$0xf]
        %v2726 = vld [vmem:[%s2723 + $0x8] sm:$0xf]
        %v2727 = vld [vmem:[%s2723 + $0xc] sm:$0xf]
        %v2728 = vld [vmem:[%s2723 + $0x10] sm:$0xf]
        %v2729 = vld [vmem:[%s2723 + $0x14] sm:$0xf]
        %v2730 = vld [vmem:[%s2723 + $0x18] sm:$0xf]
        %v2731 = vld [vmem:[%s2723 + $0x1c] sm:$0xf]
        %v2732 = vld [vmem:[%s2723 + $0x20] sm:$0xf]
        %v2733 = vld [vmem:[%s2723 + $0x24] sm:$0xf]
        %v2734 = vld [vmem:[%s2723 + $0x28] sm:$0xf]
        %v2735 = vld [vmem:[%s2723 + $0x2c] sm:$0xf]
        %v2736 = vld [vmem:[%s2723 + $0x30] sm:$0xf]
        %v2737 = vld [vmem:[%s2723 + $0x34] sm:$0xf]
        %v2738 = vld [vmem:[%s2723 + $0x38] sm:$0xf]
        %v2739 = vld [vmem:[%s2723 + $0x3c] sm:$0xf]
        %v2741 = vunpack.c.l.b16 %v2722
        %v2742 = vpack.c.b16 %v2280, %v2741
        %v2743 = vrot.slane %v2742, 2
        %v2744 = vrot.slane %v2612, 2
        %v2745 = vsel %vm848, %v2743, %v2744
        %v2763 = vunpack.c.l.b16 %v2724
        %v2764 = vunpack.c.l.b16 %v2725
        %v2765 = vunpack.c.l.b16 %v2726
        %v2766 = vunpack.c.l.b16 %v2727
        %v2767 = vunpack.c.l.b16 %v2728
        %v2768 = vunpack.c.l.b16 %v2729
        %v2769 = vunpack.c.l.b16 %v2730
        %v2770 = vunpack.c.l.b16 %v2731
        %v2771 = vunpack.c.l.b16 %v2732
        %v2772 = vunpack.c.l.b16 %v2733
        %v2773 = vunpack.c.l.b16 %v2734
        %v2774 = vunpack.c.l.b16 %v2735
        %v2775 = vunpack.c.l.b16 %v2736
        %v2776 = vunpack.c.l.b16 %v2737
        %v2777 = vunpack.c.l.b16 %v2738
        %v2778 = vunpack.c.l.b16 %v2739
        %v2779 = vpack.c.b16 %v2764, %v2763
        %v2780 = vpack.c.b16 %v2766, %v2765
        %v2781 = vpack.c.b16 %v2768, %v2767
        %v2782 = vpack.c.b16 %v2770, %v2769
        %v2783 = vpack.c.b16 %v2772, %v2771
        %v2784 = vpack.c.b16 %v2774, %v2773
        %v2785 = vpack.c.b16 %v2776, %v2775
        %v2786 = vpack.c.b16 %v2778, %v2777
        %2795 = vmatprep.subr.bf16.mxu0 0
        %2796 = vmatpush1.bf16.msra.mxu0 %v2786
        %2797 = vmatprep.subr.bf16.mxu0 0
        %2798 = vmatpush1.bf16.msra.mxu0 %v2785
        %2799 = vmatprep.subr.bf16.mxu0 0
        %2800 = vmatpush1.bf16.msra.mxu0 %v2784
        %2801 = vmatprep.subr.bf16.mxu0 0
        %2802 = vmatpush1.bf16.msra.mxu0 %v2783
        %2803 = vmatprep.subr.bf16.mxu0 0
        %2804 = vmatpush1.bf16.msra.mxu0 %v2782
        %2805 = vmatprep.subr.bf16.mxu0 0
        %2806 = vmatpush1.bf16.msra.mxu0 %v2781
        %2807 = vmatprep.subr.bf16.mxu0 0
        %2808 = vmatpush1.bf16.msra.mxu0 %v2780
        %2809 = vmatprep.subr.bf16.mxu0 0
        %2810 = vmatpush1.bf16.msra.mxu0 %v2779
        %2811 = vmatprep.subr.bf16.mxu0 0
        %2812 = vmatpush2.bf16.msra.mxu0 0
        %2813 = vmatprep.subr.bf16.mxu0 0
        %2814 = vmatpush2.bf16.msra.mxu0 0
        %2815 = vmatprep.subr.bf16.mxu0 0
        %2816 = vmatpush2.bf16.msra.mxu0 0
        %2817 = vmatprep.subr.bf16.mxu0 0
        %2818 = vmatpush2.bf16.msra.mxu0 0
        %2819 = vmatprep.subr.bf16.mxu0 0
        %2820 = vmatpush2.bf16.msra.mxu0 0
        %2821 = vmatprep.subr.bf16.mxu0 0
        %2822 = vmatpush2.bf16.msra.mxu0 0
        %2823 = vmatprep.subr.bf16.mxu0 0
        %2824 = vmatpush2.bf16.msra.mxu0 0
        %2825 = vmatprep.subr.bf16.mxu0 0
        %2826 = vmatpush2.bf16.msra.mxu0 0
        %2827 = vmatprep.mubr.bf16.mxu0 0
        %2828 = vmatmul.mubr.bf16.gmra.mxu0 %v2745
        %v2829 = vpop.f32.mrf.mxu0
        %v2830 = vadd.f32 0.0, %v2829
        %v2831 = vpop.f32.mrf.mxu0
        %v2832 = vpop.f32.mrf.mxu0
        %v2833 = vadd.f32 0.0, %v2832
        %v2834 = vpop.f32.mrf.mxu0
        %2835 = vdwg.mxu0
        %v2836 = vadd.f32 %v2720, %v2830
        %v2837 = vadd.f32 %v2721, %v2833
        %s2838 = scalar_lea.vmem %s4, 3
        %v2839 = vld [vmem:[%s2838] sm:$0x1]
        %v2841 = vlaneseq
        %v2842 = vshrl.u32 %v2841, 7
        %v2843 = vsub.s32 0, %v2842
        %v2844 = vrot.slane %v2839, %v2843
        %v2846 = vadd.f32 %v2836, %v2844
        %v2847 = vadd.f32 %v2837, %v2844
        %v2848 = vpack.c.bf16 %v2847, %v2846
        %v2849 = vtanh.bf16.pop %v2848
        %v2850 = vsel %vm966, %v2849, 0
        %v2852 = vunpack.c.l.b16 %v2850
        %v2853 = vunpack.c.h.b16 %v2850
        %v2854 = vpack.c.b16 %v2852, %v2852
        %v2855 = vpack.c.b16 %v2853, %v2853
        %v2856 = vrot.slane %v2854, 7
        %v2857 = vrot.slane %v2856, 4
        %v2858 = vrot.slane %v2855, 7
        %v2859 = vsel %vm325, %v2857, %v2858
        %v2860 = vrot.slane %v2858, 4
        %2864 = vst [vmem:[#allocation2] sm:$0xe] %v2856
        %2865 = vst [vmem:[#allocation2 + $0x4] sm:$0xf] %v2859
        %2866 = vst [vmem:[#allocation2 + $0x8] sm:$0x1] %v2860
        %v2867 = vld [vmem:[#allocation2] sm:$0xf]
        %v2868 = vld [vmem:[#allocation2 + $0x4] sm:$0xf]
        %v2869 = vld [vmem:[#allocation9] sm:$0xf]
        %v2870 = vld [vmem:[#allocation9 + $0x4] sm:$0xf]
        %v2871 = vld [vmem:[#allocation9 + $0x8] sm:$0xf]
        %v2872 = vld [vmem:[#allocation9 + $0xc] sm:$0xf]
        %v2873 = vld [vmem:[#allocation9 + $0x10] sm:$0xf]
        %v2874 = vld [vmem:[#allocation9 + $0x14] sm:$0xf]
        %v2875 = vld [vmem:[#allocation9 + $0x18] sm:$0xf]
        %v2876 = vld [vmem:[#allocation9 + $0x1c] sm:$0xf]
        %v2877 = vld [vmem:[#allocation9 + $0x20] sm:$0xf]
        %v2878 = vld [vmem:[#allocation9 + $0x24] sm:$0xf]
        %v2879 = vld [vmem:[#allocation9 + $0x28] sm:$0xf]
        %v2880 = vld [vmem:[#allocation9 + $0x2c] sm:$0xf]
        %v2881 = vld [vmem:[#allocation9 + $0x30] sm:$0xf]
        %v2882 = vld [vmem:[#allocation9 + $0x34] sm:$0xf]
        %v2883 = vld [vmem:[#allocation9 + $0x38] sm:$0xf]
        %v2884 = vld [vmem:[#allocation9 + $0x3c] sm:$0xf]
        %v2885 = vld [vmem:[#allocation2 + $0x8] sm:$0x1]
        %s2886 = scalar_lea.vmem [#allocation9], 64
        %v2887 = vld [vmem:[%s2886] sm:$0xf]
        %v2888 = vld [vmem:[%s2886 + $0x4] sm:$0xf]
        %v2889 = vld [vmem:[%s2886 + $0x8] sm:$0xf]
        %v2890 = vld [vmem:[%s2886 + $0xc] sm:$0xf]
        %v2891 = vld [vmem:[%s2886 + $0x10] sm:$0xf]
        %v2892 = vld [vmem:[%s2886 + $0x14] sm:$0xf]
        %v2893 = vld [vmem:[%s2886 + $0x18] sm:$0xf]
        %v2894 = vld [vmem:[%s2886 + $0x1c] sm:$0xf]
        %v2895 = vld [vmem:[%s2886 + $0x20] sm:$0xf]
        %v2896 = vld [vmem:[%s2886 + $0x24] sm:$0xf]
        %v2897 = vld [vmem:[%s2886 + $0x28] sm:$0xf]
        %v2898 = vld [vmem:[%s2886 + $0x2c] sm:$0xf]
        %v2899 = vld [vmem:[%s2886 + $0x30] sm:$0xf]
        %v2900 = vld [vmem:[%s2886 + $0x34] sm:$0xf]
        %v2901 = vld [vmem:[%s2886 + $0x38] sm:$0xf]
        %v2902 = vld [vmem:[%s2886 + $0x3c] sm:$0xf]
        %v2906 = vunpack.c.l.b16 %v2867
        %v2907 = vunpack.c.l.b16 %v2868
        %v2908 = vunpack.c.l.b16 %v2885
        %v2909 = vpack.c.b16 %v2907, %v2906
        %v2910 = vpack.c.b16 %v2908, %v2908
        %v2912 = vshrl.u32 %v2909, 16
        %v2914 = vshll.u32 %v2909, 16
        %v2916 = vrot.slane %v2914, 1
        %v2917 = vor.u32 %v2912, %v2916
        %v2919 = vshll.u32 %v2910, 16
        %v2921 = vrot.slane %v2919, 1
        %v2922 = vsel %vm386, %v2917, %v2921
        %v2940 = vunpack.c.l.b16 %v2887
        %v2941 = vunpack.c.l.b16 %v2888
        %v2942 = vunpack.c.l.b16 %v2889
        %v2943 = vunpack.c.l.b16 %v2890
        %v2944 = vunpack.c.l.b16 %v2891
        %v2945 = vunpack.c.l.b16 %v2892
        %v2946 = vunpack.c.l.b16 %v2893
        %v2947 = vunpack.c.l.b16 %v2894
        %v2948 = vunpack.c.l.b16 %v2895
        %v2949 = vunpack.c.l.b16 %v2896
        %v2950 = vunpack.c.l.b16 %v2897
        %v2951 = vunpack.c.l.b16 %v2898
        %v2952 = vunpack.c.l.b16 %v2899
        %v2953 = vunpack.c.l.b16 %v2900
        %v2954 = vunpack.c.l.b16 %v2901
        %v2955 = vunpack.c.l.b16 %v2902
        %v2956 = vpack.c.b16 %v2941, %v2940
        %v2957 = vpack.c.b16 %v2943, %v2942
        %v2958 = vpack.c.b16 %v2945, %v2944
        %v2959 = vpack.c.b16 %v2947, %v2946
        %v2960 = vpack.c.b16 %v2949, %v2948
        %v2961 = vpack.c.b16 %v2951, %v2950
        %v2962 = vpack.c.b16 %v2953, %v2952
        %v2963 = vpack.c.b16 %v2955, %v2954
        %2972 = vmatprep.subr.bf16.mxu0 0
        %2973 = vmatpush1.bf16.msra.mxu0 %v2963
        %2974 = vmatprep.subr.bf16.mxu0 0
        %2975 = vmatpush1.bf16.msra.mxu0 %v2962
        %2976 = vmatprep.subr.bf16.mxu0 0
        %2977 = vmatpush1.bf16.msra.mxu0 %v2961
        %2978 = vmatprep.subr.bf16.mxu0 0
        %2979 = vmatpush1.bf16.msra.mxu0 %v2960
        %2980 = vmatprep.subr.bf16.mxu0 0
        %2981 = vmatpush1.bf16.msra.mxu0 %v2959
        %2982 = vmatprep.subr.bf16.mxu0 0
        %2983 = vmatpush1.bf16.msra.mxu0 %v2958
        %2984 = vmatprep.subr.bf16.mxu0 0
        %2985 = vmatpush1.bf16.msra.mxu0 %v2957
        %2986 = vmatprep.subr.bf16.mxu0 0
        %2987 = vmatpush1.bf16.msra.mxu0 %v2956
        %2988 = vmatprep.subr.bf16.mxu0 0
        %2989 = vmatpush2.bf16.msra.mxu0 0
        %2990 = vmatprep.subr.bf16.mxu0 0
        %2991 = vmatpush2.bf16.msra.mxu0 0
        %2992 = vmatprep.subr.bf16.mxu0 0
        %2993 = vmatpush2.bf16.msra.mxu0 0
        %2994 = vmatprep.subr.bf16.mxu0 0
        %2995 = vmatpush2.bf16.msra.mxu0 0
        %2996 = vmatprep.subr.bf16.mxu0 0
        %2997 = vmatpush2.bf16.msra.mxu0 0
        %2998 = vmatprep.subr.bf16.mxu0 0
        %2999 = vmatpush2.bf16.msra.mxu0 0
        %3000 = vmatprep.subr.bf16.mxu0 0
        %3001 = vmatpush2.bf16.msra.mxu0 0
        %3002 = vmatprep.subr.bf16.mxu0 0
        %3003 = vmatpush2.bf16.msra.mxu0 0
        %3004 = vmatprep.mubr.bf16.mxu0 0
        %3005 = vmatmul.mubr.bf16.gmra.mxu0 %v2922
        %v3006 = vpop.f32.mrf.mxu0
        %v3007 = vadd.f32 0.0, %v3006
        %v3008 = vpop.f32.mrf.mxu0
        %v3009 = vpop.f32.mrf.mxu0
        %v3010 = vadd.f32 0.0, %v3009
        %v3011 = vpop.f32.mrf.mxu0
        %3012 = vdwg.mxu0
        %v3030 = vunpack.c.l.b16 %v2869
        %v3031 = vunpack.c.l.b16 %v2870
        %v3032 = vunpack.c.l.b16 %v2871
        %v3033 = vunpack.c.l.b16 %v2872
        %v3034 = vunpack.c.l.b16 %v2873
        %v3035 = vunpack.c.l.b16 %v2874
        %v3036 = vunpack.c.l.b16 %v2875
        %v3037 = vunpack.c.l.b16 %v2876
        %v3038 = vunpack.c.l.b16 %v2877
        %v3039 = vunpack.c.l.b16 %v2878
        %v3040 = vunpack.c.l.b16 %v2879
        %v3041 = vunpack.c.l.b16 %v2880
        %v3042 = vunpack.c.l.b16 %v2881
        %v3043 = vunpack.c.l.b16 %v2882
        %v3044 = vunpack.c.l.b16 %v2883
        %v3045 = vunpack.c.l.b16 %v2884
        %v3046 = vpack.c.b16 %v3031, %v3030
        %v3047 = vpack.c.b16 %v3033, %v3032
        %v3048 = vpack.c.b16 %v3035, %v3034
        %v3049 = vpack.c.b16 %v3037, %v3036
        %v3050 = vpack.c.b16 %v3039, %v3038
        %v3051 = vpack.c.b16 %v3041, %v3040
        %v3052 = vpack.c.b16 %v3043, %v3042
        %v3053 = vpack.c.b16 %v3045, %v3044
        %3062 = vmatprep.subr.bf16.mxu0 0
        %3063 = vmatpush1.bf16.msra.mxu0 %v3053
        %3064 = vmatprep.subr.bf16.mxu0 0
        %3065 = vmatpush1.bf16.msra.mxu0 %v3052
        %3066 = vmatprep.subr.bf16.mxu0 0
        %3067 = vmatpush1.bf16.msra.mxu0 %v3051
        %3068 = vmatprep.subr.bf16.mxu0 0
        %3069 = vmatpush1.bf16.msra.mxu0 %v3050
        %3070 = vmatprep.subr.bf16.mxu0 0
        %3071 = vmatpush1.bf16.msra.mxu0 %v3049
        %3072 = vmatprep.subr.bf16.mxu0 0
        %3073 = vmatpush1.bf16.msra.mxu0 %v3048
        %3074 = vmatprep.subr.bf16.mxu0 0
        %3075 = vmatpush1.bf16.msra.mxu0 %v3047
        %3076 = vmatprep.subr.bf16.mxu0 0
        %3077 = vmatpush1.bf16.msra.mxu0 %v3046
        %3078 = vmatprep.subr.bf16.mxu0 0
        %3079 = vmatpush2.bf16.msra.mxu0 0
        %3080 = vmatprep.subr.bf16.mxu0 0
        %3081 = vmatpush2.bf16.msra.mxu0 0
        %3082 = vmatprep.subr.bf16.mxu0 0
        %3083 = vmatpush2.bf16.msra.mxu0 0
        %3084 = vmatprep.subr.bf16.mxu0 0
        %3085 = vmatpush2.bf16.msra.mxu0 0
        %3086 = vmatprep.subr.bf16.mxu0 0
        %3087 = vmatpush2.bf16.msra.mxu0 0
        %3088 = vmatprep.subr.bf16.mxu0 0
        %3089 = vmatpush2.bf16.msra.mxu0 0
        %3090 = vmatprep.subr.bf16.mxu0 0
        %3091 = vmatpush2.bf16.msra.mxu0 0
        %3092 = vmatprep.subr.bf16.mxu0 0
        %3093 = vmatpush2.bf16.msra.mxu0 0
        %3094 = vmatprep.mubr.bf16.mxu0 0
        %3095 = vmatmul.mubr.bf16.gmra.mxu0 %v2909
        %v3096 = vpop.f32.mrf.mxu0
        %v3097 = vadd.f32 %v3007, %v3096
        %v3098 = vpop.f32.mrf.mxu0
        %v3099 = vpop.f32.mrf.mxu0
        %v3100 = vadd.f32 %v3010, %v3099
        %v3101 = vpop.f32.mrf.mxu0
        %3102 = vdwg.mxu0
        %v3103 = vld [vmem:[#allocation2] sm:$0xe]
        %s3104 = scalar_lea.vmem [#allocation9], 128
        %v3105 = vld [vmem:[%s3104] sm:$0xf]
        %v3106 = vld [vmem:[%s3104 + $0x4] sm:$0xf]
        %v3107 = vld [vmem:[%s3104 + $0x8] sm:$0xf]
        %v3108 = vld [vmem:[%s3104 + $0xc] sm:$0xf]
        %v3109 = vld [vmem:[%s3104 + $0x10] sm:$0xf]
        %v3110 = vld [vmem:[%s3104 + $0x14] sm:$0xf]
        %v3111 = vld [vmem:[%s3104 + $0x18] sm:$0xf]
        %v3112 = vld [vmem:[%s3104 + $0x1c] sm:$0xf]
        %v3113 = vld [vmem:[%s3104 + $0x20] sm:$0xf]
        %v3114 = vld [vmem:[%s3104 + $0x24] sm:$0xf]
        %v3115 = vld [vmem:[%s3104 + $0x28] sm:$0xf]
        %v3116 = vld [vmem:[%s3104 + $0x2c] sm:$0xf]
        %v3117 = vld [vmem:[%s3104 + $0x30] sm:$0xf]
        %v3118 = vld [vmem:[%s3104 + $0x34] sm:$0xf]
        %v3119 = vld [vmem:[%s3104 + $0x38] sm:$0xf]
        %v3120 = vld [vmem:[%s3104 + $0x3c] sm:$0xf]
        %v3122 = vunpack.c.l.b16 %v3103
        %v3123 = vpack.c.b16 %v2907, %v3122
        %v3124 = vrot.slane %v3123, 1
        %v3125 = vrot.slane %v2910, 1
        %v3126 = vsel %vm600, %v3124, %v3125
        %v3144 = vunpack.c.l.b16 %v3105
        %v3145 = vunpack.c.l.b16 %v3106
        %v3146 = vunpack.c.l.b16 %v3107
        %v3147 = vunpack.c.l.b16 %v3108
        %v3148 = vunpack.c.l.b16 %v3109
        %v3149 = vunpack.c.l.b16 %v3110
        %v3150 = vunpack.c.l.b16 %v3111
        %v3151 = vunpack.c.l.b16 %v3112
        %v3152 = vunpack.c.l.b16 %v3113
        %v3153 = vunpack.c.l.b16 %v3114
        %v3154 = vunpack.c.l.b16 %v3115
        %v3155 = vunpack.c.l.b16 %v3116
        %v3156 = vunpack.c.l.b16 %v3117
        %v3157 = vunpack.c.l.b16 %v3118
        %v3158 = vunpack.c.l.b16 %v3119
        %v3159 = vunpack.c.l.b16 %v3120
        %v3160 = vpack.c.b16 %v3145, %v3144
        %v3161 = vpack.c.b16 %v3147, %v3146
        %v3162 = vpack.c.b16 %v3149, %v3148
        %v3163 = vpack.c.b16 %v3151, %v3150
        %v3164 = vpack.c.b16 %v3153, %v3152
        %v3165 = vpack.c.b16 %v3155, %v3154
        %v3166 = vpack.c.b16 %v3157, %v3156
        %v3167 = vpack.c.b16 %v3159, %v3158
        %3176 = vmatprep.subr.bf16.mxu0 0
        %3177 = vmatpush1.bf16.msra.mxu0 %v3167
        %3178 = vmatprep.subr.bf16.mxu0 0
        %3179 = vmatpush1.bf16.msra.mxu0 %v3166
        %3180 = vmatprep.subr.bf16.mxu0 0
        %3181 = vmatpush1.bf16.msra.mxu0 %v3165
        %3182 = vmatprep.subr.bf16.mxu0 0
        %3183 = vmatpush1.bf16.msra.mxu0 %v3164
        %3184 = vmatprep.subr.bf16.mxu0 0
        %3185 = vmatpush1.bf16.msra.mxu0 %v3163
        %3186 = vmatprep.subr.bf16.mxu0 0
        %3187 = vmatpush1.bf16.msra.mxu0 %v3162
        %3188 = vmatprep.subr.bf16.mxu0 0
        %3189 = vmatpush1.bf16.msra.mxu0 %v3161
        %3190 = vmatprep.subr.bf16.mxu0 0
        %3191 = vmatpush1.bf16.msra.mxu0 %v3160
        %3192 = vmatprep.subr.bf16.mxu0 0
        %3193 = vmatpush2.bf16.msra.mxu0 0
        %3194 = vmatprep.subr.bf16.mxu0 0
        %3195 = vmatpush2.bf16.msra.mxu0 0
        %3196 = vmatprep.subr.bf16.mxu0 0
        %3197 = vmatpush2.bf16.msra.mxu0 0
        %3198 = vmatprep.subr.bf16.mxu0 0
        %3199 = vmatpush2.bf16.msra.mxu0 0
        %3200 = vmatprep.subr.bf16.mxu0 0
        %3201 = vmatpush2.bf16.msra.mxu0 0
        %3202 = vmatprep.subr.bf16.mxu0 0
        %3203 = vmatpush2.bf16.msra.mxu0 0
        %3204 = vmatprep.subr.bf16.mxu0 0
        %3205 = vmatpush2.bf16.msra.mxu0 0
        %3206 = vmatprep.subr.bf16.mxu0 0
        %3207 = vmatpush2.bf16.msra.mxu0 0
        %3208 = vmatprep.mubr.bf16.mxu0 0
        %3209 = vmatmul.mubr.bf16.gmra.mxu0 %v3126
        %v3210 = vpop.f32.mrf.mxu0
        %v3211 = vadd.f32 0.0, %v3210
        %v3212 = vpop.f32.mrf.mxu0
        %v3213 = vpop.f32.mrf.mxu0
        %v3214 = vadd.f32 0.0, %v3213
        %v3215 = vpop.f32.mrf.mxu0
        %3216 = vdwg.mxu0
        %v3217 = vadd.f32 %v3097, %v3211
        %v3218 = vadd.f32 %v3100, %v3214
        %v3219 = vld [vmem:[#allocation2 + $0x8] sm:$0x3]
        %s3220 = scalar_lea.vmem [#allocation9], 192
        %v3221 = vld [vmem:[%s3220] sm:$0xf]
        %v3222 = vld [vmem:[%s3220 + $0x4] sm:$0xf]
        %v3223 = vld [vmem:[%s3220 + $0x8] sm:$0xf]
        %v3224 = vld [vmem:[%s3220 + $0xc] sm:$0xf]
        %v3225 = vld [vmem:[%s3220 + $0x10] sm:$0xf]
        %v3226 = vld [vmem:[%s3220 + $0x14] sm:$0xf]
        %v3227 = vld [vmem:[%s3220 + $0x18] sm:$0xf]
        %v3228 = vld [vmem:[%s3220 + $0x1c] sm:$0xf]
        %v3229 = vld [vmem:[%s3220 + $0x20] sm:$0xf]
        %v3230 = vld [vmem:[%s3220 + $0x24] sm:$0xf]
        %v3231 = vld [vmem:[%s3220 + $0x28] sm:$0xf]
        %v3232 = vld [vmem:[%s3220 + $0x2c] sm:$0xf]
        %v3233 = vld [vmem:[%s3220 + $0x30] sm:$0xf]
        %v3234 = vld [vmem:[%s3220 + $0x34] sm:$0xf]
        %v3235 = vld [vmem:[%s3220 + $0x38] sm:$0xf]
        %v3236 = vld [vmem:[%s3220 + $0x3c] sm:$0xf]
        %v3238 = vunpack.c.l.b16 %v3219
        %v3239 = vpack.c.b16 %v3238, %v3238
        %v3241 = vshrl.u32 %v3123, 16
        %v3243 = vrot.slane %v3241, 1
        %v3244 = vshll.u32 %v3123, 16
        %v3246 = vrot.slane %v3244, 2
        %v3247 = vor.u32 %v3243, %v3246
        %v3249 = vshrl.u32 %v3239, 16
        %v3251 = vrot.slane %v3249, 1
        %v3252 = vshll.u32 %v3239, 16
        %v3254 = vrot.slane %v3252, 2
        %v3255 = vor.u32 %v3251, %v3254
        %v3256 = vsel %vm717, %v3247, %v3255
        %v3274 = vunpack.c.l.b16 %v3221
        %v3275 = vunpack.c.l.b16 %v3222
        %v3276 = vunpack.c.l.b16 %v3223
        %v3277 = vunpack.c.l.b16 %v3224
        %v3278 = vunpack.c.l.b16 %v3225
        %v3279 = vunpack.c.l.b16 %v3226
        %v3280 = vunpack.c.l.b16 %v3227
        %v3281 = vunpack.c.l.b16 %v3228
        %v3282 = vunpack.c.l.b16 %v3229
        %v3283 = vunpack.c.l.b16 %v3230
        %v3284 = vunpack.c.l.b16 %v3231
        %v3285 = vunpack.c.l.b16 %v3232
        %v3286 = vunpack.c.l.b16 %v3233
        %v3287 = vunpack.c.l.b16 %v3234
        %v3288 = vunpack.c.l.b16 %v3235
        %v3289 = vunpack.c.l.b16 %v3236
        %v3290 = vpack.c.b16 %v3275, %v3274
        %v3291 = vpack.c.b16 %v3277, %v3276
        %v3292 = vpack.c.b16 %v3279, %v3278
        %v3293 = vpack.c.b16 %v3281, %v3280
        %v3294 = vpack.c.b16 %v3283, %v3282
        %v3295 = vpack.c.b16 %v3285, %v3284
        %v3296 = vpack.c.b16 %v3287, %v3286
        %v3297 = vpack.c.b16 %v3289, %v3288
        %3306 = vmatprep.subr.bf16.mxu0 0
        %3307 = vmatpush1.bf16.msra.mxu0 %v3297
        %3308 = vmatprep.subr.bf16.mxu0 0
        %3309 = vmatpush1.bf16.msra.mxu0 %v3296
        %3310 = vmatprep.subr.bf16.mxu0 0
        %3311 = vmatpush1.bf16.msra.mxu0 %v3295
        %3312 = vmatprep.subr.bf16.mxu0 0
        %3313 = vmatpush1.bf16.msra.mxu0 %v3294
        %3314 = vmatprep.subr.bf16.mxu0 0
        %3315 = vmatpush1.bf16.msra.mxu0 %v3293
        %3316 = vmatprep.subr.bf16.mxu0 0
        %3317 = vmatpush1.bf16.msra.mxu0 %v3292
        %3318 = vmatprep.subr.bf16.mxu0 0
        %3319 = vmatpush1.bf16.msra.mxu0 %v3291
        %3320 = vmatprep.subr.bf16.mxu0 0
        %3321 = vmatpush1.bf16.msra.mxu0 %v3290
        %3322 = vmatprep.subr.bf16.mxu0 0
        %3323 = vmatpush2.bf16.msra.mxu0 0
        %3324 = vmatprep.subr.bf16.mxu0 0
        %3325 = vmatpush2.bf16.msra.mxu0 0
        %3326 = vmatprep.subr.bf16.mxu0 0
        %3327 = vmatpush2.bf16.msra.mxu0 0
        %3328 = vmatprep.subr.bf16.mxu0 0
        %3329 = vmatpush2.bf16.msra.mxu0 0
        %3330 = vmatprep.subr.bf16.mxu0 0
        %3331 = vmatpush2.bf16.msra.mxu0 0
        %3332 = vmatprep.subr.bf16.mxu0 0
        %3333 = vmatpush2.bf16.msra.mxu0 0
        %3334 = vmatprep.subr.bf16.mxu0 0
        %3335 = vmatpush2.bf16.msra.mxu0 0
        %3336 = vmatprep.subr.bf16.mxu0 0
        %3337 = vmatpush2.bf16.msra.mxu0 0
        %3338 = vmatprep.mubr.bf16.mxu0 0
        %3339 = vmatmul.mubr.bf16.gmra.mxu0 %v3256
        %v3340 = vpop.f32.mrf.mxu0
        %v3341 = vadd.f32 0.0, %v3340
        %v3342 = vpop.f32.mrf.mxu0
        %v3343 = vpop.f32.mrf.mxu0
        %v3344 = vadd.f32 0.0, %v3343
        %v3345 = vpop.f32.mrf.mxu0
        %3346 = vdwg.mxu0
        %v3347 = vadd.f32 %v3217, %v3341
        %v3348 = vadd.f32 %v3218, %v3344
        %v3349 = vld [vmem:[#allocation2] sm:$0xc]
        %s3350 = scalar_lea.vmem [#allocation9], 256
        %v3351 = vld [vmem:[%s3350] sm:$0xf]
        %v3352 = vld [vmem:[%s3350 + $0x4] sm:$0xf]
        %v3353 = vld [vmem:[%s3350 + $0x8] sm:$0xf]
        %v3354 = vld [vmem:[%s3350 + $0xc] sm:$0xf]
        %v3355 = vld [vmem:[%s3350 + $0x10] sm:$0xf]
        %v3356 = vld [vmem:[%s3350 + $0x14] sm:$0xf]
        %v3357 = vld [vmem:[%s3350 + $0x18] sm:$0xf]
        %v3358 = vld [vmem:[%s3350 + $0x1c] sm:$0xf]
        %v3359 = vld [vmem:[%s3350 + $0x20] sm:$0xf]
        %v3360 = vld [vmem:[%s3350 + $0x24] sm:$0xf]
        %v3361 = vld [vmem:[%s3350 + $0x28] sm:$0xf]
        %v3362 = vld [vmem:[%s3350 + $0x2c] sm:$0xf]
        %v3363 = vld [vmem:[%s3350 + $0x30] sm:$0xf]
        %v3364 = vld [vmem:[%s3350 + $0x34] sm:$0xf]
        %v3365 = vld [vmem:[%s3350 + $0x38] sm:$0xf]
        %v3366 = vld [vmem:[%s3350 + $0x3c] sm:$0xf]
        %v3368 = vunpack.c.l.b16 %v3349
        %v3369 = vpack.c.b16 %v2907, %v3368
        %v3370 = vrot.slane %v3369, 2
        %v3371 = vrot.slane %v3239, 2
        %v3372 = vsel %vm848, %v3370, %v3371
        %v3390 = vunpack.c.l.b16 %v3351
        %v3391 = vunpack.c.l.b16 %v3352
        %v3392 = vunpack.c.l.b16 %v3353
        %v3393 = vunpack.c.l.b16 %v3354
        %v3394 = vunpack.c.l.b16 %v3355
        %v3395 = vunpack.c.l.b16 %v3356
        %v3396 = vunpack.c.l.b16 %v3357
        %v3397 = vunpack.c.l.b16 %v3358
        %v3398 = vunpack.c.l.b16 %v3359
        %v3399 = vunpack.c.l.b16 %v3360
        %v3400 = vunpack.c.l.b16 %v3361
        %v3401 = vunpack.c.l.b16 %v3362
        %v3402 = vunpack.c.l.b16 %v3363
        %v3403 = vunpack.c.l.b16 %v3364
        %v3404 = vunpack.c.l.b16 %v3365
        %v3405 = vunpack.c.l.b16 %v3366
        %v3406 = vpack.c.b16 %v3391, %v3390
        %v3407 = vpack.c.b16 %v3393, %v3392
        %v3408 = vpack.c.b16 %v3395, %v3394
        %v3409 = vpack.c.b16 %v3397, %v3396
        %v3410 = vpack.c.b16 %v3399, %v3398
        %v3411 = vpack.c.b16 %v3401, %v3400
        %v3412 = vpack.c.b16 %v3403, %v3402
        %v3413 = vpack.c.b16 %v3405, %v3404
        %3422 = vmatprep.subr.bf16.mxu0 0
        %3423 = vmatpush1.bf16.msra.mxu0 %v3413
        %3424 = vmatprep.subr.bf16.mxu0 0
        %3425 = vmatpush1.bf16.msra.mxu0 %v3412
        %3426 = vmatprep.subr.bf16.mxu0 0
        %3427 = vmatpush1.bf16.msra.mxu0 %v3411
        %3428 = vmatprep.subr.bf16.mxu0 0
        %3429 = vmatpush1.bf16.msra.mxu0 %v3410
        %3430 = vmatprep.subr.bf16.mxu0 0
        %3431 = vmatpush1.bf16.msra.mxu0 %v3409
        %3432 = vmatprep.subr.bf16.mxu0 0
        %3433 = vmatpush1.bf16.msra.mxu0 %v3408
        %3434 = vmatprep.subr.bf16.mxu0 0
        %3435 = vmatpush1.bf16.msra.mxu0 %v3407
        %3436 = vmatprep.subr.bf16.mxu0 0
        %3437 = vmatpush1.bf16.msra.mxu0 %v3406
        %3438 = vmatprep.subr.bf16.mxu0 0
        %3439 = vmatpush2.bf16.msra.mxu0 0
        %3440 = vmatprep.subr.bf16.mxu0 0
        %3441 = vmatpush2.bf16.msra.mxu0 0
        %3442 = vmatprep.subr.bf16.mxu0 0
        %3443 = vmatpush2.bf16.msra.mxu0 0
        %3444 = vmatprep.subr.bf16.mxu0 0
        %3445 = vmatpush2.bf16.msra.mxu0 0
        %3446 = vmatprep.subr.bf16.mxu0 0
        %3447 = vmatpush2.bf16.msra.mxu0 0
        %3448 = vmatprep.subr.bf16.mxu0 0
        %3449 = vmatpush2.bf16.msra.mxu0 0
        %3450 = vmatprep.subr.bf16.mxu0 0
        %3451 = vmatpush2.bf16.msra.mxu0 0
        %3452 = vmatprep.subr.bf16.mxu0 0
        %3453 = vmatpush2.bf16.msra.mxu0 0
        %3454 = vmatprep.mubr.bf16.mxu0 0
        %3455 = vmatmul.mubr.bf16.gmra.mxu0 %v3372
        %v3456 = vpop.f32.mrf.mxu0
        %v3457 = vadd.f32 0.0, %v3456
        %v3458 = vpop.f32.mrf.mxu0
        %v3459 = vpop.f32.mrf.mxu0
        %v3460 = vadd.f32 0.0, %v3459
        %v3461 = vpop.f32.mrf.mxu0
        %3462 = vdwg.mxu0
        %v3463 = vadd.f32 %v3347, %v3457
        %v3464 = vadd.f32 %v3348, %v3460
        %v3465 = vld [vmem:[%s5] sm:$0x1]
        %v3467 = vlaneseq
        %v3468 = vshrl.u32 %v3467, 7
        %v3469 = vsub.s32 0, %v3468
        %v3470 = vrot.slane %v3465, %v3469
        %v3472 = vadd.f32 %v3463, %v3470
        %v3473 = vadd.f32 %v3464, %v3470
        %3474 = vst [vmem:[%s313] sm:$0xff] %v3472
        %3475 = vst [vmem:[%s313 + $0x8] sm:$0xff] %v3473
        %s3476 = sand.u32 %s164, 1
        %s3477 = scalar_lea.sflag [#allocation5], %s3476
        %s3478 = sand.u32 %s164, 1
        %s3479 = smul.addr %s3478, 16
        %s3480 = scalar_lea.vmem [#allocation11], %s3479
        // Predicated region
        $region61: #{tpu_custom_call.1} parent=43 // pred_check
          %p3481 = pneg %p174
        $region62: #{tpu_custom_call.1} parent=43 // pred_check_branch
          %3483 = sbr.rel (%p3481) target = $region64
        $region63: #{tpu_custom_call.1} parent=43 // pred_region
          %s3485 = ssub.s32 256, 256
          %3486 = vsyncadd %s3477, %s3485
          %s3487 = smul.addr %s25, 2
          %s3488 = smul.addr %s3487, 128
          %s3489 = scalar_lea.hbm %s6, %s3488
          %s3490 = sshll.u32 %s3480, 4
          %s3491 = int_to_ptr.vmem [resolvable:$true] %s3490
          %3496 = dma.vmem_to_hbm [thread:$0]  %s3491, 256, %s3489, %s3477, 128, 128, 8
        $region64: #{tpu_custom_call.1} parent=43 // pred_fallthru
          _
      $region44: #{tpu_custom_call.1} parent=5 // pred_fallthru
        _
      %p3497 = scmp.le.s32.totalorder 2, %s20
      // Predicated region
      $region65: #{tpu_custom_call.1} parent=5 // pred_check
        %p3498 = pneg %p3497
      $region66: #{tpu_custom_call.1} parent=5 // pred_check_branch
        %3500 = sbr.rel (%p3498) target = $region68
      $region67: #{tpu_custom_call.1} parent=5 // pred_region
        %s3501 = ssub.s32 %s20, 2
        // Predicated region
        $region69: #{tpu_custom_call.1} parent=67 // pred_check
          %p3502 = pneg %p180
        $region70: #{tpu_custom_call.1} parent=67 // pred_check_branch
          %3504 = sbr.rel (%p3502) target = $region72
        $region71: #{tpu_custom_call.1} parent=67 // pred_region
          %s3505 = sand.u32 %s165, 1
          %s3506 = scalar_lea.sflag [#allocation5], %s3505
          %s3507 = sand.u32 %s165, 1
          %s3508 = smul.addr %s3507, 16
          %s3509 = scalar_lea.vmem [#allocation11], %s3508
          %3510 = dma.done %s3506, 256
        $region72: #{tpu_custom_call.1} parent=67 // pred_fallthru
          _
      $region68: #{tpu_custom_call.1} parent=5 // pred_fallthru
        _
    $region6: #{tpu_custom_call.1} parent=1 // loop_footer
      %s24 = sadd.s32 1, %s20
    $region7: #{tpu_custom_call.1} parent=1 // loop_footer_branch
      %19 = sbr.rel target = $region3
    $region8: #{tpu_custom_call.1} parent=1 // loop_exit
      _
    %3511 = vsyncpa [#allocation4], 1
    %s3512 = scalar_lea.sflag [#allocation4], 1
    %3513 = vsyncpa %s3512, 1
    %3514 = vsyncpa [#allocation7], 1
    %3515 = vsyncpa [#allocation10], 1
    %3516 = vsyncpa [#allocation5], 1
    %s3517 = scalar_lea.sflag [#allocation5], 1
    %3518 = vsyncpa %s3517, 1

// kernel: tpu_custom_call.1
$region0: #{tpu_custom_call.1}
  #allocation0 [shape = 'u32[]', space=smem, size = 0x4, offset = 0x4, fixed_abs, tag = 'smem constant byte address 0x4 - core index']
  #allocation1 [shape = 'u32[144,128]{1,0:T(1,128)}', space=vmem, size = 0x12000, scoped, tag = 'internal scratch']
  #allocation2 [shape = 'bf16[32,128]{1,0:T(8,128)(2,1)}', space=vmem, size = 0x2000, scoped, tag = 'scratch operand']
  %s0 = inlined_call_operand.hbm [shape: bf16[2,16,128], index: 0, kind: input, shape index: {}]
  %s1 = inlined_call_operand.hbm [shape: bf16[5,128,128], index: 1, kind: input, shape index: {}]
  %s2 = inlined_call_operand.hbm [shape: bf16[3,5,128,128], index: 2, kind: input, shape index: {}]
  %s3 = inlined_call_operand.hbm [shape: bf16[5,128,128], index: 3, kind: input, shape index: {}]
  %s4 = inlined_call_operand.vmem [shape: f32[4,1,128], index: 4, kind: input, shape index: {}]
  %s5 = inlined_call_operand.vmem [shape: f32[1,128], index: 5, kind: input, shape index: {}]
  %s6 = inlined_call_operand.hbm [shape: f32[2,16,128], index: 6, kind: output, shape index: {}]
  %s7 = sld [smem:[#allocation0]]
  $region73: #{tpu_custom_call.1} parent=0
    _
  %s9 = ssub.s32 1, %s7
  %s10 = scalar_select 0, %s9, %s7
  $region1: #{tpu_custom_call.1} parent=0
    #allocation3 [shape = 'u8[8192]{0}', space=vmem, size = 0x2000, scoped, tag = 'input window, operand 0']
    #allocation4 [shape = 's32[2]{0}', space=sflag, size = 0x8, scoped, tag = 'scoped memory for tpu_custom_call.1']
    #allocation5 [shape = 's32[2]{0}', space=sflag, size = 0x8, scoped, tag = 'scoped memory for tpu_custom_call.1']
    #allocation6 [shape = 'u8[163840]{0}', space=vmem, size = 0x28000, scoped, tag = 'input window, operand 1, single buffered']
    #allocation7 [shape = 's32[1]{0}', space=sflag, size = 0x4, scoped, tag = 'scoped memory for tpu_custom_call.1']
    #allocation8 [shape = 'u8[491520]{0}', space=vmem, size = 0x78000, scoped, tag = 'input window, operand 2, single buffered']
    #allocation9 [shape = 'u8[163840]{0}', space=vmem, size = 0x28000, scoped, tag = 'input window, operand 3, single buffered']
    #allocation10 [shape = 's32[1]{0}', space=sflag, size = 0x4, scoped, tag = 'scoped memory for tpu_custom_call.1']
    #allocation11 [shape = 'u8[16384]{0}', space=vmem, size = 0x4000, scoped, tag = 'output window, operand 0']
    %11 = vsyncpa [#allocation4], 0
    %s12 = scalar_lea.sflag [#allocation4], 1
    %13 = vsyncpa %s12, 0
    %14 = vsyncpa [#allocation7], 0
    %15 = vsyncpa [#allocation10], 0
    %16 = vsyncpa [#allocation5], 0
    %s17 = scalar_lea.sflag [#allocation5], 1
    %18 = vsyncpa %s17, 0
    loop: start=0, step=1, limit=4
    $region2: #{tpu_custom_call.1} parent=1 // loop_pre_header
      _
    $region3: #{tpu_custom_call.1} parent=1 // loop_header
      %s20 = sphi 0, %s24
      %p21 = scmp.ge.s32.totalorder %s20, 4
      %s30 = sphi 0, %s32
      %s33 = sphi 0, %s30
      %s34 = sphi 0, %s33
      %s50 = sphi 0, %s34
      %s54 = sphi 0, %s54
      %s56 = sphi 0, %s54
      %s57 = sphi 0, %s56
      %s71 = sphi 0, %s57
      %s75 = sphi 0, %s75
      %s77 = sphi 0, %s75
      %s78 = sphi 0, %s77
      %s92 = sphi 0, %s78
      %s96 = sphi 0, %s96
      %s98 = sphi 0, %s96
      %s99 = sphi 0, %s98
      %s113 = sphi 0, %s99
      %s117 = sphi 0, %s117
      %s119 = sphi 0, %s117
      %s120 = sphi 0, %s119
      %s134 = sphi 0, %s120
      %s138 = sphi 0, %s138
      %s140 = sphi 0, %s138
      %s141 = sphi 0, %s140
      %s155 = sphi 0, %s141
      %s161 = sphi 0, %s163
      %s164 = sphi 0, %s161
      %s165 = sphi 0, %s164
      %s181 = sphi 0, %s165
    $region4: #{tpu_custom_call.1} parent=1 // loop_header_branch
      %23 = sbr.rel (%p21) target = $region8
    $region5: #{tpu_custom_call.1} parent=1 // loop_body
      %s25 = ssub.s32 %s20, 1
      %s26 = ssub.s32 %s20, 2
      %s27 = sadd.s32 %s20, 1
      %s28 = ssub.s32 %s20, %s27
      %p29 = scmp.eq.s32.totalorder %s28, 0
      %s31 = sadd.s32 %s30, 1
      %s32 = scalar_select %p29, %s30, %s31
      %p35 = pneg %p29
      %p36 = scmp.eq.s32.totalorder %s20, 1
      %p37 = por %p35, %p36
      %p38 = scmp.ne.s32.totalorder %s30, %s33
      %p39 = scmp.eq.s32.totalorder %s20, 0
      %p40 = por %p38, %p39
      %p41 = scmp.ne.s32.totalorder %s30, %s33
      %p42 = scmp.eq.s32.totalorder %s25, 1
      %p43 = por %p41, %p42
      %p44 = scmp.ne.s32.totalorder %s33, %s34
      %p45 = scmp.eq.s32.totalorder %s25, 0
      %p46 = por %p44, %p45
      %p47 = scmp.ne.s32.totalorder %s33, %s34
      %p48 = scmp.eq.s32.totalorder %s26, 1
      %p49 = por %p47, %p48
      %p51 = scmp.ne.s32.totalorder %s34, %s50
      %p52 = scmp.eq.s32.totalorder %s26, 0
      %p53 = por %p51, %p52
      %s55 = sadd.s32 %s54, 1
      %p58 = scmp.eq.s32.totalorder %s20, 1
      %p59 = scmp.ne.s32.totalorder %s54, %s56
      %p60 = scmp.eq.s32.totalorder %s20, 0
      %p61 = por %p59, %p60
      %p62 = scmp.ne.s32.totalorder %s54, %s56
      %p63 = scmp.eq.s32.totalorder %s25, 1
      %p64 = por %p62, %p63
      %p65 = scmp.ne.s32.totalorder %s56, %s57
      %p66 = scmp.eq.s32.totalorder %s25, 0
      %p67 = por %p65, %p66
      %p68 = scmp.ne.s32.totalorder %s56, %s57
      %p69 = scmp.eq.s32.totalorder %s26, 1
      %p70 = por %p68, %p69
      %p72 = scmp.ne.s32.totalorder %s57, %s71
      %p73 = scmp.eq.s32.totalorder %s26, 0
      %p74 = por %p72, %p73
      %s76 = sadd.s32 %s75, 1
      %p79 = scmp.eq.s32.totalorder %s20, 1
      %p80 = scmp.ne.s32.totalorder %s75, %s77
      %p81 = scmp.eq.s32.totalorder %s20, 0
      %p82 = por %p80, %p81
      %p83 = scmp.ne.s32.totalorder %s75, %s77
      %p84 = scmp.eq.s32.totalorder %s25, 1
      %p85 = por %p83, %p84
      %p86 = scmp.ne.s32.totalorder %s77, %s78
      %p87 = scmp.eq.s32.totalorder %s25, 0
      %p88 = por %p86, %p87
      %p89 = scmp.ne.s32.totalorder %s77, %s78
      %p90 = scmp.eq.s32.totalorder %s26, 1
      %p91 = por %p89, %p90
      %p93 = scmp.ne.s32.totalorder %s78, %s92
      %p94 = scmp.eq.s32.totalorder %s26, 0
      %p95 = por %p93, %p94
      %s97 = sadd.s32 %s96, 1
      %p100 = scmp.eq.s32.totalorder %s20, 1
      %p101 = scmp.ne.s32.totalorder %s96, %s98
      %p102 = scmp.eq.s32.totalorder %s20, 0
      %p103 = por %p101, %p102
      %p104 = scmp.ne.s32.totalorder %s96, %s98
      %p105 = scmp.eq.s32.totalorder %s25, 1
      %p106 = por %p104, %p105
      %p107 = scmp.ne.s32.totalorder %s98, %s99
      %p108 = scmp.eq.s32.totalorder %s25, 0
      %p109 = por %p107, %p108
      %p110 = scmp.ne.s32.totalorder %s98, %s99
      %p111 = scmp.eq.s32.totalorder %s26, 1
      %p112 = por %p110, %p111
      %p114 = scmp.ne.s32.totalorder %s99, %s113
      %p115 = scmp.eq.s32.totalorder %s26, 0
      %p116 = por %p114, %p115
      %s118 = sadd.s32 %s117, 1
      %p121 = scmp.eq.s32.totalorder %s20, 1
      %p122 = scmp.ne.s32.totalorder %s117, %s119
      %p123 = scmp.eq.s32.totalorder %s20, 0
      %p124 = por %p122, %p123
      %p125 = scmp.ne.s32.totalorder %s117, %s119
      %p126 = scmp.eq.s32.totalorder %s25, 1
      %p127 = por %p125, %p126
      %p128 = scmp.ne.s32.totalorder %s119, %s120
      %p129 = scmp.eq.s32.totalorder %s25, 0
      %p130 = por %p128, %p129
      %p131 = scmp.ne.s32.totalorder %s119, %s120
      %p132 = scmp.eq.s32.totalorder %s26, 1
      %p133 = por %p131, %p132
      %p135 = scmp.ne.s32.totalorder %s120, %s134
      %p136 = scmp.eq.s32.totalorder %s26, 0
      %p137 = por %p135, %p136
      %s139 = sadd.s32 %s138, 1
      %p142 = scmp.eq.s32.totalorder %s20, 1
      %p143 = scmp.ne.s32.totalorder %s138, %s140
      %p144 = scmp.eq.s32.totalorder %s20, 0
      %p145 = por %p143, %p144
      %p146 = scmp.ne.s32.totalorder %s138, %s140
      %p147 = scmp.eq.s32.totalorder %s25, 1
      %p148 = por %p146, %p147
      %p149 = scmp.ne.s32.totalorder %s140, %s141
      %p150 = scmp.eq.s32.totalorder %s25, 0
      %p151 = por %p149, %p150
      %p152 = scmp.ne.s32.totalorder %s140, %s141
      %p153 = scmp.eq.s32.totalorder %s26, 1
      %p154 = por %p152, %p153
      %p156 = scmp.ne.s32.totalorder %s141, %s155
      %p157 = scmp.eq.s32.totalorder %s26, 0
      %p158 = por %p156, %p157
      %s159 = ssub.s32 %s20, %s27
      %p160 = scmp.eq.s32.totalorder %s159, 0
      %s162 = sadd.s32 %s161, 1
      %s163 = scalar_select %p160, %s161, %s162
      %p166 = pneg %p160
      %p167 = scmp.eq.s32.totalorder %s20, 1
      %p168 = por %p166, %p167
      %p169 = scmp.ne.s32.totalorder %s161, %s164
      %p170 = scmp.eq.s32.totalorder %s20, 0
      %p171 = por %p169, %p170
      %p172 = scmp.ne.s32.totalorder %s161, %s164
      %p173 = scmp.eq.s32.totalorder %s25, 1
      %p174 = por %p172, %p173
      %p175 = scmp.ne.s32.totalorder %s164, %s165
      %p176 = scmp.eq.s32.totalorder %s25, 0
      %p177 = por %p175, %p176
      %p178 = scmp.ne.s32.totalorder %s164, %s165
      %p179 = scmp.eq.s32.totalorder %s26, 1
      %p180 = por %p178, %p179
      %p182 = scmp.ne.s32.totalorder %s165, %s181
      %p183 = scmp.eq.s32.totalorder %s26, 0
      %p184 = por %p182, %p183
      %p185 = scmp.le.s32.totalorder 1, %s20
      %p186 = scmp.lt.s32.totalorder %s20, 3
      %p187 = pnand %p185, %p186
      %p188 = pneg %p187
      // Predicated region
      $region9: #{tpu_custom_call.1} parent=5 // pred_check
        _
      $region10: #{tpu_custom_call.1} parent=5 // pred_check_branch
        %190 = sbr.rel (%p187) target = $region12
      $region11: #{tpu_custom_call.1} parent=5 // pred_region
        %s191 = ssub.s32 %s20, 1
        // Predicated region
        $region13: #{tpu_custom_call.1} parent=11 // pred_check
          %p192 = pneg %p67
        $region14: #{tpu_custom_call.1} parent=11 // pred_check_branch
          %194 = sbr.rel (%p192) target = $region16
        $region15: #{tpu_custom_call.1} parent=11 // pred_region
          %s196 = ssub.s32 5120, 5120
          %197 = vsyncadd [#allocation7], %s196
          %s198 = sshll.u32 [#allocation6], 4
          %s199 = int_to_ptr.vmem [resolvable:$true] %s198
          %204 = dma.hbm_to_vmem [thread:$0]  %s1, 5120, %s199, [#allocation7], 64, 64, 4
        $region16: #{tpu_custom_call.1} parent=11 // pred_fallthru
          _
        // Predicated region
        $region17: #{tpu_custom_call.1} parent=11 // pred_check
          %p205 = pneg %p88
        $region18: #{tpu_custom_call.1} parent=11 // pred_check_branch
          %207 = sbr.rel (%p205) target = $region20
        $region19: #{tpu_custom_call.1} parent=11 // pred_region
          %s209 = ssub.s32 15360, 15360
          %210 = vsyncadd [#allocation7], %s209
          %s211 = sshll.u32 [#allocation8], 4
          %s212 = int_to_ptr.vmem [resolvable:$true] %s211
          %217 = dma.hbm_to_vmem [thread:$0]  %s2, 15360, %s212, [#allocation7], 64, 64, 4
        $region20: #{tpu_custom_call.1} parent=11 // pred_fallthru
          _
        // Predicated region
        $region21: #{tpu_custom_call.1} parent=11 // pred_check
          %p218 = pneg %p109
        $region22: #{tpu_custom_call.1} parent=11 // pred_check_branch
          %220 = sbr.rel (%p218) target = $region24
        $region23: #{tpu_custom_call.1} parent=11 // pred_region
          %s222 = ssub.s32 5120, 5120
          %223 = vsyncadd [#allocation10], %s222
          %s224 = sshll.u32 [#allocation9], 4
          %s225 = int_to_ptr.vmem [resolvable:$true] %s224
          %230 = dma.hbm_to_vmem [thread:$0]  %s3, 5120, %s225, [#allocation10], 64, 64, 4
        $region24: #{tpu_custom_call.1} parent=11 // pred_fallthru
          _
        // Predicated region
        $region25: #{tpu_custom_call.1} parent=11 // pred_check
          %p231 = pneg %p130
        $region26: #{tpu_custom_call.1} parent=11 // pred_check_branch
          %233 = sbr.rel (%p231) target = $region28
        $region27: #{tpu_custom_call.1} parent=11 // pred_region
          _
        $region28: #{tpu_custom_call.1} parent=11 // pred_fallthru
          _
        // Predicated region
        $region29: #{tpu_custom_call.1} parent=11 // pred_check
          %p234 = pneg %p151
        $region30: #{tpu_custom_call.1} parent=11 // pred_check_branch
          %236 = sbr.rel (%p234) target = $region32
        $region31: #{tpu_custom_call.1} parent=11 // pred_region
          _
        $region32: #{tpu_custom_call.1} parent=11 // pred_fallthru
          _
      $region12: #{tpu_custom_call.1} parent=5 // pred_fallthru
        _
      %p237 = scmp.lt.s32.totalorder %s20, 2
      // Predicated region
      $region33: #{tpu_custom_call.1} parent=5 // pred_check
        %p238 = pneg %p237
      $region34: #{tpu_custom_call.1} parent=5 // pred_check_branch
        %240 = sbr.rel (%p238) target = $region36
      $region35: #{tpu_custom_call.1} parent=5 // pred_region
        // Predicated region
        $region37: #{tpu_custom_call.1} parent=35 // pred_check
          %p241 = pneg %p40
        $region38: #{tpu_custom_call.1} parent=35 // pred_check_branch
          %243 = sbr.rel (%p241) target = $region40
        $region39: #{tpu_custom_call.1} parent=35 // pred_region
          %s244 = sand.u32 %s30, 1
          %s245 = scalar_lea.sflag [#allocation4], %s244
          %s246 = sand.u32 %s30, 1
          %s247 = smul.addr %s246, 8
          %s248 = scalar_lea.vmem [#allocation3], %s247
          %s250 = ssub.s32 128, 128
          %251 = vsyncadd %s245, %s250
          %s252 = smul.addr %s20, 2
          %s253 = smul.addr %s252, 64
          %s254 = scalar_lea.hbm %s0, %s253
          %s255 = sshll.u32 %s248, 4
          %s256 = int_to_ptr.vmem [resolvable:$true] %s255
          %261 = dma.hbm_to_vmem [thread:$0]  %s254, 128, %s256, %s245, 64, 64, 4
        $region40: #{tpu_custom_call.1} parent=35 // pred_fallthru
          _
      $region36: #{tpu_custom_call.1} parent=5 // pred_fallthru
        _
      %p262 = scmp.le.s32.totalorder 1, %s20
      %p263 = scmp.lt.s32.totalorder %s20, 3
      %p264 = pnand %p262, %p263
      %p265 = pneg %p264
      // Predicated region
      $region41: #{tpu_custom_call.1} parent=5 // pred_check
        _
      $region42: #{tpu_custom_call.1} parent=5 // pred_check_branch
        %267 = sbr.rel (%p264) target = $region44
      $region43: #{tpu_custom_call.1} parent=5 // pred_region
        %s268 = ssub.s32 %s20, 1
        %s269 = sand.u32 %s33, 1
        %s270 = scalar_lea.sflag [#allocation4], %s269
        %s271 = sand.u32 %s33, 1
        %s272 = smul.addr %s271, 8
        %s273 = scalar_lea.vmem [#allocation3], %s272
        // Predicated region
        $region45: #{tpu_custom_call.1} parent=43 // pred_check
          %p274 = pneg %p46
        $region46: #{tpu_custom_call.1} parent=43 // pred_check_branch
          %276 = sbr.rel (%p274) target = $region48
        $region47: #{tpu_custom_call.1} parent=43 // pred_region
          %277 = dma.done %s270, 128
        $region48: #{tpu_custom_call.1} parent=43 // pred_fallthru
          _
        // Predicated region
        $region49: #{tpu_custom_call.1} parent=43 // pred_check
          %p278 = pneg %p67
        $region50: #{tpu_custom_call.1} parent=43 // pred_check_branch
          %280 = sbr.rel (%p278) target = $region52
        $region51: #{tpu_custom_call.1} parent=43 // pred_region
          %281 = dma.done [#allocation7], 5120
        $region52: #{tpu_custom_call.1} parent=43 // pred_fallthru
          _
        // Predicated region
        $region53: #{tpu_custom_call.1} parent=43 // pred_check
          %p282 = pneg %p88
        $region54: #{tpu_custom_call.1} parent=43 // pred_check_branch
          %284 = sbr.rel (%p282) target = $region56
        $region55: #{tpu_custom_call.1} parent=43 // pred_region
          %285 = dma.done [#allocation7], 15360
        $region56: #{tpu_custom_call.1} parent=43 // pred_fallthru
          _
        // Predicated region
        $region57: #{tpu_custom_call.1} parent=43 // pred_check
          %p286 = pneg %p109
        $region58: #{tpu_custom_call.1} parent=43 // pred_check_branch
          %288 = sbr.rel (%p286) target = $region60
        $region59: #{tpu_custom_call.1} parent=43 // pred_region
          %289 = dma.done [#allocation10], 5120
        $region60: #{tpu_custom_call.1} parent=43 // pred_fallthru
          _
        %s290 = sand.u32 %s33, 1
        %s291 = scalar_lea.sflag [#allocation4], %s290
        %s292 = sand.u32 %s33, 1
        %s293 = smul.addr %s292, 8
        %s294 = scalar_lea.vmem [#allocation3], %s293
        %p295 = pneg %p46
        %p296 = pneg %p43
        %p297 = pneg %p67
        %p298 = pneg %p64
        %p299 = pneg %p88
        %p300 = pneg %p85
        %p301 = pneg %p109
        %p302 = pneg %p106
        %p303 = pneg %p130
        %p304 = pneg %p127
        %p305 = pneg %p151
        %p306 = pneg %p148
        %p307 = pneg %p177
        %p308 = pneg %p174
        %s309 = sand.u32 %s164, 1
        %s310 = scalar_lea.sflag [#allocation5], %s309
        %s311 = sand.u32 %s164, 1
        %s312 = smul.addr %s311, 16
        %s313 = scalar_lea.vmem [#allocation11], %s312
        %317 = vst [vmem:[#allocation2] sm:$0x1] 0
        %318 = vst [vmem:[#allocation2 + $0x8] sm:$0x2] 0
        %v319 = vld [vmem:[%s273] sm:$0xf]
        %v320 = vld [vmem:[%s273 + $0x4] sm:$0xf]
        %vm323 = vcmask 1040384
        %vm324 = vcmask 1044484
        %vm325 = vmor %vm323, %vm324
        %v326 = vrot.slane %v319, 7
        %v327 = vrot.slane %v326, 4
        %v328 = vrot.slane %v320, 7
        %v329 = vsel %vm325, %v327, %v328
        %v330 = vrot.slane %v328, 4
        %334 = vst [vmem:[#allocation2] sm:$0xe] %v326
        %335 = vst [vmem:[#allocation2 + $0x4] sm:$0xf] %v329
        %336 = vst [vmem:[#allocation2 + $0x8] sm:$0x1] %v330
        %v337 = vlaneseq
        %v338 = vshrl.u32 %v337, 7
        %v339 = vadd.s32 %v338, 8
        %vm340 = vcmp.lt.s32.totalorder %v338, 8
        %vm341 = vcmp.lt.s32.totalorder %v339, 8
        %v342 = vld [vmem:[#allocation2] sm:$0xf]
        %v343 = vld [vmem:[#allocation2 + $0x4] sm:$0xf]
        %v344 = vld [vmem:[#allocation6] sm:$0xf]
        %v345 = vld [vmem:[#allocation6 + $0x4] sm:$0xf]
        %v346 = vld [vmem:[#allocation6 + $0x8] sm:$0xf]
        %v347 = vld [vmem:[#allocation6 + $0xc] sm:$0xf]
        %v348 = vld [vmem:[#allocation6 + $0x10] sm:$0xf]
        %v349 = vld [vmem:[#allocation6 + $0x14] sm:$0xf]
        %v350 = vld [vmem:[#allocation6 + $0x18] sm:$0xf]
        %v351 = vld [vmem:[#allocation6 + $0x1c] sm:$0xf]
        %v352 = vld [vmem:[#allocation6 + $0x20] sm:$0xf]
        %v353 = vld [vmem:[#allocation6 + $0x24] sm:$0xf]
        %v354 = vld [vmem:[#allocation6 + $0x28] sm:$0xf]
        %v355 = vld [vmem:[#allocation6 + $0x2c] sm:$0xf]
        %v356 = vld [vmem:[#allocation6 + $0x30] sm:$0xf]
        %v357 = vld [vmem:[#allocation6 + $0x34] sm:$0xf]
        %v358 = vld [vmem:[#allocation6 + $0x38] sm:$0xf]
        %v359 = vld [vmem:[#allocation6 + $0x3c] sm:$0xf]
        %v360 = vld [vmem:[#allocation2 + $0x8] sm:$0x1]
        %s361 = scalar_lea.vmem [#allocation6], 64
        %v362 = vld [vmem:[%s361] sm:$0xf]
        %v363 = vld [vmem:[%s361 + $0x4] sm:$0xf]
        %v364 = vld [vmem:[%s361 + $0x8] sm:$0xf]
        %v365 = vld [vmem:[%s361 + $0xc] sm:$0xf]
        %v366 = vld [vmem:[%s361 + $0x10] sm:$0xf]
        %v367 = vld [vmem:[%s361 + $0x14] sm:$0xf]
        %v368 = vld [vmem:[%s361 + $0x18] sm:$0xf]
        %v369 = vld [vmem:[%s361 + $0x1c] sm:$0xf]
        %v370 = vld [vmem:[%s361 + $0x20] sm:$0xf]
        %v371 = vld [vmem:[%s361 + $0x24] sm:$0xf]
        %v372 = vld [vmem:[%s361 + $0x28] sm:$0xf]
        %v373 = vld [vmem:[%s361 + $0x2c] sm:$0xf]
        %v374 = vld [vmem:[%s361 + $0x30] sm:$0xf]
        %v375 = vld [vmem:[%s361 + $0x34] sm:$0xf]
        %v376 = vld [vmem:[%s361 + $0x38] sm:$0xf]
        %v377 = vld [vmem:[%s361 + $0x3c] sm:$0xf]
        %v381 = vunpack.c.l.b16 %v342
        %v382 = vunpack.c.l.b16 %v343
        %v383 = vunpack.c.l.b16 %v360
        %v384 = vpack.c.b16 %v382, %v381
        %v385 = vpack.c.b16 %v383, %v383
        %vm386 = vsmask.f32 7424
        %v388 = vshrl.u32 %v384, 16
        %v390 = vshll.u32 %v384, 16
        %v392 = vrot.slane %v390, 1
        %v393 = vor.u32 %v388, %v392
        %v395 = vshll.u32 %v385, 16
        %v397 = vrot.slane %v395, 1
        %v398 = vsel %vm386, %v393, %v397
        %v416 = vunpack.c.l.b16 %v362
        %v417 = vunpack.c.l.b16 %v363
        %v418 = vunpack.c.l.b16 %v364
        %v419 = vunpack.c.l.b16 %v365
        %v420 = vunpack.c.l.b16 %v366
        %v421 = vunpack.c.l.b16 %v367
        %v422 = vunpack.c.l.b16 %v368
        %v423 = vunpack.c.l.b16 %v369
        %v424 = vunpack.c.l.b16 %v370
        %v425 = vunpack.c.l.b16 %v371
        %v426 = vunpack.c.l.b16 %v372
        %v427 = vunpack.c.l.b16 %v373
        %v428 = vunpack.c.l.b16 %v374
        %v429 = vunpack.c.l.b16 %v375
        %v430 = vunpack.c.l.b16 %v376
        %v431 = vunpack.c.l.b16 %v377
        %v432 = vpack.c.b16 %v417, %v416
        %v433 = vpack.c.b16 %v419, %v418
        %v434 = vpack.c.b16 %v421, %v420
        %v435 = vpack.c.b16 %v423, %v422
        %v436 = vpack.c.b16 %v425, %v424
        %v437 = vpack.c.b16 %v427, %v426
        %v438 = vpack.c.b16 %v429, %v428
        %v439 = vpack.c.b16 %v431, %v430
        %448 = vmatprep.subr.bf16.mxu0 0
        %449 = vmatpush1.bf16.msra.mxu0 %v439
        %450 = vmatprep.subr.bf16.mxu0 0
        %451 = vmatpush1.bf16.msra.mxu0 %v438
        %452 = vmatprep.subr.bf16.mxu0 0
        %453 = vmatpush1.bf16.msra.mxu0 %v437
        %454 = vmatprep.subr.bf16.mxu0 0
        %455 = vmatpush1.bf16.msra.mxu0 %v436
        %456 = vmatprep.subr.bf16.mxu0 0
        %457 = vmatpush1.bf16.msra.mxu0 %v435
        %458 = vmatprep.subr.bf16.mxu0 0
        %459 = vmatpush1.bf16.msra.mxu0 %v434
        %460 = vmatprep.subr.bf16.mxu0 0
        %461 = vmatpush1.bf16.msra.mxu0 %v433
        %462 = vmatprep.subr.bf16.mxu0 0
        %463 = vmatpush1.bf16.msra.mxu0 %v432
        %464 = vmatprep.subr.bf16.mxu0 0
        %465 = vmatpush2.bf16.msra.mxu0 0
        %466 = vmatprep.subr.bf16.mxu0 0
        %467 = vmatpush2.bf16.msra.mxu0 0
        %468 = vmatprep.subr.bf16.mxu0 0
        %469 = vmatpush2.bf16.msra.mxu0 0
        %470 = vmatprep.subr.bf16.mxu0 0
        %471 = vmatpush2.bf16.msra.mxu0 0
        %472 = vmatprep.subr.bf16.mxu0 0
        %473 = vmatpush2.bf16.msra.mxu0 0
        %474 = vmatprep.subr.bf16.mxu0 0
        %475 = vmatpush2.bf16.msra.mxu0 0
        %476 = vmatprep.subr.bf16.mxu0 0
        %477 = vmatpush2.bf16.msra.mxu0 0
        %478 = vmatprep.subr.bf16.mxu0 0
        %479 = vmatpush2.bf16.msra.mxu0 0
        %480 = vmatprep.mubr.bf16.mxu0 0
        %481 = vmatmul.mubr.bf16.gmra.mxu0 %v398
        %v482 = vpop.f32.mrf.mxu0
        %v483 = vadd.f32 0.0, %v482
        %v484 = vpop.f32.mrf.mxu0
        %v485 = vpop.f32.mrf.mxu0
        %v486 = vadd.f32 0.0, %v485
        %v487 = vpop.f32.mrf.mxu0
        %488 = vdwg.mxu0
        %v506 = vunpack.c.l.b16 %v344
        %v507 = vunpack.c.l.b16 %v345
        %v508 = vunpack.c.l.b16 %v346
        %v509 = vunpack.c.l.b16 %v347
        %v510 = vunpack.c.l.b16 %v348
        %v511 = vunpack.c.l.b16 %v349
        %v512 = vunpack.c.l.b16 %v350
        %v513 = vunpack.c.l.b16 %v351
        %v514 = vunpack.c.l.b16 %v352
        %v515 = vunpack.c.l.b16 %v353
        %v516 = vunpack.c.l.b16 %v354
        %v517 = vunpack.c.l.b16 %v355
        %v518 = vunpack.c.l.b16 %v356
        %v519 = vunpack.c.l.b16 %v357
        %v520 = vunpack.c.l.b16 %v358
        %v521 = vunpack.c.l.b16 %v359
        %v522 = vpack.c.b16 %v507, %v506
        %v523 = vpack.c.b16 %v509, %v508
        %v524 = vpack.c.b16 %v511, %v510
        %v525 = vpack.c.b16 %v513, %v512
        %v526 = vpack.c.b16 %v515, %v514
        %v527 = vpack.c.b16 %v517, %v516
        %v528 = vpack.c.b16 %v519, %v518
        %v529 = vpack.c.b16 %v521, %v520
        %538 = vmatprep.subr.bf16.mxu0 0
        %539 = vmatpush1.bf16.msra.mxu0 %v529
        %540 = vmatprep.subr.bf16.mxu0 0
        %541 = vmatpush1.bf16.msra.mxu0 %v528
        %542 = vmatprep.subr.bf16.mxu0 0
        %543 = vmatpush1.bf16.msra.mxu0 %v527
        %544 = vmatprep.subr.bf16.mxu0 0
        %545 = vmatpush1.bf16.msra.mxu0 %v526
        %546 = vmatprep.subr.bf16.mxu0 0
        %547 = vmatpush1.bf16.msra.mxu0 %v525
        %548 = vmatprep.subr.bf16.mxu0 0
        %549 = vmatpush1.bf16.msra.mxu0 %v524
        %550 = vmatprep.subr.bf16.mxu0 0
        %551 = vmatpush1.bf16.msra.mxu0 %v523
        %552 = vmatprep.subr.bf16.mxu0 0
        %553 = vmatpush1.bf16.msra.mxu0 %v522
        %554 = vmatprep.subr.bf16.mxu0 0
        %555 = vmatpush2.bf16.msra.mxu0 0
        %556 = vmatprep.subr.bf16.mxu0 0
        %557 = vmatpush2.bf16.msra.mxu0 0
        %558 = vmatprep.subr.bf16.mxu0 0
        %559 = vmatpush2.bf16.msra.mxu0 0
        %560 = vmatprep.subr.bf16.mxu0 0
        %561 = vmatpush2.bf16.msra.mxu0 0
        %562 = vmatprep.subr.bf16.mxu0 0
        %563 = vmatpush2.bf16.msra.mxu0 0
        %564 = vmatprep.subr.bf16.mxu0 0
        %565 = vmatpush2.bf16.msra.mxu0 0
        %566 = vmatprep.subr.bf16.mxu0 0
        %567 = vmatpush2.bf16.msra.mxu0 0
        %568 = vmatprep.subr.bf16.mxu0 0
        %569 = vmatpush2.bf16.msra.mxu0 0
        %570 = vmatprep.mubr.bf16.mxu0 0
        %571 = vmatmul.mubr.bf16.gmra.mxu0 %v384
        %v572 = vpop.f32.mrf.mxu0
        %v573 = vadd.f32 %v483, %v572
        %v574 = vpop.f32.mrf.mxu0
        %v575 = vpop.f32.mrf.mxu0
        %v576 = vadd.f32 %v486, %v575
        %v577 = vpop.f32.mrf.mxu0
        %578 = vdwg.mxu0
        %v579 = vld [vmem:[#allocation2] sm:$0xe]
        %s580 = scalar_lea.vmem [#allocation6], 128
        %v581 = vld [vmem:[%s580] sm:$0xf]
        %v582 = vld [vmem:[%s580 + $0x4] sm:$0xf]
        %v583 = vld [vmem:[%s580 + $0x8] sm:$0xf]
        %v584 = vld [vmem:[%s580 + $0xc] sm:$0xf]
        %v585 = vld [vmem:[%s580 + $0x10] sm:$0xf]
        %v586 = vld [vmem:[%s580 + $0x14] sm:$0xf]
        %v587 = vld [vmem:[%s580 + $0x18] sm:$0xf]
        %v588 = vld [vmem:[%s580 + $0x1c] sm:$0xf]
        %v589 = vld [vmem:[%s580 + $0x20] sm:$0xf]
        %v590 = vld [vmem:[%s580 + $0x24] sm:$0xf]
        %v591 = vld [vmem:[%s580 + $0x28] sm:$0xf]
        %v592 = vld [vmem:[%s580 + $0x2c] sm:$0xf]
        %v593 = vld [vmem:[%s580 + $0x30] sm:$0xf]
        %v594 = vld [vmem:[%s580 + $0x34] sm:$0xf]
        %v595 = vld [vmem:[%s580 + $0x38] sm:$0xf]
        %v596 = vld [vmem:[%s580 + $0x3c] sm:$0xf]
        %v598 = vunpack.c.l.b16 %v579
        %v599 = vpack.c.b16 %v382, %v598
        %vm600 = vcmask 1046528
        %v601 = vrot.slane %v599, 1
        %v602 = vrot.slane %v385, 1
        %v603 = vsel %vm600, %v601, %v602
        %v621 = vunpack.c.l.b16 %v581
        %v622 = vunpack.c.l.b16 %v582
        %v623 = vunpack.c.l.b16 %v583
        %v624 = vunpack.c.l.b16 %v584
        %v625 = vunpack.c.l.b16 %v585
        %v626 = vunpack.c.l.b16 %v586
        %v627 = vunpack.c.l.b16 %v587
        %v628 = vunpack.c.l.b16 %v588
        %v629 = vunpack.c.l.b16 %v589
        %v630 = vunpack.c.l.b16 %v590
        %v631 = vunpack.c.l.b16 %v591
        %v632 = vunpack.c.l.b16 %v592
        %v633 = vunpack.c.l.b16 %v593
        %v634 = vunpack.c.l.b16 %v594
        %v635 = vunpack.c.l.b16 %v595
        %v636 = vunpack.c.l.b16 %v596
        %v637 = vpack.c.b16 %v622, %v621
        %v638 = vpack.c.b16 %v624, %v623
        %v639 = vpack.c.b16 %v626, %v625
        %v640 = vpack.c.b16 %v628, %v627
        %v641 = vpack.c.b16 %v630, %v629
        %v642 = vpack.c.b16 %v632, %v631
        %v643 = vpack.c.b16 %v634, %v633
        %v644 = vpack.c.b16 %v636, %v635
        %653 = vmatprep.subr.bf16.mxu0 0
        %654 = vmatpush1.bf16.msra.mxu0 %v644
        %655 = vmatprep.subr.bf16.mxu0 0
        %656 = vmatpush1.bf16.msra.mxu0 %v643
        %657 = vmatprep.subr.bf16.mxu0 0
        %658 = vmatpush1.bf16.msra.mxu0 %v642
        %659 = vmatprep.subr.bf16.mxu0 0
        %660 = vmatpush1.bf16.msra.mxu0 %v641
        %661 = vmatprep.subr.bf16.mxu0 0
        %662 = vmatpush1.bf16.msra.mxu0 %v640
        %663 = vmatprep.subr.bf16.mxu0 0
        %664 = vmatpush1.bf16.msra.mxu0 %v639
        %665 = vmatprep.subr.bf16.mxu0 0
        %666 = vmatpush1.bf16.msra.mxu0 %v638
        %667 = vmatprep.subr.bf16.mxu0 0
        %668 = vmatpush1.bf16.msra.mxu0 %v637
        %669 = vmatprep.subr.bf16.mxu0 0
        %670 = vmatpush2.bf16.msra.mxu0 0
        %671 = vmatprep.subr.bf16.mxu0 0
        %672 = vmatpush2.bf16.msra.mxu0 0
        %673 = vmatprep.subr.bf16.mxu0 0
        %674 = vmatpush2.bf16.msra.mxu0 0
        %675 = vmatprep.subr.bf16.mxu0 0
        %676 = vmatpush2.bf16.msra.mxu0 0
        %677 = vmatprep.subr.bf16.mxu0 0
        %678 = vmatpush2.bf16.msra.mxu0 0
        %679 = vmatprep.subr.bf16.mxu0 0
        %680 = vmatpush2.bf16.msra.mxu0 0
        %681 = vmatprep.subr.bf16.mxu0 0
        %682 = vmatpush2.bf16.msra.mxu0 0
        %683 = vmatprep.subr.bf16.mxu0 0
        %684 = vmatpush2.bf16.msra.mxu0 0
        %685 = vmatprep.mubr.bf16.mxu0 0
        %686 = vmatmul.mubr.bf16.gmra.mxu0 %v603
        %v687 = vpop.f32.mrf.mxu0
        %v688 = vadd.f32 0.0, %v687
        %v689 = vpop.f32.mrf.mxu0
        %v690 = vpop.f32.mrf.mxu0
        %v691 = vadd.f32 0.0, %v690
        %v692 = vpop.f32.mrf.mxu0
        %693 = vdwg.mxu0
        %v694 = vadd.f32 %v573, %v688
        %v695 = vadd.f32 %v576, %v691
        %v696 = vld [vmem:[#allocation2 + $0x8] sm:$0x3]
        %s697 = scalar_lea.vmem [#allocation6], 192
        %v698 = vld [vmem:[%s697] sm:$0xf]
        %v699 = vld [vmem:[%s697 + $0x4] sm:$0xf]
        %v700 = vld [vmem:[%s697 + $0x8] sm:$0xf]
        %v701 = vld [vmem:[%s697 + $0xc] sm:$0xf]
        %v702 = vld [vmem:[%s697 + $0x10] sm:$0xf]
        %v703 = vld [vmem:[%s697 + $0x14] sm:$0xf]
        %v704 = vld [vmem:[%s697 + $0x18] sm:$0xf]
        %v705 = vld [vmem:[%s697 + $0x1c] sm:$0xf]
        %v706 = vld [vmem:[%s697 + $0x20] sm:$0xf]
        %v707 = vld [vmem:[%s697 + $0x24] sm:$0xf]
        %v708 = vld [vmem:[%s697 + $0x28] sm:$0xf]
        %v709 = vld [vmem:[%s697 + $0x2c] sm:$0xf]
        %v710 = vld [vmem:[%s697 + $0x30] sm:$0xf]
        %v711 = vld [vmem:[%s697 + $0x34] sm:$0xf]
        %v712 = vld [vmem:[%s697 + $0x38] sm:$0xf]
        %v713 = vld [vmem:[%s697 + $0x3c] sm:$0xf]
        %v715 = vunpack.c.l.b16 %v696
        %v716 = vpack.c.b16 %v715, %v715
        %vm717 = vsmask.f32 6400
        %v719 = vshrl.u32 %v599, 16
        %v721 = vrot.slane %v719, 1
        %v722 = vshll.u32 %v599, 16
        %v724 = vrot.slane %v722, 2
        %v725 = vor.u32 %v721, %v724
        %v727 = vshrl.u32 %v716, 16
        %v729 = vrot.slane %v727, 1
        %v730 = vshll.u32 %v716, 16
        %v732 = vrot.slane %v730, 2
        %v733 = vor.u32 %v729, %v732
        %v734 = vsel %vm717, %v725, %v733
        %v752 = vunpack.c.l.b16 %v698
        %v753 = vunpack.c.l.b16 %v699
        %v754 = vunpack.c.l.b16 %v700
        %v755 = vunpack.c.l.b16 %v701
        %v756 = vunpack.c.l.b16 %v702
        %v757 = vunpack.c.l.b16 %v703
        %v758 = vunpack.c.l.b16 %v704
        %v759 = vunpack.c.l.b16 %v705
        %v760 = vunpack.c.l.b16 %v706
        %v761 = vunpack.c.l.b16 %v707
        %v762 = vunpack.c.l.b16 %v708
        %v763 = vunpack.c.l.b16 %v709
        %v764 = vunpack.c.l.b16 %v710
        %v765 = vunpack.c.l.b16 %v711
        %v766 = vunpack.c.l.b16 %v712
        %v767 = vunpack.c.l.b16 %v713
        %v768 = vpack.c.b16 %v753, %v752
        %v769 = vpack.c.b16 %v755, %v754
        %v770 = vpack.c.b16 %v757, %v756
        %v771 = vpack.c.b16 %v759, %v758
        %v772 = vpack.c.b16 %v761, %v760
        %v773 = vpack.c.b16 %v763, %v762
        %v774 = vpack.c.b16 %v765, %v764
        %v775 = vpack.c.b16 %v767, %v766
        %784 = vmatprep.subr.bf16.mxu0 0
        %785 = vmatpush1.bf16.msra.mxu0 %v775
        %786 = vmatprep.subr.bf16.mxu0 0
        %787 = vmatpush1.bf16.msra.mxu0 %v774
        %788 = vmatprep.subr.bf16.mxu0 0
        %789 = vmatpush1.bf16.msra.mxu0 %v773
        %790 = vmatprep.subr.bf16.mxu0 0
        %791 = vmatpush1.bf16.msra.mxu0 %v772
        %792 = vmatprep.subr.bf16.mxu0 0
        %793 = vmatpush1.bf16.msra.mxu0 %v771
        %794 = vmatprep.subr.bf16.mxu0 0
        %795 = vmatpush1.bf16.msra.mxu0 %v770
        %796 = vmatprep.subr.bf16.mxu0 0
        %797 = vmatpush1.bf16.msra.mxu0 %v769
        %798 = vmatprep.subr.bf16.mxu0 0
        %799 = vmatpush1.bf16.msra.mxu0 %v768
        %800 = vmatprep.subr.bf16.mxu0 0
        %801 = vmatpush2.bf16.msra.mxu0 0
        %802 = vmatprep.subr.bf16.mxu0 0
        %803 = vmatpush2.bf16.msra.mxu0 0
        %804 = vmatprep.subr.bf16.mxu0 0
        %805 = vmatpush2.bf16.msra.mxu0 0
        %806 = vmatprep.subr.bf16.mxu0 0
        %807 = vmatpush2.bf16.msra.mxu0 0
        %808 = vmatprep.subr.bf16.mxu0 0
        %809 = vmatpush2.bf16.msra.mxu0 0
        %810 = vmatprep.subr.bf16.mxu0 0
        %811 = vmatpush2.bf16.msra.mxu0 0
        %812 = vmatprep.subr.bf16.mxu0 0
        %813 = vmatpush2.bf16.msra.mxu0 0
        %814 = vmatprep.subr.bf16.mxu0 0
        %815 = vmatpush2.bf16.msra.mxu0 0
        %816 = vmatprep.mubr.bf16.mxu0 0
        %817 = vmatmul.mubr.bf16.gmra.mxu0 %v734
        %v818 = vpop.f32.mrf.mxu0
        %v819 = vadd.f32 0.0, %v818
        %v820 = vpop.f32.mrf.mxu0
        %v821 = vpop.f32.mrf.mxu0
        %v822 = vadd.f32 0.0, %v821
        %v823 = vpop.f32.mrf.mxu0
        %824 = vdwg.mxu0
        %v825 = vadd.f32 %v694, %v819
        %v826 = vadd.f32 %v695, %v822
        %v827 = vld [vmem:[#allocation2] sm:$0xc]
        %s828 = scalar_lea.vmem [#allocation6], 256
        %v829 = vld [vmem:[%s828] sm:$0xf]
        %v830 = vld [vmem:[%s828 + $0x4] sm:$0xf]
        %v831 = vld [vmem:[%s828 + $0x8] sm:$0xf]
        %v832 = vld [vmem:[%s828 + $0xc] sm:$0xf]
        %v833 = vld [vmem:[%s828 + $0x10] sm:$0xf]
        %v834 = vld [vmem:[%s828 + $0x14] sm:$0xf]
        %v835 = vld [vmem:[%s828 + $0x18] sm:$0xf]
        %v836 = vld [vmem:[%s828 + $0x1c] sm:$0xf]
        %v837 = vld [vmem:[%s828 + $0x20] sm:$0xf]
        %v838 = vld [vmem:[%s828 + $0x24] sm:$0xf]
        %v839 = vld [vmem:[%s828 + $0x28] sm:$0xf]
        %v840 = vld [vmem:[%s828 + $0x2c] sm:$0xf]
        %v841 = vld [vmem:[%s828 + $0x30] sm:$0xf]
        %v842 = vld [vmem:[%s828 + $0x34] sm:$0xf]
        %v843 = vld [vmem:[%s828 + $0x38] sm:$0xf]
        %v844 = vld [vmem:[%s828 + $0x3c] sm:$0xf]
        %v846 = vunpack.c.l.b16 %v827
        %v847 = vpack.c.b16 %v382, %v846
        %vm848 = vcmask 1045504
        %v849 = vrot.slane %v847, 2
        %v850 = vrot.slane %v716, 2
        %v851 = vsel %vm848, %v849, %v850
        %v869 = vunpack.c.l.b16 %v829
        %v870 = vunpack.c.l.b16 %v830
        %v871 = vunpack.c.l.b16 %v831
        %v872 = vunpack.c.l.b16 %v832
        %v873 = vunpack.c.l.b16 %v833
        %v874 = vunpack.c.l.b16 %v834
        %v875 = vunpack.c.l.b16 %v835
        %v876 = vunpack.c.l.b16 %v836
        %v877 = vunpack.c.l.b16 %v837
        %v878 = vunpack.c.l.b16 %v838
        %v879 = vunpack.c.l.b16 %v839
        %v880 = vunpack.c.l.b16 %v840
        %v881 = vunpack.c.l.b16 %v841
        %v882 = vunpack.c.l.b16 %v842
        %v883 = vunpack.c.l.b16 %v843
        %v884 = vunpack.c.l.b16 %v844
        %v885 = vpack.c.b16 %v870, %v869
        %v886 = vpack.c.b16 %v872, %v871
        %v887 = vpack.c.b16 %v874, %v873
        %v888 = vpack.c.b16 %v876, %v875
        %v889 = vpack.c.b16 %v878, %v877
        %v890 = vpack.c.b16 %v880, %v879
        %v891 = vpack.c.b16 %v882, %v881
        %v892 = vpack.c.b16 %v884, %v883
        %901 = vmatprep.subr.bf16.mxu0 0
        %902 = vmatpush1.bf16.msra.mxu0 %v892
        %903 = vmatprep.subr.bf16.mxu0 0
        %904 = vmatpush1.bf16.msra.mxu0 %v891
        %905 = vmatprep.subr.bf16.mxu0 0
        %906 = vmatpush1.bf16.msra.mxu0 %v890
        %907 = vmatprep.subr.bf16.mxu0 0
        %908 = vmatpush1.bf16.msra.mxu0 %v889
        %909 = vmatprep.subr.bf16.mxu0 0
        %910 = vmatpush1.bf16.msra.mxu0 %v888
        %911 = vmatprep.subr.bf16.mxu0 0
        %912 = vmatpush1.bf16.msra.mxu0 %v887
        %913 = vmatprep.subr.bf16.mxu0 0
        %914 = vmatpush1.bf16.msra.mxu0 %v886
        %915 = vmatprep.subr.bf16.mxu0 0
        %916 = vmatpush1.bf16.msra.mxu0 %v885
        %917 = vmatprep.subr.bf16.mxu0 0
        %918 = vmatpush2.bf16.msra.mxu0 0
        %919 = vmatprep.subr.bf16.mxu0 0
        %920 = vmatpush2.bf16.msra.mxu0 0
        %921 = vmatprep.subr.bf16.mxu0 0
        %922 = vmatpush2.bf16.msra.mxu0 0
        %923 = vmatprep.subr.bf16.mxu0 0
        %924 = vmatpush2.bf16.msra.mxu0 0
        %925 = vmatprep.subr.bf16.mxu0 0
        %926 = vmatpush2.bf16.msra.mxu0 0
        %927 = vmatprep.subr.bf16.mxu0 0
        %928 = vmatpush2.bf16.msra.mxu0 0
        %929 = vmatprep.subr.bf16.mxu0 0
        %930 = vmatpush2.bf16.msra.mxu0 0
        %931 = vmatprep.subr.bf16.mxu0 0
        %932 = vmatpush2.bf16.msra.mxu0 0
        %933 = vmatprep.mubr.bf16.mxu0 0
        %934 = vmatmul.mubr.bf16.gmra.mxu0 %v851
        %v935 = vpop.f32.mrf.mxu0
        %v936 = vadd.f32 0.0, %v935
        %v937 = vpop.f32.mrf.mxu0
        %v938 = vpop.f32.mrf.mxu0
        %v939 = vadd.f32 0.0, %v938
        %v940 = vpop.f32.mrf.mxu0
        %941 = vdwg.mxu0
        %v942 = vadd.f32 %v825, %v936
        %v943 = vadd.f32 %v826, %v939
        %v944 = vld [vmem:[%s4] sm:$0x1]
        %v946 = vlaneseq
        %v947 = vshrl.u32 %v946, 7
        %v948 = vsub.s32 0, %v947
        %v949 = vrot.slane %v944, %v948
        %v951 = vadd.f32 %v942, %v949
        %v952 = vadd.f32 %v943, %v949
        %v953 = vpack.c.bf16 %v952, %v951
        %v954 = vtanh.bf16.pop %v953
        %v955 = vsel %vm340, 1, 0
        %v956 = vsel %vm341, 1, 0
        %vm957 = vcmp.eq.s32.totalorder %v955, 1
        %vm958 = vcmp.eq.s32.totalorder %v956, 1
        %vm959 = vmpackc.low %vm957, %vm957
        %vm960 = vmpackc.low %vm958, %vm958
        %v961 = vsel %vm959, 65537, 0
        %v962 = vsel %vm960, 65537, 0
        %v963 = vunpack.c.l.b16 %v961
        %v964 = vunpack.c.l.b16 %v962
        %v965 = vpack.c.b16 %v964, %v963
        %vm966 = vcmp.ne.s16.totalorder %v965, 0
        %v967 = vsel %vm966, %v954, 0
        %v969 = vunpack.c.l.b16 %v967
        %v970 = vunpack.c.h.b16 %v967
        %v971 = vpack.c.b16 %v969, %v969
        %v972 = vpack.c.b16 %v970, %v970
        %v973 = vrot.slane %v971, 7
        %v974 = vrot.slane %v973, 4
        %v975 = vrot.slane %v972, 7
        %v976 = vsel %vm325, %v974, %v975
        %v977 = vrot.slane %v975, 4
        %981 = vst [vmem:[#allocation2] sm:$0xe] %v973
        %982 = vst [vmem:[#allocation2 + $0x4] sm:$0xf] %v976
        %983 = vst [vmem:[#allocation2 + $0x8] sm:$0x1] %v977
        %v984 = vld [vmem:[#allocation2] sm:$0xf]
        %v985 = vld [vmem:[#allocation2 + $0x4] sm:$0xf]
        %v986 = vld [vmem:[#allocation8] sm:$0xf]
        %v987 = vld [vmem:[#allocation8 + $0x4] sm:$0xf]
        %v988 = vld [vmem:[#allocation8 + $0x8] sm:$0xf]
        %v989 = vld [vmem:[#allocation8 + $0xc] sm:$0xf]
        %v990 = vld [vmem:[#allocation8 + $0x10] sm:$0xf]
        %v991 = vld [vmem:[#allocation8 + $0x14] sm:$0xf]
        %v992 = vld [vmem:[#allocation8 + $0x18] sm:$0xf]
        %v993 = vld [vmem:[#allocation8 + $0x1c] sm:$0xf]
        %v994 = vld [vmem:[#allocation8 + $0x20] sm:$0xf]
        %v995 = vld [vmem:[#allocation8 + $0x24] sm:$0xf]
        %v996 = vld [vmem:[#allocation8 + $0x28] sm:$0xf]
        %v997 = vld [vmem:[#allocation8 + $0x2c] sm:$0xf]
        %v998 = vld [vmem:[#allocation8 + $0x30] sm:$0xf]
        %v999 = vld [vmem:[#allocation8 + $0x34] sm:$0xf]
        %v1000 = vld [vmem:[#allocation8 + $0x38] sm:$0xf]
        %v1001 = vld [vmem:[#allocation8 + $0x3c] sm:$0xf]
        %v1002 = vld [vmem:[#allocation2 + $0x8] sm:$0x1]
        %s1003 = scalar_lea.vmem [#allocation8], 64
        %v1004 = vld [vmem:[%s1003] sm:$0xf]
        %v1005 = vld [vmem:[%s1003 + $0x4] sm:$0xf]
        %v1006 = vld [vmem:[%s1003 + $0x8] sm:$0xf]
        %v1007 = vld [vmem:[%s1003 + $0xc] sm:$0xf]
        %v1008 = vld [vmem:[%s1003 + $0x10] sm:$0xf]
        %v1009 = vld [vmem:[%s1003 + $0x14] sm:$0xf]
        %v1010 = vld [vmem:[%s1003 + $0x18] sm:$0xf]
        %v1011 = vld [vmem:[%s1003 + $0x1c] sm:$0xf]
        %v1012 = vld [vmem:[%s1003 + $0x20] sm:$0xf]
        %v1013 = vld [vmem:[%s1003 + $0x24] sm:$0xf]
        %v1014 = vld [vmem:[%s1003 + $0x28] sm:$0xf]
        %v1015 = vld [vmem:[%s1003 + $0x2c] sm:$0xf]
        %v1016 = vld [vmem:[%s1003 + $0x30] sm:$0xf]
        %v1017 = vld [vmem:[%s1003 + $0x34] sm:$0xf]
        %v1018 = vld [vmem:[%s1003 + $0x38] sm:$0xf]
        %v1019 = vld [vmem:[%s1003 + $0x3c] sm:$0xf]
        %v1023 = vunpack.c.l.b16 %v984
        %v1024 = vunpack.c.l.b16 %v985
        %v1025 = vunpack.c.l.b16 %v1002
        %v1026 = vpack.c.b16 %v1024, %v1023
        %v1027 = vpack.c.b16 %v1025, %v1025
        %v1029 = vshrl.u32 %v1026, 16
        %v1031 = vshll.u32 %v1026, 16
        %v1033 = vrot.slane %v1031, 1
        %v1034 = vor.u32 %v1029, %v1033
        %v1036 = vshll.u32 %v1027, 16
        %v1038 = vrot.slane %v1036, 1
        %v1039 = vsel %vm386, %v1034, %v1038
        %v1057 = vunpack.c.l.b16 %v1004
        %v1058 = vunpack.c.l.b16 %v1005
        %v1059 = vunpack.c.l.b16 %v1006
        %v1060 = vunpack.c.l.b16 %v1007
        %v1061 = vunpack.c.l.b16 %v1008
        %v1062 = vunpack.c.l.b16 %v1009
        %v1063 = vunpack.c.l.b16 %v1010
        %v1064 = vunpack.c.l.b16 %v1011
        %v1065 = vunpack.c.l.b16 %v1012
        %v1066 = vunpack.c.l.b16 %v1013
        %v1067 = vunpack.c.l.b16 %v1014
        %v1068 = vunpack.c.l.b16 %v1015
        %v1069 = vunpack.c.l.b16 %v1016
        %v1070 = vunpack.c.l.b16 %v1017
        %v1071 = vunpack.c.l.b16 %v1018
        %v1072 = vunpack.c.l.b16 %v1019
        %v1073 = vpack.c.b16 %v1058, %v1057
        %v1074 = vpack.c.b16 %v1060, %v1059
        %v1075 = vpack.c.b16 %v1062, %v1061
        %v1076 = vpack.c.b16 %v1064, %v1063
        %v1077 = vpack.c.b16 %v1066, %v1065
        %v1078 = vpack.c.b16 %v1068, %v1067
        %v1079 = vpack.c.b16 %v1070, %v1069
        %v1080 = vpack.c.b16 %v1072, %v1071
        %1089 = vmatprep.subr.bf16.mxu0 0
        %1090 = vmatpush1.bf16.msra.mxu0 %v1080
        %1091 = vmatprep.subr.bf16.mxu0 0
        %1092 = vmatpush1.bf16.msra.mxu0 %v1079
        %1093 = vmatprep.subr.bf16.mxu0 0
        %1094 = vmatpush1.bf16.msra.mxu0 %v1078
        %1095 = vmatprep.subr.bf16.mxu0 0
        %1096 = vmatpush1.bf16.msra.mxu0 %v1077
        %1097 = vmatprep.subr.bf16.mxu0 0
        %1098 = vmatpush1.bf16.msra.mxu0 %v1076
        %1099 = vmatprep.subr.bf16.mxu0 0
        %1100 = vmatpush1.bf16.msra.mxu0 %v1075
        %1101 = vmatprep.subr.bf16.mxu0 0
        %1102 = vmatpush1.bf16.msra.mxu0 %v1074
        %1103 = vmatprep.subr.bf16.mxu0 0
        %1104 = vmatpush1.bf16.msra.mxu0 %v1073
        %1105 = vmatprep.subr.bf16.mxu0 0
        %1106 = vmatpush2.bf16.msra.mxu0 0
        %1107 = vmatprep.subr.bf16.mxu0 0
        %1108 = vmatpush2.bf16.msra.mxu0 0
        %1109 = vmatprep.subr.bf16.mxu0 0
        %1110 = vmatpush2.bf16.msra.mxu0 0
        %1111 = vmatprep.subr.bf16.mxu0 0
        %1112 = vmatpush2.bf16.msra.mxu0 0
        %1113 = vmatprep.subr.bf16.mxu0 0
        %1114 = vmatpush2.bf16.msra.mxu0 0
        %1115 = vmatprep.subr.bf16.mxu0 0
        %1116 = vmatpush2.bf16.msra.mxu0 0
        %1117 = vmatprep.subr.bf16.mxu0 0
        %1118 = vmatpush2.bf16.msra.mxu0 0
        %1119 = vmatprep.subr.bf16.mxu0 0
        %1120 = vmatpush2.bf16.msra.mxu0 0
        %1121 = vmatprep.mubr.bf16.mxu0 0
        %1122 = vmatmul.mubr.bf16.gmra.mxu0 %v1039
        %v1123 = vpop.f32.mrf.mxu0
        %v1124 = vadd.f32 0.0, %v1123
        %v1125 = vpop.f32.mrf.mxu0
        %v1126 = vpop.f32.mrf.mxu0
        %v1127 = vadd.f32 0.0, %v1126
        %v1128 = vpop.f32.mrf.mxu0
        %1129 = vdwg.mxu0
        %v1147 = vunpack.c.l.b16 %v986
        %v1148 = vunpack.c.l.b16 %v987
        %v1149 = vunpack.c.l.b16 %v988
        %v1150 = vunpack.c.l.b16 %v989
        %v1151 = vunpack.c.l.b16 %v990
        %v1152 = vunpack.c.l.b16 %v991
        %v1153 = vunpack.c.l.b16 %v992
        %v1154 = vunpack.c.l.b16 %v993
        %v1155 = vunpack.c.l.b16 %v994
        %v1156 = vunpack.c.l.b16 %v995
        %v1157 = vunpack.c.l.b16 %v996
        %v1158 = vunpack.c.l.b16 %v997
        %v1159 = vunpack.c.l.b16 %v998
        %v1160 = vunpack.c.l.b16 %v999
        %v1161 = vunpack.c.l.b16 %v1000
        %v1162 = vunpack.c.l.b16 %v1001
        %v1163 = vpack.c.b16 %v1148, %v1147
        %v1164 = vpack.c.b16 %v1150, %v1149
        %v1165 = vpack.c.b16 %v1152, %v1151
        %v1166 = vpack.c.b16 %v1154, %v1153
        %v1167 = vpack.c.b16 %v1156, %v1155
        %v1168 = vpack.c.b16 %v1158, %v1157
        %v1169 = vpack.c.b16 %v1160, %v1159
        %v1170 = vpack.c.b16 %v1162, %v1161
        %1179 = vmatprep.subr.bf16.mxu0 0
        %1180 = vmatpush1.bf16.msra.mxu0 %v1170
        %1181 = vmatprep.subr.bf16.mxu0 0
        %1182 = vmatpush1.bf16.msra.mxu0 %v1169
        %1183 = vmatprep.subr.bf16.mxu0 0
        %1184 = vmatpush1.bf16.msra.mxu0 %v1168
        %1185 = vmatprep.subr.bf16.mxu0 0
        %1186 = vmatpush1.bf16.msra.mxu0 %v1167
        %1187 = vmatprep.subr.bf16.mxu0 0
        %1188 = vmatpush1.bf16.msra.mxu0 %v1166
        %1189 = vmatprep.subr.bf16.mxu0 0
        %1190 = vmatpush1.bf16.msra.mxu0 %v1165
        %1191 = vmatprep.subr.bf16.mxu0 0
        %1192 = vmatpush1.bf16.msra.mxu0 %v1164
        %1193 = vmatprep.subr.bf16.mxu0 0
        %1194 = vmatpush1.bf16.msra.mxu0 %v1163
        %1195 = vmatprep.subr.bf16.mxu0 0
        %1196 = vmatpush2.bf16.msra.mxu0 0
        %1197 = vmatprep.subr.bf16.mxu0 0
        %1198 = vmatpush2.bf16.msra.mxu0 0
        %1199 = vmatprep.subr.bf16.mxu0 0
        %1200 = vmatpush2.bf16.msra.mxu0 0
        %1201 = vmatprep.subr.bf16.mxu0 0
        %1202 = vmatpush2.bf16.msra.mxu0 0
        %1203 = vmatprep.subr.bf16.mxu0 0
        %1204 = vmatpush2.bf16.msra.mxu0 0
        %1205 = vmatprep.subr.bf16.mxu0 0
        %1206 = vmatpush2.bf16.msra.mxu0 0
        %1207 = vmatprep.subr.bf16.mxu0 0
        %1208 = vmatpush2.bf16.msra.mxu0 0
        %1209 = vmatprep.subr.bf16.mxu0 0
        %1210 = vmatpush2.bf16.msra.mxu0 0
        %1211 = vmatprep.mubr.bf16.mxu0 0
        %1212 = vmatmul.mubr.bf16.gmra.mxu0 %v1026
        %v1213 = vpop.f32.mrf.mxu0
        %v1214 = vadd.f32 %v1124, %v1213
        %v1215 = vpop.f32.mrf.mxu0
        %v1216 = vpop.f32.mrf.mxu0
        %v1217 = vadd.f32 %v1127, %v1216
        %v1218 = vpop.f32.mrf.mxu0
        %1219 = vdwg.mxu0
        %v1220 = vld [vmem:[#allocation2] sm:$0xe]
        %s1221 = scalar_lea.vmem [#allocation8], 128
        %v1222 = vld [vmem:[%s1221] sm:$0xf]
        %v1223 = vld [vmem:[%s1221 + $0x4] sm:$0xf]
        %v1224 = vld [vmem:[%s1221 + $0x8] sm:$0xf]
        %v1225 = vld [vmem:[%s1221 + $0xc] sm:$0xf]
        %v1226 = vld [vmem:[%s1221 + $0x10] sm:$0xf]
        %v1227 = vld [vmem:[%s1221 + $0x14] sm:$0xf]
        %v1228 = vld [vmem:[%s1221 + $0x18] sm:$0xf]
        %v1229 = vld [vmem:[%s1221 + $0x1c] sm:$0xf]
        %v1230 = vld [vmem:[%s1221 + $0x20] sm:$0xf]
        %v1231 = vld [vmem:[%s1221 + $0x24] sm:$0xf]
        %v1232 = vld [vmem:[%s1221 + $0x28] sm:$0xf]
        %v1233 = vld [vmem:[%s1221 + $0x2c] sm:$0xf]
        %v1234 = vld [vmem:[%s1221 + $0x30] sm:$0xf]
        %v1235 = vld [vmem:[%s1221 + $0x34] sm:$0xf]
        %v1236 = vld [vmem:[%s1221 + $0x38] sm:$0xf]
        %v1237 = vld [vmem:[%s1221 + $0x3c] sm:$0xf]
        %v1239 = vunpack.c.l.b16 %v1220
        %v1240 = vpack.c.b16 %v1024, %v1239
        %v1241 = vrot.slane %v1240, 1
        %v1242 = vrot.slane %v1027, 1
        %v1243 = vsel %vm600, %v1241, %v1242
        %v1261 = vunpack.c.l.b16 %v1222
        %v1262 = vunpack.c.l.b16 %v1223
        %v1263 = vunpack.c.l.b16 %v1224
        %v1264 = vunpack.c.l.b16 %v1225
        %v1265 = vunpack.c.l.b16 %v1226
        %v1266 = vunpack.c.l.b16 %v1227
        %v1267 = vunpack.c.l.b16 %v1228
        %v1268 = vunpack.c.l.b16 %v1229
        %v1269 = vunpack.c.l.b16 %v1230
        %v1270 = vunpack.c.l.b16 %v1231
        %v1271 = vunpack.c.l.b16 %v1232
        %v1272 = vunpack.c.l.b16 %v1233
        %v1273 = vunpack.c.l.b16 %v1234
        %v1274 = vunpack.c.l.b16 %v1235
        %v1275 = vunpack.c.l.b16 %v1236
        %v1276 = vunpack.c.l.b16 %v1237
        %v1277 = vpack.c.b16 %v1262, %v1261
        %v1278 = vpack.c.b16 %v1264, %v1263
        %v1279 = vpack.c.b16 %v1266, %v1265
        %v1280 = vpack.c.b16 %v1268, %v1267
        %v1281 = vpack.c.b16 %v1270, %v1269
        %v1282 = vpack.c.b16 %v1272, %v1271
        %v1283 = vpack.c.b16 %v1274, %v1273
        %v1284 = vpack.c.b16 %v1276, %v1275
        %1293 = vmatprep.subr.bf16.mxu0 0
        %1294 = vmatpush1.bf16.msra.mxu0 %v1284
        %1295 = vmatprep.subr.bf16.mxu0 0
        %1296 = vmatpush1.bf16.msra.mxu0 %v1283
        %1297 = vmatprep.subr.bf16.mxu0 0
        %1298 = vmatpush1.bf16.msra.mxu0 %v1282
        %1299 = vmatprep.subr.bf16.mxu0 0
        %1300 = vmatpush1.bf16.msra.mxu0 %v1281
        %1301 = vmatprep.subr.bf16.mxu0 0
        %1302 = vmatpush1.bf16.msra.mxu0 %v1280
        %1303 = vmatprep.subr.bf16.mxu0 0
        %1304 = vmatpush1.bf16.msra.mxu0 %v1279
        %1305 = vmatprep.subr.bf16.mxu0 0
        %1306 = vmatpush1.bf16.msra.mxu0 %v1278
        %1307 = vmatprep.subr.bf16.mxu0 0
        %1308 = vmatpush1.bf16.msra.mxu0 %v1277
        %1309 = vmatprep.subr.bf16.mxu0 0
        %1310 = vmatpush2.bf16.msra.mxu0 0
        %1311 = vmatprep.subr.bf16.mxu0 0
        %1312 = vmatpush2.bf16.msra.mxu0 0
        %1313 = vmatprep.subr.bf16.mxu0 0
        %1314 = vmatpush2.bf16.msra.mxu0 0
        %1315 = vmatprep.subr.bf16.mxu0 0
        %1316 = vmatpush2.bf16.msra.mxu0 0
        %1317 = vmatprep.subr.bf16.mxu0 0
        %1318 = vmatpush2.bf16.msra.mxu0 0
        %1319 = vmatprep.subr.bf16.mxu0 0
        %1320 = vmatpush2.bf16.msra.mxu0 0
        %1321 = vmatprep.subr.bf16.mxu0 0
        %1322 = vmatpush2.bf16.msra.mxu0 0
        %1323 = vmatprep.subr.bf16.mxu0 0
        %1324 = vmatpush2.bf16.msra.mxu0 0
        %1325 = vmatprep.mubr.bf16.mxu0 0
        %1326 = vmatmul.mubr.bf16.gmra.mxu0 %v1243
        %v1327 = vpop.f32.mrf.mxu0
        %v1328 = vadd.f32 0.0, %v1327
        %v1329 = vpop.f32.mrf.mxu0
        %v1330 = vpop.f32.mrf.mxu0
        %v1331 = vadd.f32 0.0, %v1330
        %v1332 = vpop.f32.mrf.mxu0
        %1333 = vdwg.mxu0
        %v1334 = vadd.f32 %v1214, %v1328
        %v1335 = vadd.f32 %v1217, %v1331
        %v1336 = vld [vmem:[#allocation2 + $0x8] sm:$0x3]
        %s1337 = scalar_lea.vmem [#allocation8], 192
        %v1338 = vld [vmem:[%s1337] sm:$0xf]
        %v1339 = vld [vmem:[%s1337 + $0x4] sm:$0xf]
        %v1340 = vld [vmem:[%s1337 + $0x8] sm:$0xf]
        %v1341 = vld [vmem:[%s1337 + $0xc] sm:$0xf]
        %v1342 = vld [vmem:[%s1337 + $0x10] sm:$0xf]
        %v1343 = vld [vmem:[%s1337 + $0x14] sm:$0xf]
        %v1344 = vld [vmem:[%s1337 + $0x18] sm:$0xf]
        %v1345 = vld [vmem:[%s1337 + $0x1c] sm:$0xf]
        %v1346 = vld [vmem:[%s1337 + $0x20] sm:$0xf]
        %v1347 = vld [vmem:[%s1337 + $0x24] sm:$0xf]
        %v1348 = vld [vmem:[%s1337 + $0x28] sm:$0xf]
        %v1349 = vld [vmem:[%s1337 + $0x2c] sm:$0xf]
        %v1350 = vld [vmem:[%s1337 + $0x30] sm:$0xf]
        %v1351 = vld [vmem:[%s1337 + $0x34] sm:$0xf]
        %v1352 = vld [vmem:[%s1337 + $0x38] sm:$0xf]
        %v1353 = vld [vmem:[%s1337 + $0x3c] sm:$0xf]
        %v1355 = vunpack.c.l.b16 %v1336
        %v1356 = vpack.c.b16 %v1355, %v1355
        %v1358 = vshrl.u32 %v1240, 16
        %v1360 = vrot.slane %v1358, 1
        %v1361 = vshll.u32 %v1240, 16
        %v1363 = vrot.slane %v1361, 2
        %v1364 = vor.u32 %v1360, %v1363
        %v1366 = vshrl.u32 %v1356, 16
        %v1368 = vrot.slane %v1366, 1
        %v1369 = vshll.u32 %v1356, 16
        %v1371 = vrot.slane %v1369, 2
        %v1372 = vor.u32 %v1368, %v1371
        %v1373 = vsel %vm717, %v1364, %v1372
        %v1391 = vunpack.c.l.b16 %v1338
        %v1392 = vunpack.c.l.b16 %v1339
        %v1393 = vunpack.c.l.b16 %v1340
        %v1394 = vunpack.c.l.b16 %v1341
        %v1395 = vunpack.c.l.b16 %v1342
        %v1396 = vunpack.c.l.b16 %v1343
        %v1397 = vunpack.c.l.b16 %v1344
        %v1398 = vunpack.c.l.b16 %v1345
        %v1399 = vunpack.c.l.b16 %v1346
        %v1400 = vunpack.c.l.b16 %v1347
        %v1401 = vunpack.c.l.b16 %v1348
        %v1402 = vunpack.c.l.b16 %v1349
        %v1403 = vunpack.c.l.b16 %v1350
        %v1404 = vunpack.c.l.b16 %v1351
        %v1405 = vunpack.c.l.b16 %v1352
        %v1406 = vunpack.c.l.b16 %v1353
        %v1407 = vpack.c.b16 %v1392, %v1391
        %v1408 = vpack.c.b16 %v1394, %v1393
        %v1409 = vpack.c.b16 %v1396, %v1395
        %v1410 = vpack.c.b16 %v1398, %v1397
        %v1411 = vpack.c.b16 %v1400, %v1399
        %v1412 = vpack.c.b16 %v1402, %v1401
        %v1413 = vpack.c.b16 %v1404, %v1403
        %v1414 = vpack.c.b16 %v1406, %v1405
        %1423 = vmatprep.subr.bf16.mxu0 0
        %1424 = vmatpush1.bf16.msra.mxu0 %v1414
        %1425 = vmatprep.subr.bf16.mxu0 0
        %1426 = vmatpush1.bf16.msra.mxu0 %v1413
        %1427 = vmatprep.subr.bf16.mxu0 0
        %1428 = vmatpush1.bf16.msra.mxu0 %v1412
        %1429 = vmatprep.subr.bf16.mxu0 0
        %1430 = vmatpush1.bf16.msra.mxu0 %v1411
        %1431 = vmatprep.subr.bf16.mxu0 0
        %1432 = vmatpush1.bf16.msra.mxu0 %v1410
        %1433 = vmatprep.subr.bf16.mxu0 0
        %1434 = vmatpush1.bf16.msra.mxu0 %v1409
        %1435 = vmatprep.subr.bf16.mxu0 0
        %1436 = vmatpush1.bf16.msra.mxu0 %v1408
        %1437 = vmatprep.subr.bf16.mxu0 0
        %1438 = vmatpush1.bf16.msra.mxu0 %v1407
        %1439 = vmatprep.subr.bf16.mxu0 0
        %1440 = vmatpush2.bf16.msra.mxu0 0
        %1441 = vmatprep.subr.bf16.mxu0 0
        %1442 = vmatpush2.bf16.msra.mxu0 0
        %1443 = vmatprep.subr.bf16.mxu0 0
        %1444 = vmatpush2.bf16.msra.mxu0 0
        %1445 = vmatprep.subr.bf16.mxu0 0
        %1446 = vmatpush2.bf16.msra.mxu0 0
        %1447 = vmatprep.subr.bf16.mxu0 0
        %1448 = vmatpush2.bf16.msra.mxu0 0
        %1449 = vmatprep.subr.bf16.mxu0 0
        %1450 = vmatpush2.bf16.msra.mxu0 0
        %1451 = vmatprep.subr.bf16.mxu0 0
        %1452 = vmatpush2.bf16.msra.mxu0 0
        %1453 = vmatprep.subr.bf16.mxu0 0
        %1454 = vmatpush2.bf16.msra.mxu0 0
        %1455 = vmatprep.mubr.bf16.mxu0 0
        %1456 = vmatmul.mubr.bf16.gmra.mxu0 %v1373
        %v1457 = vpop.f32.mrf.mxu0
        %v1458 = vadd.f32 0.0, %v1457
        %v1459 = vpop.f32.mrf.mxu0
        %v1460 = vpop.f32.mrf.mxu0
        %v1461 = vadd.f32 0.0, %v1460
        %v1462 = vpop.f32.mrf.mxu0
        %1463 = vdwg.mxu0
        %v1464 = vadd.f32 %v1334, %v1458
        %v1465 = vadd.f32 %v1335, %v1461
        %v1466 = vld [vmem:[#allocation2] sm:$0xc]
        %s1467 = scalar_lea.vmem [#allocation8], 256
        %v1468 = vld [vmem:[%s1467] sm:$0xf]
        %v1469 = vld [vmem:[%s1467 + $0x4] sm:$0xf]
        %v1470 = vld [vmem:[%s1467 + $0x8] sm:$0xf]
        %v1471 = vld [vmem:[%s1467 + $0xc] sm:$0xf]
        %v1472 = vld [vmem:[%s1467 + $0x10] sm:$0xf]
        %v1473 = vld [vmem:[%s1467 + $0x14] sm:$0xf]
        %v1474 = vld [vmem:[%s1467 + $0x18] sm:$0xf]
        %v1475 = vld [vmem:[%s1467 + $0x1c] sm:$0xf]
        %v1476 = vld [vmem:[%s1467 + $0x20] sm:$0xf]
        %v1477 = vld [vmem:[%s1467 + $0x24] sm:$0xf]
        %v1478 = vld [vmem:[%s1467 + $0x28] sm:$0xf]
        %v1479 = vld [vmem:[%s1467 + $0x2c] sm:$0xf]
        %v1480 = vld [vmem:[%s1467 + $0x30] sm:$0xf]
        %v1481 = vld [vmem:[%s1467 + $0x34] sm:$0xf]
        %v1482 = vld [vmem:[%s1467 + $0x38] sm:$0xf]
        %v1483 = vld [vmem:[%s1467 + $0x3c] sm:$0xf]
        %v1485 = vunpack.c.l.b16 %v1466
        %v1486 = vpack.c.b16 %v1024, %v1485
        %v1487 = vrot.slane %v1486, 2
        %v1488 = vrot.slane %v1356, 2
        %v1489 = vsel %vm848, %v1487, %v1488
        %v1507 = vunpack.c.l.b16 %v1468
        %v1508 = vunpack.c.l.b16 %v1469
        %v1509 = vunpack.c.l.b16 %v1470
        %v1510 = vunpack.c.l.b16 %v1471
        %v1511 = vunpack.c.l.b16 %v1472
        %v1512 = vunpack.c.l.b16 %v1473
        %v1513 = vunpack.c.l.b16 %v1474
        %v1514 = vunpack.c.l.b16 %v1475
        %v1515 = vunpack.c.l.b16 %v1476
        %v1516 = vunpack.c.l.b16 %v1477
        %v1517 = vunpack.c.l.b16 %v1478
        %v1518 = vunpack.c.l.b16 %v1479
        %v1519 = vunpack.c.l.b16 %v1480
        %v1520 = vunpack.c.l.b16 %v1481
        %v1521 = vunpack.c.l.b16 %v1482
        %v1522 = vunpack.c.l.b16 %v1483
        %v1523 = vpack.c.b16 %v1508, %v1507
        %v1524 = vpack.c.b16 %v1510, %v1509
        %v1525 = vpack.c.b16 %v1512, %v1511
        %v1526 = vpack.c.b16 %v1514, %v1513
        %v1527 = vpack.c.b16 %v1516, %v1515
        %v1528 = vpack.c.b16 %v1518, %v1517
        %v1529 = vpack.c.b16 %v1520, %v1519
        %v1530 = vpack.c.b16 %v1522, %v1521
        %1539 = vmatprep.subr.bf16.mxu0 0
        %1540 = vmatpush1.bf16.msra.mxu0 %v1530
        %1541 = vmatprep.subr.bf16.mxu0 0
        %1542 = vmatpush1.bf16.msra.mxu0 %v1529
        %1543 = vmatprep.subr.bf16.mxu0 0
        %1544 = vmatpush1.bf16.msra.mxu0 %v1528
        %1545 = vmatprep.subr.bf16.mxu0 0
        %1546 = vmatpush1.bf16.msra.mxu0 %v1527
        %1547 = vmatprep.subr.bf16.mxu0 0
        %1548 = vmatpush1.bf16.msra.mxu0 %v1526
        %1549 = vmatprep.subr.bf16.mxu0 0
        %1550 = vmatpush1.bf16.msra.mxu0 %v1525
        %1551 = vmatprep.subr.bf16.mxu0 0
        %1552 = vmatpush1.bf16.msra.mxu0 %v1524
        %1553 = vmatprep.subr.bf16.mxu0 0
        %1554 = vmatpush1.bf16.msra.mxu0 %v1523
        %1555 = vmatprep.subr.bf16.mxu0 0
        %1556 = vmatpush2.bf16.msra.mxu0 0
        %1557 = vmatprep.subr.bf16.mxu0 0
        %1558 = vmatpush2.bf16.msra.mxu0 0
        %1559 = vmatprep.subr.bf16.mxu0 0
        %1560 = vmatpush2.bf16.msra.mxu0 0
        %1561 = vmatprep.subr.bf16.mxu0 0
        %1562 = vmatpush2.bf16.msra.mxu0 0
        %1563 = vmatprep.subr.bf16.mxu0 0
        %1564 = vmatpush2.bf16.msra.mxu0 0
        %1565 = vmatprep.subr.bf16.mxu0 0
        %1566 = vmatpush2.bf16.msra.mxu0 0
        %1567 = vmatprep.subr.bf16.mxu0 0
        %1568 = vmatpush2.bf16.msra.mxu0 0
        %1569 = vmatprep.subr.bf16.mxu0 0
        %1570 = vmatpush2.bf16.msra.mxu0 0
        %1571 = vmatprep.mubr.bf16.mxu0 0
        %1572 = vmatmul.mubr.bf16.gmra.mxu0 %v1489
        %v1573 = vpop.f32.mrf.mxu0
        %v1574 = vadd.f32 0.0, %v1573
        %v1575 = vpop.f32.mrf.mxu0
        %v1576 = vpop.f32.mrf.mxu0
        %v1577 = vadd.f32 0.0, %v1576
        %v1578 = vpop.f32.mrf.mxu0
        %1579 = vdwg.mxu0
        %v1580 = vadd.f32 %v1464, %v1574
        %v1581 = vadd.f32 %v1465, %v1577
        %s1582 = scalar_lea.vmem %s4, 1
        %v1583 = vld [vmem:[%s1582] sm:$0x1]
        %v1585 = vlaneseq
        %v1586 = vshrl.u32 %v1585, 7
        %v1587 = vsub.s32 0, %v1586
        %v1588 = vrot.slane %v1583, %v1587
        %v1590 = vadd.f32 %v1580, %v1588
        %v1591 = vadd.f32 %v1581, %v1588
        %v1592 = vpack.c.bf16 %v1591, %v1590
        %v1593 = vtanh.bf16.pop %v1592
        %v1594 = vsel %vm966, %v1593, 0
        %v1596 = vunpack.c.l.b16 %v1594
        %v1597 = vunpack.c.h.b16 %v1594
        %v1598 = vpack.c.b16 %v1596, %v1596
        %v1599 = vpack.c.b16 %v1597, %v1597
        %v1600 = vrot.slane %v1598, 7
        %v1601 = vrot.slane %v1600, 4
        %v1602 = vrot.slane %v1599, 7
        %v1603 = vsel %vm325, %v1601, %v1602
        %v1604 = vrot.slane %v1602, 4
        %1608 = vst [vmem:[#allocation2] sm:$0xe] %v1600
        %1609 = vst [vmem:[#allocation2 + $0x4] sm:$0xf] %v1603
        %1610 = vst [vmem:[#allocation2 + $0x8] sm:$0x1] %v1604
        %v1611 = vld [vmem:[#allocation2] sm:$0xf]
        %v1612 = vld [vmem:[#allocation2 + $0x4] sm:$0xf]
        %s1613 = scalar_lea.vmem [#allocation8], 320
        %v1614 = vld [vmem:[%s1613] sm:$0xf]
        %v1615 = vld [vmem:[%s1613 + $0x4] sm:$0xf]
        %v1616 = vld [vmem:[%s1613 + $0x8] sm:$0xf]
        %v1617 = vld [vmem:[%s1613 + $0xc] sm:$0xf]
        %v1618 = vld [vmem:[%s1613 + $0x10] sm:$0xf]
        %v1619 = vld [vmem:[%s1613 + $0x14] sm:$0xf]
        %v1620 = vld [vmem:[%s1613 + $0x18] sm:$0xf]
        %v1621 = vld [vmem:[%s1613 + $0x1c] sm:$0xf]
        %v1622 = vld [vmem:[%s1613 + $0x20] sm:$0xf]
        %v1623 = vld [vmem:[%s1613 + $0x24] sm:$0xf]
        %v1624 = vld [vmem:[%s1613 + $0x28] sm:$0xf]
        %v1625 = vld [vmem:[%s1613 + $0x2c] sm:$0xf]
        %v1626 = vld [vmem:[%s1613 + $0x30] sm:$0xf]
        %v1627 = vld [vmem:[%s1613 + $0x34] sm:$0xf]
        %v1628 = vld [vmem:[%s1613 + $0x38] sm:$0xf]
        %v1629 = vld [vmem:[%s1613 + $0x3c] sm:$0xf]
        %v1630 = vld [vmem:[#allocation2 + $0x8] sm:$0x1]
        %s1631 = scalar_lea.vmem [#allocation8], 384
        %v1632 = vld [vmem:[%s1631] sm:$0xf]
        %v1633 = vld [vmem:[%s1631 + $0x4] sm:$0xf]
        %v1634 = vld [vmem:[%s1631 + $0x8] sm:$0xf]
        %v1635 = vld [vmem:[%s1631 + $0xc] sm:$0xf]
        %v1636 = vld [vmem:[%s1631 + $0x10] sm:$0xf]
        %v1637 = vld [vmem:[%s1631 + $0x14] sm:$0xf]
        %v1638 = vld [vmem:[%s1631 + $0x18] sm:$0xf]
        %v1639 = vld [vmem:[%s1631 + $0x1c] sm:$0xf]
        %v1640 = vld [vmem:[%s1631 + $0x20] sm:$0xf]
        %v1641 = vld [vmem:[%s1631 + $0x24] sm:$0xf]
        %v1642 = vld [vmem:[%s1631 + $0x28] sm:$0xf]
        %v1643 = vld [vmem:[%s1631 + $0x2c] sm:$0xf]
        %v1644 = vld [vmem:[%s1631 + $0x30] sm:$0xf]
        %v1645 = vld [vmem:[%s1631 + $0x34] sm:$0xf]
        %v1646 = vld [vmem:[%s1631 + $0x38] sm:$0xf]
        %v1647 = vld [vmem:[%s1631 + $0x3c] sm:$0xf]
        %v1651 = vunpack.c.l.b16 %v1611
        %v1652 = vunpack.c.l.b16 %v1612
        %v1653 = vunpack.c.l.b16 %v1630
        %v1654 = vpack.c.b16 %v1652, %v1651
        %v1655 = vpack.c.b16 %v1653, %v1653
        %v1657 = vshrl.u32 %v1654, 16
        %v1659 = vshll.u32 %v1654, 16
        %v1661 = vrot.slane %v1659, 1
        %v1662 = vor.u32 %v1657, %v1661
        %v1664 = vshll.u32 %v1655, 16
        %v1666 = vrot.slane %v1664, 1
        %v1667 = vsel %vm386, %v1662, %v1666
        %v1685 = vunpack.c.l.b16 %v1632
        %v1686 = vunpack.c.l.b16 %v1633
        %v1687 = vunpack.c.l.b16 %v1634
        %v1688 = vunpack.c.l.b16 %v1635
        %v1689 = vunpack.c.l.b16 %v1636
        %v1690 = vunpack.c.l.b16 %v1637
        %v1691 = vunpack.c.l.b16 %v1638
        %v1692 = vunpack.c.l.b16 %v1639
        %v1693 = vunpack.c.l.b16 %v1640
        %v1694 = vunpack.c.l.b16 %v1641
        %v1695 = vunpack.c.l.b16 %v1642
        %v1696 = vunpack.c.l.b16 %v1643
        %v1697 = vunpack.c.l.b16 %v1644
        %v1698 = vunpack.c.l.b16 %v1645
        %v1699 = vunpack.c.l.b16 %v1646
        %v1700 = vunpack.c.l.b16 %v1647
        %v1701 = vpack.c.b16 %v1686, %v1685
        %v1702 = vpack.c.b16 %v1688, %v1687
        %v1703 = vpack.c.b16 %v1690, %v1689
        %v1704 = vpack.c.b16 %v1692, %v1691
        %v1705 = vpack.c.b16 %v1694, %v1693
        %v1706 = vpack.c.b16 %v1696, %v1695
        %v1707 = vpack.c.b16 %v1698, %v1697
        %v1708 = vpack.c.b16 %v1700, %v1699
        %1717 = vmatprep.subr.bf16.mxu0 0
        %1718 = vmatpush1.bf16.msra.mxu0 %v1708
        %1719 = vmatprep.subr.bf16.mxu0 0
        %1720 = vmatpush1.bf16.msra.mxu0 %v1707
        %1721 = vmatprep.subr.bf16.mxu0 0
        %1722 = vmatpush1.bf16.msra.mxu0 %v1706
        %1723 = vmatprep.subr.bf16.mxu0 0
        %1724 = vmatpush1.bf16.msra.mxu0 %v1705
        %1725 = vmatprep.subr.bf16.mxu0 0
        %1726 = vmatpush1.bf16.msra.mxu0 %v1704
        %1727 = vmatprep.subr.bf16.mxu0 0
        %1728 = vmatpush1.bf16.msra.mxu0 %v1703
        %1729 = vmatprep.subr.bf16.mxu0 0
        %1730 = vmatpush1.bf16.msra.mxu0 %v1702
        %1731 = vmatprep.subr.bf16.mxu0 0
        %1732 = vmatpush1.bf16.msra.mxu0 %v1701
        %1733 = vmatprep.subr.bf16.mxu0 0
        %1734 = vmatpush2.bf16.msra.mxu0 0
        %1735 = vmatprep.subr.bf16.mxu0 0
        %1736 = vmatpush2.bf16.msra.mxu0 0
        %1737 = vmatprep.subr.bf16.mxu0 0
        %1738 = vmatpush2.bf16.msra.mxu0 0
        %1739 = vmatprep.subr.bf16.mxu0 0
        %1740 = vmatpush2.bf16.msra.mxu0 0
        %1741 = vmatprep.subr.bf16.mxu0 0
        %1742 = vmatpush2.bf16.msra.mxu0 0
        %1743 = vmatprep.subr.bf16.mxu0 0
        %1744 = vmatpush2.bf16.msra.mxu0 0
        %1745 = vmatprep.subr.bf16.mxu0 0
        %1746 = vmatpush2.bf16.msra.mxu0 0
        %1747 = vmatprep.subr.bf16.mxu0 0
        %1748 = vmatpush2.bf16.msra.mxu0 0
        %1749 = vmatprep.mubr.bf16.mxu0 0
        %1750 = vmatmul.mubr.bf16.gmra.mxu0 %v1667
        %v1751 = vpop.f32.mrf.mxu0
        %v1752 = vadd.f32 0.0, %v1751
        %v1753 = vpop.f32.mrf.mxu0
        %v1754 = vpop.f32.mrf.mxu0
        %v1755 = vadd.f32 0.0, %v1754
        %v1756 = vpop.f32.mrf.mxu0
        %1757 = vdwg.mxu0
        %v1775 = vunpack.c.l.b16 %v1614
        %v1776 = vunpack.c.l.b16 %v1615
        %v1777 = vunpack.c.l.b16 %v1616
        %v1778 = vunpack.c.l.b16 %v1617
        %v1779 = vunpack.c.l.b16 %v1618
        %v1780 = vunpack.c.l.b16 %v1619
        %v1781 = vunpack.c.l.b16 %v1620
        %v1782 = vunpack.c.l.b16 %v1621
        %v1783 = vunpack.c.l.b16 %v1622
        %v1784 = vunpack.c.l.b16 %v1623
        %v1785 = vunpack.c.l.b16 %v1624
        %v1786 = vunpack.c.l.b16 %v1625
        %v1787 = vunpack.c.l.b16 %v1626
        %v1788 = vunpack.c.l.b16 %v1627
        %v1789 = vunpack.c.l.b16 %v1628
        %v1790 = vunpack.c.l.b16 %v1629
        %v1791 = vpack.c.b16 %v1776, %v1775
        %v1792 = vpack.c.b16 %v1778, %v1777
        %v1793 = vpack.c.b16 %v1780, %v1779
        %v1794 = vpack.c.b16 %v1782, %v1781
        %v1795 = vpack.c.b16 %v1784, %v1783
        %v1796 = vpack.c.b16 %v1786, %v1785
        %v1797 = vpack.c.b16 %v1788, %v1787
        %v1798 = vpack.c.b16 %v1790, %v1789
        %1807 = vmatprep.subr.bf16.mxu0 0
        %1808 = vmatpush1.bf16.msra.mxu0 %v1798
        %1809 = vmatprep.subr.bf16.mxu0 0
        %1810 = vmatpush1.bf16.msra.mxu0 %v1797
        %1811 = vmatprep.subr.bf16.mxu0 0
        %1812 = vmatpush1.bf16.msra.mxu0 %v1796
        %1813 = vmatprep.subr.bf16.mxu0 0
        %1814 = vmatpush1.bf16.msra.mxu0 %v1795
        %1815 = vmatprep.subr.bf16.mxu0 0
        %1816 = vmatpush1.bf16.msra.mxu0 %v1794
        %1817 = vmatprep.subr.bf16.mxu0 0
        %1818 = vmatpush1.bf16.msra.mxu0 %v1793
        %1819 = vmatprep.subr.bf16.mxu0 0
        %1820 = vmatpush1.bf16.msra.mxu0 %v1792
        %1821 = vmatprep.subr.bf16.mxu0 0
        %1822 = vmatpush1.bf16.msra.mxu0 %v1791
        %1823 = vmatprep.subr.bf16.mxu0 0
        %1824 = vmatpush2.bf16.msra.mxu0 0
        %1825 = vmatprep.subr.bf16.mxu0 0
        %1826 = vmatpush2.bf16.msra.mxu0 0
        %1827 = vmatprep.subr.bf16.mxu0 0
        %1828 = vmatpush2.bf16.msra.mxu0 0
        %1829 = vmatprep.subr.bf16.mxu0 0
        %1830 = vmatpush2.bf16.msra.mxu0 0
        %1831 = vmatprep.subr.bf16.mxu0 0
        %1832 = vmatpush2.bf16.msra.mxu0 0
        %1833 = vmatprep.subr.bf16.mxu0 0
        %1834 = vmatpush2.bf16.msra.mxu0 0
        %1835 = vmatprep.subr.bf16.mxu0 0
        %1836 = vmatpush2.bf16.msra.mxu0 0
        %1837 = vmatprep.subr.bf16.mxu0 0
        %1838 = vmatpush2.bf16.msra.mxu0 0
        %1839 = vmatprep.mubr.bf16.mxu0 0
        %1840 = vmatmul.mubr.bf16.gmra.mxu0 %v1654
        %v1841 = vpop.f32.mrf.mxu0
        %v1842 = vadd.f32 %v1752, %v1841
        %v1843 = vpop.f32.mrf.mxu0
        %v1844 = vpop.f32.mrf.mxu0
        %v1845 = vadd.f32 %v1755, %v1844
        %v1846 = vpop.f32.mrf.mxu0
        %1847 = vdwg.mxu0
        %v1848 = vld [vmem:[#allocation2] sm:$0xe]
        %s1849 = scalar_lea.vmem [#allocation8], 448
        %v1850 = vld [vmem:[%s1849] sm:$0xf]
        %v1851 = vld [vmem:[%s1849 + $0x4] sm:$0xf]
        %v1852 = vld [vmem:[%s1849 + $0x8] sm:$0xf]
        %v1853 = vld [vmem:[%s1849 + $0xc] sm:$0xf]
        %v1854 = vld [vmem:[%s1849 + $0x10] sm:$0xf]
        %v1855 = vld [vmem:[%s1849 + $0x14] sm:$0xf]
        %v1856 = vld [vmem:[%s1849 + $0x18] sm:$0xf]
        %v1857 = vld [vmem:[%s1849 + $0x1c] sm:$0xf]
        %v1858 = vld [vmem:[%s1849 + $0x20] sm:$0xf]
        %v1859 = vld [vmem:[%s1849 + $0x24] sm:$0xf]
        %v1860 = vld [vmem:[%s1849 + $0x28] sm:$0xf]
        %v1861 = vld [vmem:[%s1849 + $0x2c] sm:$0xf]
        %v1862 = vld [vmem:[%s1849 + $0x30] sm:$0xf]
        %v1863 = vld [vmem:[%s1849 + $0x34] sm:$0xf]
        %v1864 = vld [vmem:[%s1849 + $0x38] sm:$0xf]
        %v1865 = vld [vmem:[%s1849 + $0x3c] sm:$0xf]
        %v1867 = vunpack.c.l.b16 %v1848
        %v1868 = vpack.c.b16 %v1652, %v1867
        %v1869 = vrot.slane %v1868, 1
        %v1870 = vrot.slane %v1655, 1
        %v1871 = vsel %vm600, %v1869, %v1870
        %v1889 = vunpack.c.l.b16 %v1850
        %v1890 = vunpack.c.l.b16 %v1851
        %v1891 = vunpack.c.l.b16 %v1852
        %v1892 = vunpack.c.l.b16 %v1853
        %v1893 = vunpack.c.l.b16 %v1854
        %v1894 = vunpack.c.l.b16 %v1855
        %v1895 = vunpack.c.l.b16 %v1856
        %v1896 = vunpack.c.l.b16 %v1857
        %v1897 = vunpack.c.l.b16 %v1858
        %v1898 = vunpack.c.l.b16 %v1859
        %v1899 = vunpack.c.l.b16 %v1860
        %v1900 = vunpack.c.l.b16 %v1861
        %v1901 = vunpack.c.l.b16 %v1862
        %v1902 = vunpack.c.l.b16 %v1863
        %v1903 = vunpack.c.l.b16 %v1864
        %v1904 = vunpack.c.l.b16 %v1865
        %v1905 = vpack.c.b16 %v1890, %v1889
        %v1906 = vpack.c.b16 %v1892, %v1891
        %v1907 = vpack.c.b16 %v1894, %v1893
        %v1908 = vpack.c.b16 %v1896, %v1895
        %v1909 = vpack.c.b16 %v1898, %v1897
        %v1910 = vpack.c.b16 %v1900, %v1899
        %v1911 = vpack.c.b16 %v1902, %v1901
        %v1912 = vpack.c.b16 %v1904, %v1903
        %1921 = vmatprep.subr.bf16.mxu0 0
        %1922 = vmatpush1.bf16.msra.mxu0 %v1912
        %1923 = vmatprep.subr.bf16.mxu0 0
        %1924 = vmatpush1.bf16.msra.mxu0 %v1911
        %1925 = vmatprep.subr.bf16.mxu0 0
        %1926 = vmatpush1.bf16.msra.mxu0 %v1910
        %1927 = vmatprep.subr.bf16.mxu0 0
        %1928 = vmatpush1.bf16.msra.mxu0 %v1909
        %1929 = vmatprep.subr.bf16.mxu0 0
        %1930 = vmatpush1.bf16.msra.mxu0 %v1908
        %1931 = vmatprep.subr.bf16.mxu0 0
        %1932 = vmatpush1.bf16.msra.mxu0 %v1907
        %1933 = vmatprep.subr.bf16.mxu0 0
        %1934 = vmatpush1.bf16.msra.mxu0 %v1906
        %1935 = vmatprep.subr.bf16.mxu0 0
        %1936 = vmatpush1.bf16.msra.mxu0 %v1905
        %1937 = vmatprep.subr.bf16.mxu0 0
        %1938 = vmatpush2.bf16.msra.mxu0 0
        %1939 = vmatprep.subr.bf16.mxu0 0
        %1940 = vmatpush2.bf16.msra.mxu0 0
        %1941 = vmatprep.subr.bf16.mxu0 0
        %1942 = vmatpush2.bf16.msra.mxu0 0
        %1943 = vmatprep.subr.bf16.mxu0 0
        %1944 = vmatpush2.bf16.msra.mxu0 0
        %1945 = vmatprep.subr.bf16.mxu0 0
        %1946 = vmatpush2.bf16.msra.mxu0 0
        %1947 = vmatprep.subr.bf16.mxu0 0
        %1948 = vmatpush2.bf16.msra.mxu0 0
        %1949 = vmatprep.subr.bf16.mxu0 0
        %1950 = vmatpush2.bf16.msra.mxu0 0
        %1951 = vmatprep.subr.bf16.mxu0 0
        %1952 = vmatpush2.bf16.msra.mxu0 0
        %1953 = vmatprep.mubr.bf16.mxu0 0
        %1954 = vmatmul.mubr.bf16.gmra.mxu0 %v1871
        %v1955 = vpop.f32.mrf.mxu0
        %v1956 = vadd.f32 0.0, %v1955
        %v1957 = vpop.f32.mrf.mxu0
        %v1958 = vpop.f32.mrf.mxu0
        %v1959 = vadd.f32 0.0, %v1958
        %v1960 = vpop.f32.mrf.mxu0
        %1961 = vdwg.mxu0
        %v1962 = vadd.f32 %v1842, %v1956
        %v1963 = vadd.f32 %v1845, %v1959
        %v1964 = vld [vmem:[#allocation2 + $0x8] sm:$0x3]
        %s1965 = scalar_lea.vmem [#allocation8], 512
        %v1966 = vld [vmem:[%s1965] sm:$0xf]
        %v1967 = vld [vmem:[%s1965 + $0x4] sm:$0xf]
        %v1968 = vld [vmem:[%s1965 + $0x8] sm:$0xf]
        %v1969 = vld [vmem:[%s1965 + $0xc] sm:$0xf]
        %v1970 = vld [vmem:[%s1965 + $0x10] sm:$0xf]
        %v1971 = vld [vmem:[%s1965 + $0x14] sm:$0xf]
        %v1972 = vld [vmem:[%s1965 + $0x18] sm:$0xf]
        %v1973 = vld [vmem:[%s1965 + $0x1c] sm:$0xf]
        %v1974 = vld [vmem:[%s1965 + $0x20] sm:$0xf]
        %v1975 = vld [vmem:[%s1965 + $0x24] sm:$0xf]
        %v1976 = vld [vmem:[%s1965 + $0x28] sm:$0xf]
        %v1977 = vld [vmem:[%s1965 + $0x2c] sm:$0xf]
        %v1978 = vld [vmem:[%s1965 + $0x30] sm:$0xf]
        %v1979 = vld [vmem:[%s1965 + $0x34] sm:$0xf]
        %v1980 = vld [vmem:[%s1965 + $0x38] sm:$0xf]
        %v1981 = vld [vmem:[%s1965 + $0x3c] sm:$0xf]
        %v1983 = vunpack.c.l.b16 %v1964
        %v1984 = vpack.c.b16 %v1983, %v1983
        %v1986 = vshrl.u32 %v1868, 16
        %v1988 = vrot.slane %v1986, 1
        %v1989 = vshll.u32 %v1868, 16
        %v1991 = vrot.slane %v1989, 2
        %v1992 = vor.u32 %v1988, %v1991
        %v1994 = vshrl.u32 %v1984, 16
        %v1996 = vrot.slane %v1994, 1
        %v1997 = vshll.u32 %v1984, 16
        %v1999 = vrot.slane %v1997, 2
        %v2000 = vor.u32 %v1996, %v1999
        %v2001 = vsel %vm717, %v1992, %v2000
        %v2019 = vunpack.c.l.b16 %v1966
        %v2020 = vunpack.c.l.b16 %v1967
        %v2021 = vunpack.c.l.b16 %v1968
        %v2022 = vunpack.c.l.b16 %v1969
        %v2023 = vunpack.c.l.b16 %v1970
        %v2024 = vunpack.c.l.b16 %v1971
        %v2025 = vunpack.c.l.b16 %v1972
        %v2026 = vunpack.c.l.b16 %v1973
        %v2027 = vunpack.c.l.b16 %v1974
        %v2028 = vunpack.c.l.b16 %v1975
        %v2029 = vunpack.c.l.b16 %v1976
        %v2030 = vunpack.c.l.b16 %v1977
        %v2031 = vunpack.c.l.b16 %v1978
        %v2032 = vunpack.c.l.b16 %v1979
        %v2033 = vunpack.c.l.b16 %v1980
        %v2034 = vunpack.c.l.b16 %v1981
        %v2035 = vpack.c.b16 %v2020, %v2019
        %v2036 = vpack.c.b16 %v2022, %v2021
        %v2037 = vpack.c.b16 %v2024, %v2023
        %v2038 = vpack.c.b16 %v2026, %v2025
        %v2039 = vpack.c.b16 %v2028, %v2027
        %v2040 = vpack.c.b16 %v2030, %v2029
        %v2041 = vpack.c.b16 %v2032, %v2031
        %v2042 = vpack.c.b16 %v2034, %v2033
        %2051 = vmatprep.subr.bf16.mxu0 0
        %2052 = vmatpush1.bf16.msra.mxu0 %v2042
        %2053 = vmatprep.subr.bf16.mxu0 0
        %2054 = vmatpush1.bf16.msra.mxu0 %v2041
        %2055 = vmatprep.subr.bf16.mxu0 0
        %2056 = vmatpush1.bf16.msra.mxu0 %v2040
        %2057 = vmatprep.subr.bf16.mxu0 0
        %2058 = vmatpush1.bf16.msra.mxu0 %v2039
        %2059 = vmatprep.subr.bf16.mxu0 0
        %2060 = vmatpush1.bf16.msra.mxu0 %v2038
        %2061 = vmatprep.subr.bf16.mxu0 0
        %2062 = vmatpush1.bf16.msra.mxu0 %v2037
        %2063 = vmatprep.subr.bf16.mxu0 0
        %2064 = vmatpush1.bf16.msra.mxu0 %v2036
        %2065 = vmatprep.subr.bf16.mxu0 0
        %2066 = vmatpush1.bf16.msra.mxu0 %v2035
        %2067 = vmatprep.subr.bf16.mxu0 0
        %2068 = vmatpush2.bf16.msra.mxu0 0
        %2069 = vmatprep.subr.bf16.mxu0 0
        %2070 = vmatpush2.bf16.msra.mxu0 0
        %2071 = vmatprep.subr.bf16.mxu0 0
        %2072 = vmatpush2.bf16.msra.mxu0 0
        %2073 = vmatprep.subr.bf16.mxu0 0
        %2074 = vmatpush2.bf16.msra.mxu0 0
        %2075 = vmatprep.subr.bf16.mxu0 0
        %2076 = vmatpush2.bf16.msra.mxu0 0
        %2077 = vmatprep.subr.bf16.mxu0 0
        %2078 = vmatpush2.bf16.msra.mxu0 0
        %2079 = vmatprep.subr.bf16.mxu0 0
        %2080 = vmatpush2.bf16.msra.mxu0 0
        %2081 = vmatprep.subr.bf16.mxu0 0
        %2082 = vmatpush2.bf16.msra.mxu0 0
        %2083 = vmatprep.mubr.bf16.mxu0 0
        %2084 = vmatmul.mubr.bf16.gmra.mxu0 %v2001
        %v2085 = vpop.f32.mrf.mxu0
        %v2086 = vadd.f32 0.0, %v2085
        %v2087 = vpop.f32.mrf.mxu0
        %v2088 = vpop.f32.mrf.mxu0
        %v2089 = vadd.f32 0.0, %v2088
        %v2090 = vpop.f32.mrf.mxu0
        %2091 = vdwg.mxu0
        %v2092 = vadd.f32 %v1962, %v2086
        %v2093 = vadd.f32 %v1963, %v2089
        %v2094 = vld [vmem:[#allocation2] sm:$0xc]
        %s2095 = scalar_lea.vmem [#allocation8], 576
        %v2096 = vld [vmem:[%s2095] sm:$0xf]
        %v2097 = vld [vmem:[%s2095 + $0x4] sm:$0xf]
        %v2098 = vld [vmem:[%s2095 + $0x8] sm:$0xf]
        %v2099 = vld [vmem:[%s2095 + $0xc] sm:$0xf]
        %v2100 = vld [vmem:[%s2095 + $0x10] sm:$0xf]
        %v2101 = vld [vmem:[%s2095 + $0x14] sm:$0xf]
        %v2102 = vld [vmem:[%s2095 + $0x18] sm:$0xf]
        %v2103 = vld [vmem:[%s2095 + $0x1c] sm:$0xf]
        %v2104 = vld [vmem:[%s2095 + $0x20] sm:$0xf]
        %v2105 = vld [vmem:[%s2095 + $0x24] sm:$0xf]
        %v2106 = vld [vmem:[%s2095 + $0x28] sm:$0xf]
        %v2107 = vld [vmem:[%s2095 + $0x2c] sm:$0xf]
        %v2108 = vld [vmem:[%s2095 + $0x30] sm:$0xf]
        %v2109 = vld [vmem:[%s2095 + $0x34] sm:$0xf]
        %v2110 = vld [vmem:[%s2095 + $0x38] sm:$0xf]
        %v2111 = vld [vmem:[%s2095 + $0x3c] sm:$0xf]
        %v2113 = vunpack.c.l.b16 %v2094
        %v2114 = vpack.c.b16 %v1652, %v2113
        %v2115 = vrot.slane %v2114, 2
        %v2116 = vrot.slane %v1984, 2
        %v2117 = vsel %vm848, %v2115, %v2116
        %v2135 = vunpack.c.l.b16 %v2096
        %v2136 = vunpack.c.l.b16 %v2097
        %v2137 = vunpack.c.l.b16 %v2098
        %v2138 = vunpack.c.l.b16 %v2099
        %v2139 = vunpack.c.l.b16 %v2100
        %v2140 = vunpack.c.l.b16 %v2101
        %v2141 = vunpack.c.l.b16 %v2102
        %v2142 = vunpack.c.l.b16 %v2103
        %v2143 = vunpack.c.l.b16 %v2104
        %v2144 = vunpack.c.l.b16 %v2105
        %v2145 = vunpack.c.l.b16 %v2106
        %v2146 = vunpack.c.l.b16 %v2107
        %v2147 = vunpack.c.l.b16 %v2108
        %v2148 = vunpack.c.l.b16 %v2109
        %v2149 = vunpack.c.l.b16 %v2110
        %v2150 = vunpack.c.l.b16 %v2111
        %v2151 = vpack.c.b16 %v2136, %v2135
        %v2152 = vpack.c.b16 %v2138, %v2137
        %v2153 = vpack.c.b16 %v2140, %v2139
        %v2154 = vpack.c.b16 %v2142, %v2141
        %v2155 = vpack.c.b16 %v2144, %v2143
        %v2156 = vpack.c.b16 %v2146, %v2145
        %v2157 = vpack.c.b16 %v2148, %v2147
        %v2158 = vpack.c.b16 %v2150, %v2149
        %2167 = vmatprep.subr.bf16.mxu0 0
        %2168 = vmatpush1.bf16.msra.mxu0 %v2158
        %2169 = vmatprep.subr.bf16.mxu0 0
        %2170 = vmatpush1.bf16.msra.mxu0 %v2157
        %2171 = vmatprep.subr.bf16.mxu0 0
        %2172 = vmatpush1.bf16.msra.mxu0 %v2156
        %2173 = vmatprep.subr.bf16.mxu0 0
        %2174 = vmatpush1.bf16.msra.mxu0 %v2155
        %2175 = vmatprep.subr.bf16.mxu0 0
        %2176 = vmatpush1.bf16.msra.mxu0 %v2154
        %2177 = vmatprep.subr.bf16.mxu0 0
        %2178 = vmatpush1.bf16.msra.mxu0 %v2153
        %2179 = vmatprep.subr.bf16.mxu0 0
        %2180 = vmatpush1.bf16.msra.mxu0 %v2152
        %2181 = vmatprep.subr.bf16.mxu0 0
        %2182 = vmatpush1.bf16.msra.mxu0 %v2151
        %2183 = vmatprep.subr.bf16.mxu0 0
        %2184 = vmatpush2.bf16.msra.mxu0 0
        %2185 = vmatprep.subr.bf16.mxu0 0
        %2186 = vmatpush2.bf16.msra.mxu0 0
        %2187 = vmatprep.subr.bf16.mxu0 0
        %2188 = vmatpush2.bf16.msra.mxu0 0
        %2189 = vmatprep.subr.bf16.mxu0 0
        %2190 = vmatpush2.bf16.msra.mxu0 0
        %2191 = vmatprep.subr.bf16.mxu0 0
        %2192 = vmatpush2.bf16.msra.mxu0 0
        %2193 = vmatprep.subr.bf16.mxu0 0
        %2194 = vmatpush2.bf16.msra.mxu0 0
        %2195 = vmatprep.subr.bf16.mxu0 0
        %2196 = vmatpush2.bf16.msra.mxu0 0
        %2197 = vmatprep.subr.bf16.mxu0 0
        %2198 = vmatpush2.bf16.msra.mxu0 0
        %2199 = vmatprep.mubr.bf16.mxu0 0
        %2200 = vmatmul.mubr.bf16.gmra.mxu0 %v2117
        %v2201 = vpop.f32.mrf.mxu0
        %v2202 = vadd.f32 0.0, %v2201
        %v2203 = vpop.f32.mrf.mxu0
        %v2204 = vpop.f32.mrf.mxu0
        %v2205 = vadd.f32 0.0, %v2204
        %v2206 = vpop.f32.mrf.mxu0
        %2207 = vdwg.mxu0
        %v2208 = vadd.f32 %v2092, %v2202
        %v2209 = vadd.f32 %v2093, %v2205
        %s2210 = scalar_lea.vmem %s4, 2
        %v2211 = vld [vmem:[%s2210] sm:$0x1]
        %v2213 = vlaneseq
        %v2214 = vshrl.u32 %v2213, 7
        %v2215 = vsub.s32 0, %v2214
        %v2216 = vrot.slane %v2211, %v2215
        %v2218 = vadd.f32 %v2208, %v2216
        %v2219 = vadd.f32 %v2209, %v2216
        %v2220 = vpack.c.bf16 %v2219, %v2218
        %v2221 = vtanh.bf16.pop %v2220
        %v2222 = vsel %vm966, %v2221, 0
        %v2224 = vunpack.c.l.b16 %v2222
        %v2225 = vunpack.c.h.b16 %v2222
        %v2226 = vpack.c.b16 %v2224, %v2224
        %v2227 = vpack.c.b16 %v2225, %v2225
        %v2228 = vrot.slane %v2226, 7
        %v2229 = vrot.slane %v2228, 4
        %v2230 = vrot.slane %v2227, 7
        %v2231 = vsel %vm325, %v2229, %v2230
        %v2232 = vrot.slane %v2230, 4
        %2236 = vst [vmem:[#allocation2] sm:$0xe] %v2228
        %2237 = vst [vmem:[#allocation2 + $0x4] sm:$0xf] %v2231
        %2238 = vst [vmem:[#allocation2 + $0x8] sm:$0x1] %v2232
        %v2239 = vld [vmem:[#allocation2] sm:$0xf]
        %v2240 = vld [vmem:[#allocation2 + $0x4] sm:$0xf]
        %s2241 = scalar_lea.vmem [#allocation8], 640
        %v2242 = vld [vmem:[%s2241] sm:$0xf]
        %v2243 = vld [vmem:[%s2241 + $0x4] sm:$0xf]
        %v2244 = vld [vmem:[%s2241 + $0x8] sm:$0xf]
        %v2245 = vld [vmem:[%s2241 + $0xc] sm:$0xf]
        %v2246 = vld [vmem:[%s2241 + $0x10] sm:$0xf]
        %v2247 = vld [vmem:[%s2241 + $0x14] sm:$0xf]
        %v2248 = vld [vmem:[%s2241 + $0x18] sm:$0xf]
        %v2249 = vld [vmem:[%s2241 + $0x1c] sm:$0xf]
        %v2250 = vld [vmem:[%s2241 + $0x20] sm:$0xf]
        %v2251 = vld [vmem:[%s2241 + $0x24] sm:$0xf]
        %v2252 = vld [vmem:[%s2241 + $0x28] sm:$0xf]
        %v2253 = vld [vmem:[%s2241 + $0x2c] sm:$0xf]
        %v2254 = vld [vmem:[%s2241 + $0x30] sm:$0xf]
        %v2255 = vld [vmem:[%s2241 + $0x34] sm:$0xf]
        %v2256 = vld [vmem:[%s2241 + $0x38] sm:$0xf]
        %v2257 = vld [vmem:[%s2241 + $0x3c] sm:$0xf]
        %v2258 = vld [vmem:[#allocation2 + $0x8] sm:$0x1]
        %s2259 = scalar_lea.vmem [#allocation8], 704
        %v2260 = vld [vmem:[%s2259] sm:$0xf]
        %v2261 = vld [vmem:[%s2259 + $0x4] sm:$0xf]
        %v2262 = vld [vmem:[%s2259 + $0x8] sm:$0xf]
        %v2263 = vld [vmem:[%s2259 + $0xc] sm:$0xf]
        %v2264 = vld [vmem:[%s2259 + $0x10] sm:$0xf]
        %v2265 = vld [vmem:[%s2259 + $0x14] sm:$0xf]
        %v2266 = vld [vmem:[%s2259 + $0x18] sm:$0xf]
        %v2267 = vld [vmem:[%s2259 + $0x1c] sm:$0xf]
        %v2268 = vld [vmem:[%s2259 + $0x20] sm:$0xf]
        %v2269 = vld [vmem:[%s2259 + $0x24] sm:$0xf]
        %v2270 = vld [vmem:[%s2259 + $0x28] sm:$0xf]
        %v2271 = vld [vmem:[%s2259 + $0x2c] sm:$0xf]
        %v2272 = vld [vmem:[%s2259 + $0x30] sm:$0xf]
        %v2273 = vld [vmem:[%s2259 + $0x34] sm:$0xf]
        %v2274 = vld [vmem:[%s2259 + $0x38] sm:$0xf]
        %v2275 = vld [vmem:[%s2259 + $0x3c] sm:$0xf]
        %v2279 = vunpack.c.l.b16 %v2239
        %v2280 = vunpack.c.l.b16 %v2240
        %v2281 = vunpack.c.l.b16 %v2258
        %v2282 = vpack.c.b16 %v2280, %v2279
        %v2283 = vpack.c.b16 %v2281, %v2281
        %v2285 = vshrl.u32 %v2282, 16
        %v2287 = vshll.u32 %v2282, 16
        %v2289 = vrot.slane %v2287, 1
        %v2290 = vor.u32 %v2285, %v2289
        %v2292 = vshll.u32 %v2283, 16
        %v2294 = vrot.slane %v2292, 1
        %v2295 = vsel %vm386, %v2290, %v2294
        %v2313 = vunpack.c.l.b16 %v2260
        %v2314 = vunpack.c.l.b16 %v2261
        %v2315 = vunpack.c.l.b16 %v2262
        %v2316 = vunpack.c.l.b16 %v2263
        %v2317 = vunpack.c.l.b16 %v2264
        %v2318 = vunpack.c.l.b16 %v2265
        %v2319 = vunpack.c.l.b16 %v2266
        %v2320 = vunpack.c.l.b16 %v2267
        %v2321 = vunpack.c.l.b16 %v2268
        %v2322 = vunpack.c.l.b16 %v2269
        %v2323 = vunpack.c.l.b16 %v2270
        %v2324 = vunpack.c.l.b16 %v2271
        %v2325 = vunpack.c.l.b16 %v2272
        %v2326 = vunpack.c.l.b16 %v2273
        %v2327 = vunpack.c.l.b16 %v2274
        %v2328 = vunpack.c.l.b16 %v2275
        %v2329 = vpack.c.b16 %v2314, %v2313
        %v2330 = vpack.c.b16 %v2316, %v2315
        %v2331 = vpack.c.b16 %v2318, %v2317
        %v2332 = vpack.c.b16 %v2320, %v2319
        %v2333 = vpack.c.b16 %v2322, %v2321
        %v2334 = vpack.c.b16 %v2324, %v2323
        %v2335 = vpack.c.b16 %v2326, %v2325
        %v2336 = vpack.c.b16 %v2328, %v2327
        %2345 = vmatprep.subr.bf16.mxu0 0
        %2346 = vmatpush1.bf16.msra.mxu0 %v2336
        %2347 = vmatprep.subr.bf16.mxu0 0
        %2348 = vmatpush1.bf16.msra.mxu0 %v2335
        %2349 = vmatprep.subr.bf16.mxu0 0
        %2350 = vmatpush1.bf16.msra.mxu0 %v2334
        %2351 = vmatprep.subr.bf16.mxu0 0
        %2352 = vmatpush1.bf16.msra.mxu0 %v2333
        %2353 = vmatprep.subr.bf16.mxu0 0
        %2354 = vmatpush1.bf16.msra.mxu0 %v2332
        %2355 = vmatprep.subr.bf16.mxu0 0
        %2356 = vmatpush1.bf16.msra.mxu0 %v2331
        %2357 = vmatprep.subr.bf16.mxu0 0
        %2358 = vmatpush1.bf16.msra.mxu0 %v2330
        %2359 = vmatprep.subr.bf16.mxu0 0
        %2360 = vmatpush1.bf16.msra.mxu0 %v2329
        %2361 = vmatprep.subr.bf16.mxu0 0
        %2362 = vmatpush2.bf16.msra.mxu0 0
        %2363 = vmatprep.subr.bf16.mxu0 0
        %2364 = vmatpush2.bf16.msra.mxu0 0
        %2365 = vmatprep.subr.bf16.mxu0 0
        %2366 = vmatpush2.bf16.msra.mxu0 0
        %2367 = vmatprep.subr.bf16.mxu0 0
        %2368 = vmatpush2.bf16.msra.mxu0 0
        %2369 = vmatprep.subr.bf16.mxu0 0
        %2370 = vmatpush2.bf16.msra.mxu0 0
        %2371 = vmatprep.subr.bf16.mxu0 0
        %2372 = vmatpush2.bf16.msra.mxu0 0
        %2373 = vmatprep.subr.bf16.mxu0 0
        %2374 = vmatpush2.bf16.msra.mxu0 0
        %2375 = vmatprep.subr.bf16.mxu0 0
        %2376 = vmatpush2.bf16.msra.mxu0 0
        %2377 = vmatprep.mubr.bf16.mxu0 0
        %2378 = vmatmul.mubr.bf16.gmra.mxu0 %v2295
        %v2379 = vpop.f32.mrf.mxu0
        %v2380 = vadd.f32 0.0, %v2379
        %v2381 = vpop.f32.mrf.mxu0
        %v2382 = vpop.f32.mrf.mxu0
        %v2383 = vadd.f32 0.0, %v2382
        %v2384 = vpop.f32.mrf.mxu0
        %2385 = vdwg.mxu0
        %v2403 = vunpack.c.l.b16 %v2242
        %v2404 = vunpack.c.l.b16 %v2243
        %v2405 = vunpack.c.l.b16 %v2244
        %v2406 = vunpack.c.l.b16 %v2245
        %v2407 = vunpack.c.l.b16 %v2246
        %v2408 = vunpack.c.l.b16 %v2247
        %v2409 = vunpack.c.l.b16 %v2248
        %v2410 = vunpack.c.l.b16 %v2249
        %v2411 = vunpack.c.l.b16 %v2250
        %v2412 = vunpack.c.l.b16 %v2251
        %v2413 = vunpack.c.l.b16 %v2252
        %v2414 = vunpack.c.l.b16 %v2253
        %v2415 = vunpack.c.l.b16 %v2254
        %v2416 = vunpack.c.l.b16 %v2255
        %v2417 = vunpack.c.l.b16 %v2256
        %v2418 = vunpack.c.l.b16 %v2257
        %v2419 = vpack.c.b16 %v2404, %v2403
        %v2420 = vpack.c.b16 %v2406, %v2405
        %v2421 = vpack.c.b16 %v2408, %v2407
        %v2422 = vpack.c.b16 %v2410, %v2409
        %v2423 = vpack.c.b16 %v2412, %v2411
        %v2424 = vpack.c.b16 %v2414, %v2413
        %v2425 = vpack.c.b16 %v2416, %v2415
        %v2426 = vpack.c.b16 %v2418, %v2417
        %2435 = vmatprep.subr.bf16.mxu0 0
        %2436 = vmatpush1.bf16.msra.mxu0 %v2426
        %2437 = vmatprep.subr.bf16.mxu0 0
        %2438 = vmatpush1.bf16.msra.mxu0 %v2425
        %2439 = vmatprep.subr.bf16.mxu0 0
        %2440 = vmatpush1.bf16.msra.mxu0 %v2424
        %2441 = vmatprep.subr.bf16.mxu0 0
        %2442 = vmatpush1.bf16.msra.mxu0 %v2423
        %2443 = vmatprep.subr.bf16.mxu0 0
        %2444 = vmatpush1.bf16.msra.mxu0 %v2422
        %2445 = vmatprep.subr.bf16.mxu0 0
        %2446 = vmatpush1.bf16.msra.mxu0 %v2421
        %2447 = vmatprep.subr.bf16.mxu0 0
        %2448 = vmatpush1.bf16.msra.mxu0 %v2420
        %2449 = vmatprep.subr.bf16.mxu0 0
        %2450 = vmatpush1.bf16.msra.mxu0 %v2419
        %2451 = vmatprep.subr.bf16.mxu0 0
        %2452 = vmatpush2.bf16.msra.mxu0 0
        %2453 = vmatprep.subr.bf16.mxu0 0
        %2454 = vmatpush2.bf16.msra.mxu0 0
        %2455 = vmatprep.subr.bf16.mxu0 0
        %2456 = vmatpush2.bf16.msra.mxu0 0
        %2457 = vmatprep.subr.bf16.mxu0 0
        %2458 = vmatpush2.bf16.msra.mxu0 0
        %2459 = vmatprep.subr.bf16.mxu0 0
        %2460 = vmatpush2.bf16.msra.mxu0 0
        %2461 = vmatprep.subr.bf16.mxu0 0
        %2462 = vmatpush2.bf16.msra.mxu0 0
        %2463 = vmatprep.subr.bf16.mxu0 0
        %2464 = vmatpush2.bf16.msra.mxu0 0
        %2465 = vmatprep.subr.bf16.mxu0 0
        %2466 = vmatpush2.bf16.msra.mxu0 0
        %2467 = vmatprep.mubr.bf16.mxu0 0
        %2468 = vmatmul.mubr.bf16.gmra.mxu0 %v2282
        %v2469 = vpop.f32.mrf.mxu0
        %v2470 = vadd.f32 %v2380, %v2469
        %v2471 = vpop.f32.mrf.mxu0
        %v2472 = vpop.f32.mrf.mxu0
        %v2473 = vadd.f32 %v2383, %v2472
        %v2474 = vpop.f32.mrf.mxu0
        %2475 = vdwg.mxu0
        %v2476 = vld [vmem:[#allocation2] sm:$0xe]
        %s2477 = scalar_lea.vmem [#allocation8], 768
        %v2478 = vld [vmem:[%s2477] sm:$0xf]
        %v2479 = vld [vmem:[%s2477 + $0x4] sm:$0xf]
        %v2480 = vld [vmem:[%s2477 + $0x8] sm:$0xf]
        %v2481 = vld [vmem:[%s2477 + $0xc] sm:$0xf]
        %v2482 = vld [vmem:[%s2477 + $0x10] sm:$0xf]
        %v2483 = vld [vmem:[%s2477 + $0x14] sm:$0xf]
        %v2484 = vld [vmem:[%s2477 + $0x18] sm:$0xf]
        %v2485 = vld [vmem:[%s2477 + $0x1c] sm:$0xf]
        %v2486 = vld [vmem:[%s2477 + $0x20] sm:$0xf]
        %v2487 = vld [vmem:[%s2477 + $0x24] sm:$0xf]
        %v2488 = vld [vmem:[%s2477 + $0x28] sm:$0xf]
        %v2489 = vld [vmem:[%s2477 + $0x2c] sm:$0xf]
        %v2490 = vld [vmem:[%s2477 + $0x30] sm:$0xf]
        %v2491 = vld [vmem:[%s2477 + $0x34] sm:$0xf]
        %v2492 = vld [vmem:[%s2477 + $0x38] sm:$0xf]
        %v2493 = vld [vmem:[%s2477 + $0x3c] sm:$0xf]
        %v2495 = vunpack.c.l.b16 %v2476
        %v2496 = vpack.c.b16 %v2280, %v2495
        %v2497 = vrot.slane %v2496, 1
        %v2498 = vrot.slane %v2283, 1
        %v2499 = vsel %vm600, %v2497, %v2498
        %v2517 = vunpack.c.l.b16 %v2478
        %v2518 = vunpack.c.l.b16 %v2479
        %v2519 = vunpack.c.l.b16 %v2480
        %v2520 = vunpack.c.l.b16 %v2481
        %v2521 = vunpack.c.l.b16 %v2482
        %v2522 = vunpack.c.l.b16 %v2483
        %v2523 = vunpack.c.l.b16 %v2484
        %v2524 = vunpack.c.l.b16 %v2485
        %v2525 = vunpack.c.l.b16 %v2486
        %v2526 = vunpack.c.l.b16 %v2487
        %v2527 = vunpack.c.l.b16 %v2488
        %v2528 = vunpack.c.l.b16 %v2489
        %v2529 = vunpack.c.l.b16 %v2490
        %v2530 = vunpack.c.l.b16 %v2491
        %v2531 = vunpack.c.l.b16 %v2492
        %v2532 = vunpack.c.l.b16 %v2493
        %v2533 = vpack.c.b16 %v2518, %v2517
        %v2534 = vpack.c.b16 %v2520, %v2519
        %v2535 = vpack.c.b16 %v2522, %v2521
        %v2536 = vpack.c.b16 %v2524, %v2523
        %v2537 = vpack.c.b16 %v2526, %v2525
        %v2538 = vpack.c.b16 %v2528, %v2527
        %v2539 = vpack.c.b16 %v2530, %v2529
        %v2540 = vpack.c.b16 %v2532, %v2531
        %2549 = vmatprep.subr.bf16.mxu0 0
        %2550 = vmatpush1.bf16.msra.mxu0 %v2540
        %2551 = vmatprep.subr.bf16.mxu0 0
        %2552 = vmatpush1.bf16.msra.mxu0 %v2539
        %2553 = vmatprep.subr.bf16.mxu0 0
        %2554 = vmatpush1.bf16.msra.mxu0 %v2538
        %2555 = vmatprep.subr.bf16.mxu0 0
        %2556 = vmatpush1.bf16.msra.mxu0 %v2537
        %2557 = vmatprep.subr.bf16.mxu0 0
        %2558 = vmatpush1.bf16.msra.mxu0 %v2536
        %2559 = vmatprep.subr.bf16.mxu0 0
        %2560 = vmatpush1.bf16.msra.mxu0 %v2535
        %2561 = vmatprep.subr.bf16.mxu0 0
        %2562 = vmatpush1.bf16.msra.mxu0 %v2534
        %2563 = vmatprep.subr.bf16.mxu0 0
        %2564 = vmatpush1.bf16.msra.mxu0 %v2533
        %2565 = vmatprep.subr.bf16.mxu0 0
        %2566 = vmatpush2.bf16.msra.mxu0 0
        %2567 = vmatprep.subr.bf16.mxu0 0
        %2568 = vmatpush2.bf16.msra.mxu0 0
        %2569 = vmatprep.subr.bf16.mxu0 0
        %2570 = vmatpush2.bf16.msra.mxu0 0
        %2571 = vmatprep.subr.bf16.mxu0 0
        %2572 = vmatpush2.bf16.msra.mxu0 0
        %2573 = vmatprep.subr.bf16.mxu0 0
        %2574 = vmatpush2.bf16.msra.mxu0 0
        %2575 = vmatprep.subr.bf16.mxu0 0
        %2576 = vmatpush2.bf16.msra.mxu0 0
        %2577 = vmatprep.subr.bf16.mxu0 0
        %2578 = vmatpush2.bf16.msra.mxu0 0
        %2579 = vmatprep.subr.bf16.mxu0 0
        %2580 = vmatpush2.bf16.msra.mxu0 0
        %2581 = vmatprep.mubr.bf16.mxu0 0
        %2582 = vmatmul.mubr.bf16.gmra.mxu0 %v2499
        %v2583 = vpop.f32.mrf.mxu0
        %v2584 = vadd.f32 0.0, %v2583
        %v2585 = vpop.f32.mrf.mxu0
        %v2586 = vpop.f32.mrf.mxu0
        %v2587 = vadd.f32 0.0, %v2586
        %v2588 = vpop.f32.mrf.mxu0
        %2589 = vdwg.mxu0
        %v2590 = vadd.f32 %v2470, %v2584
        %v2591 = vadd.f32 %v2473, %v2587
        %v2592 = vld [vmem:[#allocation2 + $0x8] sm:$0x3]
        %s2593 = scalar_lea.vmem [#allocation8], 832
        %v2594 = vld [vmem:[%s2593] sm:$0xf]
        %v2595 = vld [vmem:[%s2593 + $0x4] sm:$0xf]
        %v2596 = vld [vmem:[%s2593 + $0x8] sm:$0xf]
        %v2597 = vld [vmem:[%s2593 + $0xc] sm:$0xf]
        %v2598 = vld [vmem:[%s2593 + $0x10] sm:$0xf]
        %v2599 = vld [vmem:[%s2593 + $0x14] sm:$0xf]
        %v2600 = vld [vmem:[%s2593 + $0x18] sm:$0xf]
        %v2601 = vld [vmem:[%s2593 + $0x1c] sm:$0xf]
        %v2602 = vld [vmem:[%s2593 + $0x20] sm:$0xf]
        %v2603 = vld [vmem:[%s2593 + $0x24] sm:$0xf]
        %v2604 = vld [vmem:[%s2593 + $0x28] sm:$0xf]
        %v2605 = vld [vmem:[%s2593 + $0x2c] sm:$0xf]
        %v2606 = vld [vmem:[%s2593 + $0x30] sm:$0xf]
        %v2607 = vld [vmem:[%s2593 + $0x34] sm:$0xf]
        %v2608 = vld [vmem:[%s2593 + $0x38] sm:$0xf]
        %v2609 = vld [vmem:[%s2593 + $0x3c] sm:$0xf]
        %v2611 = vunpack.c.l.b16 %v2592
        %v2612 = vpack.c.b16 %v2611, %v2611
        %v2614 = vshrl.u32 %v2496, 16
        %v2616 = vrot.slane %v2614, 1
        %v2617 = vshll.u32 %v2496, 16
        %v2619 = vrot.slane %v2617, 2
        %v2620 = vor.u32 %v2616, %v2619
        %v2622 = vshrl.u32 %v2612, 16
        %v2624 = vrot.slane %v2622, 1
        %v2625 = vshll.u32 %v2612, 16
        %v2627 = vrot.slane %v2625, 2
        %v2628 = vor.u32 %v2624, %v2627
        %v2629 = vsel %vm717, %v2620, %v2628
        %v2647 = vunpack.c.l.b16 %v2594
        %v2648 = vunpack.c.l.b16 %v2595
        %v2649 = vunpack.c.l.b16 %v2596
        %v2650 = vunpack.c.l.b16 %v2597
        %v2651 = vunpack.c.l.b16 %v2598
        %v2652 = vunpack.c.l.b16 %v2599
        %v2653 = vunpack.c.l.b16 %v2600
        %v2654 = vunpack.c.l.b16 %v2601
        %v2655 = vunpack.c.l.b16 %v2602
        %v2656 = vunpack.c.l.b16 %v2603
        %v2657 = vunpack.c.l.b16 %v2604
        %v2658 = vunpack.c.l.b16 %v2605
        %v2659 = vunpack.c.l.b16 %v2606
        %v2660 = vunpack.c.l.b16 %v2607
        %v2661 = vunpack.c.l.b16 %v2608
        %v2662 = vunpack.c.l.b16 %v2609
        %v2663 = vpack.c.b16 %v2648, %v2647
        %v2664 = vpack.c.b16 %v2650, %v2649
        %v2665 = vpack.c.b16 %v2652, %v2651
        %v2666 = vpack.c.b16 %v2654, %v2653
        %v2667 = vpack.c.b16 %v2656, %v2655
        %v2668 = vpack.c.b16 %v2658, %v2657
        %v2669 = vpack.c.b16 %v2660, %v2659
        %v2670 = vpack.c.b16 %v2662, %v2661
        %2679 = vmatprep.subr.bf16.mxu0 0
        %2680 = vmatpush1.bf16.msra.mxu0 %v2670
        %2681 = vmatprep.subr.bf16.mxu0 0
        %2682 = vmatpush1.bf16.msra.mxu0 %v2669
        %2683 = vmatprep.subr.bf16.mxu0 0
        %2684 = vmatpush1.bf16.msra.mxu0 %v2668
        %2685 = vmatprep.subr.bf16.mxu0 0
        %2686 = vmatpush1.bf16.msra.mxu0 %v2667
        %2687 = vmatprep.subr.bf16.mxu0 0
        %2688 = vmatpush1.bf16.msra.mxu0 %v2666
        %2689 = vmatprep.subr.bf16.mxu0 0
        %2690 = vmatpush1.bf16.msra.mxu0 %v2665
        %2691 = vmatprep.subr.bf16.mxu0 0
        %2692 = vmatpush1.bf16.msra.mxu0 %v2664
        %2693 = vmatprep.subr.bf16.mxu0 0
        %2694 = vmatpush1.bf16.msra.mxu0 %v2663
        %2695 = vmatprep.subr.bf16.mxu0 0
        %2696 = vmatpush2.bf16.msra.mxu0 0
        %2697 = vmatprep.subr.bf16.mxu0 0
        %2698 = vmatpush2.bf16.msra.mxu0 0
        %2699 = vmatprep.subr.bf16.mxu0 0
        %2700 = vmatpush2.bf16.msra.mxu0 0
        %2701 = vmatprep.subr.bf16.mxu0 0
        %2702 = vmatpush2.bf16.msra.mxu0 0
        %2703 = vmatprep.subr.bf16.mxu0 0
        %2704 = vmatpush2.bf16.msra.mxu0 0
        %2705 = vmatprep.subr.bf16.mxu0 0
        %2706 = vmatpush2.bf16.msra.mxu0 0
        %2707 = vmatprep.subr.bf16.mxu0 0
        %2708 = vmatpush2.bf16.msra.mxu0 0
        %2709 = vmatprep.subr.bf16.mxu0 0
        %2710 = vmatpush2.bf16.msra.mxu0 0
        %2711 = vmatprep.mubr.bf16.mxu0 0
        %2712 = vmatmul.mubr.bf16.gmra.mxu0 %v2629
        %v2713 = vpop.f32.mrf.mxu0
        %v2714 = vadd.f32 0.0, %v2713
        %v2715 = vpop.f32.mrf.mxu0
        %v2716 = vpop.f32.mrf.mxu0
        %v2717 = vadd.f32 0.0, %v2716
        %v2718 = vpop.f32.mrf.mxu0
        %2719 = vdwg.mxu0
        %v2720 = vadd.f32 %v2590, %v2714
        %v2721 = vadd.f32 %v2591, %v2717
        %v2722 = vld [vmem:[#allocation2] sm:$0xc]
        %s2723 = scalar_lea.vmem [#allocation8], 896
        %v2724 = vld [vmem:[%s2723] sm:$0xf]
        %v2725 = vld [vmem:[%s2723 + $0x4] sm:$0xf]
        %v2726 = vld [vmem:[%s2723 + $0x8] sm:$0xf]
        %v2727 = vld [vmem:[%s2723 + $0xc] sm:$0xf]
        %v2728 = vld [vmem:[%s2723 + $0x10] sm:$0xf]
        %v2729 = vld [vmem:[%s2723 + $0x14] sm:$0xf]
        %v2730 = vld [vmem:[%s2723 + $0x18] sm:$0xf]
        %v2731 = vld [vmem:[%s2723 + $0x1c] sm:$0xf]
        %v2732 = vld [vmem:[%s2723 + $0x20] sm:$0xf]
        %v2733 = vld [vmem:[%s2723 + $0x24] sm:$0xf]
        %v2734 = vld [vmem:[%s2723 + $0x28] sm:$0xf]
        %v2735 = vld [vmem:[%s2723 + $0x2c] sm:$0xf]
        %v2736 = vld [vmem:[%s2723 + $0x30] sm:$0xf]
        %v2737 = vld [vmem:[%s2723 + $0x34] sm:$0xf]
        %v2738 = vld [vmem:[%s2723 + $0x38] sm:$0xf]
        %v2739 = vld [vmem:[%s2723 + $0x3c] sm:$0xf]
        %v2741 = vunpack.c.l.b16 %v2722
        %v2742 = vpack.c.b16 %v2280, %v2741
        %v2743 = vrot.slane %v2742, 2
        %v2744 = vrot.slane %v2612, 2
        %v2745 = vsel %vm848, %v2743, %v2744
        %v2763 = vunpack.c.l.b16 %v2724
        %v2764 = vunpack.c.l.b16 %v2725
        %v2765 = vunpack.c.l.b16 %v2726
        %v2766 = vunpack.c.l.b16 %v2727
        %v2767 = vunpack.c.l.b16 %v2728
        %v2768 = vunpack.c.l.b16 %v2729
        %v2769 = vunpack.c.l.b16 %v2730
        %v2770 = vunpack.c.l.b16 %v2731
        %v2771 = vunpack.c.l.b16 %v2732
        %v2772 = vunpack.c.l.b16 %v2733
        %v2773 = vunpack.c.l.b16 %v2734
        %v2774 = vunpack.c.l.b16 %v2735
        %v2775 = vunpack.c.l.b16 %v2736
        %v2776 = vunpack.c.l.b16 %v2737
        %v2777 = vunpack.c.l.b16 %v2738
        %v2778 = vunpack.c.l.b16 %v2739
        %v2779 = vpack.c.b16 %v2764, %v2763
        %v2780 = vpack.c.b16 %v2766, %v2765
        %v2781 = vpack.c.b16 %v2768, %v2767
        %v2782 = vpack.c.b16 %v2770, %v2769
        %v2783 = vpack.c.b16 %v2772, %v2771
        %v2784 = vpack.c.b16 %v2774, %v2773
        %v2785 = vpack.c.b16 %v2776, %v2775
        %v2786 = vpack.c.b16 %v2778, %v2777
        %2795 = vmatprep.subr.bf16.mxu0 0
        %2796 = vmatpush1.bf16.msra.mxu0 %v2786
        %2797 = vmatprep.subr.bf16.mxu0 0
        %2798 = vmatpush1.bf16.msra.mxu0 %v2785
        %2799 = vmatprep.subr.bf16.mxu0 0
        %2800 = vmatpush1.bf16.msra.mxu0 %v2784
        %2801 = vmatprep.subr.bf16.mxu0 0
        %2802 = vmatpush1.bf16.msra.mxu0 %v2783
        %2803 = vmatprep.subr.bf16.mxu0 0
        %2804 = vmatpush1.bf16.msra.mxu0 %v2782
        %2805 = vmatprep.subr.bf16.mxu0 0
        %2806 = vmatpush1.bf16.msra.mxu0 %v2781
        %2807 = vmatprep.subr.bf16.mxu0 0
        %2808 = vmatpush1.bf16.msra.mxu0 %v2780
        %2809 = vmatprep.subr.bf16.mxu0 0
        %2810 = vmatpush1.bf16.msra.mxu0 %v2779
        %2811 = vmatprep.subr.bf16.mxu0 0
        %2812 = vmatpush2.bf16.msra.mxu0 0
        %2813 = vmatprep.subr.bf16.mxu0 0
        %2814 = vmatpush2.bf16.msra.mxu0 0
        %2815 = vmatprep.subr.bf16.mxu0 0
        %2816 = vmatpush2.bf16.msra.mxu0 0
        %2817 = vmatprep.subr.bf16.mxu0 0
        %2818 = vmatpush2.bf16.msra.mxu0 0
        %2819 = vmatprep.subr.bf16.mxu0 0
        %2820 = vmatpush2.bf16.msra.mxu0 0
        %2821 = vmatprep.subr.bf16.mxu0 0
        %2822 = vmatpush2.bf16.msra.mxu0 0
        %2823 = vmatprep.subr.bf16.mxu0 0
        %2824 = vmatpush2.bf16.msra.mxu0 0
        %2825 = vmatprep.subr.bf16.mxu0 0
        %2826 = vmatpush2.bf16.msra.mxu0 0
        %2827 = vmatprep.mubr.bf16.mxu0 0
        %2828 = vmatmul.mubr.bf16.gmra.mxu0 %v2745
        %v2829 = vpop.f32.mrf.mxu0
        %v2830 = vadd.f32 0.0, %v2829
        %v2831 = vpop.f32.mrf.mxu0
        %v2832 = vpop.f32.mrf.mxu0
        %v2833 = vadd.f32 0.0, %v2832
        %v2834 = vpop.f32.mrf.mxu0
        %2835 = vdwg.mxu0
        %v2836 = vadd.f32 %v2720, %v2830
        %v2837 = vadd.f32 %v2721, %v2833
        %s2838 = scalar_lea.vmem %s4, 3
        %v2839 = vld [vmem:[%s2838] sm:$0x1]
        %v2841 = vlaneseq
        %v2842 = vshrl.u32 %v2841, 7
        %v2843 = vsub.s32 0, %v2842
        %v2844 = vrot.slane %v2839, %v2843
        %v2846 = vadd.f32 %v2836, %v2844
        %v2847 = vadd.f32 %v2837, %v2844
        %v2848 = vpack.c.bf16 %v2847, %v2846
        %v2849 = vtanh.bf16.pop %v2848
        %v2850 = vsel %vm966, %v2849, 0
        %v2852 = vunpack.c.l.b16 %v2850
        %v2853 = vunpack.c.h.b16 %v2850
        %v2854 = vpack.c.b16 %v2852, %v2852
        %v2855 = vpack.c.b16 %v2853, %v2853
        %v2856 = vrot.slane %v2854, 7
        %v2857 = vrot.slane %v2856, 4
        %v2858 = vrot.slane %v2855, 7
        %v2859 = vsel %vm325, %v2857, %v2858
        %v2860 = vrot.slane %v2858, 4
        %2864 = vst [vmem:[#allocation2] sm:$0xe] %v2856
        %2865 = vst [vmem:[#allocation2 + $0x4] sm:$0xf] %v2859
        %2866 = vst [vmem:[#allocation2 + $0x8] sm:$0x1] %v2860
        %v2867 = vld [vmem:[#allocation2] sm:$0xf]
        %v2868 = vld [vmem:[#allocation2 + $0x4] sm:$0xf]
        %v2869 = vld [vmem:[#allocation9] sm:$0xf]
        %v2870 = vld [vmem:[#allocation9 + $0x4] sm:$0xf]
        %v2871 = vld [vmem:[#allocation9 + $0x8] sm:$0xf]
        %v2872 = vld [vmem:[#allocation9 + $0xc] sm:$0xf]
        %v2873 = vld [vmem:[#allocation9 + $0x10] sm:$0xf]
        %v2874 = vld [vmem:[#allocation9 + $0x14] sm:$0xf]
        %v2875 = vld [vmem:[#allocation9 + $0x18] sm:$0xf]
        %v2876 = vld [vmem:[#allocation9 + $0x1c] sm:$0xf]
        %v2877 = vld [vmem:[#allocation9 + $0x20] sm:$0xf]
        %v2878 = vld [vmem:[#allocation9 + $0x24] sm:$0xf]
        %v2879 = vld [vmem:[#allocation9 + $0x28] sm:$0xf]
        %v2880 = vld [vmem:[#allocation9 + $0x2c] sm:$0xf]
        %v2881 = vld [vmem:[#allocation9 + $0x30] sm:$0xf]
        %v2882 = vld [vmem:[#allocation9 + $0x34] sm:$0xf]
        %v2883 = vld [vmem:[#allocation9 + $0x38] sm:$0xf]
        %v2884 = vld [vmem:[#allocation9 + $0x3c] sm:$0xf]
        %v2885 = vld [vmem:[#allocation2 + $0x8] sm:$0x1]
        %s2886 = scalar_lea.vmem [#allocation9], 64
        %v2887 = vld [vmem:[%s2886] sm:$0xf]
        %v2888 = vld [vmem:[%s2886 + $0x4] sm:$0xf]
        %v2889 = vld [vmem:[%s2886 + $0x8] sm:$0xf]
        %v2890 = vld [vmem:[%s2886 + $0xc] sm:$0xf]
        %v2891 = vld [vmem:[%s2886 + $0x10] sm:$0xf]
        %v2892 = vld [vmem:[%s2886 + $0x14] sm:$0xf]
        %v2893 = vld [vmem:[%s2886 + $0x18] sm:$0xf]
        %v2894 = vld [vmem:[%s2886 + $0x1c] sm:$0xf]
        %v2895 = vld [vmem:[%s2886 + $0x20] sm:$0xf]
        %v2896 = vld [vmem:[%s2886 + $0x24] sm:$0xf]
        %v2897 = vld [vmem:[%s2886 + $0x28] sm:$0xf]
        %v2898 = vld [vmem:[%s2886 + $0x2c] sm:$0xf]
        %v2899 = vld [vmem:[%s2886 + $0x30] sm:$0xf]
        %v2900 = vld [vmem:[%s2886 + $0x34] sm:$0xf]
        %v2901 = vld [vmem:[%s2886 + $0x38] sm:$0xf]
        %v2902 = vld [vmem:[%s2886 + $0x3c] sm:$0xf]
        %v2906 = vunpack.c.l.b16 %v2867
        %v2907 = vunpack.c.l.b16 %v2868
        %v2908 = vunpack.c.l.b16 %v2885
        %v2909 = vpack.c.b16 %v2907, %v2906
        %v2910 = vpack.c.b16 %v2908, %v2908
        %v2912 = vshrl.u32 %v2909, 16
        %v2914 = vshll.u32 %v2909, 16
        %v2916 = vrot.slane %v2914, 1
        %v2917 = vor.u32 %v2912, %v2916
        %v2919 = vshll.u32 %v2910, 16
        %v2921 = vrot.slane %v2919, 1
        %v2922 = vsel %vm386, %v2917, %v2921
        %v2940 = vunpack.c.l.b16 %v2887
        %v2941 = vunpack.c.l.b16 %v2888
        %v2942 = vunpack.c.l.b16 %v2889
        %v2943 = vunpack.c.l.b16 %v2890
        %v2944 = vunpack.c.l.b16 %v2891
        %v2945 = vunpack.c.l.b16 %v2892
        %v2946 = vunpack.c.l.b16 %v2893
        %v2947 = vunpack.c.l.b16 %v2894
        %v2948 = vunpack.c.l.b16 %v2895
        %v2949 = vunpack.c.l.b16 %v2896
        %v2950 = vunpack.c.l.b16 %v2897
        %v2951 = vunpack.c.l.b16 %v2898
        %v2952 = vunpack.c.l.b16 %v2899
        %v2953 = vunpack.c.l.b16 %v2900
        %v2954 = vunpack.c.l.b16 %v2901
        %v2955 = vunpack.c.l.b16 %v2902
        %v2956 = vpack.c.b16 %v2941, %v2940
        %v2957 = vpack.c.b16 %v2943, %v2942
        %v2958 = vpack.c.b16 %v2945, %v2944
        %v2959 = vpack.c.b16 %v2947, %v2946
        %v2960 = vpack.c.b16 %v2949, %v2948
        %v2961 = vpack.c.b16 %v2951, %v2950
        %v2962 = vpack.c.b16 %v2953, %v2952
        %v2963 = vpack.c.b16 %v2955, %v2954
        %2972 = vmatprep.subr.bf16.mxu0 0
        %2973 = vmatpush1.bf16.msra.mxu0 %v2963
        %2974 = vmatprep.subr.bf16.mxu0 0
        %2975 = vmatpush1.bf16.msra.mxu0 %v2962
        %2976 = vmatprep.subr.bf16.mxu0 0
        %2977 = vmatpush1.bf16.msra.mxu0 %v2961
        %2978 = vmatprep.subr.bf16.mxu0 0
        %2979 = vmatpush1.bf16.msra.mxu0 %v2960
        %2980 = vmatprep.subr.bf16.mxu0 0
        %2981 = vmatpush1.bf16.msra.mxu0 %v2959
        %2982 = vmatprep.subr.bf16.mxu0 0
        %2983 = vmatpush1.bf16.msra.mxu0 %v2958
        %2984 = vmatprep.subr.bf16.mxu0 0
        %2985 = vmatpush1.bf16.msra.mxu0 %v2957
        %2986 = vmatprep.subr.bf16.mxu0 0
        %2987 = vmatpush1.bf16.msra.mxu0 %v2956
        %2988 = vmatprep.subr.bf16.mxu0 0
        %2989 = vmatpush2.bf16.msra.mxu0 0
        %2990 = vmatprep.subr.bf16.mxu0 0
        %2991 = vmatpush2.bf16.msra.mxu0 0
        %2992 = vmatprep.subr.bf16.mxu0 0
        %2993 = vmatpush2.bf16.msra.mxu0 0
        %2994 = vmatprep.subr.bf16.mxu0 0
        %2995 = vmatpush2.bf16.msra.mxu0 0
        %2996 = vmatprep.subr.bf16.mxu0 0
        %2997 = vmatpush2.bf16.msra.mxu0 0
        %2998 = vmatprep.subr.bf16.mxu0 0
        %2999 = vmatpush2.bf16.msra.mxu0 0
        %3000 = vmatprep.subr.bf16.mxu0 0
        %3001 = vmatpush2.bf16.msra.mxu0 0
        %3002 = vmatprep.subr.bf16.mxu0 0
        %3003 = vmatpush2.bf16.msra.mxu0 0
        %3004 = vmatprep.mubr.bf16.mxu0 0
        %3005 = vmatmul.mubr.bf16.gmra.mxu0 %v2922
        %v3006 = vpop.f32.mrf.mxu0
        %v3007 = vadd.f32 0.0, %v3006
        %v3008 = vpop.f32.mrf.mxu0
        %v3009 = vpop.f32.mrf.mxu0
        %v3010 = vadd.f32 0.0, %v3009
        %v3011 = vpop.f32.mrf.mxu0
        %3012 = vdwg.mxu0
        %v3030 = vunpack.c.l.b16 %v2869
        %v3031 = vunpack.c.l.b16 %v2870
        %v3032 = vunpack.c.l.b16 %v2871
        %v3033 = vunpack.c.l.b16 %v2872
        %v3034 = vunpack.c.l.b16 %v2873
        %v3035 = vunpack.c.l.b16 %v2874
        %v3036 = vunpack.c.l.b16 %v2875
        %v3037 = vunpack.c.l.b16 %v2876
        %v3038 = vunpack.c.l.b16 %v2877
        %v3039 = vunpack.c.l.b16 %v2878
        %v3040 = vunpack.c.l.b16 %v2879
        %v3041 = vunpack.c.l.b16 %v2880
        %v3042 = vunpack.c.l.b16 %v2881
        %v3043 = vunpack.c.l.b16 %v2882
        %v3044 = vunpack.c.l.b16 %v2883
        %v3045 = vunpack.c.l.b16 %v2884
        %v3046 = vpack.c.b16 %v3031, %v3030
        %v3047 = vpack.c.b16 %v3033, %v3032
        %v3048 = vpack.c.b16 %v3035, %v3034
        %v3049 = vpack.c.b16 %v3037, %v3036
        %v3050 = vpack.c.b16 %v3039, %v3038
        %v3051 = vpack.c.b16 %v3041, %v3040
        %v3052 = vpack.c.b16 %v3043, %v3042
        %v3053 = vpack.c.b16 %v3045, %v3044
        %3062 = vmatprep.subr.bf16.mxu0 0
        %3063 = vmatpush1.bf16.msra.mxu0 %v3053
        %3064 = vmatprep.subr.bf16.mxu0 0
        %3065 = vmatpush1.bf16.msra.mxu0 %v3052
        %3066 = vmatprep.subr.bf16.mxu0 0
        %3067 = vmatpush1.bf16.msra.mxu0 %v3051
        %3068 = vmatprep.subr.bf16.mxu0 0
        %3069 = vmatpush1.bf16.msra.mxu0 %v3050
        %3070 = vmatprep.subr.bf16.mxu0 0
        %3071 = vmatpush1.bf16.msra.mxu0 %v3049
        %3072 = vmatprep.subr.bf16.mxu0 0
        %3073 = vmatpush1.bf16.msra.mxu0 %v3048
        %3074 = vmatprep.subr.bf16.mxu0 0
        %3075 = vmatpush1.bf16.msra.mxu0 %v3047
        %3076 = vmatprep.subr.bf16.mxu0 0
        %3077 = vmatpush1.bf16.msra.mxu0 %v3046
        %3078 = vmatprep.subr.bf16.mxu0 0
        %3079 = vmatpush2.bf16.msra.mxu0 0
        %3080 = vmatprep.subr.bf16.mxu0 0
        %3081 = vmatpush2.bf16.msra.mxu0 0
        %3082 = vmatprep.subr.bf16.mxu0 0
        %3083 = vmatpush2.bf16.msra.mxu0 0
        %3084 = vmatprep.subr.bf16.mxu0 0
        %3085 = vmatpush2.bf16.msra.mxu0 0
        %3086 = vmatprep.subr.bf16.mxu0 0
        %3087 = vmatpush2.bf16.msra.mxu0 0
        %3088 = vmatprep.subr.bf16.mxu0 0
        %3089 = vmatpush2.bf16.msra.mxu0 0
        %3090 = vmatprep.subr.bf16.mxu0 0
        %3091 = vmatpush2.bf16.msra.mxu0 0
        %3092 = vmatprep.subr.bf16.mxu0 0
        %3093 = vmatpush2.bf16.msra.mxu0 0
        %3094 = vmatprep.mubr.bf16.mxu0 0
        %3095 = vmatmul.mubr.bf16.gmra.mxu0 %v2909
        %v3096 = vpop.f32.mrf.mxu0
        %v3097 = vadd.f32 %v3007, %v3096
        %v3098 = vpop.f32.mrf.mxu0
        %v3099 = vpop.f32.mrf.mxu0
        %v3100 = vadd.f32 %v3010, %v3099
        %v3101 = vpop.f32.mrf.mxu0
        %3102 = vdwg.mxu0
        %v3103 = vld [vmem:[#allocation2] sm:$0xe]
        %s3104 = scalar_lea.vmem [#allocation9], 128
        %v3105 = vld [vmem:[%s3104] sm:$0xf]
        %v3106 = vld [vmem:[%s3104 + $0x4] sm:$0xf]
        %v3107 = vld [vmem:[%s3104 + $0x8] sm:$0xf]
        %v3108 = vld [vmem:[%s3104 + $0xc] sm:$0xf]
        %v3109 = vld [vmem:[%s3104 + $0x10] sm:$0xf]
        %v3110 = vld [vmem:[%s3104 + $0x14] sm:$0xf]
        %v3111 = vld [vmem:[%s3104 + $0x18] sm:$0xf]
        %v3112 = vld [vmem:[%s3104 + $0x1c] sm:$0xf]
        %v3113 = vld [vmem:[%s3104 + $0x20] sm:$0xf]
        %v3114 = vld [vmem:[%s3104 + $0x24] sm:$0xf]
        %v3115 = vld [vmem:[%s3104 + $0x28] sm:$0xf]
        %v3116 = vld [vmem:[%s3104 + $0x2c] sm:$0xf]
        %v3117 = vld [vmem:[%s3104 + $0x30] sm:$0xf]
        %v3118 = vld [vmem:[%s3104 + $0x34] sm:$0xf]
        %v3119 = vld [vmem:[%s3104 + $0x38] sm:$0xf]
        %v3120 = vld [vmem:[%s3104 + $0x3c] sm:$0xf]
        %v3122 = vunpack.c.l.b16 %v3103
        %v3123 = vpack.c.b16 %v2907, %v3122
        %v3124 = vrot.slane %v3123, 1
        %v3125 = vrot.slane %v2910, 1
        %v3126 = vsel %vm600, %v3124, %v3125
        %v3144 = vunpack.c.l.b16 %v3105
        %v3145 = vunpack.c.l.b16 %v3106
        %v3146 = vunpack.c.l.b16 %v3107
        %v3147 = vunpack.c.l.b16 %v3108
        %v3148 = vunpack.c.l.b16 %v3109
        %v3149 = vunpack.c.l.b16 %v3110
        %v3150 = vunpack.c.l.b16 %v3111
        %v3151 = vunpack.c.l.b16 %v3112
        %v3152 = vunpack.c.l.b16 %v3113
        %v3153 = vunpack.c.l.b16 %v3114
        %v3154 = vunpack.c.l.b16 %v3115
        %v3155 = vunpack.c.l.b16 %v3116
        %v3156 = vunpack.c.l.b16 %v3117
        %v3157 = vunpack.c.l.b16 %v3118
        %v3158 = vunpack.c.l.b16 %v3119
        %v3159 = vunpack.c.l.b16 %v3120
        %v3160 = vpack.c.b16 %v3145, %v3144
        %v3161 = vpack.c.b16 %v3147, %v3146
        %v3162 = vpack.c.b16 %v3149, %v3148
        %v3163 = vpack.c.b16 %v3151, %v3150
        %v3164 = vpack.c.b16 %v3153, %v3152
        %v3165 = vpack.c.b16 %v3155, %v3154
        %v3166 = vpack.c.b16 %v3157, %v3156
        %v3167 = vpack.c.b16 %v3159, %v3158
        %3176 = vmatprep.subr.bf16.mxu0 0
        %3177 = vmatpush1.bf16.msra.mxu0 %v3167
        %3178 = vmatprep.subr.bf16.mxu0 0
        %3179 = vmatpush1.bf16.msra.mxu0 %v3166
        %3180 = vmatprep.subr.bf16.mxu0 0
        %3181 = vmatpush1.bf16.msra.mxu0 %v3165
        %3182 = vmatprep.subr.bf16.mxu0 0
        %3183 = vmatpush1.bf16.msra.mxu0 %v3164
        %3184 = vmatprep.subr.bf16.mxu0 0
        %3185 = vmatpush1.bf16.msra.mxu0 %v3163
        %3186 = vmatprep.subr.bf16.mxu0 0
        %3187 = vmatpush1.bf16.msra.mxu0 %v3162
        %3188 = vmatprep.subr.bf16.mxu0 0
        %3189 = vmatpush1.bf16.msra.mxu0 %v3161
        %3190 = vmatprep.subr.bf16.mxu0 0
        %3191 = vmatpush1.bf16.msra.mxu0 %v3160
        %3192 = vmatprep.subr.bf16.mxu0 0
        %3193 = vmatpush2.bf16.msra.mxu0 0
        %3194 = vmatprep.subr.bf16.mxu0 0
        %3195 = vmatpush2.bf16.msra.mxu0 0
        %3196 = vmatprep.subr.bf16.mxu0 0
        %3197 = vmatpush2.bf16.msra.mxu0 0
        %3198 = vmatprep.subr.bf16.mxu0 0
        %3199 = vmatpush2.bf16.msra.mxu0 0
        %3200 = vmatprep.subr.bf16.mxu0 0
        %3201 = vmatpush2.bf16.msra.mxu0 0
        %3202 = vmatprep.subr.bf16.mxu0 0
        %3203 = vmatpush2.bf16.msra.mxu0 0
        %3204 = vmatprep.subr.bf16.mxu0 0
        %3205 = vmatpush2.bf16.msra.mxu0 0
        %3206 = vmatprep.subr.bf16.mxu0 0
        %3207 = vmatpush2.bf16.msra.mxu0 0
        %3208 = vmatprep.mubr.bf16.mxu0 0
        %3209 = vmatmul.mubr.bf16.gmra.mxu0 %v3126
        %v3210 = vpop.f32.mrf.mxu0
        %v3211 = vadd.f32 0.0, %v3210
        %v3212 = vpop.f32.mrf.mxu0
        %v3213 = vpop.f32.mrf.mxu0
        %v3214 = vadd.f32 0.0, %v3213
        %v3215 = vpop.f32.mrf.mxu0
        %3216 = vdwg.mxu0
        %v3217 = vadd.f32 %v3097, %v3211
        %v3218 = vadd.f32 %v3100, %v3214
        %v3219 = vld [vmem:[#allocation2 + $0x8] sm:$0x3]
        %s3220 = scalar_lea.vmem [#allocation9], 192
        %v3221 = vld [vmem:[%s3220] sm:$0xf]
        %v3222 = vld [vmem:[%s3220 + $0x4] sm:$0xf]
        %v3223 = vld [vmem:[%s3220 + $0x8] sm:$0xf]
        %v3224 = vld [vmem:[%s3220 + $0xc] sm:$0xf]
        %v3225 = vld [vmem:[%s3220 + $0x10] sm:$0xf]
        %v3226 = vld [vmem:[%s3220 + $0x14] sm:$0xf]
        %v3227 = vld [vmem:[%s3220 + $0x18] sm:$0xf]
        %v3228 = vld [vmem:[%s3220 + $0x1c] sm:$0xf]
        %v3229 = vld [vmem:[%s3220 + $0x20] sm:$0xf]
        %v3230 = vld [vmem:[%s3220 + $0x24] sm:$0xf]
        %v3231 = vld [vmem:[%s3220 + $0x28] sm:$0xf]
        %v3232 = vld [vmem:[%s3220 + $0x2c] sm:$0xf]
        %v3233 = vld [vmem:[%s3220 + $0x30] sm:$0xf]
        %v3234 = vld [vmem:[%s3220 + $0x34] sm:$0xf]
        %v3235 = vld [vmem:[%s3220 + $0x38] sm:$0xf]
        %v3236 = vld [vmem:[%s3220 + $0x3c] sm:$0xf]
        %v3238 = vunpack.c.l.b16 %v3219
        %v3239 = vpack.c.b16 %v3238, %v3238
        %v3241 = vshrl.u32 %v3123, 16
        %v3243 = vrot.slane %v3241, 1
        %v3244 = vshll.u32 %v3123, 16
        %v3246 = vrot.slane %v3244, 2
        %v3247 = vor.u32 %v3243, %v3246
        %v3249 = vshrl.u32 %v3239, 16
        %v3251 = vrot.slane %v3249, 1
        %v3252 = vshll.u32 %v3239, 16
        %v3254 = vrot.slane %v3252, 2
        %v3255 = vor.u32 %v3251, %v3254
        %v3256 = vsel %vm717, %v3247, %v3255
        %v3274 = vunpack.c.l.b16 %v3221
        %v3275 = vunpack.c.l.b16 %v3222
        %v3276 = vunpack.c.l.b16 %v3223
        %v3277 = vunpack.c.l.b16 %v3224
        %v3278 = vunpack.c.l.b16 %v3225
        %v3279 = vunpack.c.l.b16 %v3226
        %v3280 = vunpack.c.l.b16 %v3227
        %v3281 = vunpack.c.l.b16 %v3228
        %v3282 = vunpack.c.l.b16 %v3229
        %v3283 = vunpack.c.l.b16 %v3230
        %v3284 = vunpack.c.l.b16 %v3231
        %v3285 = vunpack.c.l.b16 %v3232
        %v3286 = vunpack.c.l.b16 %v3233
        %v3287 = vunpack.c.l.b16 %v3234
        %v3288 = vunpack.c.l.b16 %v3235
        %v3289 = vunpack.c.l.b16 %v3236
        %v3290 = vpack.c.b16 %v3275, %v3274
        %v3291 = vpack.c.b16 %v3277, %v3276
        %v3292 = vpack.c.b16 %v3279, %v3278
        %v3293 = vpack.c.b16 %v3281, %v3280
        %v3294 = vpack.c.b16 %v3283, %v3282
        %v3295 = vpack.c.b16 %v3285, %v3284
        %v3296 = vpack.c.b16 %v3287, %v3286
        %v3297 = vpack.c.b16 %v3289, %v3288
        %3306 = vmatprep.subr.bf16.mxu0 0
        %3307 = vmatpush1.bf16.msra.mxu0 %v3297
        %3308 = vmatprep.subr.bf16.mxu0 0
        %3309 = vmatpush1.bf16.msra.mxu0 %v3296
        %3310 = vmatprep.subr.bf16.mxu0 0
        %3311 = vmatpush1.bf16.msra.mxu0 %v3295
        %3312 = vmatprep.subr.bf16.mxu0 0
        %3313 = vmatpush1.bf16.msra.mxu0 %v3294
        %3314 = vmatprep.subr.bf16.mxu0 0
        %3315 = vmatpush1.bf16.msra.mxu0 %v3293
        %3316 = vmatprep.subr.bf16.mxu0 0
        %3317 = vmatpush1.bf16.msra.mxu0 %v3292
        %3318 = vmatprep.subr.bf16.mxu0 0
        %3319 = vmatpush1.bf16.msra.mxu0 %v3291
        %3320 = vmatprep.subr.bf16.mxu0 0
        %3321 = vmatpush1.bf16.msra.mxu0 %v3290
        %3322 = vmatprep.subr.bf16.mxu0 0
        %3323 = vmatpush2.bf16.msra.mxu0 0
        %3324 = vmatprep.subr.bf16.mxu0 0
        %3325 = vmatpush2.bf16.msra.mxu0 0
        %3326 = vmatprep.subr.bf16.mxu0 0
        %3327 = vmatpush2.bf16.msra.mxu0 0
        %3328 = vmatprep.subr.bf16.mxu0 0
        %3329 = vmatpush2.bf16.msra.mxu0 0
        %3330 = vmatprep.subr.bf16.mxu0 0
        %3331 = vmatpush2.bf16.msra.mxu0 0
        %3332 = vmatprep.subr.bf16.mxu0 0
        %3333 = vmatpush2.bf16.msra.mxu0 0
        %3334 = vmatprep.subr.bf16.mxu0 0
        %3335 = vmatpush2.bf16.msra.mxu0 0
        %3336 = vmatprep.subr.bf16.mxu0 0
        %3337 = vmatpush2.bf16.msra.mxu0 0
        %3338 = vmatprep.mubr.bf16.mxu0 0
        %3339 = vmatmul.mubr.bf16.gmra.mxu0 %v3256
        %v3340 = vpop.f32.mrf.mxu0
        %v3341 = vadd.f32 0.0, %v3340
        %v3342 = vpop.f32.mrf.mxu0
        %v3343 = vpop.f32.mrf.mxu0
        %v3344 = vadd.f32 0.0, %v3343
        %v3345 = vpop.f32.mrf.mxu0
        %3346 = vdwg.mxu0
        %v3347 = vadd.f32 %v3217, %v3341
        %v3348 = vadd.f32 %v3218, %v3344
        %v3349 = vld [vmem:[#allocation2] sm:$0xc]
        %s3350 = scalar_lea.vmem [#allocation9], 256
        %v3351 = vld [vmem:[%s3350] sm:$0xf]
        %v3352 = vld [vmem:[%s3350 + $0x4] sm:$0xf]
        %v3353 = vld [vmem:[%s3350 + $0x8] sm:$0xf]
        %v3354 = vld [vmem:[%s3350 + $0xc] sm:$0xf]
        %v3355 = vld [vmem:[%s3350 + $0x10] sm:$0xf]
        %v3356 = vld [vmem:[%s3350 + $0x14] sm:$0xf]
        %v3357 = vld [vmem:[%s3350 + $0x18] sm:$0xf]
        %v3358 = vld [vmem:[%s3350 + $0x1c] sm:$0xf]
        %v3359 = vld [vmem:[%s3350 + $0x20] sm:$0xf]
        %v3360 = vld [vmem:[%s3350 + $0x24] sm:$0xf]
        %v3361 = vld [vmem:[%s3350 + $0x28] sm:$0xf]
        %v3362 = vld [vmem:[%s3350 + $0x2c] sm:$0xf]
        %v3363 = vld [vmem:[%s3350 + $0x30] sm:$0xf]
        %v3364 = vld [vmem:[%s3350 + $0x34] sm:$0xf]
        %v3365 = vld [vmem:[%s3350 + $0x38] sm:$0xf]
        %v3366 = vld [vmem:[%s3350 + $0x3c] sm:$0xf]
        %v3368 = vunpack.c.l.b16 %v3349
        %v3369 = vpack.c.b16 %v2907, %v3368
        %v3370 = vrot.slane %v3369, 2
        %v3371 = vrot.slane %v3239, 2
        %v3372 = vsel %vm848, %v3370, %v3371
        %v3390 = vunpack.c.l.b16 %v3351
        %v3391 = vunpack.c.l.b16 %v3352
        %v3392 = vunpack.c.l.b16 %v3353
        %v3393 = vunpack.c.l.b16 %v3354
        %v3394 = vunpack.c.l.b16 %v3355
        %v3395 = vunpack.c.l.b16 %v3356
        %v3396 = vunpack.c.l.b16 %v3357
        %v3397 = vunpack.c.l.b16 %v3358
        %v3398 = vunpack.c.l.b16 %v3359
        %v3399 = vunpack.c.l.b16 %v3360
        %v3400 = vunpack.c.l.b16 %v3361
        %v3401 = vunpack.c.l.b16 %v3362
        %v3402 = vunpack.c.l.b16 %v3363
        %v3403 = vunpack.c.l.b16 %v3364
        %v3404 = vunpack.c.l.b16 %v3365
        %v3405 = vunpack.c.l.b16 %v3366
        %v3406 = vpack.c.b16 %v3391, %v3390
        %v3407 = vpack.c.b16 %v3393, %v3392
        %v3408 = vpack.c.b16 %v3395, %v3394
        %v3409 = vpack.c.b16 %v3397, %v3396
        %v3410 = vpack.c.b16 %v3399, %v3398
        %v3411 = vpack.c.b16 %v3401, %v3400
        %v3412 = vpack.c.b16 %v3403, %v3402
        %v3413 = vpack.c.b16 %v3405, %v3404
        %3422 = vmatprep.subr.bf16.mxu0 0
        %3423 = vmatpush1.bf16.msra.mxu0 %v3413
        %3424 = vmatprep.subr.bf16.mxu0 0
        %3425 = vmatpush1.bf16.msra.mxu0 %v3412
        %3426 = vmatprep.subr.bf16.mxu0 0
        %3427 = vmatpush1.bf16.msra.mxu0 %v3411
        %3428 = vmatprep.subr.bf16.mxu0 0
        %3429 = vmatpush1.bf16.msra.mxu0 %v3410
        %3430 = vmatprep.subr.bf16.mxu0 0
        %3431 = vmatpush1.bf16.msra.mxu0 %v3409
        %3432 = vmatprep.subr.bf16.mxu0 0
        %3433 = vmatpush1.bf16.msra.mxu0 %v3408
        %3434 = vmatprep.subr.bf16.mxu0 0
        %3435 = vmatpush1.bf16.msra.mxu0 %v3407
        %3436 = vmatprep.subr.bf16.mxu0 0
        %3437 = vmatpush1.bf16.msra.mxu0 %v3406
        %3438 = vmatprep.subr.bf16.mxu0 0
        %3439 = vmatpush2.bf16.msra.mxu0 0
        %3440 = vmatprep.subr.bf16.mxu0 0
        %3441 = vmatpush2.bf16.msra.mxu0 0
        %3442 = vmatprep.subr.bf16.mxu0 0
        %3443 = vmatpush2.bf16.msra.mxu0 0
        %3444 = vmatprep.subr.bf16.mxu0 0
        %3445 = vmatpush2.bf16.msra.mxu0 0
        %3446 = vmatprep.subr.bf16.mxu0 0
        %3447 = vmatpush2.bf16.msra.mxu0 0
        %3448 = vmatprep.subr.bf16.mxu0 0
        %3449 = vmatpush2.bf16.msra.mxu0 0
        %3450 = vmatprep.subr.bf16.mxu0 0
        %3451 = vmatpush2.bf16.msra.mxu0 0
        %3452 = vmatprep.subr.bf16.mxu0 0
        %3453 = vmatpush2.bf16.msra.mxu0 0
        %3454 = vmatprep.mubr.bf16.mxu0 0
        %3455 = vmatmul.mubr.bf16.gmra.mxu0 %v3372
        %v3456 = vpop.f32.mrf.mxu0
        %v3457 = vadd.f32 0.0, %v3456
        %v3458 = vpop.f32.mrf.mxu0
        %v3459 = vpop.f32.mrf.mxu0
        %v3460 = vadd.f32 0.0, %v3459
        %v3461 = vpop.f32.mrf.mxu0
        %3462 = vdwg.mxu0
        %v3463 = vadd.f32 %v3347, %v3457
        %v3464 = vadd.f32 %v3348, %v3460
        %v3465 = vld [vmem:[%s5] sm:$0x1]
        %v3467 = vlaneseq
        %v3468 = vshrl.u32 %v3467, 7
        %v3469 = vsub.s32 0, %v3468
        %v3470 = vrot.slane %v3465, %v3469
        %v3472 = vadd.f32 %v3463, %v3470
        %v3473 = vadd.f32 %v3464, %v3470
        %3474 = vst [vmem:[%s313] sm:$0xff] %v3472
        %3475 = vst [vmem:[%s313 + $0x8] sm:$0xff] %v3473
        %s3476 = sand.u32 %s164, 1
        %s3477 = scalar_lea.sflag [#allocation5], %s3476
        %s3478 = sand.u32 %s164, 1
        %s3479 = smul.addr %s3478, 16
        %s3480 = scalar_lea.vmem [#allocation11], %s3479
        // Predicated region
        $region61: #{tpu_custom_call.1} parent=43 // pred_check
          %p3481 = pneg %p174
        $region62: #{tpu_custom_call.1} parent=43 // pred_check_branch
          %3483 = sbr.rel (%p3481) target = $region64
        $region63: #{tpu_custom_call.1} parent=43 // pred_region
          %s3485 = ssub.s32 256, 256
          %3486 = vsyncadd %s3477, %s3485
          %s3487 = smul.addr %s25, 2
          %s3488 = smul.addr %s3487, 128
          %s3489 = scalar_lea.hbm %s6, %s3488
          %s3490 = sshll.u32 %s3480, 4
          %s3491 = int_to_ptr.vmem [resolvable:$true] %s3490
          %3496 = dma.vmem_to_hbm [thread:$0]  %s3491, 256, %s3489, %s3477, 128, 128, 8
        $region64: #{tpu_custom_call.1} parent=43 // pred_fallthru
          _
      $region44: #{tpu_custom_call.1} parent=5 // pred_fallthru
        _
      %p3497 = scmp.le.s32.totalorder 2, %s20
      // Predicated region
      $region65: #{tpu_custom_call.1} parent=5 // pred_check
        %p3498 = pneg %p3497
      $region66: #{tpu_custom_call.1} parent=5 // pred_check_branch
        %3500 = sbr.rel (%p3498) target = $region68
      $region67: #{tpu_custom_call.1} parent=5 // pred_region
        %s3501 = ssub.s32 %s20, 2
        // Predicated region
        $region69: #{tpu_custom_call.1} parent=67 // pred_check
          %p3502 = pneg %p180
        $region70: #{tpu_custom_call.1} parent=67 // pred_check_branch
          %3504 = sbr.rel (%p3502) target = $region72
        $region71: #{tpu_custom_call.1} parent=67 // pred_region
          %s3505 = sand.u32 %s165, 1
          %s3506 = scalar_lea.sflag [#allocation5], %s3505
          %s3507 = sand.u32 %s165, 1
          %s3508 = smul.addr %s3507, 16
          %s3509 = scalar_lea.vmem [#allocation11], %s3508
          %3510 = dma.done %s3506, 256
        $region72: #{tpu_custom_call.1} parent=67 // pred_fallthru
          _
      $region68: #{tpu_custom_call.1} parent=5 // pred_fallthru
        _
    $region6: #{tpu_custom_call.1} parent=1 // loop_footer
      %s24 = sadd.s32 1, %s20
    $region7: #{tpu_custom_call.1} parent=1 // loop_footer_branch
      %19 = sbr.rel target = $region3
    $region8: #{tpu_custom_call.1} parent=1 // loop_exit
      _
    %3511 = vsyncpa [#allocation4], 1
    %s3512 = scalar_lea.sflag [#allocation4], 1
    %3513 = vsyncpa %s3512, 1
    %3514 = vsyncpa [#allocation7], 1
    %3515 = vsyncpa [#allocation10], 1
    %3516 = vsyncpa [#allocation5], 1
    %s3517 = scalar_lea.sflag [#allocation5], 1
    %3518 = vsyncpa %s3517, 1

</llo_original>
